<compile_context>
chip_gen: v7x
topology: tpu7x:2x2x1
jax: 0.10.0
libtpu: 0.0.40
codegen_flags: <defaults>
</compile_context>

<pallas_src>
import functools
import math

import jax
import jax.numpy as jnp
from jax.experimental import pallas as pl
from jax.experimental.pallas import tpu as pltpu

# ----- problem sizes (consistent with the module's __init__) ---------------------
N_NODES = 4
N_OPS = 5
HIDDEN = 32
VOCAB = N_NODES + 1 + N_OPS            # 10 embedding rows
N_PREV = 2                             # n_prev_nodes
N_STEPS = 4 * N_NODES                  # 16 sampling steps per controller
N_SEL = 2 * N_NODES                    # 8 node picks == 8 op picks

FUSED_IN = VOCAB + HIDDEN              # 42 : [onehot | h]
CTRL_IN_USED = FUSED_IN + 1            # 43 : [onehot | h | const-1 (bias lane)]
CTRL_IN_PAD = 64                       # per-controller lane group in x / row block in W
TOTAL_IN = 2 * CTRL_IN_PAD             # 128 contracting lanes of the shared matmul

GATE_HI = 4 * HIDDEN                   # 128 : LSTM gate columns
HID_LO, HID_HI = 4 * HIDDEN, 5 * HIDDEN          # 128:160 hid_attn(h)
SOFT_LO, SOFT_HI = 5 * HIDDEN, 5 * HIDDEN + VOCAB  # 160:170 op logits (padded)
FUSED_OUT_PAD = 256                    # padded fused-output lanes
BIAS_ROW = FUSED_IN                    # 42 : bias row inside each 64-row block

OUT_LANES = 128
LOGP_LANE = 2 * N_SEL                  # 16
ENT_LANE = 2 * N_SEL + 1               # 17

TEMPERATURE = 5.0
TANH_CONSTANT = 2.5
OP_TANH_REDUCE = 2.5


def _controller_pair_kernel(unif_ref, w_ref, ea_ref, wv_ref, out_ref, *,
                            force_uniform):
    f32 = jnp.float32
    lane_v = jax.lax.broadcasted_iota(jnp.int32, (2, VOCAB), 1)       # (2, V)
    lane_out = jax.lax.broadcasted_iota(jnp.int32, (2, OUT_LANES), 1)  # (2, 128)
    row_in = jax.lax.broadcasted_iota(jnp.int32, (2, TOTAL_IN), 0)     # (2, 128)
    ones_col = jnp.ones((2, 1), f32)

    res = jnp.zeros((2, OUT_LANES), f32)       # packed lane-dense output

    if force_uniform:
        # Reference: softmax(zeros(k)) == uniform over k; LSTM state NOT advanced.
        # Closed forms: act = min(floor(u*k), k-1); logp = -log(k); entropy = log(k).
        sum_logk = 0.0
        step, node_ctr, op_ctr = 0, 0, 0
        for node_idx in range(N_NODES):
            for select in ("node", "op"):
                for _ in range(N_PREV):
                    k = node_idx + 2 if select == "node" else N_OPS
                    u_vec = unif_ref[:, step:step + 1]                 # (2, 1)
                    act_f = jnp.minimum(jnp.floor(u_vec * float(k)), float(k - 1))
                    if select == "node":
                        lane_idx = node_ctr
                        node_ctr += 1
                    else:
                        lane_idx = N_SEL + op_ctr
                        op_ctr += 1
                    res = res + act_f * (lane_out == lane_idx).astype(f32)
                    sum_logk += math.log(float(k))
                    step += 1
        total_logp = jnp.full((2, 1), -sum_logk, f32)
        total_ent = jnp.full((2, 1), sum_logk, f32)
    else:
        ri = jax.lax.broadcasted_iota(jnp.int32, (VOCAB, VOCAB), 0)
        ci = jax.lax.broadcasted_iota(jnp.int32, (VOCAB, VOCAB), 1)
        tri = (ri <= ci).astype(f32)           # tri[i, j] = 1 iff i <= j (prefix sum)

        inv_temp = (1.0 / TEMPERATURE) if TEMPERATURE is not None else 1.0

        h = jnp.zeros((2, HIDDEN), f32)
        c_state = jnp.zeros((2, HIDDEN), f32)
        inputs_onehot = jnp.zeros((2, VOCAB), f32)    # first step: embed == zeros
        total_logp = jnp.zeros((2, 1), f32)
        total_ent = jnp.zeros((2, 1), f32)

        step, node_ctr, op_ctr = 0, 0, 0
        for node_idx in range(N_NODES):
            for select in ("node", "op"):
                for _ in range(N_PREV):
                    k = node_idx + 2 if select == "node" else N_OPS
                    valid = lane_v < k

                    # ---- one fused MXU push shared by both controllers ----------
                    # row 0 occupies lanes [0:43), row 1 lanes [64:107); the const-1
                    # lane picks up the folded biases from W's bias row.
                    xc = jnp.concatenate([inputs_onehot, h, ones_col], axis=1)  # (2,43)
                    left = jnp.concatenate(
                        [xc, jnp.zeros((2, TOTAL_IN - CTRL_IN_USED), f32)], axis=1)
                    right = jnp.concatenate(
                        [jnp.zeros((2, CTRL_IN_PAD), f32), xc,
                         jnp.zeros((2, TOTAL_IN - CTRL_IN_PAD - CTRL_IN_USED), f32)],
                        axis=1)
                    x_pad = jnp.where(row_in == 0, left, right)          # (2, 128)
                    w = w_ref[...]            # reload per step: short live range
                    fused = jnp.dot(x_pad, w, preferred_element_type=f32)  # (2, 256)

                    # ---- LSTMCell (gate order i, f, g, o); biases pre-folded -----
                    gates = fused[:, 0:GATE_HI]
                    sig = jax.nn.sigmoid(gates)
                    tnh = jnp.tanh(gates)
                    i_g = sig[:, 0:HIDDEN]
                    f_g = sig[:, HIDDEN:2 * HIDDEN]
                    g_g = tnh[:, 2 * HIDDEN:3 * HIDDEN]
                    o_g = sig[:, 3 * HIDDEN:4 * HIDDEN]
                    c_state = f_g * c_state + i_g * g_g
                    h = o_g * jnp.tanh(c_state)

                    if select == "node":
                        hw = fused[:, HID_LO:HID_HI]                     # (2, H)
                        # per-controller attention (two tiny, independent MXU dots)
                        q0 = jnp.tanh(ea_ref[0] + hw[0:1, :])            # (V, H)
                        q1 = jnp.tanh(ea_ref[1] + hw[1:2, :])
                        l0 = jax.lax.dot_general(wv_ref[0], q0,
                                                 (((1,), (1,)), ((), ())),
                                                 preferred_element_type=f32)  # (1, V)
                        l1 = jax.lax.dot_general(wv_ref[1], q1,
                                                 (((1,), (1,)), ((), ())),
                                                 preferred_element_type=f32)
                        logits = jnp.concatenate([l0, l1], axis=0)        # (2, V)
                        tanh_c = TANH_CONSTANT
                    else:
                        logits = fused[:, SOFT_LO:SOFT_HI]                # (2, V)
                        tanh_c = (TANH_CONSTANT / OP_TANH_REDUCE
                                  if OP_TANH_REDUCE is not None else TANH_CONSTANT)

                    if TEMPERATURE is not None:
                        logits = logits * inv_temp
                    if TANH_CONSTANT is not None:
                        logits = tanh_c * jnp.tanh(logits)   # clamp |logits| <= 2.5
                    else:
                        # only needed if the tanh clamp is disabled
                        logits = logits - jnp.max(jnp.where(valid, logits, -30.0),
                                                  axis=1, keepdims=True)

                    # ---- masked softmax (no max-sub: logits are bounded) ---------
                    e = jnp.where(valid, jnp.exp(logits), 0.0)
                    z = jnp.sum(e, axis=1, keepdims=True)                 # (2, 1)
                    logz = jnp.log(z)                                     # exact for logp
                    inv_z = pl.reciprocal(z, approx=True)                 # entropy only
                    logp_vec = jnp.where(valid, logits - logz, 0.0)

                    # ---- inverse-CDF sampling (prefix-sum via shared tiny MXU dot)
                    u_vec = unif_ref[:, step:step + 1]                    # (2, 1)
                    cdf = jnp.dot(e, tri, preferred_element_type=f32)     # (2, V)
                    below = (cdf < u_vec * z).astype(f32)
                    count = jnp.sum(below, axis=1, keepdims=True)
                    act_i = jnp.minimum(count.astype(jnp.int32), k - 1)   # (2, 1)
                    act_f = act_i.astype(f32)
                    onehot = (lane_v == act_i).astype(f32)                # (2, V)

                    total_logp = total_logp + jnp.sum(onehot * logp_vec,
                                                      axis=1, keepdims=True)
                    total_ent = total_ent - jnp.sum(e * logp_vec,
                                                    axis=1, keepdims=True) * inv_z

                    if select == "node":
                        res = res + act_f * (lane_out == node_ctr).astype(f32)
                        node_ctr += 1
                        inputs_onehot = onehot                 # inputs = action
                    else:
                        res = res + act_f * (lane_out == (N_SEL + op_ctr)).astype(f32)
                        op_ctr += 1
                        # inputs = action + (n_nodes + 1)
                        inputs_onehot = (lane_v == (act_i + (N_NODES + 1))).astype(f32)
                    step += 1

    res = res + total_logp * (lane_out == LOGP_LANE).astype(f32)
    res = res + total_ent * (lane_out == ENT_LANE).astype(f32)
    out_ref[...] = res                         # single lane-dense (2, 128) store


def _init_controller_params(key):
    """PyTorch shapes, uniform(-0.1, 0.1) init (reset_parameters)."""
    def u(k, shape):
        return jax.random.uniform(k, shape, jnp.float32, -0.1, 0.1)
    ks = jax.random.split(key, 10)
    return dict(
        emb=u(ks[0], (VOCAB, HIDDEN)),
        w_ih=u(ks[1], (4 * HIDDEN, HIDDEN)), w_hh=u(ks[2], (4 * HIDDEN, HIDDEN)),
        b_ih=u(ks[3], (4 * HIDDEN,)), b_hh=u(ks[4], (4 * HIDDEN,)),
        w_emb_attn=u(ks[5], (HIDDEN, HIDDEN)), w_hid_attn=u(ks[6], (HIDDEN, HIDDEN)),
        w_v=u(ks[7], (1, HIDDEN)),
        w_soft=u(ks[8], (N_OPS, HIDDEN)), b_soft=u(ks[9], (N_OPS,)),
    )


def _pack_for_kernel(p_normal, p_reduced):
    """Re-layout both controllers' params for the shared fused-dot kernel.

    Per controller c, rows [64c : 64c+64) of w_stack hold:
      rows 0:V      -> emb @ W_ih^T            (embedding lookup folded into matmul)
      rows V:V+H    -> [W_hh^T | W_hid^T | W_soft^T (padded)]
      row  42       -> [b_ih+b_hh | 0 | b_soft]  (picked up by the const-1 lane)
    Columns: gates 0:128, hid_attn(h) 128:160, op logits 160:170, zeros to 256.
    """
    f32 = jnp.float32
    blocks, ea_list, wv_list = [], [], []
    for p in (p_normal, p_reduced):
        emb = p["emb"]
        emb_ih = jnp.dot(emb, p["w_ih"].T)                        # (V, 4H)
        blk = jnp.zeros((CTRL_IN_PAD, FUSED_OUT_PAD), f32)
        blk = blk.at[0:VOCAB, 0:GATE_HI].set(emb_ih)
        blk = blk.at[VOCAB:FUSED_IN, 0:GATE_HI].set(p["w_hh"].T)
        blk = blk.at[VOCAB:FUSED_IN, HID_LO:HID_HI].set(p["w_hid_attn"].T)
        blk = blk.at[VOCAB:FUSED_IN, SOFT_LO:SOFT_LO + N_OPS].set(p["w_soft"].T)
        blk = blk.at[BIAS_ROW, 0:GATE_HI].set(p["b_ih"] + p["b_hh"])
        blk = blk.at[BIAS_ROW, SOFT_LO:SOFT_LO + N_OPS].set(p["b_soft"])
        blocks.append(blk)
        ea_list.append(jnp.dot(emb, p["w_emb_attn"].T))           # (V, H)
        wv_list.append(p["w_v"])                                   # (1, H)
    w_stack = jnp.concatenate(blocks, axis=0)                      # (128, 256)
    ea = jnp.stack(ea_list, axis=0)                                # (2, V, H)
    wv = jnp.stack(wv_list, axis=0)                                # (2, 1, H)
    return w_stack, ea, wv


def large_space_controller_forward(packed, uniforms, force_uniform=False):
    """Pallas forward. Returns (normal_arch, reduced_arch, logp_sum, entropy_sum)."""
    w_stack, ea, wv = packed
    kernel = functools.partial(_controller_pair_kernel, force_uniform=force_uniform)

    out = pl.pallas_call(
        kernel,
        grid=(1,),
        in_specs=[
            pl.BlockSpec(tuple(uniforms.shape), lambda i: (0, 0)),
            pl.BlockSpec(tuple(w_stack.shape), lambda i: (0, 0)),
            pl.BlockSpec(tuple(ea.shape), lambda i: (0, 0, 0)),
            pl.BlockSpec(tuple(wv.shape), lambda i: (0, 0, 0)),
        ],
        out_specs=pl.BlockSpec((2, OUT_LANES), lambda i: (0, 0)),
        out_shape=jax.ShapeDtypeStruct((2, OUT_LANES), jnp.float32),
        compiler_params=pltpu.CompilerParams(dimension_semantics=("arbitrary",)),
        cost_estimate=pl.CostEstimate(flops=2_500_000, transcendentals=10_000,
                                      bytes_accessed=200_000),
    )(uniforms, w_stack, ea, wv)

    # split the packed lane-dense output on the host
    nodes = out[:, 0:N_SEL].astype(jnp.int32)            # (2, 8)
    ops = out[:, N_SEL:2 * N_SEL].astype(jnp.int32)      # (2, 8)
    logp = out[:, LOGP_LANE]
    ent = out[:, ENT_LANE]

    # TODO(synk): Genotype.lstm_output_to_ordinal is not provided in the source;
    # return raw (node, op) index sequences per cell instead of the ordinal arch.
    normal_arch = (nodes[0], ops[0])
    reduced_arch = (nodes[1], ops[1])
    return normal_arch, reduced_arch, logp[0] + logp[1], ent[0] + ent[1]


if __name__ == "__main__":
    key = jax.random.PRNGKey(0)
    k_normal, k_reduced, k_unif = jax.random.split(key, 3)

    packed = _pack_for_kernel(_init_controller_params(k_normal),
                              _init_controller_params(k_reduced))
    # one uniform per sampling step, per controller (drives the Categorical draws)
    uniforms = jax.random.uniform(k_unif, (2, N_STEPS), jnp.float32)

    result = large_space_controller_forward(packed, uniforms, force_uniform=False)
    jax.block_until_ready(result)

    result_uniform = large_space_controller_forward(packed, uniforms,
                                                    force_uniform=True)
    jax.block_until_ready(result_uniform)

    print("KERNEL_OK")
</pallas_src>

<mosaic_0001>
module attributes {stable_mosaic.version = 11 : i64} {
  func.func @_controller_pair_kernel(%arg0: i32, %arg1: memref<2x16xf32, #tpu.memory_space<vmem>>, %arg2: memref<128x256xf32, #tpu.memory_space<vmem>>, %arg3: memref<2x10x32xf32, #tpu.memory_space<vmem>>, %arg4: memref<2x1x32xf32, #tpu.memory_space<vmem>>, %arg5: memref<2x128xf32, #tpu.memory_space<vmem>>) attributes {dimension_semantics = [#tpu.dimension_semantics<arbitrary>], iteration_bounds = array<i64: 1>, scalar_prefetch = 0 : i64, scratch_operands = 0 : i64, tpu.core_type = #tpu.core_type<tc>, window_params = [{pipeline_mode = #tpu.pipeline_mode<synchronous>, transform_indices = @transform_0, window_bounds = array<i64: 2, 16>}, {pipeline_mode = #tpu.pipeline_mode<synchronous>, transform_indices = @transform_1, window_bounds = array<i64: 128, 256>}, {pipeline_mode = #tpu.pipeline_mode<synchronous>, transform_indices = @transform_2, window_bounds = array<i64: 2, 10, 32>}, {pipeline_mode = #tpu.pipeline_mode<synchronous>, transform_indices = @transform_3, window_bounds = array<i64: 2, 1, 32>}, {pipeline_mode = #tpu.pipeline_mode<synchronous>, transform_indices = @transform_4, window_bounds = array<i64: 2, 128>}]} {
    %0 = tpu.iota {dimensions = array<i32: 1>} : vector<2x10xi32>
    %1 = tpu.iota {dimensions = array<i32: 1>} : vector<2x128xi32>
    %2 = tpu.iota {dimensions = array<i32: 0>} : vector<2x128xi32>
    %cst = arith.constant 1.000000e+00 : f32
    %3 = vector.broadcast %cst : f32 to vector<2x1xf32>
    %cst_0 = arith.constant 0.000000e+00 : f32
    %4 = vector.broadcast %cst_0 : f32 to vector<2x128xf32>
    %5 = tpu.iota {dimensions = array<i32: 0>} : vector<10x10xi32>
    %6 = tpu.iota {dimensions = array<i32: 1>} : vector<10x10xi32>
    %7 = arith.cmpi sle, %5, %6 : vector<10x10xi32>
    %8 = arith.extui %7 : vector<10x10xi1> to vector<10x10xi32>
    %9 = arith.sitofp %8 : vector<10x10xi32> to vector<10x10xf32>
    %cst_1 = arith.constant 0.000000e+00 : f32
    %10 = vector.broadcast %cst_1 : f32 to vector<2x32xf32>
    %cst_2 = arith.constant 0.000000e+00 : f32
    %11 = vector.broadcast %cst_2 : f32 to vector<2x32xf32>
    %cst_3 = arith.constant 0.000000e+00 : f32
    %12 = vector.broadcast %cst_3 : f32 to vector<2x10xf32>
    %cst_4 = arith.constant 0.000000e+00 : f32
    %13 = vector.broadcast %cst_4 : f32 to vector<2x1xf32>
    %cst_5 = arith.constant 0.000000e+00 : f32
    %14 = vector.broadcast %cst_5 : f32 to vector<2x1xf32>
    %c2_i32 = arith.constant 2 : i32
    %15 = vector.broadcast %c2_i32 : i32 to vector<2x10xi32>
    %16 = arith.cmpi slt, %0, %15 : vector<2x10xi32>
    %17 = tpu.concatenate %12, %10, %3 in 1 : vector<2x10xf32>, vector<2x32xf32>, vector<2x1xf32> -> vector<2x43xf32>
    %cst_6 = arith.constant 0.000000e+00 : f32
    %18 = vector.broadcast %cst_6 : f32 to vector<2x85xf32>
    %19 = tpu.concatenate %17, %18 in 1 : vector<2x43xf32>, vector<2x85xf32> -> vector<2x128xf32>
    %cst_7 = arith.constant 0.000000e+00 : f32
    %20 = vector.broadcast %cst_7 : f32 to vector<2x64xf32>
    %cst_8 = arith.constant 0.000000e+00 : f32
    %21 = vector.broadcast %cst_8 : f32 to vector<2x21xf32>
    %22 = tpu.concatenate %20, %17, %21 in 1 : vector<2x64xf32>, vector<2x43xf32>, vector<2x21xf32> -> vector<2x128xf32>
    %c0_i32 = arith.constant 0 : i32
    %23 = vector.broadcast %c0_i32 : i32 to vector<2x128xi32>
    %24 = arith.cmpi eq, %2, %23 : vector<2x128xi32>
    %25 = arith.select %24, %19, %22 : vector<2x128xi1>, vector<2x128xf32>
    %c0 = arith.constant 0 : index
    %c0_9 = arith.constant 0 : index
    %26 = vector.load %arg2[%c0, %c0_9] : memref<128x256xf32, #tpu.memory_space<vmem>>, vector<128x256xf32>
    %cst_10 = arith.constant dense<0.000000e+00> : vector<2x256xf32>
    %27 = tpu.matmul %25, %26, %cst_10 {dimension_numbers = #tpu.dot_dimension_numbers<[1], [0], [0], [1], [0, 0, 1, 1], [], []>} : vector<2x128xf32>, vector<128x256xf32>, vector<2x256xf32> -> vector<2x256xf32>
    %28 = vector.extract_strided_slice %27 {offsets = [0, 0], sizes = [2, 128], strides = [1, 1]} : vector<2x256xf32> to vector<2x128xf32>
    %29 = arith.negf %28 : vector<2x128xf32>
    %30 = math.exp %29 : vector<2x128xf32>
    %cst_11 = arith.constant 1.000000e+00 : f32
    %31 = vector.broadcast %cst_11 : f32 to vector<2x128xf32>
    %32 = arith.addf %31, %30 : vector<2x128xf32>
    %33 = arith.divf %31, %32 : vector<2x128xf32>
    %34 = math.tanh %28 : vector<2x128xf32>
    %35 = vector.extract_strided_slice %33 {offsets = [0, 0], sizes = [2, 32], strides = [1, 1]} : vector<2x128xf32> to vector<2x32xf32>
    %36 = vector.extract_strided_slice %33 {offsets = [0, 32], sizes = [2, 32], strides = [1, 1]} : vector<2x128xf32> to vector<2x32xf32>
    %37 = vector.extract_strided_slice %34 {offsets = [0, 64], sizes = [2, 32], strides = [1, 1]} : vector<2x128xf32> to vector<2x32xf32>
    %38 = vector.extract_strided_slice %33 {offsets = [0, 96], sizes = [2, 32], strides = [1, 1]} : vector<2x128xf32> to vector<2x32xf32>
    %39 = arith.mulf %36, %11 : vector<2x32xf32>
    %40 = arith.mulf %35, %37 : vector<2x32xf32>
    %41 = arith.addf %39, %40 : vector<2x32xf32>
    %42 = math.tanh %41 : vector<2x32xf32>
    %43 = arith.mulf %38, %42 : vector<2x32xf32>
    %44 = vector.extract_strided_slice %27 {offsets = [0, 128], sizes = [2, 32], strides = [1, 1]} : vector<2x256xf32> to vector<2x32xf32>
    %c0_12 = arith.constant 0 : index
    %c0_13 = arith.constant 0 : index
    %c0_14 = arith.constant 0 : index
    %45 = vector.load %arg3[%c0_12, %c0_13, %c0_14] : memref<2x10x32xf32, #tpu.memory_space<vmem>>, vector<1x10x32xf32>
    %46 = vector.shape_cast %45 : vector<1x10x32xf32> to vector<10x32xf32>
    %47 = vector.extract_strided_slice %44 {offsets = [0, 0], sizes = [1, 32], strides = [1, 1]} : vector<2x32xf32> to vector<1x32xf32>
    %48 = vector.broadcast %47 : vector<1x32xf32> to vector<10x32xf32>
    %49 = arith.addf %46, %48 : vector<10x32xf32>
    %50 = math.tanh %49 : vector<10x32xf32>
    %c1 = arith.constant 1 : index
    %c0_15 = arith.constant 0 : index
    %c0_16 = arith.constant 0 : index
    %51 = vector.load %arg3[%c1, %c0_15, %c0_16] : memref<2x10x32xf32, #tpu.memory_space<vmem>>, vector<1x10x32xf32>
    %52 = vector.shape_cast %51 : vector<1x10x32xf32> to vector<10x32xf32>
    %53 = vector.extract_strided_slice %44 {offsets = [1, 0], sizes = [1, 32], strides = [1, 1]} : vector<2x32xf32> to vector<1x32xf32>
    %54 = vector.broadcast %53 : vector<1x32xf32> to vector<10x32xf32>
    %55 = arith.addf %52, %54 : vector<10x32xf32>
    %56 = math.tanh %55 : vector<10x32xf32>
    %c0_17 = arith.constant 0 : index
    %c0_18 = arith.constant 0 : index
    %c0_19 = arith.constant 0 : index
    %57 = vector.load %arg4[%c0_17, %c0_18, %c0_19] : memref<2x1x32xf32, #tpu.memory_space<vmem>>, vector<1x1x32xf32>
    %58 = vector.shape_cast %57 : vector<1x1x32xf32> to vector<1x32xf32>
    %cst_20 = arith.constant dense<0.000000e+00> : vector<1x10xf32>
    %59 = tpu.matmul %58, %50, %cst_20 {dimension_numbers = #tpu.dot_dimension_numbers<[1], [1], [0], [0], [0, 0, 1, 0], [], []>} : vector<1x32xf32>, vector<10x32xf32>, vector<1x10xf32> -> vector<1x10xf32>
    %c1_21 = arith.constant 1 : index
    %c0_22 = arith.constant 0 : index
    %c0_23 = arith.constant 0 : index
    %60 = vector.load %arg4[%c1_21, %c0_22, %c0_23] : memref<2x1x32xf32, #tpu.memory_space<vmem>>, vector<1x1x32xf32>
    %61 = vector.shape_cast %60 : vector<1x1x32xf32> to vector<1x32xf32>
    %cst_24 = arith.constant dense<0.000000e+00> : vector<1x10xf32>
    %62 = tpu.matmul %61, %56, %cst_24 {dimension_numbers = #tpu.dot_dimension_numbers<[1], [1], [0], [0], [0, 0, 1, 0], [], []>} : vector<1x32xf32>, vector<10x32xf32>, vector<1x10xf32> -> vector<1x10xf32>
    %63 = tpu.concatenate %59, %62 in 0 : vector<1x10xf32>, vector<1x10xf32> -> vector<2x10xf32>
    %cst_25 = arith.constant 2.000000e-01 : f32
    %64 = vector.broadcast %cst_25 : f32 to vector<2x10xf32>
    %65 = arith.mulf %63, %64 : vector<2x10xf32>
    %66 = math.tanh %65 : vector<2x10xf32>
    %cst_26 = arith.constant 2.500000e+00 : f32
    %67 = vector.broadcast %cst_26 : f32 to vector<2x10xf32>
    %68 = arith.mulf %67, %66 : vector<2x10xf32>
    %69 = math.exp %68 : vector<2x10xf32>
    %cst_27 = arith.constant 0.000000e+00 : f32
    %70 = vector.broadcast %cst_27 : f32 to vector<2x10xf32>
    %71 = arith.select %16, %69, %70 : vector<2x10xi1>, vector<2x10xf32>
    %cst_28 = arith.constant dense<0.000000e+00> : vector<2xf32>
    %72 = vector.multi_reduction <add>, %71, %cst_28 [1] : vector<2x10xf32> to vector<2xf32>
    %73 = vector.shape_cast %72 : vector<2xf32> to vector<2x1xf32>
    %74 = math.log %73 : vector<2x1xf32>
    %75 = tpu.reciprocal %73 {approx = true} : vector<2x1xf32> -> vector<2x1xf32>
    %76 = vector.broadcast %74 : vector<2x1xf32> to vector<2x10xf32>
    %77 = arith.subf %68, %76 : vector<2x10xf32>
    %cst_29 = arith.constant 0.000000e+00 : f32
    %78 = vector.broadcast %cst_29 : f32 to vector<2x10xf32>
    %79 = arith.select %16, %77, %78 : vector<2x10xi1>, vector<2x10xf32>
    %c0_30 = arith.constant 0 : index
    %c0_31 = arith.constant 0 : index
    %80 = vector.load %arg1[%c0_30, %c0_31] : memref<2x16xf32, #tpu.memory_space<vmem>>, vector<2x1xf32>
    %cst_32 = arith.constant dense<0.000000e+00> : vector<2x10xf32>
    %81 = tpu.matmul %71, %9, %cst_32 {dimension_numbers = #tpu.dot_dimension_numbers<[1], [0], [0], [1], [0, 0, 1, 1], [], []>} : vector<2x10xf32>, vector<10x10xf32>, vector<2x10xf32> -> vector<2x10xf32>
    %82 = arith.mulf %80, %73 : vector<2x1xf32>
    %83 = vector.broadcast %82 : vector<2x1xf32> to vector<2x10xf32>
    %84 = arith.cmpf olt, %81, %83 : vector<2x10xf32>
    %85 = arith.extui %84 : vector<2x10xi1> to vector<2x10xi32>
    %86 = arith.sitofp %85 : vector<2x10xi32> to vector<2x10xf32>
    %cst_33 = arith.constant dense<0.000000e+00> : vector<2xf32>
    %87 = vector.multi_reduction <add>, %86, %cst_33 [1] : vector<2x10xf32> to vector<2xf32>
    %88 = vector.shape_cast %87 : vector<2xf32> to vector<2x1xf32>
    %89 = arith.fptosi %88 : vector<2x1xf32> to vector<2x1xi32>
    %c1_i32 = arith.constant 1 : i32
    %90 = vector.broadcast %c1_i32 : i32 to vector<2x1xi32>
    %91 = arith.minsi %89, %90 : vector<2x1xi32>
    %92 = arith.sitofp %91 : vector<2x1xi32> to vector<2x1xf32>
    %93 = vector.broadcast %91 : vector<2x1xi32> to vector<2x10xi32>
    %94 = arith.cmpi eq, %0, %93 : vector<2x10xi32>
    %95 = arith.extui %94 : vector<2x10xi1> to vector<2x10xi32>
    %96 = arith.sitofp %95 : vector<2x10xi32> to vector<2x10xf32>
    %97 = arith.mulf %96, %79 : vector<2x10xf32>
    %cst_34 = arith.constant dense<0.000000e+00> : vector<2xf32>
    %98 = vector.multi_reduction <add>, %97, %cst_34 [1] : vector<2x10xf32> to vector<2xf32>
    %99 = vector.shape_cast %98 : vector<2xf32> to vector<2x1xf32>
    %100 = arith.addf %13, %99 : vector<2x1xf32>
    %101 = arith.mulf %71, %79 : vector<2x10xf32>
    %cst_35 = arith.constant dense<0.000000e+00> : vector<2xf32>
    %102 = vector.multi_reduction <add>, %101, %cst_35 [1] : vector<2x10xf32> to vector<2xf32>
    %103 = vector.shape_cast %102 : vector<2xf32> to vector<2x1xf32>
    %104 = arith.mulf %103, %75 : vector<2x1xf32>
    %105 = arith.subf %14, %104 : vector<2x1xf32>
    %c0_i32_36 = arith.constant 0 : i32
    %106 = vector.broadcast %c0_i32_36 : i32 to vector<2x128xi32>
    %107 = arith.cmpi eq, %1, %106 : vector<2x128xi32>
    %108 = arith.extui %107 : vector<2x128xi1> to vector<2x128xi32>
    %109 = arith.sitofp %108 : vector<2x128xi32> to vector<2x128xf32>
    %110 = vector.broadcast %92 : vector<2x1xf32> to vector<2x128xf32>
    %111 = arith.mulf %110, %109 : vector<2x128xf32>
    %112 = arith.addf %4, %111 : vector<2x128xf32>
    %c2_i32_37 = arith.constant 2 : i32
    %113 = vector.broadcast %c2_i32_37 : i32 to vector<2x10xi32>
    %114 = arith.cmpi slt, %0, %113 : vector<2x10xi32>
    %115 = tpu.concatenate %96, %43, %3 in 1 : vector<2x10xf32>, vector<2x32xf32>, vector<2x1xf32> -> vector<2x43xf32>
    %cst_38 = arith.constant 0.000000e+00 : f32
    %116 = vector.broadcast %cst_38 : f32 to vector<2x85xf32>
    %117 = tpu.concatenate %115, %116 in 1 : vector<2x43xf32>, vector<2x85xf32> -> vector<2x128xf32>
    %cst_39 = arith.constant 0.000000e+00 : f32
    %118 = vector.broadcast %cst_39 : f32 to vector<2x64xf32>
    %cst_40 = arith.constant 0.000000e+00 : f32
    %119 = vector.broadcast %cst_40 : f32 to vector<2x21xf32>
    %120 = tpu.concatenate %118, %115, %119 in 1 : vector<2x64xf32>, vector<2x43xf32>, vector<2x21xf32> -> vector<2x128xf32>
    %c0_i32_41 = arith.constant 0 : i32
    %121 = vector.broadcast %c0_i32_41 : i32 to vector<2x128xi32>
    %122 = arith.cmpi eq, %2, %121 : vector<2x128xi32>
    %123 = arith.select %122, %117, %120 : vector<2x128xi1>, vector<2x128xf32>
    %c0_42 = arith.constant 0 : index
    %c0_43 = arith.constant 0 : index
    %124 = vector.load %arg2[%c0_42, %c0_43] : memref<128x256xf32, #tpu.memory_space<vmem>>, vector<128x256xf32>
    %cst_44 = arith.constant dense<0.000000e+00> : vector<2x256xf32>
    %125 = tpu.matmul %123, %124, %cst_44 {dimension_numbers = #tpu.dot_dimension_numbers<[1], [0], [0], [1], [0, 0, 1, 1], [], []>} : vector<2x128xf32>, vector<128x256xf32>, vector<2x256xf32> -> vector<2x256xf32>
    %126 = vector.extract_strided_slice %125 {offsets = [0, 0], sizes = [2, 128], strides = [1, 1]} : vector<2x256xf32> to vector<2x128xf32>
    %127 = arith.negf %126 : vector<2x128xf32>
    %128 = math.exp %127 : vector<2x128xf32>
    %cst_45 = arith.constant 1.000000e+00 : f32
    %129 = vector.broadcast %cst_45 : f32 to vector<2x128xf32>
    %130 = arith.addf %129, %128 : vector<2x128xf32>
    %131 = arith.divf %129, %130 : vector<2x128xf32>
    %132 = math.tanh %126 : vector<2x128xf32>
    %133 = vector.extract_strided_slice %131 {offsets = [0, 0], sizes = [2, 32], strides = [1, 1]} : vector<2x128xf32> to vector<2x32xf32>
    %134 = vector.extract_strided_slice %131 {offsets = [0, 32], sizes = [2, 32], strides = [1, 1]} : vector<2x128xf32> to vector<2x32xf32>
    %135 = vector.extract_strided_slice %132 {offsets = [0, 64], sizes = [2, 32], strides = [1, 1]} : vector<2x128xf32> to vector<2x32xf32>
    %136 = vector.extract_strided_slice %131 {offsets = [0, 96], sizes = [2, 32], strides = [1, 1]} : vector<2x128xf32> to vector<2x32xf32>
    %137 = arith.mulf %134, %41 : vector<2x32xf32>
    %138 = arith.mulf %133, %135 : vector<2x32xf32>
    %139 = arith.addf %137, %138 : vector<2x32xf32>
    %140 = math.tanh %139 : vector<2x32xf32>
    %141 = arith.mulf %136, %140 : vector<2x32xf32>
    %142 = vector.extract_strided_slice %125 {offsets = [0, 128], sizes = [2, 32], strides = [1, 1]} : vector<2x256xf32> to vector<2x32xf32>
    %c0_46 = arith.constant 0 : index
    %c0_47 = arith.constant 0 : index
    %c0_48 = arith.constant 0 : index
    %143 = vector.load %arg3[%c0_46, %c0_47, %c0_48] : memref<2x10x32xf32, #tpu.memory_space<vmem>>, vector<1x10x32xf32>
    %144 = vector.shape_cast %143 : vector<1x10x32xf32> to vector<10x32xf32>
    %145 = vector.extract_strided_slice %142 {offsets = [0, 0], sizes = [1, 32], strides = [1, 1]} : vector<2x32xf32> to vector<1x32xf32>
    %146 = vector.broadcast %145 : vector<1x32xf32> to vector<10x32xf32>
    %147 = arith.addf %144, %146 : vector<10x32xf32>
    %148 = math.tanh %147 : vector<10x32xf32>
    %c1_49 = arith.constant 1 : index
    %c0_50 = arith.constant 0 : index
    %c0_51 = arith.constant 0 : index
    %149 = vector.load %arg3[%c1_49, %c0_50, %c0_51] : memref<2x10x32xf32, #tpu.memory_space<vmem>>, vector<1x10x32xf32>
    %150 = vector.shape_cast %149 : vector<1x10x32xf32> to vector<10x32xf32>
    %151 = vector.extract_strided_slice %142 {offsets = [1, 0], sizes = [1, 32], strides = [1, 1]} : vector<2x32xf32> to vector<1x32xf32>
    %152 = vector.broadcast %151 : vector<1x32xf32> to vector<10x32xf32>
    %153 = arith.addf %150, %152 : vector<10x32xf32>
    %154 = math.tanh %153 : vector<10x32xf32>
    %c0_52 = arith.constant 0 : index
    %c0_53 = arith.constant 0 : index
    %c0_54 = arith.constant 0 : index
    %155 = vector.load %arg4[%c0_52, %c0_53, %c0_54] : memref<2x1x32xf32, #tpu.memory_space<vmem>>, vector<1x1x32xf32>
    %156 = vector.shape_cast %155 : vector<1x1x32xf32> to vector<1x32xf32>
    %cst_55 = arith.constant dense<0.000000e+00> : vector<1x10xf32>
    %157 = tpu.matmul %156, %148, %cst_55 {dimension_numbers = #tpu.dot_dimension_numbers<[1], [1], [0], [0], [0, 0, 1, 0], [], []>} : vector<1x32xf32>, vector<10x32xf32>, vector<1x10xf32> -> vector<1x10xf32>
    %c1_56 = arith.constant 1 : index
    %c0_57 = arith.constant 0 : index
    %c0_58 = arith.constant 0 : index
    %158 = vector.load %arg4[%c1_56, %c0_57, %c0_58] : memref<2x1x32xf32, #tpu.memory_space<vmem>>, vector<1x1x32xf32>
    %159 = vector.shape_cast %158 : vector<1x1x32xf32> to vector<1x32xf32>
    %cst_59 = arith.constant dense<0.000000e+00> : vector<1x10xf32>
    %160 = tpu.matmul %159, %154, %cst_59 {dimension_numbers = #tpu.dot_dimension_numbers<[1], [1], [0], [0], [0, 0, 1, 0], [], []>} : vector<1x32xf32>, vector<10x32xf32>, vector<1x10xf32> -> vector<1x10xf32>
    %161 = tpu.concatenate %157, %160 in 0 : vector<1x10xf32>, vector<1x10xf32> -> vector<2x10xf32>
    %cst_60 = arith.constant 2.000000e-01 : f32
    %162 = vector.broadcast %cst_60 : f32 to vector<2x10xf32>
    %163 = arith.mulf %161, %162 : vector<2x10xf32>
    %164 = math.tanh %163 : vector<2x10xf32>
    %cst_61 = arith.constant 2.500000e+00 : f32
    %165 = vector.broadcast %cst_61 : f32 to vector<2x10xf32>
    %166 = arith.mulf %165, %164 : vector<2x10xf32>
    %167 = math.exp %166 : vector<2x10xf32>
    %cst_62 = arith.constant 0.000000e+00 : f32
    %168 = vector.broadcast %cst_62 : f32 to vector<2x10xf32>
    %169 = arith.select %114, %167, %168 : vector<2x10xi1>, vector<2x10xf32>
    %cst_63 = arith.constant dense<0.000000e+00> : vector<2xf32>
    %170 = vector.multi_reduction <add>, %169, %cst_63 [1] : vector<2x10xf32> to vector<2xf32>
    %171 = vector.shape_cast %170 : vector<2xf32> to vector<2x1xf32>
    %172 = math.log %171 : vector<2x1xf32>
    %173 = tpu.reciprocal %171 {approx = true} : vector<2x1xf32> -> vector<2x1xf32>
    %174 = vector.broadcast %172 : vector<2x1xf32> to vector<2x10xf32>
    %175 = arith.subf %166, %174 : vector<2x10xf32>
    %cst_64 = arith.constant 0.000000e+00 : f32
    %176 = vector.broadcast %cst_64 : f32 to vector<2x10xf32>
    %177 = arith.select %114, %175, %176 : vector<2x10xi1>, vector<2x10xf32>
    %c0_65 = arith.constant 0 : index
    %c1_66 = arith.constant 1 : index
    %178 = vector.load %arg1[%c0_65, %c1_66] : memref<2x16xf32, #tpu.memory_space<vmem>>, vector<2x1xf32>
    %cst_67 = arith.constant dense<0.000000e+00> : vector<2x10xf32>
    %179 = tpu.matmul %169, %9, %cst_67 {dimension_numbers = #tpu.dot_dimension_numbers<[1], [0], [0], [1], [0, 0, 1, 1], [], []>} : vector<2x10xf32>, vector<10x10xf32>, vector<2x10xf32> -> vector<2x10xf32>
    %180 = arith.mulf %178, %171 : vector<2x1xf32>
    %181 = vector.broadcast %180 : vector<2x1xf32> to vector<2x10xf32>
    %182 = arith.cmpf olt, %179, %181 : vector<2x10xf32>
    %183 = arith.extui %182 : vector<2x10xi1> to vector<2x10xi32>
    %184 = arith.sitofp %183 : vector<2x10xi32> to vector<2x10xf32>
    %cst_68 = arith.constant dense<0.000000e+00> : vector<2xf32>
    %185 = vector.multi_reduction <add>, %184, %cst_68 [1] : vector<2x10xf32> to vector<2xf32>
    %186 = vector.shape_cast %185 : vector<2xf32> to vector<2x1xf32>
    %187 = arith.fptosi %186 : vector<2x1xf32> to vector<2x1xi32>
    %c1_i32_69 = arith.constant 1 : i32
    %188 = vector.broadcast %c1_i32_69 : i32 to vector<2x1xi32>
    %189 = arith.minsi %187, %188 : vector<2x1xi32>
    %190 = arith.sitofp %189 : vector<2x1xi32> to vector<2x1xf32>
    %191 = vector.broadcast %189 : vector<2x1xi32> to vector<2x10xi32>
    %192 = arith.cmpi eq, %0, %191 : vector<2x10xi32>
    %193 = arith.extui %192 : vector<2x10xi1> to vector<2x10xi32>
    %194 = arith.sitofp %193 : vector<2x10xi32> to vector<2x10xf32>
    %195 = arith.mulf %194, %177 : vector<2x10xf32>
    %cst_70 = arith.constant dense<0.000000e+00> : vector<2xf32>
    %196 = vector.multi_reduction <add>, %195, %cst_70 [1] : vector<2x10xf32> to vector<2xf32>
    %197 = vector.shape_cast %196 : vector<2xf32> to vector<2x1xf32>
    %198 = arith.addf %100, %197 : vector<2x1xf32>
    %199 = arith.mulf %169, %177 : vector<2x10xf32>
    %cst_71 = arith.constant dense<0.000000e+00> : vector<2xf32>
    %200 = vector.multi_reduction <add>, %199, %cst_71 [1] : vector<2x10xf32> to vector<2xf32>
    %201 = vector.shape_cast %200 : vector<2xf32> to vector<2x1xf32>
    %202 = arith.mulf %201, %173 : vector<2x1xf32>
    %203 = arith.subf %105, %202 : vector<2x1xf32>
    %c1_i32_72 = arith.constant 1 : i32
    %204 = vector.broadcast %c1_i32_72 : i32 to vector<2x128xi32>
    %205 = arith.cmpi eq, %1, %204 : vector<2x128xi32>
    %206 = arith.extui %205 : vector<2x128xi1> to vector<2x128xi32>
    %207 = arith.sitofp %206 : vector<2x128xi32> to vector<2x128xf32>
    %208 = vector.broadcast %190 : vector<2x1xf32> to vector<2x128xf32>
    %209 = arith.mulf %208, %207 : vector<2x128xf32>
    %210 = arith.addf %112, %209 : vector<2x128xf32>
    %c5_i32 = arith.constant 5 : i32
    %211 = vector.broadcast %c5_i32 : i32 to vector<2x10xi32>
    %212 = arith.cmpi slt, %0, %211 : vector<2x10xi32>
    %213 = tpu.concatenate %194, %141, %3 in 1 : vector<2x10xf32>, vector<2x32xf32>, vector<2x1xf32> -> vector<2x43xf32>
    %cst_73 = arith.constant 0.000000e+00 : f32
    %214 = vector.broadcast %cst_73 : f32 to vector<2x85xf32>
    %215 = tpu.concatenate %213, %214 in 1 : vector<2x43xf32>, vector<2x85xf32> -> vector<2x128xf32>
    %cst_74 = arith.constant 0.000000e+00 : f32
    %216 = vector.broadcast %cst_74 : f32 to vector<2x64xf32>
    %cst_75 = arith.constant 0.000000e+00 : f32
    %217 = vector.broadcast %cst_75 : f32 to vector<2x21xf32>
    %218 = tpu.concatenate %216, %213, %217 in 1 : vector<2x64xf32>, vector<2x43xf32>, vector<2x21xf32> -> vector<2x128xf32>
    %c0_i32_76 = arith.constant 0 : i32
    %219 = vector.broadcast %c0_i32_76 : i32 to vector<2x128xi32>
    %220 = arith.cmpi eq, %2, %219 : vector<2x128xi32>
    %221 = arith.select %220, %215, %218 : vector<2x128xi1>, vector<2x128xf32>
    %c0_77 = arith.constant 0 : index
    %c0_78 = arith.constant 0 : index
    %222 = vector.load %arg2[%c0_77, %c0_78] : memref<128x256xf32, #tpu.memory_space<vmem>>, vector<128x256xf32>
    %cst_79 = arith.constant dense<0.000000e+00> : vector<2x256xf32>
    %223 = tpu.matmul %221, %222, %cst_79 {dimension_numbers = #tpu.dot_dimension_numbers<[1], [0], [0], [1], [0, 0, 1, 1], [], []>} : vector<2x128xf32>, vector<128x256xf32>, vector<2x256xf32> -> vector<2x256xf32>
    %224 = vector.extract_strided_slice %223 {offsets = [0, 0], sizes = [2, 128], strides = [1, 1]} : vector<2x256xf32> to vector<2x128xf32>
    %225 = arith.negf %224 : vector<2x128xf32>
    %226 = math.exp %225 : vector<2x128xf32>
    %cst_80 = arith.constant 1.000000e+00 : f32
    %227 = vector.broadcast %cst_80 : f32 to vector<2x128xf32>
    %228 = arith.addf %227, %226 : vector<2x128xf32>
    %229 = arith.divf %227, %228 : vector<2x128xf32>
    %230 = math.tanh %224 : vector<2x128xf32>
    %231 = vector.extract_strided_slice %229 {offsets = [0, 0], sizes = [2, 32], strides = [1, 1]} : vector<2x128xf32> to vector<2x32xf32>
    %232 = vector.extract_strided_slice %229 {offsets = [0, 32], sizes = [2, 32], strides = [1, 1]} : vector<2x128xf32> to vector<2x32xf32>
    %233 = vector.extract_strided_slice %230 {offsets = [0, 64], sizes = [2, 32], strides = [1, 1]} : vector<2x128xf32> to vector<2x32xf32>
    %234 = vector.extract_strided_slice %229 {offsets = [0, 96], sizes = [2, 32], strides = [1, 1]} : vector<2x128xf32> to vector<2x32xf32>
    %235 = arith.mulf %232, %139 : vector<2x32xf32>
    %236 = arith.mulf %231, %233 : vector<2x32xf32>
    %237 = arith.addf %235, %236 : vector<2x32xf32>
    %238 = math.tanh %237 : vector<2x32xf32>
    %239 = arith.mulf %234, %238 : vector<2x32xf32>
    %240 = vector.extract_strided_slice %223 {offsets = [0, 160], sizes = [2, 10], strides = [1, 1]} : vector<2x256xf32> to vector<2x10xf32>
    %cst_81 = arith.constant 2.000000e-01 : f32
    %241 = vector.broadcast %cst_81 : f32 to vector<2x10xf32>
    %242 = arith.mulf %240, %241 : vector<2x10xf32>
    %243 = math.tanh %242 : vector<2x10xf32>
    %cst_82 = arith.constant 1.000000e+00 : f32
    %244 = vector.broadcast %cst_82 : f32 to vector<2x10xf32>
    %245 = arith.mulf %244, %243 : vector<2x10xf32>
    %246 = math.exp %245 : vector<2x10xf32>
    %cst_83 = arith.constant 0.000000e+00 : f32
    %247 = vector.broadcast %cst_83 : f32 to vector<2x10xf32>
    %248 = arith.select %212, %246, %247 : vector<2x10xi1>, vector<2x10xf32>
    %cst_84 = arith.constant dense<0.000000e+00> : vector<2xf32>
    %249 = vector.multi_reduction <add>, %248, %cst_84 [1] : vector<2x10xf32> to vector<2xf32>
    %250 = vector.shape_cast %249 : vector<2xf32> to vector<2x1xf32>
    %251 = math.log %250 : vector<2x1xf32>
    %252 = tpu.reciprocal %250 {approx = true} : vector<2x1xf32> -> vector<2x1xf32>
    %253 = vector.broadcast %251 : vector<2x1xf32> to vector<2x10xf32>
    %254 = arith.subf %245, %253 : vector<2x10xf32>
    %cst_85 = arith.constant 0.000000e+00 : f32
    %255 = vector.broadcast %cst_85 : f32 to vector<2x10xf32>
    %256 = arith.select %212, %254, %255 : vector<2x10xi1>, vector<2x10xf32>
    %c0_86 = arith.constant 0 : index
    %c2 = arith.constant 2 : index
    %257 = vector.load %arg1[%c0_86, %c2] : memref<2x16xf32, #tpu.memory_space<vmem>>, vector<2x1xf32>
    %cst_87 = arith.constant dense<0.000000e+00> : vector<2x10xf32>
    %258 = tpu.matmul %248, %9, %cst_87 {dimension_numbers = #tpu.dot_dimension_numbers<[1], [0], [0], [1], [0, 0, 1, 1], [], []>} : vector<2x10xf32>, vector<10x10xf32>, vector<2x10xf32> -> vector<2x10xf32>
    %259 = arith.mulf %257, %250 : vector<2x1xf32>
    %260 = vector.broadcast %259 : vector<2x1xf32> to vector<2x10xf32>
    %261 = arith.cmpf olt, %258, %260 : vector<2x10xf32>
    %262 = arith.extui %261 : vector<2x10xi1> to vector<2x10xi32>
    %263 = arith.sitofp %262 : vector<2x10xi32> to vector<2x10xf32>
    %cst_88 = arith.constant dense<0.000000e+00> : vector<2xf32>
    %264 = vector.multi_reduction <add>, %263, %cst_88 [1] : vector<2x10xf32> to vector<2xf32>
    %265 = vector.shape_cast %264 : vector<2xf32> to vector<2x1xf32>
    %266 = arith.fptosi %265 : vector<2x1xf32> to vector<2x1xi32>
    %c4_i32 = arith.constant 4 : i32
    %267 = vector.broadcast %c4_i32 : i32 to vector<2x1xi32>
    %268 = arith.minsi %266, %267 : vector<2x1xi32>
    %269 = arith.sitofp %268 : vector<2x1xi32> to vector<2x1xf32>
    %270 = vector.broadcast %268 : vector<2x1xi32> to vector<2x10xi32>
    %271 = arith.cmpi eq, %0, %270 : vector<2x10xi32>
    %272 = arith.extui %271 : vector<2x10xi1> to vector<2x10xi32>
    %273 = arith.sitofp %272 : vector<2x10xi32> to vector<2x10xf32>
    %274 = arith.mulf %273, %256 : vector<2x10xf32>
    %cst_89 = arith.constant dense<0.000000e+00> : vector<2xf32>
    %275 = vector.multi_reduction <add>, %274, %cst_89 [1] : vector<2x10xf32> to vector<2xf32>
    %276 = vector.shape_cast %275 : vector<2xf32> to vector<2x1xf32>
    %277 = arith.addf %198, %276 : vector<2x1xf32>
    %278 = arith.mulf %248, %256 : vector<2x10xf32>
    %cst_90 = arith.constant dense<0.000000e+00> : vector<2xf32>
    %279 = vector.multi_reduction <add>, %278, %cst_90 [1] : vector<2x10xf32> to vector<2xf32>
    %280 = vector.shape_cast %279 : vector<2xf32> to vector<2x1xf32>
    %281 = arith.mulf %280, %252 : vector<2x1xf32>
    %282 = arith.subf %203, %281 : vector<2x1xf32>
    %c8_i32 = arith.constant 8 : i32
    %283 = vector.broadcast %c8_i32 : i32 to vector<2x128xi32>
    %284 = arith.cmpi eq, %1, %283 : vector<2x128xi32>
    %285 = arith.extui %284 : vector<2x128xi1> to vector<2x128xi32>
    %286 = arith.sitofp %285 : vector<2x128xi32> to vector<2x128xf32>
    %287 = vector.broadcast %269 : vector<2x1xf32> to vector<2x128xf32>
    %288 = arith.mulf %287, %286 : vector<2x128xf32>
    %289 = arith.addf %210, %288 : vector<2x128xf32>
    %c5_i32_91 = arith.constant 5 : i32
    %290 = vector.broadcast %c5_i32_91 : i32 to vector<2x1xi32>
    %291 = arith.addi %268, %290 : vector<2x1xi32>
    %292 = vector.broadcast %291 : vector<2x1xi32> to vector<2x10xi32>
    %293 = arith.cmpi eq, %0, %292 : vector<2x10xi32>
    %294 = arith.extui %293 : vector<2x10xi1> to vector<2x10xi32>
    %295 = arith.sitofp %294 : vector<2x10xi32> to vector<2x10xf32>
    %c5_i32_92 = arith.constant 5 : i32
    %296 = vector.broadcast %c5_i32_92 : i32 to vector<2x10xi32>
    %297 = arith.cmpi slt, %0, %296 : vector<2x10xi32>
    %298 = tpu.concatenate %295, %239, %3 in 1 : vector<2x10xf32>, vector<2x32xf32>, vector<2x1xf32> -> vector<2x43xf32>
    %cst_93 = arith.constant 0.000000e+00 : f32
    %299 = vector.broadcast %cst_93 : f32 to vector<2x85xf32>
    %300 = tpu.concatenate %298, %299 in 1 : vector<2x43xf32>, vector<2x85xf32> -> vector<2x128xf32>
    %cst_94 = arith.constant 0.000000e+00 : f32
    %301 = vector.broadcast %cst_94 : f32 to vector<2x64xf32>
    %cst_95 = arith.constant 0.000000e+00 : f32
    %302 = vector.broadcast %cst_95 : f32 to vector<2x21xf32>
    %303 = tpu.concatenate %301, %298, %302 in 1 : vector<2x64xf32>, vector<2x43xf32>, vector<2x21xf32> -> vector<2x128xf32>
    %c0_i32_96 = arith.constant 0 : i32
    %304 = vector.broadcast %c0_i32_96 : i32 to vector<2x128xi32>
    %305 = arith.cmpi eq, %2, %304 : vector<2x128xi32>
    %306 = arith.select %305, %300, %303 : vector<2x128xi1>, vector<2x128xf32>
    %c0_97 = arith.constant 0 : index
    %c0_98 = arith.constant 0 : index
    %307 = vector.load %arg2[%c0_97, %c0_98] : memref<128x256xf32, #tpu.memory_space<vmem>>, vector<128x256xf32>
    %cst_99 = arith.constant dense<0.000000e+00> : vector<2x256xf32>
    %308 = tpu.matmul %306, %307, %cst_99 {dimension_numbers = #tpu.dot_dimension_numbers<[1], [0], [0], [1], [0, 0, 1, 1], [], []>} : vector<2x128xf32>, vector<128x256xf32>, vector<2x256xf32> -> vector<2x256xf32>
    %309 = vector.extract_strided_slice %308 {offsets = [0, 0], sizes = [2, 128], strides = [1, 1]} : vector<2x256xf32> to vector<2x128xf32>
    %310 = arith.negf %309 : vector<2x128xf32>
    %311 = math.exp %310 : vector<2x128xf32>
    %cst_100 = arith.constant 1.000000e+00 : f32
    %312 = vector.broadcast %cst_100 : f32 to vector<2x128xf32>
    %313 = arith.addf %312, %311 : vector<2x128xf32>
    %314 = arith.divf %312, %313 : vector<2x128xf32>
    %315 = math.tanh %309 : vector<2x128xf32>
    %316 = vector.extract_strided_slice %314 {offsets = [0, 0], sizes = [2, 32], strides = [1, 1]} : vector<2x128xf32> to vector<2x32xf32>
    %317 = vector.extract_strided_slice %314 {offsets = [0, 32], sizes = [2, 32], strides = [1, 1]} : vector<2x128xf32> to vector<2x32xf32>
    %318 = vector.extract_strided_slice %315 {offsets = [0, 64], sizes = [2, 32], strides = [1, 1]} : vector<2x128xf32> to vector<2x32xf32>
    %319 = vector.extract_strided_slice %314 {offsets = [0, 96], sizes = [2, 32], strides = [1, 1]} : vector<2x128xf32> to vector<2x32xf32>
    %320 = arith.mulf %317, %237 : vector<2x32xf32>
    %321 = arith.mulf %316, %318 : vector<2x32xf32>
    %322 = arith.addf %320, %321 : vector<2x32xf32>
    %323 = math.tanh %322 : vector<2x32xf32>
    %324 = arith.mulf %319, %323 : vector<2x32xf32>
    %325 = vector.extract_strided_slice %308 {offsets = [0, 160], sizes = [2, 10], strides = [1, 1]} : vector<2x256xf32> to vector<2x10xf32>
    %cst_101 = arith.constant 2.000000e-01 : f32
    %326 = vector.broadcast %cst_101 : f32 to vector<2x10xf32>
    %327 = arith.mulf %325, %326 : vector<2x10xf32>
    %328 = math.tanh %327 : vector<2x10xf32>
    %cst_102 = arith.constant 1.000000e+00 : f32
    %329 = vector.broadcast %cst_102 : f32 to vector<2x10xf32>
    %330 = arith.mulf %329, %328 : vector<2x10xf32>
    %331 = math.exp %330 : vector<2x10xf32>
    %cst_103 = arith.constant 0.000000e+00 : f32
    %332 = vector.broadcast %cst_103 : f32 to vector<2x10xf32>
    %333 = arith.select %297, %331, %332 : vector<2x10xi1>, vector<2x10xf32>
    %cst_104 = arith.constant dense<0.000000e+00> : vector<2xf32>
    %334 = vector.multi_reduction <add>, %333, %cst_104 [1] : vector<2x10xf32> to vector<2xf32>
    %335 = vector.shape_cast %334 : vector<2xf32> to vector<2x1xf32>
    %336 = math.log %335 : vector<2x1xf32>
    %337 = tpu.reciprocal %335 {approx = true} : vector<2x1xf32> -> vector<2x1xf32>
    %338 = vector.broadcast %336 : vector<2x1xf32> to vector<2x10xf32>
    %339 = arith.subf %330, %338 : vector<2x10xf32>
    %cst_105 = arith.constant 0.000000e+00 : f32
    %340 = vector.broadcast %cst_105 : f32 to vector<2x10xf32>
    %341 = arith.select %297, %339, %340 : vector<2x10xi1>, vector<2x10xf32>
    %c0_106 = arith.constant 0 : index
    %c3 = arith.constant 3 : index
    %342 = vector.load %arg1[%c0_106, %c3] : memref<2x16xf32, #tpu.memory_space<vmem>>, vector<2x1xf32>
    %cst_107 = arith.constant dense<0.000000e+00> : vector<2x10xf32>
    %343 = tpu.matmul %333, %9, %cst_107 {dimension_numbers = #tpu.dot_dimension_numbers<[1], [0], [0], [1], [0, 0, 1, 1], [], []>} : vector<2x10xf32>, vector<10x10xf32>, vector<2x10xf32> -> vector<2x10xf32>
    %344 = arith.mulf %342, %335 : vector<2x1xf32>
    %345 = vector.broadcast %344 : vector<2x1xf32> to vector<2x10xf32>
    %346 = arith.cmpf olt, %343, %345 : vector<2x10xf32>
    %347 = arith.extui %346 : vector<2x10xi1> to vector<2x10xi32>
    %348 = arith.sitofp %347 : vector<2x10xi32> to vector<2x10xf32>
    %cst_108 = arith.constant dense<0.000000e+00> : vector<2xf32>
    %349 = vector.multi_reduction <add>, %348, %cst_108 [1] : vector<2x10xf32> to vector<2xf32>
    %350 = vector.shape_cast %349 : vector<2xf32> to vector<2x1xf32>
    %351 = arith.fptosi %350 : vector<2x1xf32> to vector<2x1xi32>
    %c4_i32_109 = arith.constant 4 : i32
    %352 = vector.broadcast %c4_i32_109 : i32 to vector<2x1xi32>
    %353 = arith.minsi %351, %352 : vector<2x1xi32>
    %354 = arith.sitofp %353 : vector<2x1xi32> to vector<2x1xf32>
    %355 = vector.broadcast %353 : vector<2x1xi32> to vector<2x10xi32>
    %356 = arith.cmpi eq, %0, %355 : vector<2x10xi32>
    %357 = arith.extui %356 : vector<2x10xi1> to vector<2x10xi32>
    %358 = arith.sitofp %357 : vector<2x10xi32> to vector<2x10xf32>
    %359 = arith.mulf %358, %341 : vector<2x10xf32>
    %cst_110 = arith.constant dense<0.000000e+00> : vector<2xf32>
    %360 = vector.multi_reduction <add>, %359, %cst_110 [1] : vector<2x10xf32> to vector<2xf32>
    %361 = vector.shape_cast %360 : vector<2xf32> to vector<2x1xf32>
    %362 = arith.addf %277, %361 : vector<2x1xf32>
    %363 = arith.mulf %333, %341 : vector<2x10xf32>
    %cst_111 = arith.constant dense<0.000000e+00> : vector<2xf32>
    %364 = vector.multi_reduction <add>, %363, %cst_111 [1] : vector<2x10xf32> to vector<2xf32>
    %365 = vector.shape_cast %364 : vector<2xf32> to vector<2x1xf32>
    %366 = arith.mulf %365, %337 : vector<2x1xf32>
    %367 = arith.subf %282, %366 : vector<2x1xf32>
    %c9_i32 = arith.constant 9 : i32
    %368 = vector.broadcast %c9_i32 : i32 to vector<2x128xi32>
    %369 = arith.cmpi eq, %1, %368 : vector<2x128xi32>
    %370 = arith.extui %369 : vector<2x128xi1> to vector<2x128xi32>
    %371 = arith.sitofp %370 : vector<2x128xi32> to vector<2x128xf32>
    %372 = vector.broadcast %354 : vector<2x1xf32> to vector<2x128xf32>
    %373 = arith.mulf %372, %371 : vector<2x128xf32>
    %374 = arith.addf %289, %373 : vector<2x128xf32>
    %c5_i32_112 = arith.constant 5 : i32
    %375 = vector.broadcast %c5_i32_112 : i32 to vector<2x1xi32>
    %376 = arith.addi %353, %375 : vector<2x1xi32>
    %377 = vector.broadcast %376 : vector<2x1xi32> to vector<2x10xi32>
    %378 = arith.cmpi eq, %0, %377 : vector<2x10xi32>
    %379 = arith.extui %378 : vector<2x10xi1> to vector<2x10xi32>
    %380 = arith.sitofp %379 : vector<2x10xi32> to vector<2x10xf32>
    %c3_i32 = arith.constant 3 : i32
    %381 = vector.broadcast %c3_i32 : i32 to vector<2x10xi32>
    %382 = arith.cmpi slt, %0, %381 : vector<2x10xi32>
    %383 = tpu.concatenate %380, %324, %3 in 1 : vector<2x10xf32>, vector<2x32xf32>, vector<2x1xf32> -> vector<2x43xf32>
    %cst_113 = arith.constant 0.000000e+00 : f32
    %384 = vector.broadcast %cst_113 : f32 to vector<2x85xf32>
    %385 = tpu.concatenate %383, %384 in 1 : vector<2x43xf32>, vector<2x85xf32> -> vector<2x128xf32>
    %cst_114 = arith.constant 0.000000e+00 : f32
    %386 = vector.broadcast %cst_114 : f32 to vector<2x64xf32>
    %cst_115 = arith.constant 0.000000e+00 : f32
    %387 = vector.broadcast %cst_115 : f32 to vector<2x21xf32>
    %388 = tpu.concatenate %386, %383, %387 in 1 : vector<2x64xf32>, vector<2x43xf32>, vector<2x21xf32> -> vector<2x128xf32>
    %c0_i32_116 = arith.constant 0 : i32
    %389 = vector.broadcast %c0_i32_116 : i32 to vector<2x128xi32>
    %390 = arith.cmpi eq, %2, %389 : vector<2x128xi32>
    %391 = arith.select %390, %385, %388 : vector<2x128xi1>, vector<2x128xf32>
    %c0_117 = arith.constant 0 : index
    %c0_118 = arith.constant 0 : index
    %392 = vector.load %arg2[%c0_117, %c0_118] : memref<128x256xf32, #tpu.memory_space<vmem>>, vector<128x256xf32>
    %cst_119 = arith.constant dense<0.000000e+00> : vector<2x256xf32>
    %393 = tpu.matmul %391, %392, %cst_119 {dimension_numbers = #tpu.dot_dimension_numbers<[1], [0], [0], [1], [0, 0, 1, 1], [], []>} : vector<2x128xf32>, vector<128x256xf32>, vector<2x256xf32> -> vector<2x256xf32>
    %394 = vector.extract_strided_slice %393 {offsets = [0, 0], sizes = [2, 128], strides = [1, 1]} : vector<2x256xf32> to vector<2x128xf32>
    %395 = arith.negf %394 : vector<2x128xf32>
    %396 = math.exp %395 : vector<2x128xf32>
    %cst_120 = arith.constant 1.000000e+00 : f32
    %397 = vector.broadcast %cst_120 : f32 to vector<2x128xf32>
    %398 = arith.addf %397, %396 : vector<2x128xf32>
    %399 = arith.divf %397, %398 : vector<2x128xf32>
    %400 = math.tanh %394 : vector<2x128xf32>
    %401 = vector.extract_strided_slice %399 {offsets = [0, 0], sizes = [2, 32], strides = [1, 1]} : vector<2x128xf32> to vector<2x32xf32>
    %402 = vector.extract_strided_slice %399 {offsets = [0, 32], sizes = [2, 32], strides = [1, 1]} : vector<2x128xf32> to vector<2x32xf32>
    %403 = vector.extract_strided_slice %400 {offsets = [0, 64], sizes = [2, 32], strides = [1, 1]} : vector<2x128xf32> to vector<2x32xf32>
    %404 = vector.extract_strided_slice %399 {offsets = [0, 96], sizes = [2, 32], strides = [1, 1]} : vector<2x128xf32> to vector<2x32xf32>
    %405 = arith.mulf %402, %322 : vector<2x32xf32>
    %406 = arith.mulf %401, %403 : vector<2x32xf32>
    %407 = arith.addf %405, %406 : vector<2x32xf32>
    %408 = math.tanh %407 : vector<2x32xf32>
    %409 = arith.mulf %404, %408 : vector<2x32xf32>
    %410 = vector.extract_strided_slice %393 {offsets = [0, 128], sizes = [2, 32], strides = [1, 1]} : vector<2x256xf32> to vector<2x32xf32>
    %c0_121 = arith.constant 0 : index
    %c0_122 = arith.constant 0 : index
    %c0_123 = arith.constant 0 : index
    %411 = vector.load %arg3[%c0_121, %c0_122, %c0_123] : memref<2x10x32xf32, #tpu.memory_space<vmem>>, vector<1x10x32xf32>
    %412 = vector.shape_cast %411 : vector<1x10x32xf32> to vector<10x32xf32>
    %413 = vector.extract_strided_slice %410 {offsets = [0, 0], sizes = [1, 32], strides = [1, 1]} : vector<2x32xf32> to vector<1x32xf32>
    %414 = vector.broadcast %413 : vector<1x32xf32> to vector<10x32xf32>
    %415 = arith.addf %412, %414 : vector<10x32xf32>
    %416 = math.tanh %415 : vector<10x32xf32>
    %c1_124 = arith.constant 1 : index
    %c0_125 = arith.constant 0 : index
    %c0_126 = arith.constant 0 : index
    %417 = vector.load %arg3[%c1_124, %c0_125, %c0_126] : memref<2x10x32xf32, #tpu.memory_space<vmem>>, vector<1x10x32xf32>
    %418 = vector.shape_cast %417 : vector<1x10x32xf32> to vector<10x32xf32>
    %419 = vector.extract_strided_slice %410 {offsets = [1, 0], sizes = [1, 32], strides = [1, 1]} : vector<2x32xf32> to vector<1x32xf32>
    %420 = vector.broadcast %419 : vector<1x32xf32> to vector<10x32xf32>
    %421 = arith.addf %418, %420 : vector<10x32xf32>
    %422 = math.tanh %421 : vector<10x32xf32>
    %c0_127 = arith.constant 0 : index
    %c0_128 = arith.constant 0 : index
    %c0_129 = arith.constant 0 : index
    %423 = vector.load %arg4[%c0_127, %c0_128, %c0_129] : memref<2x1x32xf32, #tpu.memory_space<vmem>>, vector<1x1x32xf32>
    %424 = vector.shape_cast %423 : vector<1x1x32xf32> to vector<1x32xf32>
    %cst_130 = arith.constant dense<0.000000e+00> : vector<1x10xf32>
    %425 = tpu.matmul %424, %416, %cst_130 {dimension_numbers = #tpu.dot_dimension_numbers<[1], [1], [0], [0], [0, 0, 1, 0], [], []>} : vector<1x32xf32>, vector<10x32xf32>, vector<1x10xf32> -> vector<1x10xf32>
    %c1_131 = arith.constant 1 : index
    %c0_132 = arith.constant 0 : index
    %c0_133 = arith.constant 0 : index
    %426 = vector.load %arg4[%c1_131, %c0_132, %c0_133] : memref<2x1x32xf32, #tpu.memory_space<vmem>>, vector<1x1x32xf32>
    %427 = vector.shape_cast %426 : vector<1x1x32xf32> to vector<1x32xf32>
    %cst_134 = arith.constant dense<0.000000e+00> : vector<1x10xf32>
    %428 = tpu.matmul %427, %422, %cst_134 {dimension_numbers = #tpu.dot_dimension_numbers<[1], [1], [0], [0], [0, 0, 1, 0], [], []>} : vector<1x32xf32>, vector<10x32xf32>, vector<1x10xf32> -> vector<1x10xf32>
    %429 = tpu.concatenate %425, %428 in 0 : vector<1x10xf32>, vector<1x10xf32> -> vector<2x10xf32>
    %cst_135 = arith.constant 2.000000e-01 : f32
    %430 = vector.broadcast %cst_135 : f32 to vector<2x10xf32>
    %431 = arith.mulf %429, %430 : vector<2x10xf32>
    %432 = math.tanh %431 : vector<2x10xf32>
    %cst_136 = arith.constant 2.500000e+00 : f32
    %433 = vector.broadcast %cst_136 : f32 to vector<2x10xf32>
    %434 = arith.mulf %433, %432 : vector<2x10xf32>
    %435 = math.exp %434 : vector<2x10xf32>
    %cst_137 = arith.constant 0.000000e+00 : f32
    %436 = vector.broadcast %cst_137 : f32 to vector<2x10xf32>
    %437 = arith.select %382, %435, %436 : vector<2x10xi1>, vector<2x10xf32>
    %cst_138 = arith.constant dense<0.000000e+00> : vector<2xf32>
    %438 = vector.multi_reduction <add>, %437, %cst_138 [1] : vector<2x10xf32> to vector<2xf32>
    %439 = vector.shape_cast %438 : vector<2xf32> to vector<2x1xf32>
    %440 = math.log %439 : vector<2x1xf32>
    %441 = tpu.reciprocal %439 {approx = true} : vector<2x1xf32> -> vector<2x1xf32>
    %442 = vector.broadcast %440 : vector<2x1xf32> to vector<2x10xf32>
    %443 = arith.subf %434, %442 : vector<2x10xf32>
    %cst_139 = arith.constant 0.000000e+00 : f32
    %444 = vector.broadcast %cst_139 : f32 to vector<2x10xf32>
    %445 = arith.select %382, %443, %444 : vector<2x10xi1>, vector<2x10xf32>
    %c0_140 = arith.constant 0 : index
    %c4 = arith.constant 4 : index
    %446 = vector.load %arg1[%c0_140, %c4] : memref<2x16xf32, #tpu.memory_space<vmem>>, vector<2x1xf32>
    %cst_141 = arith.constant dense<0.000000e+00> : vector<2x10xf32>
    %447 = tpu.matmul %437, %9, %cst_141 {dimension_numbers = #tpu.dot_dimension_numbers<[1], [0], [0], [1], [0, 0, 1, 1], [], []>} : vector<2x10xf32>, vector<10x10xf32>, vector<2x10xf32> -> vector<2x10xf32>
    %448 = arith.mulf %446, %439 : vector<2x1xf32>
    %449 = vector.broadcast %448 : vector<2x1xf32> to vector<2x10xf32>
    %450 = arith.cmpf olt, %447, %449 : vector<2x10xf32>
    %451 = arith.extui %450 : vector<2x10xi1> to vector<2x10xi32>
    %452 = arith.sitofp %451 : vector<2x10xi32> to vector<2x10xf32>
    %cst_142 = arith.constant dense<0.000000e+00> : vector<2xf32>
    %453 = vector.multi_reduction <add>, %452, %cst_142 [1] : vector<2x10xf32> to vector<2xf32>
    %454 = vector.shape_cast %453 : vector<2xf32> to vector<2x1xf32>
    %455 = arith.fptosi %454 : vector<2x1xf32> to vector<2x1xi32>
    %c2_i32_143 = arith.constant 2 : i32
    %456 = vector.broadcast %c2_i32_143 : i32 to vector<2x1xi32>
    %457 = arith.minsi %455, %456 : vector<2x1xi32>
    %458 = arith.sitofp %457 : vector<2x1xi32> to vector<2x1xf32>
    %459 = vector.broadcast %457 : vector<2x1xi32> to vector<2x10xi32>
    %460 = arith.cmpi eq, %0, %459 : vector<2x10xi32>
    %461 = arith.extui %460 : vector<2x10xi1> to vector<2x10xi32>
    %462 = arith.sitofp %461 : vector<2x10xi32> to vector<2x10xf32>
    %463 = arith.mulf %462, %445 : vector<2x10xf32>
    %cst_144 = arith.constant dense<0.000000e+00> : vector<2xf32>
    %464 = vector.multi_reduction <add>, %463, %cst_144 [1] : vector<2x10xf32> to vector<2xf32>
    %465 = vector.shape_cast %464 : vector<2xf32> to vector<2x1xf32>
    %466 = arith.addf %362, %465 : vector<2x1xf32>
    %467 = arith.mulf %437, %445 : vector<2x10xf32>
    %cst_145 = arith.constant dense<0.000000e+00> : vector<2xf32>
    %468 = vector.multi_reduction <add>, %467, %cst_145 [1] : vector<2x10xf32> to vector<2xf32>
    %469 = vector.shape_cast %468 : vector<2xf32> to vector<2x1xf32>
    %470 = arith.mulf %469, %441 : vector<2x1xf32>
    %471 = arith.subf %367, %470 : vector<2x1xf32>
    %c2_i32_146 = arith.constant 2 : i32
    %472 = vector.broadcast %c2_i32_146 : i32 to vector<2x128xi32>
    %473 = arith.cmpi eq, %1, %472 : vector<2x128xi32>
    %474 = arith.extui %473 : vector<2x128xi1> to vector<2x128xi32>
    %475 = arith.sitofp %474 : vector<2x128xi32> to vector<2x128xf32>
    %476 = vector.broadcast %458 : vector<2x1xf32> to vector<2x128xf32>
    %477 = arith.mulf %476, %475 : vector<2x128xf32>
    %478 = arith.addf %374, %477 : vector<2x128xf32>
    %c3_i32_147 = arith.constant 3 : i32
    %479 = vector.broadcast %c3_i32_147 : i32 to vector<2x10xi32>
    %480 = arith.cmpi slt, %0, %479 : vector<2x10xi32>
    %481 = tpu.concatenate %462, %409, %3 in 1 : vector<2x10xf32>, vector<2x32xf32>, vector<2x1xf32> -> vector<2x43xf32>
    %cst_148 = arith.constant 0.000000e+00 : f32
    %482 = vector.broadcast %cst_148 : f32 to vector<2x85xf32>
    %483 = tpu.concatenate %481, %482 in 1 : vector<2x43xf32>, vector<2x85xf32> -> vector<2x128xf32>
    %cst_149 = arith.constant 0.000000e+00 : f32
    %484 = vector.broadcast %cst_149 : f32 to vector<2x64xf32>
    %cst_150 = arith.constant 0.000000e+00 : f32
    %485 = vector.broadcast %cst_150 : f32 to vector<2x21xf32>
    %486 = tpu.concatenate %484, %481, %485 in 1 : vector<2x64xf32>, vector<2x43xf32>, vector<2x21xf32> -> vector<2x128xf32>
    %c0_i32_151 = arith.constant 0 : i32
    %487 = vector.broadcast %c0_i32_151 : i32 to vector<2x128xi32>
    %488 = arith.cmpi eq, %2, %487 : vector<2x128xi32>
    %489 = arith.select %488, %483, %486 : vector<2x128xi1>, vector<2x128xf32>
    %c0_152 = arith.constant 0 : index
    %c0_153 = arith.constant 0 : index
    %490 = vector.load %arg2[%c0_152, %c0_153] : memref<128x256xf32, #tpu.memory_space<vmem>>, vector<128x256xf32>
    %cst_154 = arith.constant dense<0.000000e+00> : vector<2x256xf32>
    %491 = tpu.matmul %489, %490, %cst_154 {dimension_numbers = #tpu.dot_dimension_numbers<[1], [0], [0], [1], [0, 0, 1, 1], [], []>} : vector<2x128xf32>, vector<128x256xf32>, vector<2x256xf32> -> vector<2x256xf32>
    %492 = vector.extract_strided_slice %491 {offsets = [0, 0], sizes = [2, 128], strides = [1, 1]} : vector<2x256xf32> to vector<2x128xf32>
    %493 = arith.negf %492 : vector<2x128xf32>
    %494 = math.exp %493 : vector<2x128xf32>
    %cst_155 = arith.constant 1.000000e+00 : f32
    %495 = vector.broadcast %cst_155 : f32 to vector<2x128xf32>
    %496 = arith.addf %495, %494 : vector<2x128xf32>
    %497 = arith.divf %495, %496 : vector<2x128xf32>
    %498 = math.tanh %492 : vector<2x128xf32>
    %499 = vector.extract_strided_slice %497 {offsets = [0, 0], sizes = [2, 32], strides = [1, 1]} : vector<2x128xf32> to vector<2x32xf32>
    %500 = vector.extract_strided_slice %497 {offsets = [0, 32], sizes = [2, 32], strides = [1, 1]} : vector<2x128xf32> to vector<2x32xf32>
    %501 = vector.extract_strided_slice %498 {offsets = [0, 64], sizes = [2, 32], strides = [1, 1]} : vector<2x128xf32> to vector<2x32xf32>
    %502 = vector.extract_strided_slice %497 {offsets = [0, 96], sizes = [2, 32], strides = [1, 1]} : vector<2x128xf32> to vector<2x32xf32>
    %503 = arith.mulf %500, %407 : vector<2x32xf32>
    %504 = arith.mulf %499, %501 : vector<2x32xf32>
    %505 = arith.addf %503, %504 : vector<2x32xf32>
    %506 = math.tanh %505 : vector<2x32xf32>
    %507 = arith.mulf %502, %506 : vector<2x32xf32>
    %508 = vector.extract_strided_slice %491 {offsets = [0, 128], sizes = [2, 32], strides = [1, 1]} : vector<2x256xf32> to vector<2x32xf32>
    %c0_156 = arith.constant 0 : index
    %c0_157 = arith.constant 0 : index
    %c0_158 = arith.constant 0 : index
    %509 = vector.load %arg3[%c0_156, %c0_157, %c0_158] : memref<2x10x32xf32, #tpu.memory_space<vmem>>, vector<1x10x32xf32>
    %510 = vector.shape_cast %509 : vector<1x10x32xf32> to vector<10x32xf32>
    %511 = vector.extract_strided_slice %508 {offsets = [0, 0], sizes = [1, 32], strides = [1, 1]} : vector<2x32xf32> to vector<1x32xf32>
    %512 = vector.broadcast %511 : vector<1x32xf32> to vector<10x32xf32>
    %513 = arith.addf %510, %512 : vector<10x32xf32>
    %514 = math.tanh %513 : vector<10x32xf32>
    %c1_159 = arith.constant 1 : index
    %c0_160 = arith.constant 0 : index
    %c0_161 = arith.constant 0 : index
    %515 = vector.load %arg3[%c1_159, %c0_160, %c0_161] : memref<2x10x32xf32, #tpu.memory_space<vmem>>, vector<1x10x32xf32>
    %516 = vector.shape_cast %515 : vector<1x10x32xf32> to vector<10x32xf32>
    %517 = vector.extract_strided_slice %508 {offsets = [1, 0], sizes = [1, 32], strides = [1, 1]} : vector<2x32xf32> to vector<1x32xf32>
    %518 = vector.broadcast %517 : vector<1x32xf32> to vector<10x32xf32>
    %519 = arith.addf %516, %518 : vector<10x32xf32>
    %520 = math.tanh %519 : vector<10x32xf32>
    %c0_162 = arith.constant 0 : index
    %c0_163 = arith.constant 0 : index
    %c0_164 = arith.constant 0 : index
    %521 = vector.load %arg4[%c0_162, %c0_163, %c0_164] : memref<2x1x32xf32, #tpu.memory_space<vmem>>, vector<1x1x32xf32>
    %522 = vector.shape_cast %521 : vector<1x1x32xf32> to vector<1x32xf32>
    %cst_165 = arith.constant dense<0.000000e+00> : vector<1x10xf32>
    %523 = tpu.matmul %522, %514, %cst_165 {dimension_numbers = #tpu.dot_dimension_numbers<[1], [1], [0], [0], [0, 0, 1, 0], [], []>} : vector<1x32xf32>, vector<10x32xf32>, vector<1x10xf32> -> vector<1x10xf32>
    %c1_166 = arith.constant 1 : index
    %c0_167 = arith.constant 0 : index
    %c0_168 = arith.constant 0 : index
    %524 = vector.load %arg4[%c1_166, %c0_167, %c0_168] : memref<2x1x32xf32, #tpu.memory_space<vmem>>, vector<1x1x32xf32>
    %525 = vector.shape_cast %524 : vector<1x1x32xf32> to vector<1x32xf32>
    %cst_169 = arith.constant dense<0.000000e+00> : vector<1x10xf32>
    %526 = tpu.matmul %525, %520, %cst_169 {dimension_numbers = #tpu.dot_dimension_numbers<[1], [1], [0], [0], [0, 0, 1, 0], [], []>} : vector<1x32xf32>, vector<10x32xf32>, vector<1x10xf32> -> vector<1x10xf32>
    %527 = tpu.concatenate %523, %526 in 0 : vector<1x10xf32>, vector<1x10xf32> -> vector<2x10xf32>
    %cst_170 = arith.constant 2.000000e-01 : f32
    %528 = vector.broadcast %cst_170 : f32 to vector<2x10xf32>
    %529 = arith.mulf %527, %528 : vector<2x10xf32>
    %530 = math.tanh %529 : vector<2x10xf32>
    %cst_171 = arith.constant 2.500000e+00 : f32
    %531 = vector.broadcast %cst_171 : f32 to vector<2x10xf32>
    %532 = arith.mulf %531, %530 : vector<2x10xf32>
    %533 = math.exp %532 : vector<2x10xf32>
    %cst_172 = arith.constant 0.000000e+00 : f32
    %534 = vector.broadcast %cst_172 : f32 to vector<2x10xf32>
    %535 = arith.select %480, %533, %534 : vector<2x10xi1>, vector<2x10xf32>
    %cst_173 = arith.constant dense<0.000000e+00> : vector<2xf32>
    %536 = vector.multi_reduction <add>, %535, %cst_173 [1] : vector<2x10xf32> to vector<2xf32>
    %537 = vector.shape_cast %536 : vector<2xf32> to vector<2x1xf32>
    %538 = math.log %537 : vector<2x1xf32>
    %539 = tpu.reciprocal %537 {approx = true} : vector<2x1xf32> -> vector<2x1xf32>
    %540 = vector.broadcast %538 : vector<2x1xf32> to vector<2x10xf32>
    %541 = arith.subf %532, %540 : vector<2x10xf32>
    %cst_174 = arith.constant 0.000000e+00 : f32
    %542 = vector.broadcast %cst_174 : f32 to vector<2x10xf32>
    %543 = arith.select %480, %541, %542 : vector<2x10xi1>, vector<2x10xf32>
    %c0_175 = arith.constant 0 : index
    %c5 = arith.constant 5 : index
    %544 = vector.load %arg1[%c0_175, %c5] : memref<2x16xf32, #tpu.memory_space<vmem>>, vector<2x1xf32>
    %cst_176 = arith.constant dense<0.000000e+00> : vector<2x10xf32>
    %545 = tpu.matmul %535, %9, %cst_176 {dimension_numbers = #tpu.dot_dimension_numbers<[1], [0], [0], [1], [0, 0, 1, 1], [], []>} : vector<2x10xf32>, vector<10x10xf32>, vector<2x10xf32> -> vector<2x10xf32>
    %546 = arith.mulf %544, %537 : vector<2x1xf32>
    %547 = vector.broadcast %546 : vector<2x1xf32> to vector<2x10xf32>
    %548 = arith.cmpf olt, %545, %547 : vector<2x10xf32>
    %549 = arith.extui %548 : vector<2x10xi1> to vector<2x10xi32>
    %550 = arith.sitofp %549 : vector<2x10xi32> to vector<2x10xf32>
    %cst_177 = arith.constant dense<0.000000e+00> : vector<2xf32>
    %551 = vector.multi_reduction <add>, %550, %cst_177 [1] : vector<2x10xf32> to vector<2xf32>
    %552 = vector.shape_cast %551 : vector<2xf32> to vector<2x1xf32>
    %553 = arith.fptosi %552 : vector<2x1xf32> to vector<2x1xi32>
    %c2_i32_178 = arith.constant 2 : i32
    %554 = vector.broadcast %c2_i32_178 : i32 to vector<2x1xi32>
    %555 = arith.minsi %553, %554 : vector<2x1xi32>
    %556 = arith.sitofp %555 : vector<2x1xi32> to vector<2x1xf32>
    %557 = vector.broadcast %555 : vector<2x1xi32> to vector<2x10xi32>
    %558 = arith.cmpi eq, %0, %557 : vector<2x10xi32>
    %559 = arith.extui %558 : vector<2x10xi1> to vector<2x10xi32>
    %560 = arith.sitofp %559 : vector<2x10xi32> to vector<2x10xf32>
    %561 = arith.mulf %560, %543 : vector<2x10xf32>
    %cst_179 = arith.constant dense<0.000000e+00> : vector<2xf32>
    %562 = vector.multi_reduction <add>, %561, %cst_179 [1] : vector<2x10xf32> to vector<2xf32>
    %563 = vector.shape_cast %562 : vector<2xf32> to vector<2x1xf32>
    %564 = arith.addf %466, %563 : vector<2x1xf32>
    %565 = arith.mulf %535, %543 : vector<2x10xf32>
    %cst_180 = arith.constant dense<0.000000e+00> : vector<2xf32>
    %566 = vector.multi_reduction <add>, %565, %cst_180 [1] : vector<2x10xf32> to vector<2xf32>
    %567 = vector.shape_cast %566 : vector<2xf32> to vector<2x1xf32>
    %568 = arith.mulf %567, %539 : vector<2x1xf32>
    %569 = arith.subf %471, %568 : vector<2x1xf32>
    %c3_i32_181 = arith.constant 3 : i32
    %570 = vector.broadcast %c3_i32_181 : i32 to vector<2x128xi32>
    %571 = arith.cmpi eq, %1, %570 : vector<2x128xi32>
    %572 = arith.extui %571 : vector<2x128xi1> to vector<2x128xi32>
    %573 = arith.sitofp %572 : vector<2x128xi32> to vector<2x128xf32>
    %574 = vector.broadcast %556 : vector<2x1xf32> to vector<2x128xf32>
    %575 = arith.mulf %574, %573 : vector<2x128xf32>
    %576 = arith.addf %478, %575 : vector<2x128xf32>
    %c5_i32_182 = arith.constant 5 : i32
    %577 = vector.broadcast %c5_i32_182 : i32 to vector<2x10xi32>
    %578 = arith.cmpi slt, %0, %577 : vector<2x10xi32>
    %579 = tpu.concatenate %560, %507, %3 in 1 : vector<2x10xf32>, vector<2x32xf32>, vector<2x1xf32> -> vector<2x43xf32>
    %cst_183 = arith.constant 0.000000e+00 : f32
    %580 = vector.broadcast %cst_183 : f32 to vector<2x85xf32>
    %581 = tpu.concatenate %579, %580 in 1 : vector<2x43xf32>, vector<2x85xf32> -> vector<2x128xf32>
    %cst_184 = arith.constant 0.000000e+00 : f32
    %582 = vector.broadcast %cst_184 : f32 to vector<2x64xf32>
    %cst_185 = arith.constant 0.000000e+00 : f32
    %583 = vector.broadcast %cst_185 : f32 to vector<2x21xf32>
    %584 = tpu.concatenate %582, %579, %583 in 1 : vector<2x64xf32>, vector<2x43xf32>, vector<2x21xf32> -> vector<2x128xf32>
    %c0_i32_186 = arith.constant 0 : i32
    %585 = vector.broadcast %c0_i32_186 : i32 to vector<2x128xi32>
    %586 = arith.cmpi eq, %2, %585 : vector<2x128xi32>
    %587 = arith.select %586, %581, %584 : vector<2x128xi1>, vector<2x128xf32>
    %c0_187 = arith.constant 0 : index
    %c0_188 = arith.constant 0 : index
    %588 = vector.load %arg2[%c0_187, %c0_188] : memref<128x256xf32, #tpu.memory_space<vmem>>, vector<128x256xf32>
    %cst_189 = arith.constant dense<0.000000e+00> : vector<2x256xf32>
    %589 = tpu.matmul %587, %588, %cst_189 {dimension_numbers = #tpu.dot_dimension_numbers<[1], [0], [0], [1], [0, 0, 1, 1], [], []>} : vector<2x128xf32>, vector<128x256xf32>, vector<2x256xf32> -> vector<2x256xf32>
    %590 = vector.extract_strided_slice %589 {offsets = [0, 0], sizes = [2, 128], strides = [1, 1]} : vector<2x256xf32> to vector<2x128xf32>
    %591 = arith.negf %590 : vector<2x128xf32>
    %592 = math.exp %591 : vector<2x128xf32>
    %cst_190 = arith.constant 1.000000e+00 : f32
    %593 = vector.broadcast %cst_190 : f32 to vector<2x128xf32>
    %594 = arith.addf %593, %592 : vector<2x128xf32>
    %595 = arith.divf %593, %594 : vector<2x128xf32>
    %596 = math.tanh %590 : vector<2x128xf32>
    %597 = vector.extract_strided_slice %595 {offsets = [0, 0], sizes = [2, 32], strides = [1, 1]} : vector<2x128xf32> to vector<2x32xf32>
    %598 = vector.extract_strided_slice %595 {offsets = [0, 32], sizes = [2, 32], strides = [1, 1]} : vector<2x128xf32> to vector<2x32xf32>
    %599 = vector.extract_strided_slice %596 {offsets = [0, 64], sizes = [2, 32], strides = [1, 1]} : vector<2x128xf32> to vector<2x32xf32>
    %600 = vector.extract_strided_slice %595 {offsets = [0, 96], sizes = [2, 32], strides = [1, 1]} : vector<2x128xf32> to vector<2x32xf32>
    %601 = arith.mulf %598, %505 : vector<2x32xf32>
    %602 = arith.mulf %597, %599 : vector<2x32xf32>
    %603 = arith.addf %601, %602 : vector<2x32xf32>
    %604 = math.tanh %603 : vector<2x32xf32>
    %605 = arith.mulf %600, %604 : vector<2x32xf32>
    %606 = vector.extract_strided_slice %589 {offsets = [0, 160], sizes = [2, 10], strides = [1, 1]} : vector<2x256xf32> to vector<2x10xf32>
    %cst_191 = arith.constant 2.000000e-01 : f32
    %607 = vector.broadcast %cst_191 : f32 to vector<2x10xf32>
    %608 = arith.mulf %606, %607 : vector<2x10xf32>
    %609 = math.tanh %608 : vector<2x10xf32>
    %cst_192 = arith.constant 1.000000e+00 : f32
    %610 = vector.broadcast %cst_192 : f32 to vector<2x10xf32>
    %611 = arith.mulf %610, %609 : vector<2x10xf32>
    %612 = math.exp %611 : vector<2x10xf32>
    %cst_193 = arith.constant 0.000000e+00 : f32
    %613 = vector.broadcast %cst_193 : f32 to vector<2x10xf32>
    %614 = arith.select %578, %612, %613 : vector<2x10xi1>, vector<2x10xf32>
    %cst_194 = arith.constant dense<0.000000e+00> : vector<2xf32>
    %615 = vector.multi_reduction <add>, %614, %cst_194 [1] : vector<2x10xf32> to vector<2xf32>
    %616 = vector.shape_cast %615 : vector<2xf32> to vector<2x1xf32>
    %617 = math.log %616 : vector<2x1xf32>
    %618 = tpu.reciprocal %616 {approx = true} : vector<2x1xf32> -> vector<2x1xf32>
    %619 = vector.broadcast %617 : vector<2x1xf32> to vector<2x10xf32>
    %620 = arith.subf %611, %619 : vector<2x10xf32>
    %cst_195 = arith.constant 0.000000e+00 : f32
    %621 = vector.broadcast %cst_195 : f32 to vector<2x10xf32>
    %622 = arith.select %578, %620, %621 : vector<2x10xi1>, vector<2x10xf32>
    %c0_196 = arith.constant 0 : index
    %c6 = arith.constant 6 : index
    %623 = vector.load %arg1[%c0_196, %c6] : memref<2x16xf32, #tpu.memory_space<vmem>>, vector<2x1xf32>
    %cst_197 = arith.constant dense<0.000000e+00> : vector<2x10xf32>
    %624 = tpu.matmul %614, %9, %cst_197 {dimension_numbers = #tpu.dot_dimension_numbers<[1], [0], [0], [1], [0, 0, 1, 1], [], []>} : vector<2x10xf32>, vector<10x10xf32>, vector<2x10xf32> -> vector<2x10xf32>
    %625 = arith.mulf %623, %616 : vector<2x1xf32>
    %626 = vector.broadcast %625 : vector<2x1xf32> to vector<2x10xf32>
    %627 = arith.cmpf olt, %624, %626 : vector<2x10xf32>
    %628 = arith.extui %627 : vector<2x10xi1> to vector<2x10xi32>
    %629 = arith.sitofp %628 : vector<2x10xi32> to vector<2x10xf32>
    %cst_198 = arith.constant dense<0.000000e+00> : vector<2xf32>
    %630 = vector.multi_reduction <add>, %629, %cst_198 [1] : vector<2x10xf32> to vector<2xf32>
    %631 = vector.shape_cast %630 : vector<2xf32> to vector<2x1xf32>
    %632 = arith.fptosi %631 : vector<2x1xf32> to vector<2x1xi32>
    %c4_i32_199 = arith.constant 4 : i32
    %633 = vector.broadcast %c4_i32_199 : i32 to vector<2x1xi32>
    %634 = arith.minsi %632, %633 : vector<2x1xi32>
    %635 = arith.sitofp %634 : vector<2x1xi32> to vector<2x1xf32>
    %636 = vector.broadcast %634 : vector<2x1xi32> to vector<2x10xi32>
    %637 = arith.cmpi eq, %0, %636 : vector<2x10xi32>
    %638 = arith.extui %637 : vector<2x10xi1> to vector<2x10xi32>
    %639 = arith.sitofp %638 : vector<2x10xi32> to vector<2x10xf32>
    %640 = arith.mulf %639, %622 : vector<2x10xf32>
    %cst_200 = arith.constant dense<0.000000e+00> : vector<2xf32>
    %641 = vector.multi_reduction <add>, %640, %cst_200 [1] : vector<2x10xf32> to vector<2xf32>
    %642 = vector.shape_cast %641 : vector<2xf32> to vector<2x1xf32>
    %643 = arith.addf %564, %642 : vector<2x1xf32>
    %644 = arith.mulf %614, %622 : vector<2x10xf32>
    %cst_201 = arith.constant dense<0.000000e+00> : vector<2xf32>
    %645 = vector.multi_reduction <add>, %644, %cst_201 [1] : vector<2x10xf32> to vector<2xf32>
    %646 = vector.shape_cast %645 : vector<2xf32> to vector<2x1xf32>
    %647 = arith.mulf %646, %618 : vector<2x1xf32>
    %648 = arith.subf %569, %647 : vector<2x1xf32>
    %c10_i32 = arith.constant 10 : i32
    %649 = vector.broadcast %c10_i32 : i32 to vector<2x128xi32>
    %650 = arith.cmpi eq, %1, %649 : vector<2x128xi32>
    %651 = arith.extui %650 : vector<2x128xi1> to vector<2x128xi32>
    %652 = arith.sitofp %651 : vector<2x128xi32> to vector<2x128xf32>
    %653 = vector.broadcast %635 : vector<2x1xf32> to vector<2x128xf32>
    %654 = arith.mulf %653, %652 : vector<2x128xf32>
    %655 = arith.addf %576, %654 : vector<2x128xf32>
    %c5_i32_202 = arith.constant 5 : i32
    %656 = vector.broadcast %c5_i32_202 : i32 to vector<2x1xi32>
    %657 = arith.addi %634, %656 : vector<2x1xi32>
    %658 = vector.broadcast %657 : vector<2x1xi32> to vector<2x10xi32>
    %659 = arith.cmpi eq, %0, %658 : vector<2x10xi32>
    %660 = arith.extui %659 : vector<2x10xi1> to vector<2x10xi32>
    %661 = arith.sitofp %660 : vector<2x10xi32> to vector<2x10xf32>
    %c5_i32_203 = arith.constant 5 : i32
    %662 = vector.broadcast %c5_i32_203 : i32 to vector<2x10xi32>
    %663 = arith.cmpi slt, %0, %662 : vector<2x10xi32>
    %664 = tpu.concatenate %661, %605, %3 in 1 : vector<2x10xf32>, vector<2x32xf32>, vector<2x1xf32> -> vector<2x43xf32>
    %cst_204 = arith.constant 0.000000e+00 : f32
    %665 = vector.broadcast %cst_204 : f32 to vector<2x85xf32>
    %666 = tpu.concatenate %664, %665 in 1 : vector<2x43xf32>, vector<2x85xf32> -> vector<2x128xf32>
    %cst_205 = arith.constant 0.000000e+00 : f32
    %667 = vector.broadcast %cst_205 : f32 to vector<2x64xf32>
    %cst_206 = arith.constant 0.000000e+00 : f32
    %668 = vector.broadcast %cst_206 : f32 to vector<2x21xf32>
    %669 = tpu.concatenate %667, %664, %668 in 1 : vector<2x64xf32>, vector<2x43xf32>, vector<2x21xf32> -> vector<2x128xf32>
    %c0_i32_207 = arith.constant 0 : i32
    %670 = vector.broadcast %c0_i32_207 : i32 to vector<2x128xi32>
    %671 = arith.cmpi eq, %2, %670 : vector<2x128xi32>
    %672 = arith.select %671, %666, %669 : vector<2x128xi1>, vector<2x128xf32>
    %c0_208 = arith.constant 0 : index
    %c0_209 = arith.constant 0 : index
    %673 = vector.load %arg2[%c0_208, %c0_209] : memref<128x256xf32, #tpu.memory_space<vmem>>, vector<128x256xf32>
    %cst_210 = arith.constant dense<0.000000e+00> : vector<2x256xf32>
    %674 = tpu.matmul %672, %673, %cst_210 {dimension_numbers = #tpu.dot_dimension_numbers<[1], [0], [0], [1], [0, 0, 1, 1], [], []>} : vector<2x128xf32>, vector<128x256xf32>, vector<2x256xf32> -> vector<2x256xf32>
    %675 = vector.extract_strided_slice %674 {offsets = [0, 0], sizes = [2, 128], strides = [1, 1]} : vector<2x256xf32> to vector<2x128xf32>
    %676 = arith.negf %675 : vector<2x128xf32>
    %677 = math.exp %676 : vector<2x128xf32>
    %cst_211 = arith.constant 1.000000e+00 : f32
    %678 = vector.broadcast %cst_211 : f32 to vector<2x128xf32>
    %679 = arith.addf %678, %677 : vector<2x128xf32>
    %680 = arith.divf %678, %679 : vector<2x128xf32>
    %681 = math.tanh %675 : vector<2x128xf32>
    %682 = vector.extract_strided_slice %680 {offsets = [0, 0], sizes = [2, 32], strides = [1, 1]} : vector<2x128xf32> to vector<2x32xf32>
    %683 = vector.extract_strided_slice %680 {offsets = [0, 32], sizes = [2, 32], strides = [1, 1]} : vector<2x128xf32> to vector<2x32xf32>
    %684 = vector.extract_strided_slice %681 {offsets = [0, 64], sizes = [2, 32], strides = [1, 1]} : vector<2x128xf32> to vector<2x32xf32>
    %685 = vector.extract_strided_slice %680 {offsets = [0, 96], sizes = [2, 32], strides = [1, 1]} : vector<2x128xf32> to vector<2x32xf32>
    %686 = arith.mulf %683, %603 : vector<2x32xf32>
    %687 = arith.mulf %682, %684 : vector<2x32xf32>
    %688 = arith.addf %686, %687 : vector<2x32xf32>
    %689 = math.tanh %688 : vector<2x32xf32>
    %690 = arith.mulf %685, %689 : vector<2x32xf32>
    %691 = vector.extract_strided_slice %674 {offsets = [0, 160], sizes = [2, 10], strides = [1, 1]} : vector<2x256xf32> to vector<2x10xf32>
    %cst_212 = arith.constant 2.000000e-01 : f32
    %692 = vector.broadcast %cst_212 : f32 to vector<2x10xf32>
    %693 = arith.mulf %691, %692 : vector<2x10xf32>
    %694 = math.tanh %693 : vector<2x10xf32>
    %cst_213 = arith.constant 1.000000e+00 : f32
    %695 = vector.broadcast %cst_213 : f32 to vector<2x10xf32>
    %696 = arith.mulf %695, %694 : vector<2x10xf32>
    %697 = math.exp %696 : vector<2x10xf32>
    %cst_214 = arith.constant 0.000000e+00 : f32
    %698 = vector.broadcast %cst_214 : f32 to vector<2x10xf32>
    %699 = arith.select %663, %697, %698 : vector<2x10xi1>, vector<2x10xf32>
    %cst_215 = arith.constant dense<0.000000e+00> : vector<2xf32>
    %700 = vector.multi_reduction <add>, %699, %cst_215 [1] : vector<2x10xf32> to vector<2xf32>
    %701 = vector.shape_cast %700 : vector<2xf32> to vector<2x1xf32>
    %702 = math.log %701 : vector<2x1xf32>
    %703 = tpu.reciprocal %701 {approx = true} : vector<2x1xf32> -> vector<2x1xf32>
    %704 = vector.broadcast %702 : vector<2x1xf32> to vector<2x10xf32>
    %705 = arith.subf %696, %704 : vector<2x10xf32>
    %cst_216 = arith.constant 0.000000e+00 : f32
    %706 = vector.broadcast %cst_216 : f32 to vector<2x10xf32>
    %707 = arith.select %663, %705, %706 : vector<2x10xi1>, vector<2x10xf32>
    %c0_217 = arith.constant 0 : index
    %c7 = arith.constant 7 : index
    %708 = vector.load %arg1[%c0_217, %c7] : memref<2x16xf32, #tpu.memory_space<vmem>>, vector<2x1xf32>
    %cst_218 = arith.constant dense<0.000000e+00> : vector<2x10xf32>
    %709 = tpu.matmul %699, %9, %cst_218 {dimension_numbers = #tpu.dot_dimension_numbers<[1], [0], [0], [1], [0, 0, 1, 1], [], []>} : vector<2x10xf32>, vector<10x10xf32>, vector<2x10xf32> -> vector<2x10xf32>
    %710 = arith.mulf %708, %701 : vector<2x1xf32>
    %711 = vector.broadcast %710 : vector<2x1xf32> to vector<2x10xf32>
    %712 = arith.cmpf olt, %709, %711 : vector<2x10xf32>
    %713 = arith.extui %712 : vector<2x10xi1> to vector<2x10xi32>
    %714 = arith.sitofp %713 : vector<2x10xi32> to vector<2x10xf32>
    %cst_219 = arith.constant dense<0.000000e+00> : vector<2xf32>
    %715 = vector.multi_reduction <add>, %714, %cst_219 [1] : vector<2x10xf32> to vector<2xf32>
    %716 = vector.shape_cast %715 : vector<2xf32> to vector<2x1xf32>
    %717 = arith.fptosi %716 : vector<2x1xf32> to vector<2x1xi32>
    %c4_i32_220 = arith.constant 4 : i32
    %718 = vector.broadcast %c4_i32_220 : i32 to vector<2x1xi32>
    %719 = arith.minsi %717, %718 : vector<2x1xi32>
    %720 = arith.sitofp %719 : vector<2x1xi32> to vector<2x1xf32>
    %721 = vector.broadcast %719 : vector<2x1xi32> to vector<2x10xi32>
    %722 = arith.cmpi eq, %0, %721 : vector<2x10xi32>
    %723 = arith.extui %722 : vector<2x10xi1> to vector<2x10xi32>
    %724 = arith.sitofp %723 : vector<2x10xi32> to vector<2x10xf32>
    %725 = arith.mulf %724, %707 : vector<2x10xf32>
    %cst_221 = arith.constant dense<0.000000e+00> : vector<2xf32>
    %726 = vector.multi_reduction <add>, %725, %cst_221 [1] : vector<2x10xf32> to vector<2xf32>
    %727 = vector.shape_cast %726 : vector<2xf32> to vector<2x1xf32>
    %728 = arith.addf %643, %727 : vector<2x1xf32>
    %729 = arith.mulf %699, %707 : vector<2x10xf32>
    %cst_222 = arith.constant dense<0.000000e+00> : vector<2xf32>
    %730 = vector.multi_reduction <add>, %729, %cst_222 [1] : vector<2x10xf32> to vector<2xf32>
    %731 = vector.shape_cast %730 : vector<2xf32> to vector<2x1xf32>
    %732 = arith.mulf %731, %703 : vector<2x1xf32>
    %733 = arith.subf %648, %732 : vector<2x1xf32>
    %c11_i32 = arith.constant 11 : i32
    %734 = vector.broadcast %c11_i32 : i32 to vector<2x128xi32>
    %735 = arith.cmpi eq, %1, %734 : vector<2x128xi32>
    %736 = arith.extui %735 : vector<2x128xi1> to vector<2x128xi32>
    %737 = arith.sitofp %736 : vector<2x128xi32> to vector<2x128xf32>
    %738 = vector.broadcast %720 : vector<2x1xf32> to vector<2x128xf32>
    %739 = arith.mulf %738, %737 : vector<2x128xf32>
    %740 = arith.addf %655, %739 : vector<2x128xf32>
    %c5_i32_223 = arith.constant 5 : i32
    %741 = vector.broadcast %c5_i32_223 : i32 to vector<2x1xi32>
    %742 = arith.addi %719, %741 : vector<2x1xi32>
    %743 = vector.broadcast %742 : vector<2x1xi32> to vector<2x10xi32>
    %744 = arith.cmpi eq, %0, %743 : vector<2x10xi32>
    %745 = arith.extui %744 : vector<2x10xi1> to vector<2x10xi32>
    %746 = arith.sitofp %745 : vector<2x10xi32> to vector<2x10xf32>
    %c4_i32_224 = arith.constant 4 : i32
    %747 = vector.broadcast %c4_i32_224 : i32 to vector<2x10xi32>
    %748 = arith.cmpi slt, %0, %747 : vector<2x10xi32>
    %749 = tpu.concatenate %746, %690, %3 in 1 : vector<2x10xf32>, vector<2x32xf32>, vector<2x1xf32> -> vector<2x43xf32>
    %cst_225 = arith.constant 0.000000e+00 : f32
    %750 = vector.broadcast %cst_225 : f32 to vector<2x85xf32>
    %751 = tpu.concatenate %749, %750 in 1 : vector<2x43xf32>, vector<2x85xf32> -> vector<2x128xf32>
    %cst_226 = arith.constant 0.000000e+00 : f32
    %752 = vector.broadcast %cst_226 : f32 to vector<2x64xf32>
    %cst_227 = arith.constant 0.000000e+00 : f32
    %753 = vector.broadcast %cst_227 : f32 to vector<2x21xf32>
    %754 = tpu.concatenate %752, %749, %753 in 1 : vector<2x64xf32>, vector<2x43xf32>, vector<2x21xf32> -> vector<2x128xf32>
    %c0_i32_228 = arith.constant 0 : i32
    %755 = vector.broadcast %c0_i32_228 : i32 to vector<2x128xi32>
    %756 = arith.cmpi eq, %2, %755 : vector<2x128xi32>
    %757 = arith.select %756, %751, %754 : vector<2x128xi1>, vector<2x128xf32>
    %c0_229 = arith.constant 0 : index
    %c0_230 = arith.constant 0 : index
    %758 = vector.load %arg2[%c0_229, %c0_230] : memref<128x256xf32, #tpu.memory_space<vmem>>, vector<128x256xf32>
    %cst_231 = arith.constant dense<0.000000e+00> : vector<2x256xf32>
    %759 = tpu.matmul %757, %758, %cst_231 {dimension_numbers = #tpu.dot_dimension_numbers<[1], [0], [0], [1], [0, 0, 1, 1], [], []>} : vector<2x128xf32>, vector<128x256xf32>, vector<2x256xf32> -> vector<2x256xf32>
    %760 = vector.extract_strided_slice %759 {offsets = [0, 0], sizes = [2, 128], strides = [1, 1]} : vector<2x256xf32> to vector<2x128xf32>
    %761 = arith.negf %760 : vector<2x128xf32>
    %762 = math.exp %761 : vector<2x128xf32>
    %cst_232 = arith.constant 1.000000e+00 : f32
    %763 = vector.broadcast %cst_232 : f32 to vector<2x128xf32>
    %764 = arith.addf %763, %762 : vector<2x128xf32>
    %765 = arith.divf %763, %764 : vector<2x128xf32>
    %766 = math.tanh %760 : vector<2x128xf32>
    %767 = vector.extract_strided_slice %765 {offsets = [0, 0], sizes = [2, 32], strides = [1, 1]} : vector<2x128xf32> to vector<2x32xf32>
    %768 = vector.extract_strided_slice %765 {offsets = [0, 32], sizes = [2, 32], strides = [1, 1]} : vector<2x128xf32> to vector<2x32xf32>
    %769 = vector.extract_strided_slice %766 {offsets = [0, 64], sizes = [2, 32], strides = [1, 1]} : vector<2x128xf32> to vector<2x32xf32>
    %770 = vector.extract_strided_slice %765 {offsets = [0, 96], sizes = [2, 32], strides = [1, 1]} : vector<2x128xf32> to vector<2x32xf32>
    %771 = arith.mulf %768, %688 : vector<2x32xf32>
    %772 = arith.mulf %767, %769 : vector<2x32xf32>
    %773 = arith.addf %771, %772 : vector<2x32xf32>
    %774 = math.tanh %773 : vector<2x32xf32>
    %775 = arith.mulf %770, %774 : vector<2x32xf32>
    %776 = vector.extract_strided_slice %759 {offsets = [0, 128], sizes = [2, 32], strides = [1, 1]} : vector<2x256xf32> to vector<2x32xf32>
    %c0_233 = arith.constant 0 : index
    %c0_234 = arith.constant 0 : index
    %c0_235 = arith.constant 0 : index
    %777 = vector.load %arg3[%c0_233, %c0_234, %c0_235] : memref<2x10x32xf32, #tpu.memory_space<vmem>>, vector<1x10x32xf32>
    %778 = vector.shape_cast %777 : vector<1x10x32xf32> to vector<10x32xf32>
    %779 = vector.extract_strided_slice %776 {offsets = [0, 0], sizes = [1, 32], strides = [1, 1]} : vector<2x32xf32> to vector<1x32xf32>
    %780 = vector.broadcast %779 : vector<1x32xf32> to vector<10x32xf32>
    %781 = arith.addf %778, %780 : vector<10x32xf32>
    %782 = math.tanh %781 : vector<10x32xf32>
    %c1_236 = arith.constant 1 : index
    %c0_237 = arith.constant 0 : index
    %c0_238 = arith.constant 0 : index
    %783 = vector.load %arg3[%c1_236, %c0_237, %c0_238] : memref<2x10x32xf32, #tpu.memory_space<vmem>>, vector<1x10x32xf32>
    %784 = vector.shape_cast %783 : vector<1x10x32xf32> to vector<10x32xf32>
    %785 = vector.extract_strided_slice %776 {offsets = [1, 0], sizes = [1, 32], strides = [1, 1]} : vector<2x32xf32> to vector<1x32xf32>
    %786 = vector.broadcast %785 : vector<1x32xf32> to vector<10x32xf32>
    %787 = arith.addf %784, %786 : vector<10x32xf32>
    %788 = math.tanh %787 : vector<10x32xf32>
    %c0_239 = arith.constant 0 : index
    %c0_240 = arith.constant 0 : index
    %c0_241 = arith.constant 0 : index
    %789 = vector.load %arg4[%c0_239, %c0_240, %c0_241] : memref<2x1x32xf32, #tpu.memory_space<vmem>>, vector<1x1x32xf32>
    %790 = vector.shape_cast %789 : vector<1x1x32xf32> to vector<1x32xf32>
    %cst_242 = arith.constant dense<0.000000e+00> : vector<1x10xf32>
    %791 = tpu.matmul %790, %782, %cst_242 {dimension_numbers = #tpu.dot_dimension_numbers<[1], [1], [0], [0], [0, 0, 1, 0], [], []>} : vector<1x32xf32>, vector<10x32xf32>, vector<1x10xf32> -> vector<1x10xf32>
    %c1_243 = arith.constant 1 : index
    %c0_244 = arith.constant 0 : index
    %c0_245 = arith.constant 0 : index
    %792 = vector.load %arg4[%c1_243, %c0_244, %c0_245] : memref<2x1x32xf32, #tpu.memory_space<vmem>>, vector<1x1x32xf32>
    %793 = vector.shape_cast %792 : vector<1x1x32xf32> to vector<1x32xf32>
    %cst_246 = arith.constant dense<0.000000e+00> : vector<1x10xf32>
    %794 = tpu.matmul %793, %788, %cst_246 {dimension_numbers = #tpu.dot_dimension_numbers<[1], [1], [0], [0], [0, 0, 1, 0], [], []>} : vector<1x32xf32>, vector<10x32xf32>, vector<1x10xf32> -> vector<1x10xf32>
    %795 = tpu.concatenate %791, %794 in 0 : vector<1x10xf32>, vector<1x10xf32> -> vector<2x10xf32>
    %cst_247 = arith.constant 2.000000e-01 : f32
    %796 = vector.broadcast %cst_247 : f32 to vector<2x10xf32>
    %797 = arith.mulf %795, %796 : vector<2x10xf32>
    %798 = math.tanh %797 : vector<2x10xf32>
    %cst_248 = arith.constant 2.500000e+00 : f32
    %799 = vector.broadcast %cst_248 : f32 to vector<2x10xf32>
    %800 = arith.mulf %799, %798 : vector<2x10xf32>
    %801 = math.exp %800 : vector<2x10xf32>
    %cst_249 = arith.constant 0.000000e+00 : f32
    %802 = vector.broadcast %cst_249 : f32 to vector<2x10xf32>
    %803 = arith.select %748, %801, %802 : vector<2x10xi1>, vector<2x10xf32>
    %cst_250 = arith.constant dense<0.000000e+00> : vector<2xf32>
    %804 = vector.multi_reduction <add>, %803, %cst_250 [1] : vector<2x10xf32> to vector<2xf32>
    %805 = vector.shape_cast %804 : vector<2xf32> to vector<2x1xf32>
    %806 = math.log %805 : vector<2x1xf32>
    %807 = tpu.reciprocal %805 {approx = true} : vector<2x1xf32> -> vector<2x1xf32>
    %808 = vector.broadcast %806 : vector<2x1xf32> to vector<2x10xf32>
    %809 = arith.subf %800, %808 : vector<2x10xf32>
    %cst_251 = arith.constant 0.000000e+00 : f32
    %810 = vector.broadcast %cst_251 : f32 to vector<2x10xf32>
    %811 = arith.select %748, %809, %810 : vector<2x10xi1>, vector<2x10xf32>
    %c0_252 = arith.constant 0 : index
    %c8 = arith.constant 8 : index
    %812 = vector.load %arg1[%c0_252, %c8] : memref<2x16xf32, #tpu.memory_space<vmem>>, vector<2x1xf32>
    %cst_253 = arith.constant dense<0.000000e+00> : vector<2x10xf32>
    %813 = tpu.matmul %803, %9, %cst_253 {dimension_numbers = #tpu.dot_dimension_numbers<[1], [0], [0], [1], [0, 0, 1, 1], [], []>} : vector<2x10xf32>, vector<10x10xf32>, vector<2x10xf32> -> vector<2x10xf32>
    %814 = arith.mulf %812, %805 : vector<2x1xf32>
    %815 = vector.broadcast %814 : vector<2x1xf32> to vector<2x10xf32>
    %816 = arith.cmpf olt, %813, %815 : vector<2x10xf32>
    %817 = arith.extui %816 : vector<2x10xi1> to vector<2x10xi32>
    %818 = arith.sitofp %817 : vector<2x10xi32> to vector<2x10xf32>
    %cst_254 = arith.constant dense<0.000000e+00> : vector<2xf32>
    %819 = vector.multi_reduction <add>, %818, %cst_254 [1] : vector<2x10xf32> to vector<2xf32>
    %820 = vector.shape_cast %819 : vector<2xf32> to vector<2x1xf32>
    %821 = arith.fptosi %820 : vector<2x1xf32> to vector<2x1xi32>
    %c3_i32_255 = arith.constant 3 : i32
    %822 = vector.broadcast %c3_i32_255 : i32 to vector<2x1xi32>
    %823 = arith.minsi %821, %822 : vector<2x1xi32>
    %824 = arith.sitofp %823 : vector<2x1xi32> to vector<2x1xf32>
    %825 = vector.broadcast %823 : vector<2x1xi32> to vector<2x10xi32>
    %826 = arith.cmpi eq, %0, %825 : vector<2x10xi32>
    %827 = arith.extui %826 : vector<2x10xi1> to vector<2x10xi32>
    %828 = arith.sitofp %827 : vector<2x10xi32> to vector<2x10xf32>
    %829 = arith.mulf %828, %811 : vector<2x10xf32>
    %cst_256 = arith.constant dense<0.000000e+00> : vector<2xf32>
    %830 = vector.multi_reduction <add>, %829, %cst_256 [1] : vector<2x10xf32> to vector<2xf32>
    %831 = vector.shape_cast %830 : vector<2xf32> to vector<2x1xf32>
    %832 = arith.addf %728, %831 : vector<2x1xf32>
    %833 = arith.mulf %803, %811 : vector<2x10xf32>
    %cst_257 = arith.constant dense<0.000000e+00> : vector<2xf32>
    %834 = vector.multi_reduction <add>, %833, %cst_257 [1] : vector<2x10xf32> to vector<2xf32>
    %835 = vector.shape_cast %834 : vector<2xf32> to vector<2x1xf32>
    %836 = arith.mulf %835, %807 : vector<2x1xf32>
    %837 = arith.subf %733, %836 : vector<2x1xf32>
    %c4_i32_258 = arith.constant 4 : i32
    %838 = vector.broadcast %c4_i32_258 : i32 to vector<2x128xi32>
    %839 = arith.cmpi eq, %1, %838 : vector<2x128xi32>
    %840 = arith.extui %839 : vector<2x128xi1> to vector<2x128xi32>
    %841 = arith.sitofp %840 : vector<2x128xi32> to vector<2x128xf32>
    %842 = vector.broadcast %824 : vector<2x1xf32> to vector<2x128xf32>
    %843 = arith.mulf %842, %841 : vector<2x128xf32>
    %844 = arith.addf %740, %843 : vector<2x128xf32>
    %c4_i32_259 = arith.constant 4 : i32
    %845 = vector.broadcast %c4_i32_259 : i32 to vector<2x10xi32>
    %846 = arith.cmpi slt, %0, %845 : vector<2x10xi32>
    %847 = tpu.concatenate %828, %775, %3 in 1 : vector<2x10xf32>, vector<2x32xf32>, vector<2x1xf32> -> vector<2x43xf32>
    %cst_260 = arith.constant 0.000000e+00 : f32
    %848 = vector.broadcast %cst_260 : f32 to vector<2x85xf32>
    %849 = tpu.concatenate %847, %848 in 1 : vector<2x43xf32>, vector<2x85xf32> -> vector<2x128xf32>
    %cst_261 = arith.constant 0.000000e+00 : f32
    %850 = vector.broadcast %cst_261 : f32 to vector<2x64xf32>
    %cst_262 = arith.constant 0.000000e+00 : f32
    %851 = vector.broadcast %cst_262 : f32 to vector<2x21xf32>
    %852 = tpu.concatenate %850, %847, %851 in 1 : vector<2x64xf32>, vector<2x43xf32>, vector<2x21xf32> -> vector<2x128xf32>
    %c0_i32_263 = arith.constant 0 : i32
    %853 = vector.broadcast %c0_i32_263 : i32 to vector<2x128xi32>
    %854 = arith.cmpi eq, %2, %853 : vector<2x128xi32>
    %855 = arith.select %854, %849, %852 : vector<2x128xi1>, vector<2x128xf32>
    %c0_264 = arith.constant 0 : index
    %c0_265 = arith.constant 0 : index
    %856 = vector.load %arg2[%c0_264, %c0_265] : memref<128x256xf32, #tpu.memory_space<vmem>>, vector<128x256xf32>
    %cst_266 = arith.constant dense<0.000000e+00> : vector<2x256xf32>
    %857 = tpu.matmul %855, %856, %cst_266 {dimension_numbers = #tpu.dot_dimension_numbers<[1], [0], [0], [1], [0, 0, 1, 1], [], []>} : vector<2x128xf32>, vector<128x256xf32>, vector<2x256xf32> -> vector<2x256xf32>
    %858 = vector.extract_strided_slice %857 {offsets = [0, 0], sizes = [2, 128], strides = [1, 1]} : vector<2x256xf32> to vector<2x128xf32>
    %859 = arith.negf %858 : vector<2x128xf32>
    %860 = math.exp %859 : vector<2x128xf32>
    %cst_267 = arith.constant 1.000000e+00 : f32
    %861 = vector.broadcast %cst_267 : f32 to vector<2x128xf32>
    %862 = arith.addf %861, %860 : vector<2x128xf32>
    %863 = arith.divf %861, %862 : vector<2x128xf32>
    %864 = math.tanh %858 : vector<2x128xf32>
    %865 = vector.extract_strided_slice %863 {offsets = [0, 0], sizes = [2, 32], strides = [1, 1]} : vector<2x128xf32> to vector<2x32xf32>
    %866 = vector.extract_strided_slice %863 {offsets = [0, 32], sizes = [2, 32], strides = [1, 1]} : vector<2x128xf32> to vector<2x32xf32>
    %867 = vector.extract_strided_slice %864 {offsets = [0, 64], sizes = [2, 32], strides = [1, 1]} : vector<2x128xf32> to vector<2x32xf32>
    %868 = vector.extract_strided_slice %863 {offsets = [0, 96], sizes = [2, 32], strides = [1, 1]} : vector<2x128xf32> to vector<2x32xf32>
    %869 = arith.mulf %866, %773 : vector<2x32xf32>
    %870 = arith.mulf %865, %867 : vector<2x32xf32>
    %871 = arith.addf %869, %870 : vector<2x32xf32>
    %872 = math.tanh %871 : vector<2x32xf32>
    %873 = arith.mulf %868, %872 : vector<2x32xf32>
    %874 = vector.extract_strided_slice %857 {offsets = [0, 128], sizes = [2, 32], strides = [1, 1]} : vector<2x256xf32> to vector<2x32xf32>
    %c0_268 = arith.constant 0 : index
    %c0_269 = arith.constant 0 : index
    %c0_270 = arith.constant 0 : index
    %875 = vector.load %arg3[%c0_268, %c0_269, %c0_270] : memref<2x10x32xf32, #tpu.memory_space<vmem>>, vector<1x10x32xf32>
    %876 = vector.shape_cast %875 : vector<1x10x32xf32> to vector<10x32xf32>
    %877 = vector.extract_strided_slice %874 {offsets = [0, 0], sizes = [1, 32], strides = [1, 1]} : vector<2x32xf32> to vector<1x32xf32>
    %878 = vector.broadcast %877 : vector<1x32xf32> to vector<10x32xf32>
    %879 = arith.addf %876, %878 : vector<10x32xf32>
    %880 = math.tanh %879 : vector<10x32xf32>
    %c1_271 = arith.constant 1 : index
    %c0_272 = arith.constant 0 : index
    %c0_273 = arith.constant 0 : index
    %881 = vector.load %arg3[%c1_271, %c0_272, %c0_273] : memref<2x10x32xf32, #tpu.memory_space<vmem>>, vector<1x10x32xf32>
    %882 = vector.shape_cast %881 : vector<1x10x32xf32> to vector<10x32xf32>
    %883 = vector.extract_strided_slice %874 {offsets = [1, 0], sizes = [1, 32], strides = [1, 1]} : vector<2x32xf32> to vector<1x32xf32>
    %884 = vector.broadcast %883 : vector<1x32xf32> to vector<10x32xf32>
    %885 = arith.addf %882, %884 : vector<10x32xf32>
    %886 = math.tanh %885 : vector<10x32xf32>
    %c0_274 = arith.constant 0 : index
    %c0_275 = arith.constant 0 : index
    %c0_276 = arith.constant 0 : index
    %887 = vector.load %arg4[%c0_274, %c0_275, %c0_276] : memref<2x1x32xf32, #tpu.memory_space<vmem>>, vector<1x1x32xf32>
    %888 = vector.shape_cast %887 : vector<1x1x32xf32> to vector<1x32xf32>
    %cst_277 = arith.constant dense<0.000000e+00> : vector<1x10xf32>
    %889 = tpu.matmul %888, %880, %cst_277 {dimension_numbers = #tpu.dot_dimension_numbers<[1], [1], [0], [0], [0, 0, 1, 0], [], []>} : vector<1x32xf32>, vector<10x32xf32>, vector<1x10xf32> -> vector<1x10xf32>
    %c1_278 = arith.constant 1 : index
    %c0_279 = arith.constant 0 : index
    %c0_280 = arith.constant 0 : index
    %890 = vector.load %arg4[%c1_278, %c0_279, %c0_280] : memref<2x1x32xf32, #tpu.memory_space<vmem>>, vector<1x1x32xf32>
    %891 = vector.shape_cast %890 : vector<1x1x32xf32> to vector<1x32xf32>
    %cst_281 = arith.constant dense<0.000000e+00> : vector<1x10xf32>
    %892 = tpu.matmul %891, %886, %cst_281 {dimension_numbers = #tpu.dot_dimension_numbers<[1], [1], [0], [0], [0, 0, 1, 0], [], []>} : vector<1x32xf32>, vector<10x32xf32>, vector<1x10xf32> -> vector<1x10xf32>
    %893 = tpu.concatenate %889, %892 in 0 : vector<1x10xf32>, vector<1x10xf32> -> vector<2x10xf32>
    %cst_282 = arith.constant 2.000000e-01 : f32
    %894 = vector.broadcast %cst_282 : f32 to vector<2x10xf32>
    %895 = arith.mulf %893, %894 : vector<2x10xf32>
    %896 = math.tanh %895 : vector<2x10xf32>
    %cst_283 = arith.constant 2.500000e+00 : f32
    %897 = vector.broadcast %cst_283 : f32 to vector<2x10xf32>
    %898 = arith.mulf %897, %896 : vector<2x10xf32>
    %899 = math.exp %898 : vector<2x10xf32>
    %cst_284 = arith.constant 0.000000e+00 : f32
    %900 = vector.broadcast %cst_284 : f32 to vector<2x10xf32>
    %901 = arith.select %846, %899, %900 : vector<2x10xi1>, vector<2x10xf32>
    %cst_285 = arith.constant dense<0.000000e+00> : vector<2xf32>
    %902 = vector.multi_reduction <add>, %901, %cst_285 [1] : vector<2x10xf32> to vector<2xf32>
    %903 = vector.shape_cast %902 : vector<2xf32> to vector<2x1xf32>
    %904 = math.log %903 : vector<2x1xf32>
    %905 = tpu.reciprocal %903 {approx = true} : vector<2x1xf32> -> vector<2x1xf32>
    %906 = vector.broadcast %904 : vector<2x1xf32> to vector<2x10xf32>
    %907 = arith.subf %898, %906 : vector<2x10xf32>
    %cst_286 = arith.constant 0.000000e+00 : f32
    %908 = vector.broadcast %cst_286 : f32 to vector<2x10xf32>
    %909 = arith.select %846, %907, %908 : vector<2x10xi1>, vector<2x10xf32>
    %c0_287 = arith.constant 0 : index
    %c9 = arith.constant 9 : index
    %910 = vector.load %arg1[%c0_287, %c9] : memref<2x16xf32, #tpu.memory_space<vmem>>, vector<2x1xf32>
    %cst_288 = arith.constant dense<0.000000e+00> : vector<2x10xf32>
    %911 = tpu.matmul %901, %9, %cst_288 {dimension_numbers = #tpu.dot_dimension_numbers<[1], [0], [0], [1], [0, 0, 1, 1], [], []>} : vector<2x10xf32>, vector<10x10xf32>, vector<2x10xf32> -> vector<2x10xf32>
    %912 = arith.mulf %910, %903 : vector<2x1xf32>
    %913 = vector.broadcast %912 : vector<2x1xf32> to vector<2x10xf32>
    %914 = arith.cmpf olt, %911, %913 : vector<2x10xf32>
    %915 = arith.extui %914 : vector<2x10xi1> to vector<2x10xi32>
    %916 = arith.sitofp %915 : vector<2x10xi32> to vector<2x10xf32>
    %cst_289 = arith.constant dense<0.000000e+00> : vector<2xf32>
    %917 = vector.multi_reduction <add>, %916, %cst_289 [1] : vector<2x10xf32> to vector<2xf32>
    %918 = vector.shape_cast %917 : vector<2xf32> to vector<2x1xf32>
    %919 = arith.fptosi %918 : vector<2x1xf32> to vector<2x1xi32>
    %c3_i32_290 = arith.constant 3 : i32
    %920 = vector.broadcast %c3_i32_290 : i32 to vector<2x1xi32>
    %921 = arith.minsi %919, %920 : vector<2x1xi32>
    %922 = arith.sitofp %921 : vector<2x1xi32> to vector<2x1xf32>
    %923 = vector.broadcast %921 : vector<2x1xi32> to vector<2x10xi32>
    %924 = arith.cmpi eq, %0, %923 : vector<2x10xi32>
    %925 = arith.extui %924 : vector<2x10xi1> to vector<2x10xi32>
    %926 = arith.sitofp %925 : vector<2x10xi32> to vector<2x10xf32>
    %927 = arith.mulf %926, %909 : vector<2x10xf32>
    %cst_291 = arith.constant dense<0.000000e+00> : vector<2xf32>
    %928 = vector.multi_reduction <add>, %927, %cst_291 [1] : vector<2x10xf32> to vector<2xf32>
    %929 = vector.shape_cast %928 : vector<2xf32> to vector<2x1xf32>
    %930 = arith.addf %832, %929 : vector<2x1xf32>
    %931 = arith.mulf %901, %909 : vector<2x10xf32>
    %cst_292 = arith.constant dense<0.000000e+00> : vector<2xf32>
    %932 = vector.multi_reduction <add>, %931, %cst_292 [1] : vector<2x10xf32> to vector<2xf32>
    %933 = vector.shape_cast %932 : vector<2xf32> to vector<2x1xf32>
    %934 = arith.mulf %933, %905 : vector<2x1xf32>
    %935 = arith.subf %837, %934 : vector<2x1xf32>
    %c5_i32_293 = arith.constant 5 : i32
    %936 = vector.broadcast %c5_i32_293 : i32 to vector<2x128xi32>
    %937 = arith.cmpi eq, %1, %936 : vector<2x128xi32>
    %938 = arith.extui %937 : vector<2x128xi1> to vector<2x128xi32>
    %939 = arith.sitofp %938 : vector<2x128xi32> to vector<2x128xf32>
    %940 = vector.broadcast %922 : vector<2x1xf32> to vector<2x128xf32>
    %941 = arith.mulf %940, %939 : vector<2x128xf32>
    %942 = arith.addf %844, %941 : vector<2x128xf32>
    %c5_i32_294 = arith.constant 5 : i32
    %943 = vector.broadcast %c5_i32_294 : i32 to vector<2x10xi32>
    %944 = arith.cmpi slt, %0, %943 : vector<2x10xi32>
    %945 = tpu.concatenate %926, %873, %3 in 1 : vector<2x10xf32>, vector<2x32xf32>, vector<2x1xf32> -> vector<2x43xf32>
    %cst_295 = arith.constant 0.000000e+00 : f32
    %946 = vector.broadcast %cst_295 : f32 to vector<2x85xf32>
    %947 = tpu.concatenate %945, %946 in 1 : vector<2x43xf32>, vector<2x85xf32> -> vector<2x128xf32>
    %cst_296 = arith.constant 0.000000e+00 : f32
    %948 = vector.broadcast %cst_296 : f32 to vector<2x64xf32>
    %cst_297 = arith.constant 0.000000e+00 : f32
    %949 = vector.broadcast %cst_297 : f32 to vector<2x21xf32>
    %950 = tpu.concatenate %948, %945, %949 in 1 : vector<2x64xf32>, vector<2x43xf32>, vector<2x21xf32> -> vector<2x128xf32>
    %c0_i32_298 = arith.constant 0 : i32
    %951 = vector.broadcast %c0_i32_298 : i32 to vector<2x128xi32>
    %952 = arith.cmpi eq, %2, %951 : vector<2x128xi32>
    %953 = arith.select %952, %947, %950 : vector<2x128xi1>, vector<2x128xf32>
    %c0_299 = arith.constant 0 : index
    %c0_300 = arith.constant 0 : index
    %954 = vector.load %arg2[%c0_299, %c0_300] : memref<128x256xf32, #tpu.memory_space<vmem>>, vector<128x256xf32>
    %cst_301 = arith.constant dense<0.000000e+00> : vector<2x256xf32>
    %955 = tpu.matmul %953, %954, %cst_301 {dimension_numbers = #tpu.dot_dimension_numbers<[1], [0], [0], [1], [0, 0, 1, 1], [], []>} : vector<2x128xf32>, vector<128x256xf32>, vector<2x256xf32> -> vector<2x256xf32>
    %956 = vector.extract_strided_slice %955 {offsets = [0, 0], sizes = [2, 128], strides = [1, 1]} : vector<2x256xf32> to vector<2x128xf32>
    %957 = arith.negf %956 : vector<2x128xf32>
    %958 = math.exp %957 : vector<2x128xf32>
    %cst_302 = arith.constant 1.000000e+00 : f32
    %959 = vector.broadcast %cst_302 : f32 to vector<2x128xf32>
    %960 = arith.addf %959, %958 : vector<2x128xf32>
    %961 = arith.divf %959, %960 : vector<2x128xf32>
    %962 = math.tanh %956 : vector<2x128xf32>
    %963 = vector.extract_strided_slice %961 {offsets = [0, 0], sizes = [2, 32], strides = [1, 1]} : vector<2x128xf32> to vector<2x32xf32>
    %964 = vector.extract_strided_slice %961 {offsets = [0, 32], sizes = [2, 32], strides = [1, 1]} : vector<2x128xf32> to vector<2x32xf32>
    %965 = vector.extract_strided_slice %962 {offsets = [0, 64], sizes = [2, 32], strides = [1, 1]} : vector<2x128xf32> to vector<2x32xf32>
    %966 = vector.extract_strided_slice %961 {offsets = [0, 96], sizes = [2, 32], strides = [1, 1]} : vector<2x128xf32> to vector<2x32xf32>
    %967 = arith.mulf %964, %871 : vector<2x32xf32>
    %968 = arith.mulf %963, %965 : vector<2x32xf32>
    %969 = arith.addf %967, %968 : vector<2x32xf32>
    %970 = math.tanh %969 : vector<2x32xf32>
    %971 = arith.mulf %966, %970 : vector<2x32xf32>
    %972 = vector.extract_strided_slice %955 {offsets = [0, 160], sizes = [2, 10], strides = [1, 1]} : vector<2x256xf32> to vector<2x10xf32>
    %cst_303 = arith.constant 2.000000e-01 : f32
    %973 = vector.broadcast %cst_303 : f32 to vector<2x10xf32>
    %974 = arith.mulf %972, %973 : vector<2x10xf32>
    %975 = math.tanh %974 : vector<2x10xf32>
    %cst_304 = arith.constant 1.000000e+00 : f32
    %976 = vector.broadcast %cst_304 : f32 to vector<2x10xf32>
    %977 = arith.mulf %976, %975 : vector<2x10xf32>
    %978 = math.exp %977 : vector<2x10xf32>
    %cst_305 = arith.constant 0.000000e+00 : f32
    %979 = vector.broadcast %cst_305 : f32 to vector<2x10xf32>
    %980 = arith.select %944, %978, %979 : vector<2x10xi1>, vector<2x10xf32>
    %cst_306 = arith.constant dense<0.000000e+00> : vector<2xf32>
    %981 = vector.multi_reduction <add>, %980, %cst_306 [1] : vector<2x10xf32> to vector<2xf32>
    %982 = vector.shape_cast %981 : vector<2xf32> to vector<2x1xf32>
    %983 = math.log %982 : vector<2x1xf32>
    %984 = tpu.reciprocal %982 {approx = true} : vector<2x1xf32> -> vector<2x1xf32>
    %985 = vector.broadcast %983 : vector<2x1xf32> to vector<2x10xf32>
    %986 = arith.subf %977, %985 : vector<2x10xf32>
    %cst_307 = arith.constant 0.000000e+00 : f32
    %987 = vector.broadcast %cst_307 : f32 to vector<2x10xf32>
    %988 = arith.select %944, %986, %987 : vector<2x10xi1>, vector<2x10xf32>
    %c0_308 = arith.constant 0 : index
    %c10 = arith.constant 10 : index
    %989 = vector.load %arg1[%c0_308, %c10] : memref<2x16xf32, #tpu.memory_space<vmem>>, vector<2x1xf32>
    %cst_309 = arith.constant dense<0.000000e+00> : vector<2x10xf32>
    %990 = tpu.matmul %980, %9, %cst_309 {dimension_numbers = #tpu.dot_dimension_numbers<[1], [0], [0], [1], [0, 0, 1, 1], [], []>} : vector<2x10xf32>, vector<10x10xf32>, vector<2x10xf32> -> vector<2x10xf32>
    %991 = arith.mulf %989, %982 : vector<2x1xf32>
    %992 = vector.broadcast %991 : vector<2x1xf32> to vector<2x10xf32>
    %993 = arith.cmpf olt, %990, %992 : vector<2x10xf32>
    %994 = arith.extui %993 : vector<2x10xi1> to vector<2x10xi32>
    %995 = arith.sitofp %994 : vector<2x10xi32> to vector<2x10xf32>
    %cst_310 = arith.constant dense<0.000000e+00> : vector<2xf32>
    %996 = vector.multi_reduction <add>, %995, %cst_310 [1] : vector<2x10xf32> to vector<2xf32>
    %997 = vector.shape_cast %996 : vector<2xf32> to vector<2x1xf32>
    %998 = arith.fptosi %997 : vector<2x1xf32> to vector<2x1xi32>
    %c4_i32_311 = arith.constant 4 : i32
    %999 = vector.broadcast %c4_i32_311 : i32 to vector<2x1xi32>
    %1000 = arith.minsi %998, %999 : vector<2x1xi32>
    %1001 = arith.sitofp %1000 : vector<2x1xi32> to vector<2x1xf32>
    %1002 = vector.broadcast %1000 : vector<2x1xi32> to vector<2x10xi32>
    %1003 = arith.cmpi eq, %0, %1002 : vector<2x10xi32>
    %1004 = arith.extui %1003 : vector<2x10xi1> to vector<2x10xi32>
    %1005 = arith.sitofp %1004 : vector<2x10xi32> to vector<2x10xf32>
    %1006 = arith.mulf %1005, %988 : vector<2x10xf32>
    %cst_312 = arith.constant dense<0.000000e+00> : vector<2xf32>
    %1007 = vector.multi_reduction <add>, %1006, %cst_312 [1] : vector<2x10xf32> to vector<2xf32>
    %1008 = vector.shape_cast %1007 : vector<2xf32> to vector<2x1xf32>
    %1009 = arith.addf %930, %1008 : vector<2x1xf32>
    %1010 = arith.mulf %980, %988 : vector<2x10xf32>
    %cst_313 = arith.constant dense<0.000000e+00> : vector<2xf32>
    %1011 = vector.multi_reduction <add>, %1010, %cst_313 [1] : vector<2x10xf32> to vector<2xf32>
    %1012 = vector.shape_cast %1011 : vector<2xf32> to vector<2x1xf32>
    %1013 = arith.mulf %1012, %984 : vector<2x1xf32>
    %1014 = arith.subf %935, %1013 : vector<2x1xf32>
    %c12_i32 = arith.constant 12 : i32
    %1015 = vector.broadcast %c12_i32 : i32 to vector<2x128xi32>
    %1016 = arith.cmpi eq, %1, %1015 : vector<2x128xi32>
    %1017 = arith.extui %1016 : vector<2x128xi1> to vector<2x128xi32>
    %1018 = arith.sitofp %1017 : vector<2x128xi32> to vector<2x128xf32>
    %1019 = vector.broadcast %1001 : vector<2x1xf32> to vector<2x128xf32>
    %1020 = arith.mulf %1019, %1018 : vector<2x128xf32>
    %1021 = arith.addf %942, %1020 : vector<2x128xf32>
    %c5_i32_314 = arith.constant 5 : i32
    %1022 = vector.broadcast %c5_i32_314 : i32 to vector<2x1xi32>
    %1023 = arith.addi %1000, %1022 : vector<2x1xi32>
    %1024 = vector.broadcast %1023 : vector<2x1xi32> to vector<2x10xi32>
    %1025 = arith.cmpi eq, %0, %1024 : vector<2x10xi32>
    %1026 = arith.extui %1025 : vector<2x10xi1> to vector<2x10xi32>
    %1027 = arith.sitofp %1026 : vector<2x10xi32> to vector<2x10xf32>
    %c5_i32_315 = arith.constant 5 : i32
    %1028 = vector.broadcast %c5_i32_315 : i32 to vector<2x10xi32>
    %1029 = arith.cmpi slt, %0, %1028 : vector<2x10xi32>
    %1030 = tpu.concatenate %1027, %971, %3 in 1 : vector<2x10xf32>, vector<2x32xf32>, vector<2x1xf32> -> vector<2x43xf32>
    %cst_316 = arith.constant 0.000000e+00 : f32
    %1031 = vector.broadcast %cst_316 : f32 to vector<2x85xf32>
    %1032 = tpu.concatenate %1030, %1031 in 1 : vector<2x43xf32>, vector<2x85xf32> -> vector<2x128xf32>
    %cst_317 = arith.constant 0.000000e+00 : f32
    %1033 = vector.broadcast %cst_317 : f32 to vector<2x64xf32>
    %cst_318 = arith.constant 0.000000e+00 : f32
    %1034 = vector.broadcast %cst_318 : f32 to vector<2x21xf32>
    %1035 = tpu.concatenate %1033, %1030, %1034 in 1 : vector<2x64xf32>, vector<2x43xf32>, vector<2x21xf32> -> vector<2x128xf32>
    %c0_i32_319 = arith.constant 0 : i32
    %1036 = vector.broadcast %c0_i32_319 : i32 to vector<2x128xi32>
    %1037 = arith.cmpi eq, %2, %1036 : vector<2x128xi32>
    %1038 = arith.select %1037, %1032, %1035 : vector<2x128xi1>, vector<2x128xf32>
    %c0_320 = arith.constant 0 : index
    %c0_321 = arith.constant 0 : index
    %1039 = vector.load %arg2[%c0_320, %c0_321] : memref<128x256xf32, #tpu.memory_space<vmem>>, vector<128x256xf32>
    %cst_322 = arith.constant dense<0.000000e+00> : vector<2x256xf32>
    %1040 = tpu.matmul %1038, %1039, %cst_322 {dimension_numbers = #tpu.dot_dimension_numbers<[1], [0], [0], [1], [0, 0, 1, 1], [], []>} : vector<2x128xf32>, vector<128x256xf32>, vector<2x256xf32> -> vector<2x256xf32>
    %1041 = vector.extract_strided_slice %1040 {offsets = [0, 0], sizes = [2, 128], strides = [1, 1]} : vector<2x256xf32> to vector<2x128xf32>
    %1042 = arith.negf %1041 : vector<2x128xf32>
    %1043 = math.exp %1042 : vector<2x128xf32>
    %cst_323 = arith.constant 1.000000e+00 : f32
    %1044 = vector.broadcast %cst_323 : f32 to vector<2x128xf32>
    %1045 = arith.addf %1044, %1043 : vector<2x128xf32>
    %1046 = arith.divf %1044, %1045 : vector<2x128xf32>
    %1047 = math.tanh %1041 : vector<2x128xf32>
    %1048 = vector.extract_strided_slice %1046 {offsets = [0, 0], sizes = [2, 32], strides = [1, 1]} : vector<2x128xf32> to vector<2x32xf32>
    %1049 = vector.extract_strided_slice %1046 {offsets = [0, 32], sizes = [2, 32], strides = [1, 1]} : vector<2x128xf32> to vector<2x32xf32>
    %1050 = vector.extract_strided_slice %1047 {offsets = [0, 64], sizes = [2, 32], strides = [1, 1]} : vector<2x128xf32> to vector<2x32xf32>
    %1051 = vector.extract_strided_slice %1046 {offsets = [0, 96], sizes = [2, 32], strides = [1, 1]} : vector<2x128xf32> to vector<2x32xf32>
    %1052 = arith.mulf %1049, %969 : vector<2x32xf32>
    %1053 = arith.mulf %1048, %1050 : vector<2x32xf32>
    %1054 = arith.addf %1052, %1053 : vector<2x32xf32>
    %1055 = math.tanh %1054 : vector<2x32xf32>
    %1056 = arith.mulf %1051, %1055 : vector<2x32xf32>
    %1057 = vector.extract_strided_slice %1040 {offsets = [0, 160], sizes = [2, 10], strides = [1, 1]} : vector<2x256xf32> to vector<2x10xf32>
    %cst_324 = arith.constant 2.000000e-01 : f32
    %1058 = vector.broadcast %cst_324 : f32 to vector<2x10xf32>
    %1059 = arith.mulf %1057, %1058 : vector<2x10xf32>
    %1060 = math.tanh %1059 : vector<2x10xf32>
    %cst_325 = arith.constant 1.000000e+00 : f32
    %1061 = vector.broadcast %cst_325 : f32 to vector<2x10xf32>
    %1062 = arith.mulf %1061, %1060 : vector<2x10xf32>
    %1063 = math.exp %1062 : vector<2x10xf32>
    %cst_326 = arith.constant 0.000000e+00 : f32
    %1064 = vector.broadcast %cst_326 : f32 to vector<2x10xf32>
    %1065 = arith.select %1029, %1063, %1064 : vector<2x10xi1>, vector<2x10xf32>
    %cst_327 = arith.constant dense<0.000000e+00> : vector<2xf32>
    %1066 = vector.multi_reduction <add>, %1065, %cst_327 [1] : vector<2x10xf32> to vector<2xf32>
    %1067 = vector.shape_cast %1066 : vector<2xf32> to vector<2x1xf32>
    %1068 = math.log %1067 : vector<2x1xf32>
    %1069 = tpu.reciprocal %1067 {approx = true} : vector<2x1xf32> -> vector<2x1xf32>
    %1070 = vector.broadcast %1068 : vector<2x1xf32> to vector<2x10xf32>
    %1071 = arith.subf %1062, %1070 : vector<2x10xf32>
    %cst_328 = arith.constant 0.000000e+00 : f32
    %1072 = vector.broadcast %cst_328 : f32 to vector<2x10xf32>
    %1073 = arith.select %1029, %1071, %1072 : vector<2x10xi1>, vector<2x10xf32>
    %c0_329 = arith.constant 0 : index
    %c11 = arith.constant 11 : index
    %1074 = vector.load %arg1[%c0_329, %c11] : memref<2x16xf32, #tpu.memory_space<vmem>>, vector<2x1xf32>
    %cst_330 = arith.constant dense<0.000000e+00> : vector<2x10xf32>
    %1075 = tpu.matmul %1065, %9, %cst_330 {dimension_numbers = #tpu.dot_dimension_numbers<[1], [0], [0], [1], [0, 0, 1, 1], [], []>} : vector<2x10xf32>, vector<10x10xf32>, vector<2x10xf32> -> vector<2x10xf32>
    %1076 = arith.mulf %1074, %1067 : vector<2x1xf32>
    %1077 = vector.broadcast %1076 : vector<2x1xf32> to vector<2x10xf32>
    %1078 = arith.cmpf olt, %1075, %1077 : vector<2x10xf32>
    %1079 = arith.extui %1078 : vector<2x10xi1> to vector<2x10xi32>
    %1080 = arith.sitofp %1079 : vector<2x10xi32> to vector<2x10xf32>
    %cst_331 = arith.constant dense<0.000000e+00> : vector<2xf32>
    %1081 = vector.multi_reduction <add>, %1080, %cst_331 [1] : vector<2x10xf32> to vector<2xf32>
    %1082 = vector.shape_cast %1081 : vector<2xf32> to vector<2x1xf32>
    %1083 = arith.fptosi %1082 : vector<2x1xf32> to vector<2x1xi32>
    %c4_i32_332 = arith.constant 4 : i32
    %1084 = vector.broadcast %c4_i32_332 : i32 to vector<2x1xi32>
    %1085 = arith.minsi %1083, %1084 : vector<2x1xi32>
    %1086 = arith.sitofp %1085 : vector<2x1xi32> to vector<2x1xf32>
    %1087 = vector.broadcast %1085 : vector<2x1xi32> to vector<2x10xi32>
    %1088 = arith.cmpi eq, %0, %1087 : vector<2x10xi32>
    %1089 = arith.extui %1088 : vector<2x10xi1> to vector<2x10xi32>
    %1090 = arith.sitofp %1089 : vector<2x10xi32> to vector<2x10xf32>
    %1091 = arith.mulf %1090, %1073 : vector<2x10xf32>
    %cst_333 = arith.constant dense<0.000000e+00> : vector<2xf32>
    %1092 = vector.multi_reduction <add>, %1091, %cst_333 [1] : vector<2x10xf32> to vector<2xf32>
    %1093 = vector.shape_cast %1092 : vector<2xf32> to vector<2x1xf32>
    %1094 = arith.addf %1009, %1093 : vector<2x1xf32>
    %1095 = arith.mulf %1065, %1073 : vector<2x10xf32>
    %cst_334 = arith.constant dense<0.000000e+00> : vector<2xf32>
    %1096 = vector.multi_reduction <add>, %1095, %cst_334 [1] : vector<2x10xf32> to vector<2xf32>
    %1097 = vector.shape_cast %1096 : vector<2xf32> to vector<2x1xf32>
    %1098 = arith.mulf %1097, %1069 : vector<2x1xf32>
    %1099 = arith.subf %1014, %1098 : vector<2x1xf32>
    %c13_i32 = arith.constant 13 : i32
    %1100 = vector.broadcast %c13_i32 : i32 to vector<2x128xi32>
    %1101 = arith.cmpi eq, %1, %1100 : vector<2x128xi32>
    %1102 = arith.extui %1101 : vector<2x128xi1> to vector<2x128xi32>
    %1103 = arith.sitofp %1102 : vector<2x128xi32> to vector<2x128xf32>
    %1104 = vector.broadcast %1086 : vector<2x1xf32> to vector<2x128xf32>
    %1105 = arith.mulf %1104, %1103 : vector<2x128xf32>
    %1106 = arith.addf %1021, %1105 : vector<2x128xf32>
    %c5_i32_335 = arith.constant 5 : i32
    %1107 = vector.broadcast %c5_i32_335 : i32 to vector<2x1xi32>
    %1108 = arith.addi %1085, %1107 : vector<2x1xi32>
    %1109 = vector.broadcast %1108 : vector<2x1xi32> to vector<2x10xi32>
    %1110 = arith.cmpi eq, %0, %1109 : vector<2x10xi32>
    %1111 = arith.extui %1110 : vector<2x10xi1> to vector<2x10xi32>
    %1112 = arith.sitofp %1111 : vector<2x10xi32> to vector<2x10xf32>
    %c5_i32_336 = arith.constant 5 : i32
    %1113 = vector.broadcast %c5_i32_336 : i32 to vector<2x10xi32>
    %1114 = arith.cmpi slt, %0, %1113 : vector<2x10xi32>
    %1115 = tpu.concatenate %1112, %1056, %3 in 1 : vector<2x10xf32>, vector<2x32xf32>, vector<2x1xf32> -> vector<2x43xf32>
    %cst_337 = arith.constant 0.000000e+00 : f32
    %1116 = vector.broadcast %cst_337 : f32 to vector<2x85xf32>
    %1117 = tpu.concatenate %1115, %1116 in 1 : vector<2x43xf32>, vector<2x85xf32> -> vector<2x128xf32>
    %cst_338 = arith.constant 0.000000e+00 : f32
    %1118 = vector.broadcast %cst_338 : f32 to vector<2x64xf32>
    %cst_339 = arith.constant 0.000000e+00 : f32
    %1119 = vector.broadcast %cst_339 : f32 to vector<2x21xf32>
    %1120 = tpu.concatenate %1118, %1115, %1119 in 1 : vector<2x64xf32>, vector<2x43xf32>, vector<2x21xf32> -> vector<2x128xf32>
    %c0_i32_340 = arith.constant 0 : i32
    %1121 = vector.broadcast %c0_i32_340 : i32 to vector<2x128xi32>
    %1122 = arith.cmpi eq, %2, %1121 : vector<2x128xi32>
    %1123 = arith.select %1122, %1117, %1120 : vector<2x128xi1>, vector<2x128xf32>
    %c0_341 = arith.constant 0 : index
    %c0_342 = arith.constant 0 : index
    %1124 = vector.load %arg2[%c0_341, %c0_342] : memref<128x256xf32, #tpu.memory_space<vmem>>, vector<128x256xf32>
    %cst_343 = arith.constant dense<0.000000e+00> : vector<2x256xf32>
    %1125 = tpu.matmul %1123, %1124, %cst_343 {dimension_numbers = #tpu.dot_dimension_numbers<[1], [0], [0], [1], [0, 0, 1, 1], [], []>} : vector<2x128xf32>, vector<128x256xf32>, vector<2x256xf32> -> vector<2x256xf32>
    %1126 = vector.extract_strided_slice %1125 {offsets = [0, 0], sizes = [2, 128], strides = [1, 1]} : vector<2x256xf32> to vector<2x128xf32>
    %1127 = arith.negf %1126 : vector<2x128xf32>
    %1128 = math.exp %1127 : vector<2x128xf32>
    %cst_344 = arith.constant 1.000000e+00 : f32
    %1129 = vector.broadcast %cst_344 : f32 to vector<2x128xf32>
    %1130 = arith.addf %1129, %1128 : vector<2x128xf32>
    %1131 = arith.divf %1129, %1130 : vector<2x128xf32>
    %1132 = math.tanh %1126 : vector<2x128xf32>
    %1133 = vector.extract_strided_slice %1131 {offsets = [0, 0], sizes = [2, 32], strides = [1, 1]} : vector<2x128xf32> to vector<2x32xf32>
    %1134 = vector.extract_strided_slice %1131 {offsets = [0, 32], sizes = [2, 32], strides = [1, 1]} : vector<2x128xf32> to vector<2x32xf32>
    %1135 = vector.extract_strided_slice %1132 {offsets = [0, 64], sizes = [2, 32], strides = [1, 1]} : vector<2x128xf32> to vector<2x32xf32>
    %1136 = vector.extract_strided_slice %1131 {offsets = [0, 96], sizes = [2, 32], strides = [1, 1]} : vector<2x128xf32> to vector<2x32xf32>
    %1137 = arith.mulf %1134, %1054 : vector<2x32xf32>
    %1138 = arith.mulf %1133, %1135 : vector<2x32xf32>
    %1139 = arith.addf %1137, %1138 : vector<2x32xf32>
    %1140 = math.tanh %1139 : vector<2x32xf32>
    %1141 = arith.mulf %1136, %1140 : vector<2x32xf32>
    %1142 = vector.extract_strided_slice %1125 {offsets = [0, 128], sizes = [2, 32], strides = [1, 1]} : vector<2x256xf32> to vector<2x32xf32>
    %c0_345 = arith.constant 0 : index
    %c0_346 = arith.constant 0 : index
    %c0_347 = arith.constant 0 : index
    %1143 = vector.load %arg3[%c0_345, %c0_346, %c0_347] : memref<2x10x32xf32, #tpu.memory_space<vmem>>, vector<1x10x32xf32>
    %1144 = vector.shape_cast %1143 : vector<1x10x32xf32> to vector<10x32xf32>
    %1145 = vector.extract_strided_slice %1142 {offsets = [0, 0], sizes = [1, 32], strides = [1, 1]} : vector<2x32xf32> to vector<1x32xf32>
    %1146 = vector.broadcast %1145 : vector<1x32xf32> to vector<10x32xf32>
    %1147 = arith.addf %1144, %1146 : vector<10x32xf32>
    %1148 = math.tanh %1147 : vector<10x32xf32>
    %c1_348 = arith.constant 1 : index
    %c0_349 = arith.constant 0 : index
    %c0_350 = arith.constant 0 : index
    %1149 = vector.load %arg3[%c1_348, %c0_349, %c0_350] : memref<2x10x32xf32, #tpu.memory_space<vmem>>, vector<1x10x32xf32>
    %1150 = vector.shape_cast %1149 : vector<1x10x32xf32> to vector<10x32xf32>
    %1151 = vector.extract_strided_slice %1142 {offsets = [1, 0], sizes = [1, 32], strides = [1, 1]} : vector<2x32xf32> to vector<1x32xf32>
    %1152 = vector.broadcast %1151 : vector<1x32xf32> to vector<10x32xf32>
    %1153 = arith.addf %1150, %1152 : vector<10x32xf32>
    %1154 = math.tanh %1153 : vector<10x32xf32>
    %c0_351 = arith.constant 0 : index
    %c0_352 = arith.constant 0 : index
    %c0_353 = arith.constant 0 : index
    %1155 = vector.load %arg4[%c0_351, %c0_352, %c0_353] : memref<2x1x32xf32, #tpu.memory_space<vmem>>, vector<1x1x32xf32>
    %1156 = vector.shape_cast %1155 : vector<1x1x32xf32> to vector<1x32xf32>
    %cst_354 = arith.constant dense<0.000000e+00> : vector<1x10xf32>
    %1157 = tpu.matmul %1156, %1148, %cst_354 {dimension_numbers = #tpu.dot_dimension_numbers<[1], [1], [0], [0], [0, 0, 1, 0], [], []>} : vector<1x32xf32>, vector<10x32xf32>, vector<1x10xf32> -> vector<1x10xf32>
    %c1_355 = arith.constant 1 : index
    %c0_356 = arith.constant 0 : index
    %c0_357 = arith.constant 0 : index
    %1158 = vector.load %arg4[%c1_355, %c0_356, %c0_357] : memref<2x1x32xf32, #tpu.memory_space<vmem>>, vector<1x1x32xf32>
    %1159 = vector.shape_cast %1158 : vector<1x1x32xf32> to vector<1x32xf32>
    %cst_358 = arith.constant dense<0.000000e+00> : vector<1x10xf32>
    %1160 = tpu.matmul %1159, %1154, %cst_358 {dimension_numbers = #tpu.dot_dimension_numbers<[1], [1], [0], [0], [0, 0, 1, 0], [], []>} : vector<1x32xf32>, vector<10x32xf32>, vector<1x10xf32> -> vector<1x10xf32>
    %1161 = tpu.concatenate %1157, %1160 in 0 : vector<1x10xf32>, vector<1x10xf32> -> vector<2x10xf32>
    %cst_359 = arith.constant 2.000000e-01 : f32
    %1162 = vector.broadcast %cst_359 : f32 to vector<2x10xf32>
    %1163 = arith.mulf %1161, %1162 : vector<2x10xf32>
    %1164 = math.tanh %1163 : vector<2x10xf32>
    %cst_360 = arith.constant 2.500000e+00 : f32
    %1165 = vector.broadcast %cst_360 : f32 to vector<2x10xf32>
    %1166 = arith.mulf %1165, %1164 : vector<2x10xf32>
    %1167 = math.exp %1166 : vector<2x10xf32>
    %cst_361 = arith.constant 0.000000e+00 : f32
    %1168 = vector.broadcast %cst_361 : f32 to vector<2x10xf32>
    %1169 = arith.select %1114, %1167, %1168 : vector<2x10xi1>, vector<2x10xf32>
    %cst_362 = arith.constant dense<0.000000e+00> : vector<2xf32>
    %1170 = vector.multi_reduction <add>, %1169, %cst_362 [1] : vector<2x10xf32> to vector<2xf32>
    %1171 = vector.shape_cast %1170 : vector<2xf32> to vector<2x1xf32>
    %1172 = math.log %1171 : vector<2x1xf32>
    %1173 = tpu.reciprocal %1171 {approx = true} : vector<2x1xf32> -> vector<2x1xf32>
    %1174 = vector.broadcast %1172 : vector<2x1xf32> to vector<2x10xf32>
    %1175 = arith.subf %1166, %1174 : vector<2x10xf32>
    %cst_363 = arith.constant 0.000000e+00 : f32
    %1176 = vector.broadcast %cst_363 : f32 to vector<2x10xf32>
    %1177 = arith.select %1114, %1175, %1176 : vector<2x10xi1>, vector<2x10xf32>
    %c0_364 = arith.constant 0 : index
    %c12 = arith.constant 12 : index
    %1178 = vector.load %arg1[%c0_364, %c12] : memref<2x16xf32, #tpu.memory_space<vmem>>, vector<2x1xf32>
    %cst_365 = arith.constant dense<0.000000e+00> : vector<2x10xf32>
    %1179 = tpu.matmul %1169, %9, %cst_365 {dimension_numbers = #tpu.dot_dimension_numbers<[1], [0], [0], [1], [0, 0, 1, 1], [], []>} : vector<2x10xf32>, vector<10x10xf32>, vector<2x10xf32> -> vector<2x10xf32>
    %1180 = arith.mulf %1178, %1171 : vector<2x1xf32>
    %1181 = vector.broadcast %1180 : vector<2x1xf32> to vector<2x10xf32>
    %1182 = arith.cmpf olt, %1179, %1181 : vector<2x10xf32>
    %1183 = arith.extui %1182 : vector<2x10xi1> to vector<2x10xi32>
    %1184 = arith.sitofp %1183 : vector<2x10xi32> to vector<2x10xf32>
    %cst_366 = arith.constant dense<0.000000e+00> : vector<2xf32>
    %1185 = vector.multi_reduction <add>, %1184, %cst_366 [1] : vector<2x10xf32> to vector<2xf32>
    %1186 = vector.shape_cast %1185 : vector<2xf32> to vector<2x1xf32>
    %1187 = arith.fptosi %1186 : vector<2x1xf32> to vector<2x1xi32>
    %c4_i32_367 = arith.constant 4 : i32
    %1188 = vector.broadcast %c4_i32_367 : i32 to vector<2x1xi32>
    %1189 = arith.minsi %1187, %1188 : vector<2x1xi32>
    %1190 = arith.sitofp %1189 : vector<2x1xi32> to vector<2x1xf32>
    %1191 = vector.broadcast %1189 : vector<2x1xi32> to vector<2x10xi32>
    %1192 = arith.cmpi eq, %0, %1191 : vector<2x10xi32>
    %1193 = arith.extui %1192 : vector<2x10xi1> to vector<2x10xi32>
    %1194 = arith.sitofp %1193 : vector<2x10xi32> to vector<2x10xf32>
    %1195 = arith.mulf %1194, %1177 : vector<2x10xf32>
    %cst_368 = arith.constant dense<0.000000e+00> : vector<2xf32>
    %1196 = vector.multi_reduction <add>, %1195, %cst_368 [1] : vector<2x10xf32> to vector<2xf32>
    %1197 = vector.shape_cast %1196 : vector<2xf32> to vector<2x1xf32>
    %1198 = arith.addf %1094, %1197 : vector<2x1xf32>
    %1199 = arith.mulf %1169, %1177 : vector<2x10xf32>
    %cst_369 = arith.constant dense<0.000000e+00> : vector<2xf32>
    %1200 = vector.multi_reduction <add>, %1199, %cst_369 [1] : vector<2x10xf32> to vector<2xf32>
    %1201 = vector.shape_cast %1200 : vector<2xf32> to vector<2x1xf32>
    %1202 = arith.mulf %1201, %1173 : vector<2x1xf32>
    %1203 = arith.subf %1099, %1202 : vector<2x1xf32>
    %c6_i32 = arith.constant 6 : i32
    %1204 = vector.broadcast %c6_i32 : i32 to vector<2x128xi32>
    %1205 = arith.cmpi eq, %1, %1204 : vector<2x128xi32>
    %1206 = arith.extui %1205 : vector<2x128xi1> to vector<2x128xi32>
    %1207 = arith.sitofp %1206 : vector<2x128xi32> to vector<2x128xf32>
    %1208 = vector.broadcast %1190 : vector<2x1xf32> to vector<2x128xf32>
    %1209 = arith.mulf %1208, %1207 : vector<2x128xf32>
    %1210 = arith.addf %1106, %1209 : vector<2x128xf32>
    %c5_i32_370 = arith.constant 5 : i32
    %1211 = vector.broadcast %c5_i32_370 : i32 to vector<2x10xi32>
    %1212 = arith.cmpi slt, %0, %1211 : vector<2x10xi32>
    %1213 = tpu.concatenate %1194, %1141, %3 in 1 : vector<2x10xf32>, vector<2x32xf32>, vector<2x1xf32> -> vector<2x43xf32>
    %cst_371 = arith.constant 0.000000e+00 : f32
    %1214 = vector.broadcast %cst_371 : f32 to vector<2x85xf32>
    %1215 = tpu.concatenate %1213, %1214 in 1 : vector<2x43xf32>, vector<2x85xf32> -> vector<2x128xf32>
    %cst_372 = arith.constant 0.000000e+00 : f32
    %1216 = vector.broadcast %cst_372 : f32 to vector<2x64xf32>
    %cst_373 = arith.constant 0.000000e+00 : f32
    %1217 = vector.broadcast %cst_373 : f32 to vector<2x21xf32>
    %1218 = tpu.concatenate %1216, %1213, %1217 in 1 : vector<2x64xf32>, vector<2x43xf32>, vector<2x21xf32> -> vector<2x128xf32>
    %c0_i32_374 = arith.constant 0 : i32
    %1219 = vector.broadcast %c0_i32_374 : i32 to vector<2x128xi32>
    %1220 = arith.cmpi eq, %2, %1219 : vector<2x128xi32>
    %1221 = arith.select %1220, %1215, %1218 : vector<2x128xi1>, vector<2x128xf32>
    %c0_375 = arith.constant 0 : index
    %c0_376 = arith.constant 0 : index
    %1222 = vector.load %arg2[%c0_375, %c0_376] : memref<128x256xf32, #tpu.memory_space<vmem>>, vector<128x256xf32>
    %cst_377 = arith.constant dense<0.000000e+00> : vector<2x256xf32>
    %1223 = tpu.matmul %1221, %1222, %cst_377 {dimension_numbers = #tpu.dot_dimension_numbers<[1], [0], [0], [1], [0, 0, 1, 1], [], []>} : vector<2x128xf32>, vector<128x256xf32>, vector<2x256xf32> -> vector<2x256xf32>
    %1224 = vector.extract_strided_slice %1223 {offsets = [0, 0], sizes = [2, 128], strides = [1, 1]} : vector<2x256xf32> to vector<2x128xf32>
    %1225 = arith.negf %1224 : vector<2x128xf32>
    %1226 = math.exp %1225 : vector<2x128xf32>
    %cst_378 = arith.constant 1.000000e+00 : f32
    %1227 = vector.broadcast %cst_378 : f32 to vector<2x128xf32>
    %1228 = arith.addf %1227, %1226 : vector<2x128xf32>
    %1229 = arith.divf %1227, %1228 : vector<2x128xf32>
    %1230 = math.tanh %1224 : vector<2x128xf32>
    %1231 = vector.extract_strided_slice %1229 {offsets = [0, 0], sizes = [2, 32], strides = [1, 1]} : vector<2x128xf32> to vector<2x32xf32>
    %1232 = vector.extract_strided_slice %1229 {offsets = [0, 32], sizes = [2, 32], strides = [1, 1]} : vector<2x128xf32> to vector<2x32xf32>
    %1233 = vector.extract_strided_slice %1230 {offsets = [0, 64], sizes = [2, 32], strides = [1, 1]} : vector<2x128xf32> to vector<2x32xf32>
    %1234 = vector.extract_strided_slice %1229 {offsets = [0, 96], sizes = [2, 32], strides = [1, 1]} : vector<2x128xf32> to vector<2x32xf32>
    %1235 = arith.mulf %1232, %1139 : vector<2x32xf32>
    %1236 = arith.mulf %1231, %1233 : vector<2x32xf32>
    %1237 = arith.addf %1235, %1236 : vector<2x32xf32>
    %1238 = math.tanh %1237 : vector<2x32xf32>
    %1239 = arith.mulf %1234, %1238 : vector<2x32xf32>
    %1240 = vector.extract_strided_slice %1223 {offsets = [0, 128], sizes = [2, 32], strides = [1, 1]} : vector<2x256xf32> to vector<2x32xf32>
    %c0_379 = arith.constant 0 : index
    %c0_380 = arith.constant 0 : index
    %c0_381 = arith.constant 0 : index
    %1241 = vector.load %arg3[%c0_379, %c0_380, %c0_381] : memref<2x10x32xf32, #tpu.memory_space<vmem>>, vector<1x10x32xf32>
    %1242 = vector.shape_cast %1241 : vector<1x10x32xf32> to vector<10x32xf32>
    %1243 = vector.extract_strided_slice %1240 {offsets = [0, 0], sizes = [1, 32], strides = [1, 1]} : vector<2x32xf32> to vector<1x32xf32>
    %1244 = vector.broadcast %1243 : vector<1x32xf32> to vector<10x32xf32>
    %1245 = arith.addf %1242, %1244 : vector<10x32xf32>
    %1246 = math.tanh %1245 : vector<10x32xf32>
    %c1_382 = arith.constant 1 : index
    %c0_383 = arith.constant 0 : index
    %c0_384 = arith.constant 0 : index
    %1247 = vector.load %arg3[%c1_382, %c0_383, %c0_384] : memref<2x10x32xf32, #tpu.memory_space<vmem>>, vector<1x10x32xf32>
    %1248 = vector.shape_cast %1247 : vector<1x10x32xf32> to vector<10x32xf32>
    %1249 = vector.extract_strided_slice %1240 {offsets = [1, 0], sizes = [1, 32], strides = [1, 1]} : vector<2x32xf32> to vector<1x32xf32>
    %1250 = vector.broadcast %1249 : vector<1x32xf32> to vector<10x32xf32>
    %1251 = arith.addf %1248, %1250 : vector<10x32xf32>
    %1252 = math.tanh %1251 : vector<10x32xf32>
    %c0_385 = arith.constant 0 : index
    %c0_386 = arith.constant 0 : index
    %c0_387 = arith.constant 0 : index
    %1253 = vector.load %arg4[%c0_385, %c0_386, %c0_387] : memref<2x1x32xf32, #tpu.memory_space<vmem>>, vector<1x1x32xf32>
    %1254 = vector.shape_cast %1253 : vector<1x1x32xf32> to vector<1x32xf32>
    %cst_388 = arith.constant dense<0.000000e+00> : vector<1x10xf32>
    %1255 = tpu.matmul %1254, %1246, %cst_388 {dimension_numbers = #tpu.dot_dimension_numbers<[1], [1], [0], [0], [0, 0, 1, 0], [], []>} : vector<1x32xf32>, vector<10x32xf32>, vector<1x10xf32> -> vector<1x10xf32>
    %c1_389 = arith.constant 1 : index
    %c0_390 = arith.constant 0 : index
    %c0_391 = arith.constant 0 : index
    %1256 = vector.load %arg4[%c1_389, %c0_390, %c0_391] : memref<2x1x32xf32, #tpu.memory_space<vmem>>, vector<1x1x32xf32>
    %1257 = vector.shape_cast %1256 : vector<1x1x32xf32> to vector<1x32xf32>
    %cst_392 = arith.constant dense<0.000000e+00> : vector<1x10xf32>
    %1258 = tpu.matmul %1257, %1252, %cst_392 {dimension_numbers = #tpu.dot_dimension_numbers<[1], [1], [0], [0], [0, 0, 1, 0], [], []>} : vector<1x32xf32>, vector<10x32xf32>, vector<1x10xf32> -> vector<1x10xf32>
    %1259 = tpu.concatenate %1255, %1258 in 0 : vector<1x10xf32>, vector<1x10xf32> -> vector<2x10xf32>
    %cst_393 = arith.constant 2.000000e-01 : f32
    %1260 = vector.broadcast %cst_393 : f32 to vector<2x10xf32>
    %1261 = arith.mulf %1259, %1260 : vector<2x10xf32>
    %1262 = math.tanh %1261 : vector<2x10xf32>
    %cst_394 = arith.constant 2.500000e+00 : f32
    %1263 = vector.broadcast %cst_394 : f32 to vector<2x10xf32>
    %1264 = arith.mulf %1263, %1262 : vector<2x10xf32>
    %1265 = math.exp %1264 : vector<2x10xf32>
    %cst_395 = arith.constant 0.000000e+00 : f32
    %1266 = vector.broadcast %cst_395 : f32 to vector<2x10xf32>
    %1267 = arith.select %1212, %1265, %1266 : vector<2x10xi1>, vector<2x10xf32>
    %cst_396 = arith.constant dense<0.000000e+00> : vector<2xf32>
    %1268 = vector.multi_reduction <add>, %1267, %cst_396 [1] : vector<2x10xf32> to vector<2xf32>
    %1269 = vector.shape_cast %1268 : vector<2xf32> to vector<2x1xf32>
    %1270 = math.log %1269 : vector<2x1xf32>
    %1271 = tpu.reciprocal %1269 {approx = true} : vector<2x1xf32> -> vector<2x1xf32>
    %1272 = vector.broadcast %1270 : vector<2x1xf32> to vector<2x10xf32>
    %1273 = arith.subf %1264, %1272 : vector<2x10xf32>
    %cst_397 = arith.constant 0.000000e+00 : f32
    %1274 = vector.broadcast %cst_397 : f32 to vector<2x10xf32>
    %1275 = arith.select %1212, %1273, %1274 : vector<2x10xi1>, vector<2x10xf32>
    %c0_398 = arith.constant 0 : index
    %c13 = arith.constant 13 : index
    %1276 = vector.load %arg1[%c0_398, %c13] : memref<2x16xf32, #tpu.memory_space<vmem>>, vector<2x1xf32>
    %cst_399 = arith.constant dense<0.000000e+00> : vector<2x10xf32>
    %1277 = tpu.matmul %1267, %9, %cst_399 {dimension_numbers = #tpu.dot_dimension_numbers<[1], [0], [0], [1], [0, 0, 1, 1], [], []>} : vector<2x10xf32>, vector<10x10xf32>, vector<2x10xf32> -> vector<2x10xf32>
    %1278 = arith.mulf %1276, %1269 : vector<2x1xf32>
    %1279 = vector.broadcast %1278 : vector<2x1xf32> to vector<2x10xf32>
    %1280 = arith.cmpf olt, %1277, %1279 : vector<2x10xf32>
    %1281 = arith.extui %1280 : vector<2x10xi1> to vector<2x10xi32>
    %1282 = arith.sitofp %1281 : vector<2x10xi32> to vector<2x10xf32>
    %cst_400 = arith.constant dense<0.000000e+00> : vector<2xf32>
    %1283 = vector.multi_reduction <add>, %1282, %cst_400 [1] : vector<2x10xf32> to vector<2xf32>
    %1284 = vector.shape_cast %1283 : vector<2xf32> to vector<2x1xf32>
    %1285 = arith.fptosi %1284 : vector<2x1xf32> to vector<2x1xi32>
    %c4_i32_401 = arith.constant 4 : i32
    %1286 = vector.broadcast %c4_i32_401 : i32 to vector<2x1xi32>
    %1287 = arith.minsi %1285, %1286 : vector<2x1xi32>
    %1288 = arith.sitofp %1287 : vector<2x1xi32> to vector<2x1xf32>
    %1289 = vector.broadcast %1287 : vector<2x1xi32> to vector<2x10xi32>
    %1290 = arith.cmpi eq, %0, %1289 : vector<2x10xi32>
    %1291 = arith.extui %1290 : vector<2x10xi1> to vector<2x10xi32>
    %1292 = arith.sitofp %1291 : vector<2x10xi32> to vector<2x10xf32>
    %1293 = arith.mulf %1292, %1275 : vector<2x10xf32>
    %cst_402 = arith.constant dense<0.000000e+00> : vector<2xf32>
    %1294 = vector.multi_reduction <add>, %1293, %cst_402 [1] : vector<2x10xf32> to vector<2xf32>
    %1295 = vector.shape_cast %1294 : vector<2xf32> to vector<2x1xf32>
    %1296 = arith.addf %1198, %1295 : vector<2x1xf32>
    %1297 = arith.mulf %1267, %1275 : vector<2x10xf32>
    %cst_403 = arith.constant dense<0.000000e+00> : vector<2xf32>
    %1298 = vector.multi_reduction <add>, %1297, %cst_403 [1] : vector<2x10xf32> to vector<2xf32>
    %1299 = vector.shape_cast %1298 : vector<2xf32> to vector<2x1xf32>
    %1300 = arith.mulf %1299, %1271 : vector<2x1xf32>
    %1301 = arith.subf %1203, %1300 : vector<2x1xf32>
    %c7_i32 = arith.constant 7 : i32
    %1302 = vector.broadcast %c7_i32 : i32 to vector<2x128xi32>
    %1303 = arith.cmpi eq, %1, %1302 : vector<2x128xi32>
    %1304 = arith.extui %1303 : vector<2x128xi1> to vector<2x128xi32>
    %1305 = arith.sitofp %1304 : vector<2x128xi32> to vector<2x128xf32>
    %1306 = vector.broadcast %1288 : vector<2x1xf32> to vector<2x128xf32>
    %1307 = arith.mulf %1306, %1305 : vector<2x128xf32>
    %1308 = arith.addf %1210, %1307 : vector<2x128xf32>
    %c5_i32_404 = arith.constant 5 : i32
    %1309 = vector.broadcast %c5_i32_404 : i32 to vector<2x10xi32>
    %1310 = arith.cmpi slt, %0, %1309 : vector<2x10xi32>
    %1311 = tpu.concatenate %1292, %1239, %3 in 1 : vector<2x10xf32>, vector<2x32xf32>, vector<2x1xf32> -> vector<2x43xf32>
    %cst_405 = arith.constant 0.000000e+00 : f32
    %1312 = vector.broadcast %cst_405 : f32 to vector<2x85xf32>
    %1313 = tpu.concatenate %1311, %1312 in 1 : vector<2x43xf32>, vector<2x85xf32> -> vector<2x128xf32>
    %cst_406 = arith.constant 0.000000e+00 : f32
    %1314 = vector.broadcast %cst_406 : f32 to vector<2x64xf32>
    %cst_407 = arith.constant 0.000000e+00 : f32
    %1315 = vector.broadcast %cst_407 : f32 to vector<2x21xf32>
    %1316 = tpu.concatenate %1314, %1311, %1315 in 1 : vector<2x64xf32>, vector<2x43xf32>, vector<2x21xf32> -> vector<2x128xf32>
    %c0_i32_408 = arith.constant 0 : i32
    %1317 = vector.broadcast %c0_i32_408 : i32 to vector<2x128xi32>
    %1318 = arith.cmpi eq, %2, %1317 : vector<2x128xi32>
    %1319 = arith.select %1318, %1313, %1316 : vector<2x128xi1>, vector<2x128xf32>
    %c0_409 = arith.constant 0 : index
    %c0_410 = arith.constant 0 : index
    %1320 = vector.load %arg2[%c0_409, %c0_410] : memref<128x256xf32, #tpu.memory_space<vmem>>, vector<128x256xf32>
    %cst_411 = arith.constant dense<0.000000e+00> : vector<2x256xf32>
    %1321 = tpu.matmul %1319, %1320, %cst_411 {dimension_numbers = #tpu.dot_dimension_numbers<[1], [0], [0], [1], [0, 0, 1, 1], [], []>} : vector<2x128xf32>, vector<128x256xf32>, vector<2x256xf32> -> vector<2x256xf32>
    %1322 = vector.extract_strided_slice %1321 {offsets = [0, 0], sizes = [2, 128], strides = [1, 1]} : vector<2x256xf32> to vector<2x128xf32>
    %1323 = arith.negf %1322 : vector<2x128xf32>
    %1324 = math.exp %1323 : vector<2x128xf32>
    %cst_412 = arith.constant 1.000000e+00 : f32
    %1325 = vector.broadcast %cst_412 : f32 to vector<2x128xf32>
    %1326 = arith.addf %1325, %1324 : vector<2x128xf32>
    %1327 = arith.divf %1325, %1326 : vector<2x128xf32>
    %1328 = math.tanh %1322 : vector<2x128xf32>
    %1329 = vector.extract_strided_slice %1327 {offsets = [0, 0], sizes = [2, 32], strides = [1, 1]} : vector<2x128xf32> to vector<2x32xf32>
    %1330 = vector.extract_strided_slice %1327 {offsets = [0, 32], sizes = [2, 32], strides = [1, 1]} : vector<2x128xf32> to vector<2x32xf32>
    %1331 = vector.extract_strided_slice %1328 {offsets = [0, 64], sizes = [2, 32], strides = [1, 1]} : vector<2x128xf32> to vector<2x32xf32>
    %1332 = vector.extract_strided_slice %1327 {offsets = [0, 96], sizes = [2, 32], strides = [1, 1]} : vector<2x128xf32> to vector<2x32xf32>
    %1333 = arith.mulf %1330, %1237 : vector<2x32xf32>
    %1334 = arith.mulf %1329, %1331 : vector<2x32xf32>
    %1335 = arith.addf %1333, %1334 : vector<2x32xf32>
    %1336 = math.tanh %1335 : vector<2x32xf32>
    %1337 = arith.mulf %1332, %1336 : vector<2x32xf32>
    %1338 = vector.extract_strided_slice %1321 {offsets = [0, 160], sizes = [2, 10], strides = [1, 1]} : vector<2x256xf32> to vector<2x10xf32>
    %cst_413 = arith.constant 2.000000e-01 : f32
    %1339 = vector.broadcast %cst_413 : f32 to vector<2x10xf32>
    %1340 = arith.mulf %1338, %1339 : vector<2x10xf32>
    %1341 = math.tanh %1340 : vector<2x10xf32>
    %cst_414 = arith.constant 1.000000e+00 : f32
    %1342 = vector.broadcast %cst_414 : f32 to vector<2x10xf32>
    %1343 = arith.mulf %1342, %1341 : vector<2x10xf32>
    %1344 = math.exp %1343 : vector<2x10xf32>
    %cst_415 = arith.constant 0.000000e+00 : f32
    %1345 = vector.broadcast %cst_415 : f32 to vector<2x10xf32>
    %1346 = arith.select %1310, %1344, %1345 : vector<2x10xi1>, vector<2x10xf32>
    %cst_416 = arith.constant dense<0.000000e+00> : vector<2xf32>
    %1347 = vector.multi_reduction <add>, %1346, %cst_416 [1] : vector<2x10xf32> to vector<2xf32>
    %1348 = vector.shape_cast %1347 : vector<2xf32> to vector<2x1xf32>
    %1349 = math.log %1348 : vector<2x1xf32>
    %1350 = tpu.reciprocal %1348 {approx = true} : vector<2x1xf32> -> vector<2x1xf32>
    %1351 = vector.broadcast %1349 : vector<2x1xf32> to vector<2x10xf32>
    %1352 = arith.subf %1343, %1351 : vector<2x10xf32>
    %cst_417 = arith.constant 0.000000e+00 : f32
    %1353 = vector.broadcast %cst_417 : f32 to vector<2x10xf32>
    %1354 = arith.select %1310, %1352, %1353 : vector<2x10xi1>, vector<2x10xf32>
    %c0_418 = arith.constant 0 : index
    %c14 = arith.constant 14 : index
    %1355 = vector.load %arg1[%c0_418, %c14] : memref<2x16xf32, #tpu.memory_space<vmem>>, vector<2x1xf32>
    %cst_419 = arith.constant dense<0.000000e+00> : vector<2x10xf32>
    %1356 = tpu.matmul %1346, %9, %cst_419 {dimension_numbers = #tpu.dot_dimension_numbers<[1], [0], [0], [1], [0, 0, 1, 1], [], []>} : vector<2x10xf32>, vector<10x10xf32>, vector<2x10xf32> -> vector<2x10xf32>
    %1357 = arith.mulf %1355, %1348 : vector<2x1xf32>
    %1358 = vector.broadcast %1357 : vector<2x1xf32> to vector<2x10xf32>
    %1359 = arith.cmpf olt, %1356, %1358 : vector<2x10xf32>
    %1360 = arith.extui %1359 : vector<2x10xi1> to vector<2x10xi32>
    %1361 = arith.sitofp %1360 : vector<2x10xi32> to vector<2x10xf32>
    %cst_420 = arith.constant dense<0.000000e+00> : vector<2xf32>
    %1362 = vector.multi_reduction <add>, %1361, %cst_420 [1] : vector<2x10xf32> to vector<2xf32>
    %1363 = vector.shape_cast %1362 : vector<2xf32> to vector<2x1xf32>
    %1364 = arith.fptosi %1363 : vector<2x1xf32> to vector<2x1xi32>
    %c4_i32_421 = arith.constant 4 : i32
    %1365 = vector.broadcast %c4_i32_421 : i32 to vector<2x1xi32>
    %1366 = arith.minsi %1364, %1365 : vector<2x1xi32>
    %1367 = arith.sitofp %1366 : vector<2x1xi32> to vector<2x1xf32>
    %1368 = vector.broadcast %1366 : vector<2x1xi32> to vector<2x10xi32>
    %1369 = arith.cmpi eq, %0, %1368 : vector<2x10xi32>
    %1370 = arith.extui %1369 : vector<2x10xi1> to vector<2x10xi32>
    %1371 = arith.sitofp %1370 : vector<2x10xi32> to vector<2x10xf32>
    %1372 = arith.mulf %1371, %1354 : vector<2x10xf32>
    %cst_422 = arith.constant dense<0.000000e+00> : vector<2xf32>
    %1373 = vector.multi_reduction <add>, %1372, %cst_422 [1] : vector<2x10xf32> to vector<2xf32>
    %1374 = vector.shape_cast %1373 : vector<2xf32> to vector<2x1xf32>
    %1375 = arith.addf %1296, %1374 : vector<2x1xf32>
    %1376 = arith.mulf %1346, %1354 : vector<2x10xf32>
    %cst_423 = arith.constant dense<0.000000e+00> : vector<2xf32>
    %1377 = vector.multi_reduction <add>, %1376, %cst_423 [1] : vector<2x10xf32> to vector<2xf32>
    %1378 = vector.shape_cast %1377 : vector<2xf32> to vector<2x1xf32>
    %1379 = arith.mulf %1378, %1350 : vector<2x1xf32>
    %1380 = arith.subf %1301, %1379 : vector<2x1xf32>
    %c14_i32 = arith.constant 14 : i32
    %1381 = vector.broadcast %c14_i32 : i32 to vector<2x128xi32>
    %1382 = arith.cmpi eq, %1, %1381 : vector<2x128xi32>
    %1383 = arith.extui %1382 : vector<2x128xi1> to vector<2x128xi32>
    %1384 = arith.sitofp %1383 : vector<2x128xi32> to vector<2x128xf32>
    %1385 = vector.broadcast %1367 : vector<2x1xf32> to vector<2x128xf32>
    %1386 = arith.mulf %1385, %1384 : vector<2x128xf32>
    %1387 = arith.addf %1308, %1386 : vector<2x128xf32>
    %c5_i32_424 = arith.constant 5 : i32
    %1388 = vector.broadcast %c5_i32_424 : i32 to vector<2x1xi32>
    %1389 = arith.addi %1366, %1388 : vector<2x1xi32>
    %1390 = vector.broadcast %1389 : vector<2x1xi32> to vector<2x10xi32>
    %1391 = arith.cmpi eq, %0, %1390 : vector<2x10xi32>
    %1392 = arith.extui %1391 : vector<2x10xi1> to vector<2x10xi32>
    %1393 = arith.sitofp %1392 : vector<2x10xi32> to vector<2x10xf32>
    %c5_i32_425 = arith.constant 5 : i32
    %1394 = vector.broadcast %c5_i32_425 : i32 to vector<2x10xi32>
    %1395 = arith.cmpi slt, %0, %1394 : vector<2x10xi32>
    %1396 = tpu.concatenate %1393, %1337, %3 in 1 : vector<2x10xf32>, vector<2x32xf32>, vector<2x1xf32> -> vector<2x43xf32>
    %cst_426 = arith.constant 0.000000e+00 : f32
    %1397 = vector.broadcast %cst_426 : f32 to vector<2x85xf32>
    %1398 = tpu.concatenate %1396, %1397 in 1 : vector<2x43xf32>, vector<2x85xf32> -> vector<2x128xf32>
    %cst_427 = arith.constant 0.000000e+00 : f32
    %1399 = vector.broadcast %cst_427 : f32 to vector<2x64xf32>
    %cst_428 = arith.constant 0.000000e+00 : f32
    %1400 = vector.broadcast %cst_428 : f32 to vector<2x21xf32>
    %1401 = tpu.concatenate %1399, %1396, %1400 in 1 : vector<2x64xf32>, vector<2x43xf32>, vector<2x21xf32> -> vector<2x128xf32>
    %c0_i32_429 = arith.constant 0 : i32
    %1402 = vector.broadcast %c0_i32_429 : i32 to vector<2x128xi32>
    %1403 = arith.cmpi eq, %2, %1402 : vector<2x128xi32>
    %1404 = arith.select %1403, %1398, %1401 : vector<2x128xi1>, vector<2x128xf32>
    %c0_430 = arith.constant 0 : index
    %c0_431 = arith.constant 0 : index
    %1405 = vector.load %arg2[%c0_430, %c0_431] : memref<128x256xf32, #tpu.memory_space<vmem>>, vector<128x256xf32>
    %cst_432 = arith.constant dense<0.000000e+00> : vector<2x256xf32>
    %1406 = tpu.matmul %1404, %1405, %cst_432 {dimension_numbers = #tpu.dot_dimension_numbers<[1], [0], [0], [1], [0, 0, 1, 1], [], []>} : vector<2x128xf32>, vector<128x256xf32>, vector<2x256xf32> -> vector<2x256xf32>
    %1407 = vector.extract_strided_slice %1406 {offsets = [0, 160], sizes = [2, 10], strides = [1, 1]} : vector<2x256xf32> to vector<2x10xf32>
    %cst_433 = arith.constant 2.000000e-01 : f32
    %1408 = vector.broadcast %cst_433 : f32 to vector<2x10xf32>
    %1409 = arith.mulf %1407, %1408 : vector<2x10xf32>
    %1410 = math.tanh %1409 : vector<2x10xf32>
    %cst_434 = arith.constant 1.000000e+00 : f32
    %1411 = vector.broadcast %cst_434 : f32 to vector<2x10xf32>
    %1412 = arith.mulf %1411, %1410 : vector<2x10xf32>
    %1413 = math.exp %1412 : vector<2x10xf32>
    %cst_435 = arith.constant 0.000000e+00 : f32
    %1414 = vector.broadcast %cst_435 : f32 to vector<2x10xf32>
    %1415 = arith.select %1395, %1413, %1414 : vector<2x10xi1>, vector<2x10xf32>
    %cst_436 = arith.constant dense<0.000000e+00> : vector<2xf32>
    %1416 = vector.multi_reduction <add>, %1415, %cst_436 [1] : vector<2x10xf32> to vector<2xf32>
    %1417 = vector.shape_cast %1416 : vector<2xf32> to vector<2x1xf32>
    %1418 = math.log %1417 : vector<2x1xf32>
    %1419 = tpu.reciprocal %1417 {approx = true} : vector<2x1xf32> -> vector<2x1xf32>
    %1420 = vector.broadcast %1418 : vector<2x1xf32> to vector<2x10xf32>
    %1421 = arith.subf %1412, %1420 : vector<2x10xf32>
    %cst_437 = arith.constant 0.000000e+00 : f32
    %1422 = vector.broadcast %cst_437 : f32 to vector<2x10xf32>
    %1423 = arith.select %1395, %1421, %1422 : vector<2x10xi1>, vector<2x10xf32>
    %c0_438 = arith.constant 0 : index
    %c15 = arith.constant 15 : index
    %1424 = vector.load %arg1[%c0_438, %c15] : memref<2x16xf32, #tpu.memory_space<vmem>>, vector<2x1xf32>
    %cst_439 = arith.constant dense<0.000000e+00> : vector<2x10xf32>
    %1425 = tpu.matmul %1415, %9, %cst_439 {dimension_numbers = #tpu.dot_dimension_numbers<[1], [0], [0], [1], [0, 0, 1, 1], [], []>} : vector<2x10xf32>, vector<10x10xf32>, vector<2x10xf32> -> vector<2x10xf32>
    %1426 = arith.mulf %1424, %1417 : vector<2x1xf32>
    %1427 = vector.broadcast %1426 : vector<2x1xf32> to vector<2x10xf32>
    %1428 = arith.cmpf olt, %1425, %1427 : vector<2x10xf32>
    %1429 = arith.extui %1428 : vector<2x10xi1> to vector<2x10xi32>
    %1430 = arith.sitofp %1429 : vector<2x10xi32> to vector<2x10xf32>
    %cst_440 = arith.constant dense<0.000000e+00> : vector<2xf32>
    %1431 = vector.multi_reduction <add>, %1430, %cst_440 [1] : vector<2x10xf32> to vector<2xf32>
    %1432 = vector.shape_cast %1431 : vector<2xf32> to vector<2x1xf32>
    %1433 = arith.fptosi %1432 : vector<2x1xf32> to vector<2x1xi32>
    %c4_i32_441 = arith.constant 4 : i32
    %1434 = vector.broadcast %c4_i32_441 : i32 to vector<2x1xi32>
    %1435 = arith.minsi %1433, %1434 : vector<2x1xi32>
    %1436 = arith.sitofp %1435 : vector<2x1xi32> to vector<2x1xf32>
    %1437 = vector.broadcast %1435 : vector<2x1xi32> to vector<2x10xi32>
    %1438 = arith.cmpi eq, %0, %1437 : vector<2x10xi32>
    %1439 = arith.extui %1438 : vector<2x10xi1> to vector<2x10xi32>
    %1440 = arith.sitofp %1439 : vector<2x10xi32> to vector<2x10xf32>
    %1441 = arith.mulf %1440, %1423 : vector<2x10xf32>
    %cst_442 = arith.constant dense<0.000000e+00> : vector<2xf32>
    %1442 = vector.multi_reduction <add>, %1441, %cst_442 [1] : vector<2x10xf32> to vector<2xf32>
    %1443 = vector.shape_cast %1442 : vector<2xf32> to vector<2x1xf32>
    %1444 = arith.addf %1375, %1443 : vector<2x1xf32>
    %1445 = arith.mulf %1415, %1423 : vector<2x10xf32>
    %cst_443 = arith.constant dense<0.000000e+00> : vector<2xf32>
    %1446 = vector.multi_reduction <add>, %1445, %cst_443 [1] : vector<2x10xf32> to vector<2xf32>
    %1447 = vector.shape_cast %1446 : vector<2xf32> to vector<2x1xf32>
    %1448 = arith.mulf %1447, %1419 : vector<2x1xf32>
    %1449 = arith.subf %1380, %1448 : vector<2x1xf32>
    %c15_i32 = arith.constant 15 : i32
    %1450 = vector.broadcast %c15_i32 : i32 to vector<2x128xi32>
    %1451 = arith.cmpi eq, %1, %1450 : vector<2x128xi32>
    %1452 = arith.extui %1451 : vector<2x128xi1> to vector<2x128xi32>
    %1453 = arith.sitofp %1452 : vector<2x128xi32> to vector<2x128xf32>
    %1454 = vector.broadcast %1436 : vector<2x1xf32> to vector<2x128xf32>
    %1455 = arith.mulf %1454, %1453 : vector<2x128xf32>
    %1456 = arith.addf %1387, %1455 : vector<2x128xf32>
    %c16_i32 = arith.constant 16 : i32
    %1457 = vector.broadcast %c16_i32 : i32 to vector<2x128xi32>
    %1458 = arith.cmpi eq, %1, %1457 : vector<2x128xi32>
    %1459 = arith.extui %1458 : vector<2x128xi1> to vector<2x128xi32>
    %1460 = arith.sitofp %1459 : vector<2x128xi32> to vector<2x128xf32>
    %1461 = vector.broadcast %1444 : vector<2x1xf32> to vector<2x128xf32>
    %1462 = arith.mulf %1461, %1460 : vector<2x128xf32>
    %1463 = arith.addf %1456, %1462 : vector<2x128xf32>
    %c17_i32 = arith.constant 17 : i32
    %1464 = vector.broadcast %c17_i32 : i32 to vector<2x128xi32>
    %1465 = arith.cmpi eq, %1, %1464 : vector<2x128xi32>
    %1466 = arith.extui %1465 : vector<2x128xi1> to vector<2x128xi32>
    %1467 = arith.sitofp %1466 : vector<2x128xi32> to vector<2x128xf32>
    %1468 = vector.broadcast %1449 : vector<2x1xf32> to vector<2x128xf32>
    %1469 = arith.mulf %1468, %1467 : vector<2x128xf32>
    %1470 = arith.addf %1463, %1469 : vector<2x128xf32>
    %c0_444 = arith.constant 0 : index
    %c0_445 = arith.constant 0 : index
    %1471 = vector.load %arg5[%c0_444, %c0_445] : memref<2x128xf32, #tpu.memory_space<vmem>>, vector<2x128xf32>
    tpu.vector_store %arg5[%c0_444, %c0_445], %1470 {strides = array<i32>} : memref<2x128xf32, #tpu.memory_space<vmem>>, vector<2x128xf32>,
    return
  }
  func.func @transform_0(%arg0: i32) -> (i32, i32) {
    %c0_i32 = arith.constant 0 : i32
    %c0_i32_0 = arith.constant 0 : i32
    %c0_i32_1 = arith.constant 0 : i32
    return %c0_i32, %c0_i32_0 : i32, i32
  }
  func.func @transform_1(%arg0: i32) -> (i32, i32) {
    %c0_i32 = arith.constant 0 : i32
    %c0_i32_0 = arith.constant 0 : i32
    %c0_i32_1 = arith.constant 0 : i32
    return %c0_i32, %c0_i32_0 : i32, i32
  }
  func.func @transform_2(%arg0: i32) -> (i32, i32, i32) {
    %c0_i32 = arith.constant 0 : i32
    %c0_i32_0 = arith.constant 0 : i32
    %c0_i32_1 = arith.constant 0 : i32
    %c0_i32_2 = arith.constant 0 : i32
    return %c0_i32, %c0_i32_0, %c0_i32_1 : i32, i32, i32
  }
  func.func @transform_3(%arg0: i32) -> (i32, i32, i32) {
    %c0_i32 = arith.constant 0 : i32
    %c0_i32_0 = arith.constant 0 : i32
    %c0_i32_1 = arith.constant 0 : i32
    %c0_i32_2 = arith.constant 0 : i32
    return %c0_i32, %c0_i32_0, %c0_i32_1 : i32, i32, i32
  }
  func.func @transform_4(%arg0: i32) -> (i32, i32) {
    %c0_i32 = arith.constant 0 : i32
    %c0_i32_0 = arith.constant 0 : i32
    %c0_i32_1 = arith.constant 0 : i32
    return %c0_i32, %c0_i32_0 : i32, i32
  }
}

</mosaic_0001>

<llo_original>
// kernel: tpu_custom_call.1
$region0: #{tpu_custom_call.1}
  #allocation0 [shape = 'u32[]', space=smem, size = 0x4, offset = 0x4, fixed_abs, tag = 'smem constant byte address 0x4 - core index']
  #allocation1 [shape = 'u32[144,128]{1,0:T(1,128)}', space=vmem, size = 0x12000, scoped, tag = 'internal scratch']
  %s0 = inlined_call_operand.vmem [shape: f32[2,16], index: 0, kind: input, shape index: {}]
  %s1 = inlined_call_operand.hbm [shape: f32[128,256], index: 1, kind: input, shape index: {}]
  %s2 = inlined_call_operand.vmem [shape: f32[2,10,32], index: 2, kind: input, shape index: {}]
  %s3 = inlined_call_operand.vmem [shape: f32[2,1,32], index: 3, kind: input, shape index: {}]
  %s4 = inlined_call_operand.hbm [shape: f32[2,128], index: 4, kind: output, shape index: {}]
  %s5 = sld [smem:[#allocation0]]
  $region30: #{tpu_custom_call.1} parent=0
    _
  %s7 = ssub.s32 1, %s5
  %s8 = scalar_select 0, %s7, %s5
  $region1: #{tpu_custom_call.1} parent=0
    #allocation2 [shape = 'u8[131072]{0}', space=vmem, size = 0x20000, scoped, tag = 'input window, operand 1, single buffered']
    #allocation3 [shape = 's32[1]{0}', space=sflag, size = 0x4, scoped, tag = 'scoped memory for tpu_custom_call.1']
    #allocation4 [shape = 's32[1]{0}', space=sflag, size = 0x4, scoped, tag = 'scoped memory for tpu_custom_call.1']
    #allocation5 [shape = 'u8[1024]{0}', space=vmem, size = 0x400, scoped, tag = 'output window, operand 0, single buffered']
    %9 = vsyncpa [#allocation3], 0
    %10 = vsyncpa [#allocation4], 0
    // Predicated region
    $region2: #{tpu_custom_call.1} parent=1 // pred_check
      _
    $region3: #{tpu_custom_call.1} parent=1 // pred_check_branch
      %12 = sbr.rel (0) target = $region5
    $region4: #{tpu_custom_call.1} parent=1 // pred_region
      _
    $region5: #{tpu_custom_call.1} parent=1 // pred_fallthru
      _
    // Predicated region
    $region6: #{tpu_custom_call.1} parent=1 // pred_check
      _
    $region7: #{tpu_custom_call.1} parent=1 // pred_check_branch
      %14 = sbr.rel (0) target = $region9
    $region8: #{tpu_custom_call.1} parent=1 // pred_region
      %s16 = ssub.s32 4096, 4096
      %17 = vsyncadd [#allocation3], %s16
      %s18 = sshll.u32 [#allocation2], 4
      %s19 = int_to_ptr.vmem [resolvable:$true] %s18
      %24 = dma.hbm_to_vmem [thread:$0]  %s1, 4096, %s19, [#allocation3], 256, 256, 16
    $region9: #{tpu_custom_call.1} parent=1 // pred_fallthru
      _
    // Predicated region
    $region10: #{tpu_custom_call.1} parent=1 // pred_check
      _
    $region11: #{tpu_custom_call.1} parent=1 // pred_check_branch
      %26 = sbr.rel (0) target = $region13
    $region12: #{tpu_custom_call.1} parent=1 // pred_region
      _
    $region13: #{tpu_custom_call.1} parent=1 // pred_fallthru
      _
    // Predicated region
    $region14: #{tpu_custom_call.1} parent=1 // pred_check
      _
    $region15: #{tpu_custom_call.1} parent=1 // pred_check_branch
      %28 = sbr.rel (0) target = $region17
    $region16: #{tpu_custom_call.1} parent=1 // pred_region
      _
    $region17: #{tpu_custom_call.1} parent=1 // pred_fallthru
      _
    // Predicated region
    $region18: #{tpu_custom_call.1} parent=1 // pred_check
      _
    $region19: #{tpu_custom_call.1} parent=1 // pred_check_branch
      %30 = sbr.rel (0) target = $region21
    $region20: #{tpu_custom_call.1} parent=1 // pred_region
      %31 = dma.done [#allocation3], 4096
    $region21: #{tpu_custom_call.1} parent=1 // pred_fallthru
      _
    %v32 = vlaneseq
    %v33 = vand.u32 %v32, 127
    %v34 = vlaneseq
    %v35 = vshrl.u32 %v34, 7
    %v36 = vadd.s32 %v35, 8
    %vm37 = vcmp.le.s32.totalorder %v35, %v33
    %vm38 = vcmp.le.s32.totalorder %v36, %v33
    %v39 = vsel %vm37, 1, 0
    %v40 = vsel %vm38, 1, 0
    %v41 = vcvt.s32.f32 %v39
    %v42 = vcvt.s32.f32 %v40
    %vm43 = vcmp.lt.s32.totalorder %v33, 2
    %vm44 = vcmask 343040
    %v45 = vsel %vm44, 0.0, 1.0
    %vm46 = vcmask 351232
    %v47 = vsel %vm46, %v45, 0.0
    %49 = vrot.lane.b32.xlu0 %v45, 64
    %v50 = vpop.permute.xlu0 %49
    %vm52 = vcmask 523264
    %v53 = vsel %vm52, 0.0, %v50
    %vm54 = vcmask 875520
    %v55 = vsel %vm54, %v53, 0.0
    %vm56 = vcmp.eq.s32.totalorder %v35, 0
    %v57 = vsel %vm56, %v47, %v55
    %v58 = vld [vmem:[#allocation2] sm:$0xff]
    %v59 = vld [vmem:[#allocation2 + $0x8] sm:$0xff]
    %v60 = vld [vmem:[#allocation2 + $0x10] sm:$0xff]
    %v61 = vld [vmem:[#allocation2 + $0x18] sm:$0xff]
    %v62 = vld [vmem:[#allocation2 + $0x20] sm:$0xff]
    %v63 = vld [vmem:[#allocation2 + $0x28] sm:$0xff]
    %v64 = vld [vmem:[#allocation2 + $0x30] sm:$0xff]
    %v65 = vld [vmem:[#allocation2 + $0x38] sm:$0xff]
    %v66 = vld [vmem:[#allocation2 + $0x40] sm:$0xff]
    %v67 = vld [vmem:[#allocation2 + $0x48] sm:$0xff]
    %v68 = vld [vmem:[#allocation2 + $0x50] sm:$0xff]
    %v69 = vld [vmem:[#allocation2 + $0x58] sm:$0xff]
    %v70 = vld [vmem:[#allocation2 + $0x60] sm:$0xff]
    %v71 = vld [vmem:[#allocation2 + $0x68] sm:$0xff]
    %v72 = vld [vmem:[#allocation2 + $0x70] sm:$0xff]
    %v73 = vld [vmem:[#allocation2 + $0x78] sm:$0xff]
    %v74 = vld [vmem:[#allocation2 + $0x80] sm:$0xff]
    %v75 = vld [vmem:[#allocation2 + $0x88] sm:$0xff]
    %v76 = vld [vmem:[#allocation2 + $0x90] sm:$0xff]
    %v77 = vld [vmem:[#allocation2 + $0x98] sm:$0xff]
    %v78 = vld [vmem:[#allocation2 + $0xa0] sm:$0xff]
    %v79 = vld [vmem:[#allocation2 + $0xa8] sm:$0xff]
    %v80 = vld [vmem:[#allocation2 + $0xb0] sm:$0xff]
    %v81 = vld [vmem:[#allocation2 + $0xb8] sm:$0xff]
    %v82 = vld [vmem:[#allocation2 + $0xc0] sm:$0xff]
    %v83 = vld [vmem:[#allocation2 + $0xc8] sm:$0xff]
    %v84 = vld [vmem:[#allocation2 + $0xd0] sm:$0xff]
    %v85 = vld [vmem:[#allocation2 + $0xd8] sm:$0xff]
    %v86 = vld [vmem:[#allocation2 + $0xe0] sm:$0xff]
    %v87 = vld [vmem:[#allocation2 + $0xe8] sm:$0xff]
    %v88 = vld [vmem:[#allocation2 + $0xf0] sm:$0xff]
    %v89 = vld [vmem:[#allocation2 + $0xf8] sm:$0xff]
    %90 = vmatprep.subr.mxu0 %v59
    %91 = vmatpush1.msra.mxu0 %v58
    %92 = vmatprep.subr.mxu0 %v61
    %93 = vmatpush1.msra.mxu0 %v60
    %94 = vmatprep.subr.mxu0 %v63
    %95 = vmatpush1.msra.mxu0 %v62
    %96 = vmatprep.subr.mxu0 %v65
    %97 = vmatpush1.msra.mxu0 %v64
    %98 = vmatprep.subr.mxu0 %v67
    %99 = vmatpush1.msra.mxu0 %v66
    %100 = vmatprep.subr.mxu0 %v69
    %101 = vmatpush1.msra.mxu0 %v68
    %102 = vmatprep.subr.mxu0 %v71
    %103 = vmatpush1.msra.mxu0 %v70
    %104 = vmatprep.subr.mxu0 %v73
    %105 = vmatpush1.msra.mxu0 %v72
    %106 = vmatprep.subr.mxu0 %v75
    %107 = vmatpush1.msra.mxu0 %v74
    %108 = vmatprep.subr.mxu0 %v77
    %109 = vmatpush1.msra.mxu0 %v76
    %110 = vmatprep.subr.mxu0 %v79
    %111 = vmatpush1.msra.mxu0 %v78
    %112 = vmatprep.subr.mxu0 %v81
    %113 = vmatpush1.msra.mxu0 %v80
    %114 = vmatprep.subr.mxu0 %v83
    %115 = vmatpush1.msra.mxu0 %v82
    %116 = vmatprep.subr.mxu0 %v85
    %117 = vmatpush1.msra.mxu0 %v84
    %118 = vmatprep.subr.mxu0 %v87
    %119 = vmatpush1.msra.mxu0 %v86
    %120 = vmatprep.subr.mxu0 %v89
    %121 = vmatpush1.msra.mxu0 %v88
    %122 = vmatprep.subr.mxu0 0.0
    %123 = vmatpush1.msra.mxu0 0.0
    %124 = vmatprep.subr.mxu0 0.0
    %125 = vmatpush1.msra.mxu0 0.0
    %126 = vmatprep.subr.mxu0 0.0
    %127 = vmatpush1.msra.mxu0 0.0
    %128 = vmatprep.subr.mxu0 0.0
    %129 = vmatpush1.msra.mxu0 0.0
    %130 = vmatprep.subr.mxu0 0.0
    %131 = vmatpush1.msra.mxu0 0.0
    %132 = vmatprep.subr.mxu0 0.0
    %133 = vmatpush1.msra.mxu0 0.0
    %134 = vmatprep.subr.mxu0 0.0
    %135 = vmatpush1.msra.mxu0 0.0
    %136 = vmatprep.subr.mxu0 0.0
    %137 = vmatpush1.msra.mxu0 0.0
    %138 = vmatprep.subr.mxu0 0.0
    %139 = vmatpush1.msra.mxu0 0.0
    %140 = vmatprep.subr.mxu0 0.0
    %141 = vmatpush1.msra.mxu0 0.0
    %142 = vmatprep.subr.mxu0 0.0
    %143 = vmatpush1.msra.mxu0 0.0
    %144 = vmatprep.subr.mxu0 0.0
    %145 = vmatpush1.msra.mxu0 0.0
    %146 = vmatprep.subr.mxu0 0.0
    %147 = vmatpush1.msra.mxu0 0.0
    %148 = vmatprep.subr.mxu0 0.0
    %149 = vmatpush1.msra.mxu0 0.0
    %150 = vmatprep.subr.mxu0 0.0
    %151 = vmatpush1.msra.mxu0 0.0
    %152 = vmatprep.subr.mxu0 0.0
    %153 = vmatpush1.msra.mxu0 0.0
    %154 = vmatprep.mubr.f32.mxu0 0.0
    %155 = vmatmul.mubr.f32.gmra.mrb[0].mxu0 %v57
    %v156 = vpop.f32.mrb[0].mxu0
    %v157 = vadd.f32 0.0, %v156
    %v158 = vpop.f32.mrb[0].mxu0
    %v159 = vadd.f32 0.0, %v158
    %160 = vdwg.mxu0
    %v161 = vxor.u32 %v157, 2147483648
    %v162 = vmul.f32 %v161, 1.442695
    %v163 = vpow.pop %v162
    %v164 = vadd.f32 %v163, 1.0
    %v165 = vrcp.pop %v164
    %v166 = vmul.f32 1.0, %v165
    %v167 = vtanh.pop %v157
    %v168 = vmul.f32 %v166, 0.0
    %170 = vrot.lane.b32.xlu0 %v167, 64
    %v171 = vpop.permute.xlu0 %170
    %v173 = vmul.f32 %v166, %v171
    %175 = vrot.lane.b32.xlu0 %v173, 32
    %v176 = vpop.permute.xlu0 %175
    %v178 = vadd.f32 %v168, %v176
    %v179 = vtanh.pop %v178
    %181 = vrot.lane.b32.xlu0 %v179, 64
    %v182 = vpop.permute.xlu0 %181
    %v184 = vmul.f32 %v166, %v182
    %v185 = vld [vmem:[%s2] sm:$0xff]
    %v186 = vld [vmem:[%s2 + $0x8] sm:$0x3]
    %v187 = vlaneseq
    %v188 = vshrl.u32 %v187, 7
    %v189 = vsub.s32 0, %v188
    %v190 = vrot.slane %v159, %v189
    %v191 = vadd.f32 %v185, %v190
    %v192 = vadd.f32 %v186, %v190
    %v193 = vtanh.pop %v191
    %v194 = vtanh.pop %v192
    %s195 = scalar_lea.vmem %s2, 16
    %v196 = vld [vmem:[%s195] sm:$0xff]
    %v197 = vld [vmem:[%s195 + $0x8] sm:$0x3]
    %v198 = vlaneseq
    %v199 = vshrl.u32 %v198, 7
    %v200 = vsub.s32 1, %v199
    %v201 = vrot.slane %v159, %v200
    %v202 = vadd.f32 %v196, %v201
    %v203 = vadd.f32 %v197, %v201
    %v204 = vtanh.pop %v202
    %v205 = vtanh.pop %v203
    %v206 = vld [vmem:[%s3] sm:$0x1]
    %vm207 = vcmask 261120
    %v209 = vsel %vm207, %v206, 0
    %v212 = vsel %vm207, %v193, 0
    %v215 = vsel %vm207, %v194, 0
    %217 = vmatprep.subr.mxu0 0.0
    %218 = vmatpush1.xpose.msra.mxu0 %v212
    %219 = vmatprep.subr.mxu0 0.0
    %220 = vmatpush1.xpose.msra.mxu0 %v215
    %221 = vmatprep.subr.mxu0 0.0
    %222 = vmatpush1.xpose.msra.mxu0 0.0
    %223 = vmatprep.subr.mxu0 0.0
    %224 = vmatpush1.xpose.msra.mxu0 0.0
    %225 = vmatprep.subr.mxu0 0.0
    %226 = vmatpush1.xpose.msra.mxu0 0.0
    %227 = vmatprep.subr.mxu0 0.0
    %228 = vmatpush1.xpose.msra.mxu0 0.0
    %229 = vmatprep.subr.mxu0 0.0
    %230 = vmatpush1.xpose.msra.mxu0 0.0
    %231 = vmatprep.subr.mxu0 0.0
    %232 = vmatpush1.xpose.msra.mxu0 0.0
    %233 = vmatprep.subr.mxu0 0.0
    %234 = vmatpush1.xpose.msra.mxu0 0.0
    %235 = vmatprep.subr.mxu0 0.0
    %236 = vmatpush1.xpose.msra.mxu0 0.0
    %237 = vmatprep.subr.mxu0 0.0
    %238 = vmatpush1.xpose.msra.mxu0 0.0
    %239 = vmatprep.subr.mxu0 0.0
    %240 = vmatpush1.xpose.msra.mxu0 0.0
    %241 = vmatprep.subr.mxu0 0.0
    %242 = vmatpush1.xpose.msra.mxu0 0.0
    %243 = vmatprep.subr.mxu0 0.0
    %244 = vmatpush1.xpose.msra.mxu0 0.0
    %245 = vmatprep.subr.mxu0 0.0
    %246 = vmatpush1.xpose.msra.mxu0 0.0
    %247 = vmatprep.subr.mxu0 0.0
    %248 = vmatpush1.xpose.msra.mxu0 0.0
    %249 = vmatprep.subr.mxu0 0.0
    %250 = vmatpush1.xpose.msra.mxu0 0.0
    %251 = vmatprep.subr.mxu0 0.0
    %252 = vmatpush1.xpose.msra.mxu0 0.0
    %253 = vmatprep.subr.mxu0 0.0
    %254 = vmatpush1.xpose.msra.mxu0 0.0
    %255 = vmatprep.subr.mxu0 0.0
    %256 = vmatpush1.xpose.msra.mxu0 0.0
    %257 = vmatprep.subr.mxu0 0.0
    %258 = vmatpush1.xpose.msra.mxu0 0.0
    %259 = vmatprep.subr.mxu0 0.0
    %260 = vmatpush1.xpose.msra.mxu0 0.0
    %261 = vmatprep.subr.mxu0 0.0
    %262 = vmatpush1.xpose.msra.mxu0 0.0
    %263 = vmatprep.subr.mxu0 0.0
    %264 = vmatpush1.xpose.msra.mxu0 0.0
    %265 = vmatprep.subr.mxu0 0.0
    %266 = vmatpush1.xpose.msra.mxu0 0.0
    %267 = vmatprep.subr.mxu0 0.0
    %268 = vmatpush1.xpose.msra.mxu0 0.0
    %269 = vmatprep.subr.mxu0 0.0
    %270 = vmatpush1.xpose.msra.mxu0 0.0
    %271 = vmatprep.subr.mxu0 0.0
    %272 = vmatpush1.xpose.msra.mxu0 0.0
    %273 = vmatprep.subr.mxu0 0.0
    %274 = vmatpush1.xpose.msra.mxu0 0.0
    %275 = vmatprep.subr.mxu0 0.0
    %276 = vmatpush1.xpose.msra.mxu0 0.0
    %277 = vmatprep.subr.mxu0 0.0
    %278 = vmatpush1.xpose.msra.mxu0 0.0
    %279 = vmatprep.subr.mxu0 0.0
    %280 = vmatpush1.xpose.msra.mxu0 0.0
    %281 = vmatprep.mubr.f32.mxu0 0.0
    %282 = vmatmul.mubr.f32.gmra.mrb[0].mxu0 %v209
    %v283 = vpop.f32.mrb[0].mxu0
    %v284 = vadd.f32 0.0, %v283
    %v285 = vpop.f32.mrb[0].mxu0
    %286 = vdwg.mxu0
    %s287 = scalar_lea.vmem %s3, 1
    %v288 = vld [vmem:[%s287] sm:$0x1]
    %v290 = vsel %vm207, %v288, 0
    %v293 = vsel %vm207, %v204, 0
    %v296 = vsel %vm207, %v205, 0
    %298 = vmatprep.subr.mxu0 0.0
    %299 = vmatpush1.xpose.msra.mxu0 %v293
    %300 = vmatprep.subr.mxu0 0.0
    %301 = vmatpush1.xpose.msra.mxu0 %v296
    %302 = vmatprep.subr.mxu0 0.0
    %303 = vmatpush1.xpose.msra.mxu0 0.0
    %304 = vmatprep.subr.mxu0 0.0
    %305 = vmatpush1.xpose.msra.mxu0 0.0
    %306 = vmatprep.subr.mxu0 0.0
    %307 = vmatpush1.xpose.msra.mxu0 0.0
    %308 = vmatprep.subr.mxu0 0.0
    %309 = vmatpush1.xpose.msra.mxu0 0.0
    %310 = vmatprep.subr.mxu0 0.0
    %311 = vmatpush1.xpose.msra.mxu0 0.0
    %312 = vmatprep.subr.mxu0 0.0
    %313 = vmatpush1.xpose.msra.mxu0 0.0
    %314 = vmatprep.subr.mxu0 0.0
    %315 = vmatpush1.xpose.msra.mxu0 0.0
    %316 = vmatprep.subr.mxu0 0.0
    %317 = vmatpush1.xpose.msra.mxu0 0.0
    %318 = vmatprep.subr.mxu0 0.0
    %319 = vmatpush1.xpose.msra.mxu0 0.0
    %320 = vmatprep.subr.mxu0 0.0
    %321 = vmatpush1.xpose.msra.mxu0 0.0
    %322 = vmatprep.subr.mxu0 0.0
    %323 = vmatpush1.xpose.msra.mxu0 0.0
    %324 = vmatprep.subr.mxu0 0.0
    %325 = vmatpush1.xpose.msra.mxu0 0.0
    %326 = vmatprep.subr.mxu0 0.0
    %327 = vmatpush1.xpose.msra.mxu0 0.0
    %328 = vmatprep.subr.mxu0 0.0
    %329 = vmatpush1.xpose.msra.mxu0 0.0
    %330 = vmatprep.subr.mxu0 0.0
    %331 = vmatpush1.xpose.msra.mxu0 0.0
    %332 = vmatprep.subr.mxu0 0.0
    %333 = vmatpush1.xpose.msra.mxu0 0.0
    %334 = vmatprep.subr.mxu0 0.0
    %335 = vmatpush1.xpose.msra.mxu0 0.0
    %336 = vmatprep.subr.mxu0 0.0
    %337 = vmatpush1.xpose.msra.mxu0 0.0
    %338 = vmatprep.subr.mxu0 0.0
    %339 = vmatpush1.xpose.msra.mxu0 0.0
    %340 = vmatprep.subr.mxu0 0.0
    %341 = vmatpush1.xpose.msra.mxu0 0.0
    %342 = vmatprep.subr.mxu0 0.0
    %343 = vmatpush1.xpose.msra.mxu0 0.0
    %344 = vmatprep.subr.mxu0 0.0
    %345 = vmatpush1.xpose.msra.mxu0 0.0
    %346 = vmatprep.subr.mxu0 0.0
    %347 = vmatpush1.xpose.msra.mxu0 0.0
    %348 = vmatprep.subr.mxu0 0.0
    %349 = vmatpush1.xpose.msra.mxu0 0.0
    %350 = vmatprep.subr.mxu0 0.0
    %351 = vmatpush1.xpose.msra.mxu0 0.0
    %352 = vmatprep.subr.mxu0 0.0
    %353 = vmatpush1.xpose.msra.mxu0 0.0
    %354 = vmatprep.subr.mxu0 0.0
    %355 = vmatpush1.xpose.msra.mxu0 0.0
    %356 = vmatprep.subr.mxu0 0.0
    %357 = vmatpush1.xpose.msra.mxu0 0.0
    %358 = vmatprep.subr.mxu0 0.0
    %359 = vmatpush1.xpose.msra.mxu0 0.0
    %360 = vmatprep.subr.mxu0 0.0
    %361 = vmatpush1.xpose.msra.mxu0 0.0
    %362 = vmatprep.mubr.f32.mxu0 0.0
    %363 = vmatmul.mubr.f32.gmra.mrb[0].mxu0 %v290
    %v364 = vpop.f32.mrb[0].mxu0
    %v365 = vadd.f32 0.0, %v364
    %v366 = vpop.f32.mrb[0].mxu0
    %367 = vdwg.mxu0
    %v369 = vrot.slane %v365, 7
    %vm371 = vcmask 1040384
    %v372 = vsel %vm371, %v284, %v369
    %v373 = vmul.f32 %v372, 0.2
    %v374 = vtanh.pop %v373
    %v375 = vmul.f32 %v374, 2.5
    %v376 = vmul.f32 %v375, 1.442695
    %v377 = vpow.pop %v376
    %v378 = vsel %vm43, %v377, 0.0
    %vm379 = vcmask 74752
    %v380 = vsel %vm379, %v378, 0.0
    %381 = vadd.xlane.f32.xlu0 %v380
    %v382 = vpop.xlane.xlu0 %381
    %v383 = vlog2.pop %v382
    %v384 = vmul.f32 %v383, 0.6931472
    %v385 = vrcp.pop %v382
    %v386 = vsub.f32 %v375, %v384
    %v387 = vsel %vm43, %v386, 0.0
    %v388 = vld [vmem:[%s0] sm:$0x3]
    %vm389 = vcmask 80896
    %v391 = vsel %vm389, %v378, 0
    %vm393 = vcmask 1041408
    %v395 = vsel %vm393, %v42, 0
    %397 = vmatprep.subr.mxu0 0.0
    %398 = vmatpush1.msra.mxu0 %v41
    %399 = vmatprep.subr.mxu0 0.0
    %400 = vmatpush1.msra.mxu0 %v395
    %401 = vmatprep.subr.mxu0 0.0
    %402 = vmatpush1.msra.mxu0 0.0
    %403 = vmatprep.subr.mxu0 0.0
    %404 = vmatpush1.msra.mxu0 0.0
    %405 = vmatprep.subr.mxu0 0.0
    %406 = vmatpush1.msra.mxu0 0.0
    %407 = vmatprep.subr.mxu0 0.0
    %408 = vmatpush1.msra.mxu0 0.0
    %409 = vmatprep.subr.mxu0 0.0
    %410 = vmatpush1.msra.mxu0 0.0
    %411 = vmatprep.subr.mxu0 0.0
    %412 = vmatpush1.msra.mxu0 0.0
    %413 = vmatprep.subr.mxu0 0.0
    %414 = vmatpush1.msra.mxu0 0.0
    %415 = vmatprep.subr.mxu0 0.0
    %416 = vmatpush1.msra.mxu0 0.0
    %417 = vmatprep.subr.mxu0 0.0
    %418 = vmatpush1.msra.mxu0 0.0
    %419 = vmatprep.subr.mxu0 0.0
    %420 = vmatpush1.msra.mxu0 0.0
    %421 = vmatprep.subr.mxu0 0.0
    %422 = vmatpush1.msra.mxu0 0.0
    %423 = vmatprep.subr.mxu0 0.0
    %424 = vmatpush1.msra.mxu0 0.0
    %425 = vmatprep.subr.mxu0 0.0
    %426 = vmatpush1.msra.mxu0 0.0
    %427 = vmatprep.subr.mxu0 0.0
    %428 = vmatpush1.msra.mxu0 0.0
    %429 = vmatprep.subr.mxu0 0.0
    %430 = vmatpush1.msra.mxu0 0.0
    %431 = vmatprep.subr.mxu0 0.0
    %432 = vmatpush1.msra.mxu0 0.0
    %433 = vmatprep.subr.mxu0 0.0
    %434 = vmatpush1.msra.mxu0 0.0
    %435 = vmatprep.subr.mxu0 0.0
    %436 = vmatpush1.msra.mxu0 0.0
    %437 = vmatprep.subr.mxu0 0.0
    %438 = vmatpush1.msra.mxu0 0.0
    %439 = vmatprep.subr.mxu0 0.0
    %440 = vmatpush1.msra.mxu0 0.0
    %441 = vmatprep.subr.mxu0 0.0
    %442 = vmatpush1.msra.mxu0 0.0
    %443 = vmatprep.subr.mxu0 0.0
    %444 = vmatpush1.msra.mxu0 0.0
    %445 = vmatprep.subr.mxu0 0.0
    %446 = vmatpush1.msra.mxu0 0.0
    %447 = vmatprep.subr.mxu0 0.0
    %448 = vmatpush1.msra.mxu0 0.0
    %449 = vmatprep.subr.mxu0 0.0
    %450 = vmatpush1.msra.mxu0 0.0
    %451 = vmatprep.subr.mxu0 0.0
    %452 = vmatpush1.msra.mxu0 0.0
    %453 = vmatprep.subr.mxu0 0.0
    %454 = vmatpush1.msra.mxu0 0.0
    %455 = vmatprep.subr.mxu0 0.0
    %456 = vmatpush1.msra.mxu0 0.0
    %457 = vmatprep.subr.mxu0 0.0
    %458 = vmatpush1.msra.mxu0 0.0
    %459 = vmatprep.subr.mxu0 0.0
    %460 = vmatpush1.msra.mxu0 0.0
    %461 = vmatprep.mubr.f32.mxu0 0.0
    %462 = vmatmul.mubr.f32.gmra.mrb[0].mxu0 %v391
    %v463 = vpop.f32.mrb[0].mxu0
    %v464 = vadd.f32 0.0, %v463
    %v465 = vpop.f32.mrb[0].mxu0
    %466 = vdwg.mxu0
    %v467 = vmul.f32 %v388, %v382
    %469 = vset.pattern.permute.xlu0 0
    %470 = vperm.xlu0 %469, %v467
    %v471 = vpop.permute.xlu0 %470
    %vm473 = vcmp.lt.f32.partialorder %v464, %v471
    %v474 = vsel %vm473, 1, 0
    %v475 = vcvt.s32.f32 %v474
    %v476 = vsel %vm379, %v475, 0.0
    %477 = vadd.xlane.f32.xlu0 %v476
    %v478 = vpop.xlane.xlu0 %477
    %v479 = vcvt.f32.s32.to.zero.pseudo %v478
    %vm480 = vcmp.lt.s32.totalorder %v479, 1
    %v481 = vsel %vm480, %v479, 1
    %v482 = vcvt.s32.f32 %v481
    %vm483 = vcmp.eq.s32.totalorder %v33, %v481
    %v484 = vsel %vm483, 1, 0
    %v485 = vcvt.s32.f32 %v484
    %v486 = vmul.f32 %v485, %v387
    %v487 = vsel %vm379, %v486, 0.0
    %488 = vadd.xlane.f32.xlu0 %v487
    %v489 = vpop.xlane.xlu0 %488
    %v490 = vadd.f32 %v489, 0.0
    %v491 = vmul.f32 %v378, %v387
    %v492 = vsel %vm379, %v491, 0.0
    %493 = vadd.xlane.f32.xlu0 %v492
    %v494 = vpop.xlane.xlu0 %493
    %v495 = vmul.f32 %v494, %v385
    %v496 = vsub.f32 0.0, %v495
    %vm497 = vcmp.eq.s32.totalorder %v33, 0
    %v498 = vsel %vm497, 1, 0
    %v499 = vcvt.s32.f32 %v498
    %v500 = vmul.f32 %v482, %v499
    %v501 = vadd.f32 %v500, 0.0
    %503 = vrot.lane.b32.xlu0 %v184, 42
    %v504 = vpop.permute.xlu0 %503
    %v506 = vsel %vm389, %v485, %v504
    %v507 = vsel %vm44, %v506, 1.0
    %v508 = vsel %vm46, %v507, 0.0
    %510 = vrot.lane.b32.xlu0 %v507, 64
    %v511 = vpop.permute.xlu0 %510
    %v513 = vsel %vm52, 0.0, %v511
    %v514 = vsel %vm54, %v513, 0.0
    %v515 = vsel %vm56, %v508, %v514
    %516 = vmatprep.subr.mxu0 %v59
    %517 = vmatpush1.msra.mxu0 %v58
    %518 = vmatprep.subr.mxu0 %v61
    %519 = vmatpush1.msra.mxu0 %v60
    %520 = vmatprep.subr.mxu0 %v63
    %521 = vmatpush1.msra.mxu0 %v62
    %522 = vmatprep.subr.mxu0 %v65
    %523 = vmatpush1.msra.mxu0 %v64
    %524 = vmatprep.subr.mxu0 %v67
    %525 = vmatpush1.msra.mxu0 %v66
    %526 = vmatprep.subr.mxu0 %v69
    %527 = vmatpush1.msra.mxu0 %v68
    %528 = vmatprep.subr.mxu0 %v71
    %529 = vmatpush1.msra.mxu0 %v70
    %530 = vmatprep.subr.mxu0 %v73
    %531 = vmatpush1.msra.mxu0 %v72
    %532 = vmatprep.subr.mxu0 %v75
    %533 = vmatpush1.msra.mxu0 %v74
    %534 = vmatprep.subr.mxu0 %v77
    %535 = vmatpush1.msra.mxu0 %v76
    %536 = vmatprep.subr.mxu0 %v79
    %537 = vmatpush1.msra.mxu0 %v78
    %538 = vmatprep.subr.mxu0 %v81
    %539 = vmatpush1.msra.mxu0 %v80
    %540 = vmatprep.subr.mxu0 %v83
    %541 = vmatpush1.msra.mxu0 %v82
    %542 = vmatprep.subr.mxu0 %v85
    %543 = vmatpush1.msra.mxu0 %v84
    %544 = vmatprep.subr.mxu0 %v87
    %545 = vmatpush1.msra.mxu0 %v86
    %546 = vmatprep.subr.mxu0 %v89
    %547 = vmatpush1.msra.mxu0 %v88
    %548 = vmatprep.subr.mxu0 0.0
    %549 = vmatpush1.msra.mxu0 0.0
    %550 = vmatprep.subr.mxu0 0.0
    %551 = vmatpush1.msra.mxu0 0.0
    %552 = vmatprep.subr.mxu0 0.0
    %553 = vmatpush1.msra.mxu0 0.0
    %554 = vmatprep.subr.mxu0 0.0
    %555 = vmatpush1.msra.mxu0 0.0
    %556 = vmatprep.subr.mxu0 0.0
    %557 = vmatpush1.msra.mxu0 0.0
    %558 = vmatprep.subr.mxu0 0.0
    %559 = vmatpush1.msra.mxu0 0.0
    %560 = vmatprep.subr.mxu0 0.0
    %561 = vmatpush1.msra.mxu0 0.0
    %562 = vmatprep.subr.mxu0 0.0
    %563 = vmatpush1.msra.mxu0 0.0
    %564 = vmatprep.subr.mxu0 0.0
    %565 = vmatpush1.msra.mxu0 0.0
    %566 = vmatprep.subr.mxu0 0.0
    %567 = vmatpush1.msra.mxu0 0.0
    %568 = vmatprep.subr.mxu0 0.0
    %569 = vmatpush1.msra.mxu0 0.0
    %570 = vmatprep.subr.mxu0 0.0
    %571 = vmatpush1.msra.mxu0 0.0
    %572 = vmatprep.subr.mxu0 0.0
    %573 = vmatpush1.msra.mxu0 0.0
    %574 = vmatprep.subr.mxu0 0.0
    %575 = vmatpush1.msra.mxu0 0.0
    %576 = vmatprep.subr.mxu0 0.0
    %577 = vmatpush1.msra.mxu0 0.0
    %578 = vmatprep.subr.mxu0 0.0
    %579 = vmatpush1.msra.mxu0 0.0
    %580 = vmatprep.mubr.f32.mxu0 0.0
    %581 = vmatmul.mubr.f32.gmra.mrb[0].mxu0 %v515
    %v582 = vpop.f32.mrb[0].mxu0
    %v583 = vadd.f32 0.0, %v582
    %v584 = vpop.f32.mrb[0].mxu0
    %v585 = vadd.f32 0.0, %v584
    %586 = vdwg.mxu0
    %v587 = vxor.u32 %v583, 2147483648
    %v588 = vmul.f32 %v587, 1.442695
    %v589 = vpow.pop %v588
    %v590 = vadd.f32 %v589, 1.0
    %v591 = vrcp.pop %v590
    %v592 = vmul.f32 1.0, %v591
    %v593 = vtanh.pop %v583
    %v594 = vmul.f32 %v592, %v178
    %596 = vrot.lane.b32.xlu0 %v593, 64
    %v597 = vpop.permute.xlu0 %596
    %v599 = vmul.f32 %v592, %v597
    %601 = vrot.lane.b32.xlu0 %v599, 32
    %v602 = vpop.permute.xlu0 %601
    %v604 = vadd.f32 %v594, %v602
    %v605 = vtanh.pop %v604
    %607 = vrot.lane.b32.xlu0 %v605, 64
    %v608 = vpop.permute.xlu0 %607
    %v610 = vmul.f32 %v592, %v608
    %v611 = vlaneseq
    %v612 = vshrl.u32 %v611, 7
    %v613 = vsub.s32 0, %v612
    %v614 = vrot.slane %v585, %v613
    %v615 = vadd.f32 %v185, %v614
    %v616 = vadd.f32 %v186, %v614
    %v617 = vtanh.pop %v615
    %v618 = vtanh.pop %v616
    %v619 = vlaneseq
    %v620 = vshrl.u32 %v619, 7
    %v621 = vsub.s32 1, %v620
    %v622 = vrot.slane %v585, %v621
    %v623 = vadd.f32 %v196, %v622
    %v624 = vadd.f32 %v197, %v622
    %v625 = vtanh.pop %v623
    %v626 = vtanh.pop %v624
    %v628 = vsel %vm207, %v617, 0
    %v631 = vsel %vm207, %v618, 0
    %633 = vmatprep.subr.mxu0 0.0
    %634 = vmatpush1.xpose.msra.mxu0 %v628
    %635 = vmatprep.subr.mxu0 0.0
    %636 = vmatpush1.xpose.msra.mxu0 %v631
    %637 = vmatprep.subr.mxu0 0.0
    %638 = vmatpush1.xpose.msra.mxu0 0.0
    %639 = vmatprep.subr.mxu0 0.0
    %640 = vmatpush1.xpose.msra.mxu0 0.0
    %641 = vmatprep.subr.mxu0 0.0
    %642 = vmatpush1.xpose.msra.mxu0 0.0
    %643 = vmatprep.subr.mxu0 0.0
    %644 = vmatpush1.xpose.msra.mxu0 0.0
    %645 = vmatprep.subr.mxu0 0.0
    %646 = vmatpush1.xpose.msra.mxu0 0.0
    %647 = vmatprep.subr.mxu0 0.0
    %648 = vmatpush1.xpose.msra.mxu0 0.0
    %649 = vmatprep.subr.mxu0 0.0
    %650 = vmatpush1.xpose.msra.mxu0 0.0
    %651 = vmatprep.subr.mxu0 0.0
    %652 = vmatpush1.xpose.msra.mxu0 0.0
    %653 = vmatprep.subr.mxu0 0.0
    %654 = vmatpush1.xpose.msra.mxu0 0.0
    %655 = vmatprep.subr.mxu0 0.0
    %656 = vmatpush1.xpose.msra.mxu0 0.0
    %657 = vmatprep.subr.mxu0 0.0
    %658 = vmatpush1.xpose.msra.mxu0 0.0
    %659 = vmatprep.subr.mxu0 0.0
    %660 = vmatpush1.xpose.msra.mxu0 0.0
    %661 = vmatprep.subr.mxu0 0.0
    %662 = vmatpush1.xpose.msra.mxu0 0.0
    %663 = vmatprep.subr.mxu0 0.0
    %664 = vmatpush1.xpose.msra.mxu0 0.0
    %665 = vmatprep.subr.mxu0 0.0
    %666 = vmatpush1.xpose.msra.mxu0 0.0
    %667 = vmatprep.subr.mxu0 0.0
    %668 = vmatpush1.xpose.msra.mxu0 0.0
    %669 = vmatprep.subr.mxu0 0.0
    %670 = vmatpush1.xpose.msra.mxu0 0.0
    %671 = vmatprep.subr.mxu0 0.0
    %672 = vmatpush1.xpose.msra.mxu0 0.0
    %673 = vmatprep.subr.mxu0 0.0
    %674 = vmatpush1.xpose.msra.mxu0 0.0
    %675 = vmatprep.subr.mxu0 0.0
    %676 = vmatpush1.xpose.msra.mxu0 0.0
    %677 = vmatprep.subr.mxu0 0.0
    %678 = vmatpush1.xpose.msra.mxu0 0.0
    %679 = vmatprep.subr.mxu0 0.0
    %680 = vmatpush1.xpose.msra.mxu0 0.0
    %681 = vmatprep.subr.mxu0 0.0
    %682 = vmatpush1.xpose.msra.mxu0 0.0
    %683 = vmatprep.subr.mxu0 0.0
    %684 = vmatpush1.xpose.msra.mxu0 0.0
    %685 = vmatprep.subr.mxu0 0.0
    %686 = vmatpush1.xpose.msra.mxu0 0.0
    %687 = vmatprep.subr.mxu0 0.0
    %688 = vmatpush1.xpose.msra.mxu0 0.0
    %689 = vmatprep.subr.mxu0 0.0
    %690 = vmatpush1.xpose.msra.mxu0 0.0
    %691 = vmatprep.subr.mxu0 0.0
    %692 = vmatpush1.xpose.msra.mxu0 0.0
    %693 = vmatprep.subr.mxu0 0.0
    %694 = vmatpush1.xpose.msra.mxu0 0.0
    %695 = vmatprep.subr.mxu0 0.0
    %696 = vmatpush1.xpose.msra.mxu0 0.0
    %697 = vmatprep.mubr.f32.mxu0 0.0
    %698 = vmatmul.mubr.f32.gmra.mrb[0].mxu0 %v209
    %v699 = vpop.f32.mrb[0].mxu0
    %v700 = vadd.f32 0.0, %v699
    %v701 = vpop.f32.mrb[0].mxu0
    %702 = vdwg.mxu0
    %v704 = vsel %vm207, %v625, 0
    %v707 = vsel %vm207, %v626, 0
    %709 = vmatprep.subr.mxu0 0.0
    %710 = vmatpush1.xpose.msra.mxu0 %v704
    %711 = vmatprep.subr.mxu0 0.0
    %712 = vmatpush1.xpose.msra.mxu0 %v707
    %713 = vmatprep.subr.mxu0 0.0
    %714 = vmatpush1.xpose.msra.mxu0 0.0
    %715 = vmatprep.subr.mxu0 0.0
    %716 = vmatpush1.xpose.msra.mxu0 0.0
    %717 = vmatprep.subr.mxu0 0.0
    %718 = vmatpush1.xpose.msra.mxu0 0.0
    %719 = vmatprep.subr.mxu0 0.0
    %720 = vmatpush1.xpose.msra.mxu0 0.0
    %721 = vmatprep.subr.mxu0 0.0
    %722 = vmatpush1.xpose.msra.mxu0 0.0
    %723 = vmatprep.subr.mxu0 0.0
    %724 = vmatpush1.xpose.msra.mxu0 0.0
    %725 = vmatprep.subr.mxu0 0.0
    %726 = vmatpush1.xpose.msra.mxu0 0.0
    %727 = vmatprep.subr.mxu0 0.0
    %728 = vmatpush1.xpose.msra.mxu0 0.0
    %729 = vmatprep.subr.mxu0 0.0
    %730 = vmatpush1.xpose.msra.mxu0 0.0
    %731 = vmatprep.subr.mxu0 0.0
    %732 = vmatpush1.xpose.msra.mxu0 0.0
    %733 = vmatprep.subr.mxu0 0.0
    %734 = vmatpush1.xpose.msra.mxu0 0.0
    %735 = vmatprep.subr.mxu0 0.0
    %736 = vmatpush1.xpose.msra.mxu0 0.0
    %737 = vmatprep.subr.mxu0 0.0
    %738 = vmatpush1.xpose.msra.mxu0 0.0
    %739 = vmatprep.subr.mxu0 0.0
    %740 = vmatpush1.xpose.msra.mxu0 0.0
    %741 = vmatprep.subr.mxu0 0.0
    %742 = vmatpush1.xpose.msra.mxu0 0.0
    %743 = vmatprep.subr.mxu0 0.0
    %744 = vmatpush1.xpose.msra.mxu0 0.0
    %745 = vmatprep.subr.mxu0 0.0
    %746 = vmatpush1.xpose.msra.mxu0 0.0
    %747 = vmatprep.subr.mxu0 0.0
    %748 = vmatpush1.xpose.msra.mxu0 0.0
    %749 = vmatprep.subr.mxu0 0.0
    %750 = vmatpush1.xpose.msra.mxu0 0.0
    %751 = vmatprep.subr.mxu0 0.0
    %752 = vmatpush1.xpose.msra.mxu0 0.0
    %753 = vmatprep.subr.mxu0 0.0
    %754 = vmatpush1.xpose.msra.mxu0 0.0
    %755 = vmatprep.subr.mxu0 0.0
    %756 = vmatpush1.xpose.msra.mxu0 0.0
    %757 = vmatprep.subr.mxu0 0.0
    %758 = vmatpush1.xpose.msra.mxu0 0.0
    %759 = vmatprep.subr.mxu0 0.0
    %760 = vmatpush1.xpose.msra.mxu0 0.0
    %761 = vmatprep.subr.mxu0 0.0
    %762 = vmatpush1.xpose.msra.mxu0 0.0
    %763 = vmatprep.subr.mxu0 0.0
    %764 = vmatpush1.xpose.msra.mxu0 0.0
    %765 = vmatprep.subr.mxu0 0.0
    %766 = vmatpush1.xpose.msra.mxu0 0.0
    %767 = vmatprep.subr.mxu0 0.0
    %768 = vmatpush1.xpose.msra.mxu0 0.0
    %769 = vmatprep.subr.mxu0 0.0
    %770 = vmatpush1.xpose.msra.mxu0 0.0
    %771 = vmatprep.subr.mxu0 0.0
    %772 = vmatpush1.xpose.msra.mxu0 0.0
    %773 = vmatprep.mubr.f32.mxu0 0.0
    %774 = vmatmul.mubr.f32.gmra.mrb[0].mxu0 %v290
    %v775 = vpop.f32.mrb[0].mxu0
    %v776 = vadd.f32 0.0, %v775
    %v777 = vpop.f32.mrb[0].mxu0
    %778 = vdwg.mxu0
    %v780 = vrot.slane %v776, 7
    %v782 = vsel %vm371, %v700, %v780
    %v783 = vmul.f32 %v782, 0.2
    %v784 = vtanh.pop %v783
    %v785 = vmul.f32 %v784, 2.5
    %v786 = vmul.f32 %v785, 1.442695
    %v787 = vpow.pop %v786
    %v788 = vsel %vm43, %v787, 0.0
    %v789 = vsel %vm379, %v788, 0.0
    %790 = vadd.xlane.f32.xlu0 %v789
    %v791 = vpop.xlane.xlu0 %790
    %v792 = vlog2.pop %v791
    %v793 = vmul.f32 %v792, 0.6931472
    %v794 = vrcp.pop %v791
    %v795 = vsub.f32 %v785, %v793
    %v796 = vsel %vm43, %v795, 0.0
    %v798 = vsel %vm389, %v788, 0
    %800 = vmatprep.subr.mxu0 0.0
    %801 = vmatpush1.msra.mxu0 %v41
    %802 = vmatprep.subr.mxu0 0.0
    %803 = vmatpush1.msra.mxu0 %v395
    %804 = vmatprep.subr.mxu0 0.0
    %805 = vmatpush1.msra.mxu0 0.0
    %806 = vmatprep.subr.mxu0 0.0
    %807 = vmatpush1.msra.mxu0 0.0
    %808 = vmatprep.subr.mxu0 0.0
    %809 = vmatpush1.msra.mxu0 0.0
    %810 = vmatprep.subr.mxu0 0.0
    %811 = vmatpush1.msra.mxu0 0.0
    %812 = vmatprep.subr.mxu0 0.0
    %813 = vmatpush1.msra.mxu0 0.0
    %814 = vmatprep.subr.mxu0 0.0
    %815 = vmatpush1.msra.mxu0 0.0
    %816 = vmatprep.subr.mxu0 0.0
    %817 = vmatpush1.msra.mxu0 0.0
    %818 = vmatprep.subr.mxu0 0.0
    %819 = vmatpush1.msra.mxu0 0.0
    %820 = vmatprep.subr.mxu0 0.0
    %821 = vmatpush1.msra.mxu0 0.0
    %822 = vmatprep.subr.mxu0 0.0
    %823 = vmatpush1.msra.mxu0 0.0
    %824 = vmatprep.subr.mxu0 0.0
    %825 = vmatpush1.msra.mxu0 0.0
    %826 = vmatprep.subr.mxu0 0.0
    %827 = vmatpush1.msra.mxu0 0.0
    %828 = vmatprep.subr.mxu0 0.0
    %829 = vmatpush1.msra.mxu0 0.0
    %830 = vmatprep.subr.mxu0 0.0
    %831 = vmatpush1.msra.mxu0 0.0
    %832 = vmatprep.subr.mxu0 0.0
    %833 = vmatpush1.msra.mxu0 0.0
    %834 = vmatprep.subr.mxu0 0.0
    %835 = vmatpush1.msra.mxu0 0.0
    %836 = vmatprep.subr.mxu0 0.0
    %837 = vmatpush1.msra.mxu0 0.0
    %838 = vmatprep.subr.mxu0 0.0
    %839 = vmatpush1.msra.mxu0 0.0
    %840 = vmatprep.subr.mxu0 0.0
    %841 = vmatpush1.msra.mxu0 0.0
    %842 = vmatprep.subr.mxu0 0.0
    %843 = vmatpush1.msra.mxu0 0.0
    %844 = vmatprep.subr.mxu0 0.0
    %845 = vmatpush1.msra.mxu0 0.0
    %846 = vmatprep.subr.mxu0 0.0
    %847 = vmatpush1.msra.mxu0 0.0
    %848 = vmatprep.subr.mxu0 0.0
    %849 = vmatpush1.msra.mxu0 0.0
    %850 = vmatprep.subr.mxu0 0.0
    %851 = vmatpush1.msra.mxu0 0.0
    %852 = vmatprep.subr.mxu0 0.0
    %853 = vmatpush1.msra.mxu0 0.0
    %854 = vmatprep.subr.mxu0 0.0
    %855 = vmatpush1.msra.mxu0 0.0
    %856 = vmatprep.subr.mxu0 0.0
    %857 = vmatpush1.msra.mxu0 0.0
    %858 = vmatprep.subr.mxu0 0.0
    %859 = vmatpush1.msra.mxu0 0.0
    %860 = vmatprep.subr.mxu0 0.0
    %861 = vmatpush1.msra.mxu0 0.0
    %862 = vmatprep.subr.mxu0 0.0
    %863 = vmatpush1.msra.mxu0 0.0
    %864 = vmatprep.mubr.f32.mxu0 0.0
    %865 = vmatmul.mubr.f32.gmra.mrb[0].mxu0 %v798
    %v866 = vpop.f32.mrb[0].mxu0
    %v867 = vadd.f32 0.0, %v866
    %v868 = vpop.f32.mrb[0].mxu0
    %869 = vdwg.mxu0
    %v870 = vmul.f32 %v388, %v791
    %872 = vset.pattern.permute.xlu0 1
    %873 = vperm.xlu0 %872, %v870
    %v874 = vpop.permute.xlu0 %873
    %vm876 = vcmp.lt.f32.partialorder %v867, %v874
    %v877 = vsel %vm876, 1, 0
    %v878 = vcvt.s32.f32 %v877
    %v879 = vsel %vm379, %v878, 0.0
    %880 = vadd.xlane.f32.xlu0 %v879
    %v881 = vpop.xlane.xlu0 %880
    %v882 = vcvt.f32.s32.to.zero.pseudo %v881
    %vm883 = vcmp.lt.s32.totalorder %v882, 1
    %v884 = vsel %vm883, %v882, 1
    %v885 = vcvt.s32.f32 %v884
    %vm886 = vcmp.eq.s32.totalorder %v33, %v884
    %v887 = vsel %vm886, 1, 0
    %v888 = vcvt.s32.f32 %v887
    %v889 = vmul.f32 %v888, %v796
    %v890 = vsel %vm379, %v889, 0.0
    %891 = vadd.xlane.f32.xlu0 %v890
    %v892 = vpop.xlane.xlu0 %891
    %v893 = vadd.f32 %v490, %v892
    %v894 = vmul.f32 %v788, %v796
    %v895 = vsel %vm379, %v894, 0.0
    %896 = vadd.xlane.f32.xlu0 %v895
    %v897 = vpop.xlane.xlu0 %896
    %v898 = vmul.f32 %v897, %v794
    %v899 = vsub.f32 %v496, %v898
    %vm900 = vcmp.eq.s32.totalorder %v33, 1
    %v901 = vsel %vm900, 1, 0
    %v902 = vcvt.s32.f32 %v901
    %v903 = vmul.f32 %v885, %v902
    %v904 = vadd.f32 %v501, %v903
    %vm905 = vcmp.lt.s32.totalorder %v33, 5
    %907 = vrot.lane.b32.xlu0 %v610, 42
    %v908 = vpop.permute.xlu0 %907
    %v910 = vsel %vm389, %v888, %v908
    %v911 = vsel %vm44, %v910, 1.0
    %v912 = vsel %vm46, %v911, 0.0
    %914 = vrot.lane.b32.xlu0 %v911, 64
    %v915 = vpop.permute.xlu0 %914
    %v917 = vsel %vm52, 0.0, %v915
    %v918 = vsel %vm54, %v917, 0.0
    %v919 = vsel %vm56, %v912, %v918
    %920 = vmatprep.subr.mxu0 %v59
    %921 = vmatpush1.msra.mxu0 %v58
    %922 = vmatprep.subr.mxu0 %v61
    %923 = vmatpush1.msra.mxu0 %v60
    %924 = vmatprep.subr.mxu0 %v63
    %925 = vmatpush1.msra.mxu0 %v62
    %926 = vmatprep.subr.mxu0 %v65
    %927 = vmatpush1.msra.mxu0 %v64
    %928 = vmatprep.subr.mxu0 %v67
    %929 = vmatpush1.msra.mxu0 %v66
    %930 = vmatprep.subr.mxu0 %v69
    %931 = vmatpush1.msra.mxu0 %v68
    %932 = vmatprep.subr.mxu0 %v71
    %933 = vmatpush1.msra.mxu0 %v70
    %934 = vmatprep.subr.mxu0 %v73
    %935 = vmatpush1.msra.mxu0 %v72
    %936 = vmatprep.subr.mxu0 %v75
    %937 = vmatpush1.msra.mxu0 %v74
    %938 = vmatprep.subr.mxu0 %v77
    %939 = vmatpush1.msra.mxu0 %v76
    %940 = vmatprep.subr.mxu0 %v79
    %941 = vmatpush1.msra.mxu0 %v78
    %942 = vmatprep.subr.mxu0 %v81
    %943 = vmatpush1.msra.mxu0 %v80
    %944 = vmatprep.subr.mxu0 %v83
    %945 = vmatpush1.msra.mxu0 %v82
    %946 = vmatprep.subr.mxu0 %v85
    %947 = vmatpush1.msra.mxu0 %v84
    %948 = vmatprep.subr.mxu0 %v87
    %949 = vmatpush1.msra.mxu0 %v86
    %950 = vmatprep.subr.mxu0 %v89
    %951 = vmatpush1.msra.mxu0 %v88
    %952 = vmatprep.subr.mxu0 0.0
    %953 = vmatpush1.msra.mxu0 0.0
    %954 = vmatprep.subr.mxu0 0.0
    %955 = vmatpush1.msra.mxu0 0.0
    %956 = vmatprep.subr.mxu0 0.0
    %957 = vmatpush1.msra.mxu0 0.0
    %958 = vmatprep.subr.mxu0 0.0
    %959 = vmatpush1.msra.mxu0 0.0
    %960 = vmatprep.subr.mxu0 0.0
    %961 = vmatpush1.msra.mxu0 0.0
    %962 = vmatprep.subr.mxu0 0.0
    %963 = vmatpush1.msra.mxu0 0.0
    %964 = vmatprep.subr.mxu0 0.0
    %965 = vmatpush1.msra.mxu0 0.0
    %966 = vmatprep.subr.mxu0 0.0
    %967 = vmatpush1.msra.mxu0 0.0
    %968 = vmatprep.subr.mxu0 0.0
    %969 = vmatpush1.msra.mxu0 0.0
    %970 = vmatprep.subr.mxu0 0.0
    %971 = vmatpush1.msra.mxu0 0.0
    %972 = vmatprep.subr.mxu0 0.0
    %973 = vmatpush1.msra.mxu0 0.0
    %974 = vmatprep.subr.mxu0 0.0
    %975 = vmatpush1.msra.mxu0 0.0
    %976 = vmatprep.subr.mxu0 0.0
    %977 = vmatpush1.msra.mxu0 0.0
    %978 = vmatprep.subr.mxu0 0.0
    %979 = vmatpush1.msra.mxu0 0.0
    %980 = vmatprep.subr.mxu0 0.0
    %981 = vmatpush1.msra.mxu0 0.0
    %982 = vmatprep.subr.mxu0 0.0
    %983 = vmatpush1.msra.mxu0 0.0
    %984 = vmatprep.mubr.f32.mxu0 0.0
    %985 = vmatmul.mubr.f32.gmra.mrb[0].mxu0 %v919
    %v986 = vpop.f32.mrb[0].mxu0
    %v987 = vadd.f32 0.0, %v986
    %v988 = vpop.f32.mrb[0].mxu0
    %v989 = vadd.f32 0.0, %v988
    %990 = vdwg.mxu0
    %v991 = vxor.u32 %v987, 2147483648
    %v992 = vmul.f32 %v991, 1.442695
    %v993 = vpow.pop %v992
    %v994 = vadd.f32 %v993, 1.0
    %v995 = vrcp.pop %v994
    %v996 = vmul.f32 1.0, %v995
    %v997 = vtanh.pop %v987
    %v998 = vmul.f32 %v996, %v604
    %1000 = vrot.lane.b32.xlu0 %v997, 64
    %v1001 = vpop.permute.xlu0 %1000
    %v1003 = vmul.f32 %v996, %v1001
    %1005 = vrot.lane.b32.xlu0 %v1003, 32
    %v1006 = vpop.permute.xlu0 %1005
    %v1008 = vadd.f32 %v998, %v1006
    %v1009 = vtanh.pop %v1008
    %1011 = vrot.lane.b32.xlu0 %v1009, 64
    %v1012 = vpop.permute.xlu0 %1011
    %v1014 = vmul.f32 %v996, %v1012
    %v1015 = vmul.f32 %v989, 0.2
    %v1016 = vtanh.pop %v1015
    %v1017 = vmul.f32 %v1016, 1.442695
    %v1018 = vpow.pop %v1017
    %1020 = vrot.lane.b32.xlu0 %v1018, 96
    %v1021 = vpop.permute.xlu0 %1020
    %v1023 = vsel %vm905, %v1021, 0.0
    %v1024 = vsel %vm379, %v1023, 0.0
    %1025 = vadd.xlane.f32.xlu0 %v1024
    %v1026 = vpop.xlane.xlu0 %1025
    %v1027 = vlog2.pop %v1026
    %v1028 = vmul.f32 %v1027, 0.6931472
    %v1029 = vrcp.pop %v1026
    %v1030 = vsub.f32 %v1016, %v1028
    %1032 = vrot.lane.b32.xlu0 %v1030, 96
    %v1033 = vpop.permute.xlu0 %1032
    %v1035 = vsel %vm905, %v1033, 0.0
    %v1037 = vsel %vm389, %v1023, 0
    %1039 = vmatprep.subr.mxu0 0.0
    %1040 = vmatpush1.msra.mxu0 %v41
    %1041 = vmatprep.subr.mxu0 0.0
    %1042 = vmatpush1.msra.mxu0 %v395
    %1043 = vmatprep.subr.mxu0 0.0
    %1044 = vmatpush1.msra.mxu0 0.0
    %1045 = vmatprep.subr.mxu0 0.0
    %1046 = vmatpush1.msra.mxu0 0.0
    %1047 = vmatprep.subr.mxu0 0.0
    %1048 = vmatpush1.msra.mxu0 0.0
    %1049 = vmatprep.subr.mxu0 0.0
    %1050 = vmatpush1.msra.mxu0 0.0
    %1051 = vmatprep.subr.mxu0 0.0
    %1052 = vmatpush1.msra.mxu0 0.0
    %1053 = vmatprep.subr.mxu0 0.0
    %1054 = vmatpush1.msra.mxu0 0.0
    %1055 = vmatprep.subr.mxu0 0.0
    %1056 = vmatpush1.msra.mxu0 0.0
    %1057 = vmatprep.subr.mxu0 0.0
    %1058 = vmatpush1.msra.mxu0 0.0
    %1059 = vmatprep.subr.mxu0 0.0
    %1060 = vmatpush1.msra.mxu0 0.0
    %1061 = vmatprep.subr.mxu0 0.0
    %1062 = vmatpush1.msra.mxu0 0.0
    %1063 = vmatprep.subr.mxu0 0.0
    %1064 = vmatpush1.msra.mxu0 0.0
    %1065 = vmatprep.subr.mxu0 0.0
    %1066 = vmatpush1.msra.mxu0 0.0
    %1067 = vmatprep.subr.mxu0 0.0
    %1068 = vmatpush1.msra.mxu0 0.0
    %1069 = vmatprep.subr.mxu0 0.0
    %1070 = vmatpush1.msra.mxu0 0.0
    %1071 = vmatprep.subr.mxu0 0.0
    %1072 = vmatpush1.msra.mxu0 0.0
    %1073 = vmatprep.subr.mxu0 0.0
    %1074 = vmatpush1.msra.mxu0 0.0
    %1075 = vmatprep.subr.mxu0 0.0
    %1076 = vmatpush1.msra.mxu0 0.0
    %1077 = vmatprep.subr.mxu0 0.0
    %1078 = vmatpush1.msra.mxu0 0.0
    %1079 = vmatprep.subr.mxu0 0.0
    %1080 = vmatpush1.msra.mxu0 0.0
    %1081 = vmatprep.subr.mxu0 0.0
    %1082 = vmatpush1.msra.mxu0 0.0
    %1083 = vmatprep.subr.mxu0 0.0
    %1084 = vmatpush1.msra.mxu0 0.0
    %1085 = vmatprep.subr.mxu0 0.0
    %1086 = vmatpush1.msra.mxu0 0.0
    %1087 = vmatprep.subr.mxu0 0.0
    %1088 = vmatpush1.msra.mxu0 0.0
    %1089 = vmatprep.subr.mxu0 0.0
    %1090 = vmatpush1.msra.mxu0 0.0
    %1091 = vmatprep.subr.mxu0 0.0
    %1092 = vmatpush1.msra.mxu0 0.0
    %1093 = vmatprep.subr.mxu0 0.0
    %1094 = vmatpush1.msra.mxu0 0.0
    %1095 = vmatprep.subr.mxu0 0.0
    %1096 = vmatpush1.msra.mxu0 0.0
    %1097 = vmatprep.subr.mxu0 0.0
    %1098 = vmatpush1.msra.mxu0 0.0
    %1099 = vmatprep.subr.mxu0 0.0
    %1100 = vmatpush1.msra.mxu0 0.0
    %1101 = vmatprep.subr.mxu0 0.0
    %1102 = vmatpush1.msra.mxu0 0.0
    %1103 = vmatprep.mubr.f32.mxu0 0.0
    %1104 = vmatmul.mubr.f32.gmra.mrb[0].mxu0 %v1037
    %v1105 = vpop.f32.mrb[0].mxu0
    %v1106 = vadd.f32 0.0, %v1105
    %v1107 = vpop.f32.mrb[0].mxu0
    %1108 = vdwg.mxu0
    %v1109 = vmul.f32 %v388, %v1026
    %1111 = vset.pattern.permute.xlu0 2
    %1112 = vperm.xlu0 %1111, %v1109
    %v1113 = vpop.permute.xlu0 %1112
    %vm1115 = vcmp.lt.f32.partialorder %v1106, %v1113
    %v1116 = vsel %vm1115, 1, 0
    %v1117 = vcvt.s32.f32 %v1116
    %v1118 = vsel %vm379, %v1117, 0.0
    %1119 = vadd.xlane.f32.xlu0 %v1118
    %v1120 = vpop.xlane.xlu0 %1119
    %v1121 = vcvt.f32.s32.to.zero.pseudo %v1120
    %vm1122 = vcmp.lt.s32.totalorder %v1121, 4
    %v1123 = vsel %vm1122, %v1121, 4
    %v1124 = vcvt.s32.f32 %v1123
    %vm1125 = vcmp.eq.s32.totalorder %v33, %v1123
    %v1126 = vsel %vm1125, 1, 0
    %v1127 = vcvt.s32.f32 %v1126
    %v1128 = vmul.f32 %v1127, %v1035
    %v1129 = vsel %vm379, %v1128, 0.0
    %1130 = vadd.xlane.f32.xlu0 %v1129
    %v1131 = vpop.xlane.xlu0 %1130
    %v1132 = vadd.f32 %v893, %v1131
    %v1133 = vmul.f32 %v1023, %v1035
    %v1134 = vsel %vm379, %v1133, 0.0
    %1135 = vadd.xlane.f32.xlu0 %v1134
    %v1136 = vpop.xlane.xlu0 %1135
    %v1137 = vmul.f32 %v1136, %v1029
    %v1138 = vsub.f32 %v899, %v1137
    %vm1139 = vcmp.eq.s32.totalorder %v33, 8
    %v1140 = vsel %vm1139, 1, 0
    %v1141 = vcvt.s32.f32 %v1140
    %v1142 = vmul.f32 %v1124, %v1141
    %v1143 = vadd.f32 %v904, %v1142
    %v1144 = vadd.s32 %v1123, 5
    %vm1145 = vcmp.eq.s32.totalorder %v33, %v1144
    %v1146 = vsel %vm1145, 1, 0
    %v1147 = vcvt.s32.f32 %v1146
    %1149 = vrot.lane.b32.xlu0 %v1014, 42
    %v1150 = vpop.permute.xlu0 %1149
    %v1152 = vsel %vm389, %v1147, %v1150
    %v1153 = vsel %vm44, %v1152, 1.0
    %v1154 = vsel %vm46, %v1153, 0.0
    %1156 = vrot.lane.b32.xlu0 %v1153, 64
    %v1157 = vpop.permute.xlu0 %1156
    %v1159 = vsel %vm52, 0.0, %v1157
    %v1160 = vsel %vm54, %v1159, 0.0
    %v1161 = vsel %vm56, %v1154, %v1160
    %1162 = vmatprep.subr.mxu0 %v59
    %1163 = vmatpush1.msra.mxu0 %v58
    %1164 = vmatprep.subr.mxu0 %v61
    %1165 = vmatpush1.msra.mxu0 %v60
    %1166 = vmatprep.subr.mxu0 %v63
    %1167 = vmatpush1.msra.mxu0 %v62
    %1168 = vmatprep.subr.mxu0 %v65
    %1169 = vmatpush1.msra.mxu0 %v64
    %1170 = vmatprep.subr.mxu0 %v67
    %1171 = vmatpush1.msra.mxu0 %v66
    %1172 = vmatprep.subr.mxu0 %v69
    %1173 = vmatpush1.msra.mxu0 %v68
    %1174 = vmatprep.subr.mxu0 %v71
    %1175 = vmatpush1.msra.mxu0 %v70
    %1176 = vmatprep.subr.mxu0 %v73
    %1177 = vmatpush1.msra.mxu0 %v72
    %1178 = vmatprep.subr.mxu0 %v75
    %1179 = vmatpush1.msra.mxu0 %v74
    %1180 = vmatprep.subr.mxu0 %v77
    %1181 = vmatpush1.msra.mxu0 %v76
    %1182 = vmatprep.subr.mxu0 %v79
    %1183 = vmatpush1.msra.mxu0 %v78
    %1184 = vmatprep.subr.mxu0 %v81
    %1185 = vmatpush1.msra.mxu0 %v80
    %1186 = vmatprep.subr.mxu0 %v83
    %1187 = vmatpush1.msra.mxu0 %v82
    %1188 = vmatprep.subr.mxu0 %v85
    %1189 = vmatpush1.msra.mxu0 %v84
    %1190 = vmatprep.subr.mxu0 %v87
    %1191 = vmatpush1.msra.mxu0 %v86
    %1192 = vmatprep.subr.mxu0 %v89
    %1193 = vmatpush1.msra.mxu0 %v88
    %1194 = vmatprep.subr.mxu0 0.0
    %1195 = vmatpush1.msra.mxu0 0.0
    %1196 = vmatprep.subr.mxu0 0.0
    %1197 = vmatpush1.msra.mxu0 0.0
    %1198 = vmatprep.subr.mxu0 0.0
    %1199 = vmatpush1.msra.mxu0 0.0
    %1200 = vmatprep.subr.mxu0 0.0
    %1201 = vmatpush1.msra.mxu0 0.0
    %1202 = vmatprep.subr.mxu0 0.0
    %1203 = vmatpush1.msra.mxu0 0.0
    %1204 = vmatprep.subr.mxu0 0.0
    %1205 = vmatpush1.msra.mxu0 0.0
    %1206 = vmatprep.subr.mxu0 0.0
    %1207 = vmatpush1.msra.mxu0 0.0
    %1208 = vmatprep.subr.mxu0 0.0
    %1209 = vmatpush1.msra.mxu0 0.0
    %1210 = vmatprep.subr.mxu0 0.0
    %1211 = vmatpush1.msra.mxu0 0.0
    %1212 = vmatprep.subr.mxu0 0.0
    %1213 = vmatpush1.msra.mxu0 0.0
    %1214 = vmatprep.subr.mxu0 0.0
    %1215 = vmatpush1.msra.mxu0 0.0
    %1216 = vmatprep.subr.mxu0 0.0
    %1217 = vmatpush1.msra.mxu0 0.0
    %1218 = vmatprep.subr.mxu0 0.0
    %1219 = vmatpush1.msra.mxu0 0.0
    %1220 = vmatprep.subr.mxu0 0.0
    %1221 = vmatpush1.msra.mxu0 0.0
    %1222 = vmatprep.subr.mxu0 0.0
    %1223 = vmatpush1.msra.mxu0 0.0
    %1224 = vmatprep.subr.mxu0 0.0
    %1225 = vmatpush1.msra.mxu0 0.0
    %1226 = vmatprep.mubr.f32.mxu0 0.0
    %1227 = vmatmul.mubr.f32.gmra.mrb[0].mxu0 %v1161
    %v1228 = vpop.f32.mrb[0].mxu0
    %v1229 = vadd.f32 0.0, %v1228
    %v1230 = vpop.f32.mrb[0].mxu0
    %v1231 = vadd.f32 0.0, %v1230
    %1232 = vdwg.mxu0
    %v1233 = vxor.u32 %v1229, 2147483648
    %v1234 = vmul.f32 %v1233, 1.442695
    %v1235 = vpow.pop %v1234
    %v1236 = vadd.f32 %v1235, 1.0
    %v1237 = vrcp.pop %v1236
    %v1238 = vmul.f32 1.0, %v1237
    %v1239 = vtanh.pop %v1229
    %v1240 = vmul.f32 %v1238, %v1008
    %1242 = vrot.lane.b32.xlu0 %v1239, 64
    %v1243 = vpop.permute.xlu0 %1242
    %v1245 = vmul.f32 %v1238, %v1243
    %1247 = vrot.lane.b32.xlu0 %v1245, 32
    %v1248 = vpop.permute.xlu0 %1247
    %v1250 = vadd.f32 %v1240, %v1248
    %v1251 = vtanh.pop %v1250
    %1253 = vrot.lane.b32.xlu0 %v1251, 64
    %v1254 = vpop.permute.xlu0 %1253
    %v1256 = vmul.f32 %v1238, %v1254
    %v1257 = vmul.f32 %v1231, 0.2
    %v1258 = vtanh.pop %v1257
    %v1259 = vmul.f32 %v1258, 1.442695
    %v1260 = vpow.pop %v1259
    %1262 = vrot.lane.b32.xlu0 %v1260, 96
    %v1263 = vpop.permute.xlu0 %1262
    %v1265 = vsel %vm905, %v1263, 0.0
    %v1266 = vsel %vm379, %v1265, 0.0
    %1267 = vadd.xlane.f32.xlu0 %v1266
    %v1268 = vpop.xlane.xlu0 %1267
    %v1269 = vlog2.pop %v1268
    %v1270 = vmul.f32 %v1269, 0.6931472
    %v1271 = vrcp.pop %v1268
    %v1272 = vsub.f32 %v1258, %v1270
    %1274 = vrot.lane.b32.xlu0 %v1272, 96
    %v1275 = vpop.permute.xlu0 %1274
    %v1277 = vsel %vm905, %v1275, 0.0
    %v1279 = vsel %vm389, %v1265, 0
    %1281 = vmatprep.subr.mxu0 0.0
    %1282 = vmatpush1.msra.mxu0 %v41
    %1283 = vmatprep.subr.mxu0 0.0
    %1284 = vmatpush1.msra.mxu0 %v395
    %1285 = vmatprep.subr.mxu0 0.0
    %1286 = vmatpush1.msra.mxu0 0.0
    %1287 = vmatprep.subr.mxu0 0.0
    %1288 = vmatpush1.msra.mxu0 0.0
    %1289 = vmatprep.subr.mxu0 0.0
    %1290 = vmatpush1.msra.mxu0 0.0
    %1291 = vmatprep.subr.mxu0 0.0
    %1292 = vmatpush1.msra.mxu0 0.0
    %1293 = vmatprep.subr.mxu0 0.0
    %1294 = vmatpush1.msra.mxu0 0.0
    %1295 = vmatprep.subr.mxu0 0.0
    %1296 = vmatpush1.msra.mxu0 0.0
    %1297 = vmatprep.subr.mxu0 0.0
    %1298 = vmatpush1.msra.mxu0 0.0
    %1299 = vmatprep.subr.mxu0 0.0
    %1300 = vmatpush1.msra.mxu0 0.0
    %1301 = vmatprep.subr.mxu0 0.0
    %1302 = vmatpush1.msra.mxu0 0.0
    %1303 = vmatprep.subr.mxu0 0.0
    %1304 = vmatpush1.msra.mxu0 0.0
    %1305 = vmatprep.subr.mxu0 0.0
    %1306 = vmatpush1.msra.mxu0 0.0
    %1307 = vmatprep.subr.mxu0 0.0
    %1308 = vmatpush1.msra.mxu0 0.0
    %1309 = vmatprep.subr.mxu0 0.0
    %1310 = vmatpush1.msra.mxu0 0.0
    %1311 = vmatprep.subr.mxu0 0.0
    %1312 = vmatpush1.msra.mxu0 0.0
    %1313 = vmatprep.subr.mxu0 0.0
    %1314 = vmatpush1.msra.mxu0 0.0
    %1315 = vmatprep.subr.mxu0 0.0
    %1316 = vmatpush1.msra.mxu0 0.0
    %1317 = vmatprep.subr.mxu0 0.0
    %1318 = vmatpush1.msra.mxu0 0.0
    %1319 = vmatprep.subr.mxu0 0.0
    %1320 = vmatpush1.msra.mxu0 0.0
    %1321 = vmatprep.subr.mxu0 0.0
    %1322 = vmatpush1.msra.mxu0 0.0
    %1323 = vmatprep.subr.mxu0 0.0
    %1324 = vmatpush1.msra.mxu0 0.0
    %1325 = vmatprep.subr.mxu0 0.0
    %1326 = vmatpush1.msra.mxu0 0.0
    %1327 = vmatprep.subr.mxu0 0.0
    %1328 = vmatpush1.msra.mxu0 0.0
    %1329 = vmatprep.subr.mxu0 0.0
    %1330 = vmatpush1.msra.mxu0 0.0
    %1331 = vmatprep.subr.mxu0 0.0
    %1332 = vmatpush1.msra.mxu0 0.0
    %1333 = vmatprep.subr.mxu0 0.0
    %1334 = vmatpush1.msra.mxu0 0.0
    %1335 = vmatprep.subr.mxu0 0.0
    %1336 = vmatpush1.msra.mxu0 0.0
    %1337 = vmatprep.subr.mxu0 0.0
    %1338 = vmatpush1.msra.mxu0 0.0
    %1339 = vmatprep.subr.mxu0 0.0
    %1340 = vmatpush1.msra.mxu0 0.0
    %1341 = vmatprep.subr.mxu0 0.0
    %1342 = vmatpush1.msra.mxu0 0.0
    %1343 = vmatprep.subr.mxu0 0.0
    %1344 = vmatpush1.msra.mxu0 0.0
    %1345 = vmatprep.mubr.f32.mxu0 0.0
    %1346 = vmatmul.mubr.f32.gmra.mrb[0].mxu0 %v1279
    %v1347 = vpop.f32.mrb[0].mxu0
    %v1348 = vadd.f32 0.0, %v1347
    %v1349 = vpop.f32.mrb[0].mxu0
    %1350 = vdwg.mxu0
    %v1351 = vmul.f32 %v388, %v1268
    %1353 = vset.pattern.permute.xlu0 3
    %1354 = vperm.xlu0 %1353, %v1351
    %v1355 = vpop.permute.xlu0 %1354
    %vm1357 = vcmp.lt.f32.partialorder %v1348, %v1355
    %v1358 = vsel %vm1357, 1, 0
    %v1359 = vcvt.s32.f32 %v1358
    %v1360 = vsel %vm379, %v1359, 0.0
    %1361 = vadd.xlane.f32.xlu0 %v1360
    %v1362 = vpop.xlane.xlu0 %1361
    %v1363 = vcvt.f32.s32.to.zero.pseudo %v1362
    %vm1364 = vcmp.lt.s32.totalorder %v1363, 4
    %v1365 = vsel %vm1364, %v1363, 4
    %v1366 = vcvt.s32.f32 %v1365
    %vm1367 = vcmp.eq.s32.totalorder %v33, %v1365
    %v1368 = vsel %vm1367, 1, 0
    %v1369 = vcvt.s32.f32 %v1368
    %v1370 = vmul.f32 %v1369, %v1277
    %v1371 = vsel %vm379, %v1370, 0.0
    %1372 = vadd.xlane.f32.xlu0 %v1371
    %v1373 = vpop.xlane.xlu0 %1372
    %v1374 = vadd.f32 %v1132, %v1373
    %v1375 = vmul.f32 %v1265, %v1277
    %v1376 = vsel %vm379, %v1375, 0.0
    %1377 = vadd.xlane.f32.xlu0 %v1376
    %v1378 = vpop.xlane.xlu0 %1377
    %v1379 = vmul.f32 %v1378, %v1271
    %v1380 = vsub.f32 %v1138, %v1379
    %vm1381 = vcmp.eq.s32.totalorder %v33, 9
    %v1382 = vsel %vm1381, 1, 0
    %v1383 = vcvt.s32.f32 %v1382
    %v1384 = vmul.f32 %v1366, %v1383
    %v1385 = vadd.f32 %v1143, %v1384
    %v1386 = vadd.s32 %v1365, 5
    %vm1387 = vcmp.eq.s32.totalorder %v33, %v1386
    %v1388 = vsel %vm1387, 1, 0
    %v1389 = vcvt.s32.f32 %v1388
    %vm1390 = vcmp.lt.s32.totalorder %v33, 3
    %1392 = vrot.lane.b32.xlu0 %v1256, 42
    %v1393 = vpop.permute.xlu0 %1392
    %v1395 = vsel %vm389, %v1389, %v1393
    %v1396 = vsel %vm44, %v1395, 1.0
    %v1397 = vsel %vm46, %v1396, 0.0
    %1399 = vrot.lane.b32.xlu0 %v1396, 64
    %v1400 = vpop.permute.xlu0 %1399
    %v1402 = vsel %vm52, 0.0, %v1400
    %v1403 = vsel %vm54, %v1402, 0.0
    %v1404 = vsel %vm56, %v1397, %v1403
    %1405 = vmatprep.subr.mxu0 %v59
    %1406 = vmatpush1.msra.mxu0 %v58
    %1407 = vmatprep.subr.mxu0 %v61
    %1408 = vmatpush1.msra.mxu0 %v60
    %1409 = vmatprep.subr.mxu0 %v63
    %1410 = vmatpush1.msra.mxu0 %v62
    %1411 = vmatprep.subr.mxu0 %v65
    %1412 = vmatpush1.msra.mxu0 %v64
    %1413 = vmatprep.subr.mxu0 %v67
    %1414 = vmatpush1.msra.mxu0 %v66
    %1415 = vmatprep.subr.mxu0 %v69
    %1416 = vmatpush1.msra.mxu0 %v68
    %1417 = vmatprep.subr.mxu0 %v71
    %1418 = vmatpush1.msra.mxu0 %v70
    %1419 = vmatprep.subr.mxu0 %v73
    %1420 = vmatpush1.msra.mxu0 %v72
    %1421 = vmatprep.subr.mxu0 %v75
    %1422 = vmatpush1.msra.mxu0 %v74
    %1423 = vmatprep.subr.mxu0 %v77
    %1424 = vmatpush1.msra.mxu0 %v76
    %1425 = vmatprep.subr.mxu0 %v79
    %1426 = vmatpush1.msra.mxu0 %v78
    %1427 = vmatprep.subr.mxu0 %v81
    %1428 = vmatpush1.msra.mxu0 %v80
    %1429 = vmatprep.subr.mxu0 %v83
    %1430 = vmatpush1.msra.mxu0 %v82
    %1431 = vmatprep.subr.mxu0 %v85
    %1432 = vmatpush1.msra.mxu0 %v84
    %1433 = vmatprep.subr.mxu0 %v87
    %1434 = vmatpush1.msra.mxu0 %v86
    %1435 = vmatprep.subr.mxu0 %v89
    %1436 = vmatpush1.msra.mxu0 %v88
    %1437 = vmatprep.subr.mxu0 0.0
    %1438 = vmatpush1.msra.mxu0 0.0
    %1439 = vmatprep.subr.mxu0 0.0
    %1440 = vmatpush1.msra.mxu0 0.0
    %1441 = vmatprep.subr.mxu0 0.0
    %1442 = vmatpush1.msra.mxu0 0.0
    %1443 = vmatprep.subr.mxu0 0.0
    %1444 = vmatpush1.msra.mxu0 0.0
    %1445 = vmatprep.subr.mxu0 0.0
    %1446 = vmatpush1.msra.mxu0 0.0
    %1447 = vmatprep.subr.mxu0 0.0
    %1448 = vmatpush1.msra.mxu0 0.0
    %1449 = vmatprep.subr.mxu0 0.0
    %1450 = vmatpush1.msra.mxu0 0.0
    %1451 = vmatprep.subr.mxu0 0.0
    %1452 = vmatpush1.msra.mxu0 0.0
    %1453 = vmatprep.subr.mxu0 0.0
    %1454 = vmatpush1.msra.mxu0 0.0
    %1455 = vmatprep.subr.mxu0 0.0
    %1456 = vmatpush1.msra.mxu0 0.0
    %1457 = vmatprep.subr.mxu0 0.0
    %1458 = vmatpush1.msra.mxu0 0.0
    %1459 = vmatprep.subr.mxu0 0.0
    %1460 = vmatpush1.msra.mxu0 0.0
    %1461 = vmatprep.subr.mxu0 0.0
    %1462 = vmatpush1.msra.mxu0 0.0
    %1463 = vmatprep.subr.mxu0 0.0
    %1464 = vmatpush1.msra.mxu0 0.0
    %1465 = vmatprep.subr.mxu0 0.0
    %1466 = vmatpush1.msra.mxu0 0.0
    %1467 = vmatprep.subr.mxu0 0.0
    %1468 = vmatpush1.msra.mxu0 0.0
    %1469 = vmatprep.mubr.f32.mxu0 0.0
    %1470 = vmatmul.mubr.f32.gmra.mrb[0].mxu0 %v1404
    %v1471 = vpop.f32.mrb[0].mxu0
    %v1472 = vadd.f32 0.0, %v1471
    %v1473 = vpop.f32.mrb[0].mxu0
    %v1474 = vadd.f32 0.0, %v1473
    %1475 = vdwg.mxu0
    %v1476 = vxor.u32 %v1472, 2147483648
    %v1477 = vmul.f32 %v1476, 1.442695
    %v1478 = vpow.pop %v1477
    %v1479 = vadd.f32 %v1478, 1.0
    %v1480 = vrcp.pop %v1479
    %v1481 = vmul.f32 1.0, %v1480
    %v1482 = vtanh.pop %v1472
    %v1483 = vmul.f32 %v1481, %v1250
    %1485 = vrot.lane.b32.xlu0 %v1482, 64
    %v1486 = vpop.permute.xlu0 %1485
    %v1488 = vmul.f32 %v1481, %v1486
    %1490 = vrot.lane.b32.xlu0 %v1488, 32
    %v1491 = vpop.permute.xlu0 %1490
    %v1493 = vadd.f32 %v1483, %v1491
    %v1494 = vtanh.pop %v1493
    %1496 = vrot.lane.b32.xlu0 %v1494, 64
    %v1497 = vpop.permute.xlu0 %1496
    %v1499 = vmul.f32 %v1481, %v1497
    %v1500 = vlaneseq
    %v1501 = vshrl.u32 %v1500, 7
    %v1502 = vsub.s32 0, %v1501
    %v1503 = vrot.slane %v1474, %v1502
    %v1504 = vadd.f32 %v185, %v1503
    %v1505 = vadd.f32 %v186, %v1503
    %v1506 = vtanh.pop %v1504
    %v1507 = vtanh.pop %v1505
    %v1508 = vlaneseq
    %v1509 = vshrl.u32 %v1508, 7
    %v1510 = vsub.s32 1, %v1509
    %v1511 = vrot.slane %v1474, %v1510
    %v1512 = vadd.f32 %v196, %v1511
    %v1513 = vadd.f32 %v197, %v1511
    %v1514 = vtanh.pop %v1512
    %v1515 = vtanh.pop %v1513
    %v1517 = vsel %vm207, %v1506, 0
    %v1520 = vsel %vm207, %v1507, 0
    %1522 = vmatprep.subr.mxu0 0.0
    %1523 = vmatpush1.xpose.msra.mxu0 %v1517
    %1524 = vmatprep.subr.mxu0 0.0
    %1525 = vmatpush1.xpose.msra.mxu0 %v1520
    %1526 = vmatprep.subr.mxu0 0.0
    %1527 = vmatpush1.xpose.msra.mxu0 0.0
    %1528 = vmatprep.subr.mxu0 0.0
    %1529 = vmatpush1.xpose.msra.mxu0 0.0
    %1530 = vmatprep.subr.mxu0 0.0
    %1531 = vmatpush1.xpose.msra.mxu0 0.0
    %1532 = vmatprep.subr.mxu0 0.0
    %1533 = vmatpush1.xpose.msra.mxu0 0.0
    %1534 = vmatprep.subr.mxu0 0.0
    %1535 = vmatpush1.xpose.msra.mxu0 0.0
    %1536 = vmatprep.subr.mxu0 0.0
    %1537 = vmatpush1.xpose.msra.mxu0 0.0
    %1538 = vmatprep.subr.mxu0 0.0
    %1539 = vmatpush1.xpose.msra.mxu0 0.0
    %1540 = vmatprep.subr.mxu0 0.0
    %1541 = vmatpush1.xpose.msra.mxu0 0.0
    %1542 = vmatprep.subr.mxu0 0.0
    %1543 = vmatpush1.xpose.msra.mxu0 0.0
    %1544 = vmatprep.subr.mxu0 0.0
    %1545 = vmatpush1.xpose.msra.mxu0 0.0
    %1546 = vmatprep.subr.mxu0 0.0
    %1547 = vmatpush1.xpose.msra.mxu0 0.0
    %1548 = vmatprep.subr.mxu0 0.0
    %1549 = vmatpush1.xpose.msra.mxu0 0.0
    %1550 = vmatprep.subr.mxu0 0.0
    %1551 = vmatpush1.xpose.msra.mxu0 0.0
    %1552 = vmatprep.subr.mxu0 0.0
    %1553 = vmatpush1.xpose.msra.mxu0 0.0
    %1554 = vmatprep.subr.mxu0 0.0
    %1555 = vmatpush1.xpose.msra.mxu0 0.0
    %1556 = vmatprep.subr.mxu0 0.0
    %1557 = vmatpush1.xpose.msra.mxu0 0.0
    %1558 = vmatprep.subr.mxu0 0.0
    %1559 = vmatpush1.xpose.msra.mxu0 0.0
    %1560 = vmatprep.subr.mxu0 0.0
    %1561 = vmatpush1.xpose.msra.mxu0 0.0
    %1562 = vmatprep.subr.mxu0 0.0
    %1563 = vmatpush1.xpose.msra.mxu0 0.0
    %1564 = vmatprep.subr.mxu0 0.0
    %1565 = vmatpush1.xpose.msra.mxu0 0.0
    %1566 = vmatprep.subr.mxu0 0.0
    %1567 = vmatpush1.xpose.msra.mxu0 0.0
    %1568 = vmatprep.subr.mxu0 0.0
    %1569 = vmatpush1.xpose.msra.mxu0 0.0
    %1570 = vmatprep.subr.mxu0 0.0
    %1571 = vmatpush1.xpose.msra.mxu0 0.0
    %1572 = vmatprep.subr.mxu0 0.0
    %1573 = vmatpush1.xpose.msra.mxu0 0.0
    %1574 = vmatprep.subr.mxu0 0.0
    %1575 = vmatpush1.xpose.msra.mxu0 0.0
    %1576 = vmatprep.subr.mxu0 0.0
    %1577 = vmatpush1.xpose.msra.mxu0 0.0
    %1578 = vmatprep.subr.mxu0 0.0
    %1579 = vmatpush1.xpose.msra.mxu0 0.0
    %1580 = vmatprep.subr.mxu0 0.0
    %1581 = vmatpush1.xpose.msra.mxu0 0.0
    %1582 = vmatprep.subr.mxu0 0.0
    %1583 = vmatpush1.xpose.msra.mxu0 0.0
    %1584 = vmatprep.subr.mxu0 0.0
    %1585 = vmatpush1.xpose.msra.mxu0 0.0
    %1586 = vmatprep.mubr.f32.mxu0 0.0
    %1587 = vmatmul.mubr.f32.gmra.mrb[0].mxu0 %v209
    %v1588 = vpop.f32.mrb[0].mxu0
    %v1589 = vadd.f32 0.0, %v1588
    %v1590 = vpop.f32.mrb[0].mxu0
    %1591 = vdwg.mxu0
    %v1593 = vsel %vm207, %v1514, 0
    %v1596 = vsel %vm207, %v1515, 0
    %1598 = vmatprep.subr.mxu0 0.0
    %1599 = vmatpush1.xpose.msra.mxu0 %v1593
    %1600 = vmatprep.subr.mxu0 0.0
    %1601 = vmatpush1.xpose.msra.mxu0 %v1596
    %1602 = vmatprep.subr.mxu0 0.0
    %1603 = vmatpush1.xpose.msra.mxu0 0.0
    %1604 = vmatprep.subr.mxu0 0.0
    %1605 = vmatpush1.xpose.msra.mxu0 0.0
    %1606 = vmatprep.subr.mxu0 0.0
    %1607 = vmatpush1.xpose.msra.mxu0 0.0
    %1608 = vmatprep.subr.mxu0 0.0
    %1609 = vmatpush1.xpose.msra.mxu0 0.0
    %1610 = vmatprep.subr.mxu0 0.0
    %1611 = vmatpush1.xpose.msra.mxu0 0.0
    %1612 = vmatprep.subr.mxu0 0.0
    %1613 = vmatpush1.xpose.msra.mxu0 0.0
    %1614 = vmatprep.subr.mxu0 0.0
    %1615 = vmatpush1.xpose.msra.mxu0 0.0
    %1616 = vmatprep.subr.mxu0 0.0
    %1617 = vmatpush1.xpose.msra.mxu0 0.0
    %1618 = vmatprep.subr.mxu0 0.0
    %1619 = vmatpush1.xpose.msra.mxu0 0.0
    %1620 = vmatprep.subr.mxu0 0.0
    %1621 = vmatpush1.xpose.msra.mxu0 0.0
    %1622 = vmatprep.subr.mxu0 0.0
    %1623 = vmatpush1.xpose.msra.mxu0 0.0
    %1624 = vmatprep.subr.mxu0 0.0
    %1625 = vmatpush1.xpose.msra.mxu0 0.0
    %1626 = vmatprep.subr.mxu0 0.0
    %1627 = vmatpush1.xpose.msra.mxu0 0.0
    %1628 = vmatprep.subr.mxu0 0.0
    %1629 = vmatpush1.xpose.msra.mxu0 0.0
    %1630 = vmatprep.subr.mxu0 0.0
    %1631 = vmatpush1.xpose.msra.mxu0 0.0
    %1632 = vmatprep.subr.mxu0 0.0
    %1633 = vmatpush1.xpose.msra.mxu0 0.0
    %1634 = vmatprep.subr.mxu0 0.0
    %1635 = vmatpush1.xpose.msra.mxu0 0.0
    %1636 = vmatprep.subr.mxu0 0.0
    %1637 = vmatpush1.xpose.msra.mxu0 0.0
    %1638 = vmatprep.subr.mxu0 0.0
    %1639 = vmatpush1.xpose.msra.mxu0 0.0
    %1640 = vmatprep.subr.mxu0 0.0
    %1641 = vmatpush1.xpose.msra.mxu0 0.0
    %1642 = vmatprep.subr.mxu0 0.0
    %1643 = vmatpush1.xpose.msra.mxu0 0.0
    %1644 = vmatprep.subr.mxu0 0.0
    %1645 = vmatpush1.xpose.msra.mxu0 0.0
    %1646 = vmatprep.subr.mxu0 0.0
    %1647 = vmatpush1.xpose.msra.mxu0 0.0
    %1648 = vmatprep.subr.mxu0 0.0
    %1649 = vmatpush1.xpose.msra.mxu0 0.0
    %1650 = vmatprep.subr.mxu0 0.0
    %1651 = vmatpush1.xpose.msra.mxu0 0.0
    %1652 = vmatprep.subr.mxu0 0.0
    %1653 = vmatpush1.xpose.msra.mxu0 0.0
    %1654 = vmatprep.subr.mxu0 0.0
    %1655 = vmatpush1.xpose.msra.mxu0 0.0
    %1656 = vmatprep.subr.mxu0 0.0
    %1657 = vmatpush1.xpose.msra.mxu0 0.0
    %1658 = vmatprep.subr.mxu0 0.0
    %1659 = vmatpush1.xpose.msra.mxu0 0.0
    %1660 = vmatprep.subr.mxu0 0.0
    %1661 = vmatpush1.xpose.msra.mxu0 0.0
    %1662 = vmatprep.mubr.f32.mxu0 0.0
    %1663 = vmatmul.mubr.f32.gmra.mrb[0].mxu0 %v290
    %v1664 = vpop.f32.mrb[0].mxu0
    %v1665 = vadd.f32 0.0, %v1664
    %v1666 = vpop.f32.mrb[0].mxu0
    %1667 = vdwg.mxu0
    %v1669 = vrot.slane %v1665, 7
    %v1671 = vsel %vm371, %v1589, %v1669
    %v1672 = vmul.f32 %v1671, 0.2
    %v1673 = vtanh.pop %v1672
    %v1674 = vmul.f32 %v1673, 2.5
    %v1675 = vmul.f32 %v1674, 1.442695
    %v1676 = vpow.pop %v1675
    %v1677 = vsel %vm1390, %v1676, 0.0
    %v1678 = vsel %vm379, %v1677, 0.0
    %1679 = vadd.xlane.f32.xlu0 %v1678
    %v1680 = vpop.xlane.xlu0 %1679
    %v1681 = vlog2.pop %v1680
    %v1682 = vmul.f32 %v1681, 0.6931472
    %v1683 = vrcp.pop %v1680
    %v1684 = vsub.f32 %v1674, %v1682
    %v1685 = vsel %vm1390, %v1684, 0.0
    %v1687 = vsel %vm389, %v1677, 0
    %1689 = vmatprep.subr.mxu0 0.0
    %1690 = vmatpush1.msra.mxu0 %v41
    %1691 = vmatprep.subr.mxu0 0.0
    %1692 = vmatpush1.msra.mxu0 %v395
    %1693 = vmatprep.subr.mxu0 0.0
    %1694 = vmatpush1.msra.mxu0 0.0
    %1695 = vmatprep.subr.mxu0 0.0
    %1696 = vmatpush1.msra.mxu0 0.0
    %1697 = vmatprep.subr.mxu0 0.0
    %1698 = vmatpush1.msra.mxu0 0.0
    %1699 = vmatprep.subr.mxu0 0.0
    %1700 = vmatpush1.msra.mxu0 0.0
    %1701 = vmatprep.subr.mxu0 0.0
    %1702 = vmatpush1.msra.mxu0 0.0
    %1703 = vmatprep.subr.mxu0 0.0
    %1704 = vmatpush1.msra.mxu0 0.0
    %1705 = vmatprep.subr.mxu0 0.0
    %1706 = vmatpush1.msra.mxu0 0.0
    %1707 = vmatprep.subr.mxu0 0.0
    %1708 = vmatpush1.msra.mxu0 0.0
    %1709 = vmatprep.subr.mxu0 0.0
    %1710 = vmatpush1.msra.mxu0 0.0
    %1711 = vmatprep.subr.mxu0 0.0
    %1712 = vmatpush1.msra.mxu0 0.0
    %1713 = vmatprep.subr.mxu0 0.0
    %1714 = vmatpush1.msra.mxu0 0.0
    %1715 = vmatprep.subr.mxu0 0.0
    %1716 = vmatpush1.msra.mxu0 0.0
    %1717 = vmatprep.subr.mxu0 0.0
    %1718 = vmatpush1.msra.mxu0 0.0
    %1719 = vmatprep.subr.mxu0 0.0
    %1720 = vmatpush1.msra.mxu0 0.0
    %1721 = vmatprep.subr.mxu0 0.0
    %1722 = vmatpush1.msra.mxu0 0.0
    %1723 = vmatprep.subr.mxu0 0.0
    %1724 = vmatpush1.msra.mxu0 0.0
    %1725 = vmatprep.subr.mxu0 0.0
    %1726 = vmatpush1.msra.mxu0 0.0
    %1727 = vmatprep.subr.mxu0 0.0
    %1728 = vmatpush1.msra.mxu0 0.0
    %1729 = vmatprep.subr.mxu0 0.0
    %1730 = vmatpush1.msra.mxu0 0.0
    %1731 = vmatprep.subr.mxu0 0.0
    %1732 = vmatpush1.msra.mxu0 0.0
    %1733 = vmatprep.subr.mxu0 0.0
    %1734 = vmatpush1.msra.mxu0 0.0
    %1735 = vmatprep.subr.mxu0 0.0
    %1736 = vmatpush1.msra.mxu0 0.0
    %1737 = vmatprep.subr.mxu0 0.0
    %1738 = vmatpush1.msra.mxu0 0.0
    %1739 = vmatprep.subr.mxu0 0.0
    %1740 = vmatpush1.msra.mxu0 0.0
    %1741 = vmatprep.subr.mxu0 0.0
    %1742 = vmatpush1.msra.mxu0 0.0
    %1743 = vmatprep.subr.mxu0 0.0
    %1744 = vmatpush1.msra.mxu0 0.0
    %1745 = vmatprep.subr.mxu0 0.0
    %1746 = vmatpush1.msra.mxu0 0.0
    %1747 = vmatprep.subr.mxu0 0.0
    %1748 = vmatpush1.msra.mxu0 0.0
    %1749 = vmatprep.subr.mxu0 0.0
    %1750 = vmatpush1.msra.mxu0 0.0
    %1751 = vmatprep.subr.mxu0 0.0
    %1752 = vmatpush1.msra.mxu0 0.0
    %1753 = vmatprep.mubr.f32.mxu0 0.0
    %1754 = vmatmul.mubr.f32.gmra.mrb[0].mxu0 %v1687
    %v1755 = vpop.f32.mrb[0].mxu0
    %v1756 = vadd.f32 0.0, %v1755
    %v1757 = vpop.f32.mrb[0].mxu0
    %1758 = vdwg.mxu0
    %v1759 = vmul.f32 %v388, %v1680
    %1761 = vset.pattern.permute.xlu0 4
    %1762 = vperm.xlu0 %1761, %v1759
    %v1763 = vpop.permute.xlu0 %1762
    %vm1765 = vcmp.lt.f32.partialorder %v1756, %v1763
    %v1766 = vsel %vm1765, 1, 0
    %v1767 = vcvt.s32.f32 %v1766
    %v1768 = vsel %vm379, %v1767, 0.0
    %1769 = vadd.xlane.f32.xlu0 %v1768
    %v1770 = vpop.xlane.xlu0 %1769
    %v1771 = vcvt.f32.s32.to.zero.pseudo %v1770
    %vm1772 = vcmp.lt.s32.totalorder %v1771, 2
    %v1773 = vsel %vm1772, %v1771, 2
    %v1774 = vcvt.s32.f32 %v1773
    %vm1775 = vcmp.eq.s32.totalorder %v33, %v1773
    %v1776 = vsel %vm1775, 1, 0
    %v1777 = vcvt.s32.f32 %v1776
    %v1778 = vmul.f32 %v1777, %v1685
    %v1779 = vsel %vm379, %v1778, 0.0
    %1780 = vadd.xlane.f32.xlu0 %v1779
    %v1781 = vpop.xlane.xlu0 %1780
    %v1782 = vadd.f32 %v1374, %v1781
    %v1783 = vmul.f32 %v1677, %v1685
    %v1784 = vsel %vm379, %v1783, 0.0
    %1785 = vadd.xlane.f32.xlu0 %v1784
    %v1786 = vpop.xlane.xlu0 %1785
    %v1787 = vmul.f32 %v1786, %v1683
    %v1788 = vsub.f32 %v1380, %v1787
    %vm1789 = vcmp.eq.s32.totalorder %v33, 2
    %v1790 = vsel %vm1789, 1, 0
    %v1791 = vcvt.s32.f32 %v1790
    %v1792 = vmul.f32 %v1774, %v1791
    %v1793 = vadd.f32 %v1385, %v1792
    %1795 = vrot.lane.b32.xlu0 %v1499, 42
    %v1796 = vpop.permute.xlu0 %1795
    %v1798 = vsel %vm389, %v1777, %v1796
    %v1799 = vsel %vm44, %v1798, 1.0
    %v1800 = vsel %vm46, %v1799, 0.0
    %1802 = vrot.lane.b32.xlu0 %v1799, 64
    %v1803 = vpop.permute.xlu0 %1802
    %v1805 = vsel %vm52, 0.0, %v1803
    %v1806 = vsel %vm54, %v1805, 0.0
    %v1807 = vsel %vm56, %v1800, %v1806
    %1808 = vmatprep.subr.mxu0 %v59
    %1809 = vmatpush1.msra.mxu0 %v58
    %1810 = vmatprep.subr.mxu0 %v61
    %1811 = vmatpush1.msra.mxu0 %v60
    %1812 = vmatprep.subr.mxu0 %v63
    %1813 = vmatpush1.msra.mxu0 %v62
    %1814 = vmatprep.subr.mxu0 %v65
    %1815 = vmatpush1.msra.mxu0 %v64
    %1816 = vmatprep.subr.mxu0 %v67
    %1817 = vmatpush1.msra.mxu0 %v66
    %1818 = vmatprep.subr.mxu0 %v69
    %1819 = vmatpush1.msra.mxu0 %v68
    %1820 = vmatprep.subr.mxu0 %v71
    %1821 = vmatpush1.msra.mxu0 %v70
    %1822 = vmatprep.subr.mxu0 %v73
    %1823 = vmatpush1.msra.mxu0 %v72
    %1824 = vmatprep.subr.mxu0 %v75
    %1825 = vmatpush1.msra.mxu0 %v74
    %1826 = vmatprep.subr.mxu0 %v77
    %1827 = vmatpush1.msra.mxu0 %v76
    %1828 = vmatprep.subr.mxu0 %v79
    %1829 = vmatpush1.msra.mxu0 %v78
    %1830 = vmatprep.subr.mxu0 %v81
    %1831 = vmatpush1.msra.mxu0 %v80
    %1832 = vmatprep.subr.mxu0 %v83
    %1833 = vmatpush1.msra.mxu0 %v82
    %1834 = vmatprep.subr.mxu0 %v85
    %1835 = vmatpush1.msra.mxu0 %v84
    %1836 = vmatprep.subr.mxu0 %v87
    %1837 = vmatpush1.msra.mxu0 %v86
    %1838 = vmatprep.subr.mxu0 %v89
    %1839 = vmatpush1.msra.mxu0 %v88
    %1840 = vmatprep.subr.mxu0 0.0
    %1841 = vmatpush1.msra.mxu0 0.0
    %1842 = vmatprep.subr.mxu0 0.0
    %1843 = vmatpush1.msra.mxu0 0.0
    %1844 = vmatprep.subr.mxu0 0.0
    %1845 = vmatpush1.msra.mxu0 0.0
    %1846 = vmatprep.subr.mxu0 0.0
    %1847 = vmatpush1.msra.mxu0 0.0
    %1848 = vmatprep.subr.mxu0 0.0
    %1849 = vmatpush1.msra.mxu0 0.0
    %1850 = vmatprep.subr.mxu0 0.0
    %1851 = vmatpush1.msra.mxu0 0.0
    %1852 = vmatprep.subr.mxu0 0.0
    %1853 = vmatpush1.msra.mxu0 0.0
    %1854 = vmatprep.subr.mxu0 0.0
    %1855 = vmatpush1.msra.mxu0 0.0
    %1856 = vmatprep.subr.mxu0 0.0
    %1857 = vmatpush1.msra.mxu0 0.0
    %1858 = vmatprep.subr.mxu0 0.0
    %1859 = vmatpush1.msra.mxu0 0.0
    %1860 = vmatprep.subr.mxu0 0.0
    %1861 = vmatpush1.msra.mxu0 0.0
    %1862 = vmatprep.subr.mxu0 0.0
    %1863 = vmatpush1.msra.mxu0 0.0
    %1864 = vmatprep.subr.mxu0 0.0
    %1865 = vmatpush1.msra.mxu0 0.0
    %1866 = vmatprep.subr.mxu0 0.0
    %1867 = vmatpush1.msra.mxu0 0.0
    %1868 = vmatprep.subr.mxu0 0.0
    %1869 = vmatpush1.msra.mxu0 0.0
    %1870 = vmatprep.subr.mxu0 0.0
    %1871 = vmatpush1.msra.mxu0 0.0
    %1872 = vmatprep.mubr.f32.mxu0 0.0
    %1873 = vmatmul.mubr.f32.gmra.mrb[0].mxu0 %v1807
    %v1874 = vpop.f32.mrb[0].mxu0
    %v1875 = vadd.f32 0.0, %v1874
    %v1876 = vpop.f32.mrb[0].mxu0
    %v1877 = vadd.f32 0.0, %v1876
    %1878 = vdwg.mxu0
    %v1879 = vxor.u32 %v1875, 2147483648
    %v1880 = vmul.f32 %v1879, 1.442695
    %v1881 = vpow.pop %v1880
    %v1882 = vadd.f32 %v1881, 1.0
    %v1883 = vrcp.pop %v1882
    %v1884 = vmul.f32 1.0, %v1883
    %v1885 = vtanh.pop %v1875
    %v1886 = vmul.f32 %v1884, %v1493
    %1888 = vrot.lane.b32.xlu0 %v1885, 64
    %v1889 = vpop.permute.xlu0 %1888
    %v1891 = vmul.f32 %v1884, %v1889
    %1893 = vrot.lane.b32.xlu0 %v1891, 32
    %v1894 = vpop.permute.xlu0 %1893
    %v1896 = vadd.f32 %v1886, %v1894
    %v1897 = vtanh.pop %v1896
    %1899 = vrot.lane.b32.xlu0 %v1897, 64
    %v1900 = vpop.permute.xlu0 %1899
    %v1902 = vmul.f32 %v1884, %v1900
    %v1903 = vlaneseq
    %v1904 = vshrl.u32 %v1903, 7
    %v1905 = vsub.s32 0, %v1904
    %v1906 = vrot.slane %v1877, %v1905
    %v1907 = vadd.f32 %v185, %v1906
    %v1908 = vadd.f32 %v186, %v1906
    %v1909 = vtanh.pop %v1907
    %v1910 = vtanh.pop %v1908
    %v1911 = vlaneseq
    %v1912 = vshrl.u32 %v1911, 7
    %v1913 = vsub.s32 1, %v1912
    %v1914 = vrot.slane %v1877, %v1913
    %v1915 = vadd.f32 %v196, %v1914
    %v1916 = vadd.f32 %v197, %v1914
    %v1917 = vtanh.pop %v1915
    %v1918 = vtanh.pop %v1916
    %v1920 = vsel %vm207, %v1909, 0
    %v1923 = vsel %vm207, %v1910, 0
    %1925 = vmatprep.subr.mxu0 0.0
    %1926 = vmatpush1.xpose.msra.mxu0 %v1920
    %1927 = vmatprep.subr.mxu0 0.0
    %1928 = vmatpush1.xpose.msra.mxu0 %v1923
    %1929 = vmatprep.subr.mxu0 0.0
    %1930 = vmatpush1.xpose.msra.mxu0 0.0
    %1931 = vmatprep.subr.mxu0 0.0
    %1932 = vmatpush1.xpose.msra.mxu0 0.0
    %1933 = vmatprep.subr.mxu0 0.0
    %1934 = vmatpush1.xpose.msra.mxu0 0.0
    %1935 = vmatprep.subr.mxu0 0.0
    %1936 = vmatpush1.xpose.msra.mxu0 0.0
    %1937 = vmatprep.subr.mxu0 0.0
    %1938 = vmatpush1.xpose.msra.mxu0 0.0
    %1939 = vmatprep.subr.mxu0 0.0
    %1940 = vmatpush1.xpose.msra.mxu0 0.0
    %1941 = vmatprep.subr.mxu0 0.0
    %1942 = vmatpush1.xpose.msra.mxu0 0.0
    %1943 = vmatprep.subr.mxu0 0.0
    %1944 = vmatpush1.xpose.msra.mxu0 0.0
    %1945 = vmatprep.subr.mxu0 0.0
    %1946 = vmatpush1.xpose.msra.mxu0 0.0
    %1947 = vmatprep.subr.mxu0 0.0
    %1948 = vmatpush1.xpose.msra.mxu0 0.0
    %1949 = vmatprep.subr.mxu0 0.0
    %1950 = vmatpush1.xpose.msra.mxu0 0.0
    %1951 = vmatprep.subr.mxu0 0.0
    %1952 = vmatpush1.xpose.msra.mxu0 0.0
    %1953 = vmatprep.subr.mxu0 0.0
    %1954 = vmatpush1.xpose.msra.mxu0 0.0
    %1955 = vmatprep.subr.mxu0 0.0
    %1956 = vmatpush1.xpose.msra.mxu0 0.0
    %1957 = vmatprep.subr.mxu0 0.0
    %1958 = vmatpush1.xpose.msra.mxu0 0.0
    %1959 = vmatprep.subr.mxu0 0.0
    %1960 = vmatpush1.xpose.msra.mxu0 0.0
    %1961 = vmatprep.subr.mxu0 0.0
    %1962 = vmatpush1.xpose.msra.mxu0 0.0
    %1963 = vmatprep.subr.mxu0 0.0
    %1964 = vmatpush1.xpose.msra.mxu0 0.0
    %1965 = vmatprep.subr.mxu0 0.0
    %1966 = vmatpush1.xpose.msra.mxu0 0.0
    %1967 = vmatprep.subr.mxu0 0.0
    %1968 = vmatpush1.xpose.msra.mxu0 0.0
    %1969 = vmatprep.subr.mxu0 0.0
    %1970 = vmatpush1.xpose.msra.mxu0 0.0
    %1971 = vmatprep.subr.mxu0 0.0
    %1972 = vmatpush1.xpose.msra.mxu0 0.0
    %1973 = vmatprep.subr.mxu0 0.0
    %1974 = vmatpush1.xpose.msra.mxu0 0.0
    %1975 = vmatprep.subr.mxu0 0.0
    %1976 = vmatpush1.xpose.msra.mxu0 0.0
    %1977 = vmatprep.subr.mxu0 0.0
    %1978 = vmatpush1.xpose.msra.mxu0 0.0
    %1979 = vmatprep.subr.mxu0 0.0
    %1980 = vmatpush1.xpose.msra.mxu0 0.0
    %1981 = vmatprep.subr.mxu0 0.0
    %1982 = vmatpush1.xpose.msra.mxu0 0.0
    %1983 = vmatprep.subr.mxu0 0.0
    %1984 = vmatpush1.xpose.msra.mxu0 0.0
    %1985 = vmatprep.subr.mxu0 0.0
    %1986 = vmatpush1.xpose.msra.mxu0 0.0
    %1987 = vmatprep.subr.mxu0 0.0
    %1988 = vmatpush1.xpose.msra.mxu0 0.0
    %1989 = vmatprep.mubr.f32.mxu0 0.0
    %1990 = vmatmul.mubr.f32.gmra.mrb[0].mxu0 %v209
    %v1991 = vpop.f32.mrb[0].mxu0
    %v1992 = vadd.f32 0.0, %v1991
    %v1993 = vpop.f32.mrb[0].mxu0
    %1994 = vdwg.mxu0
    %v1996 = vsel %vm207, %v1917, 0
    %v1999 = vsel %vm207, %v1918, 0
    %2001 = vmatprep.subr.mxu0 0.0
    %2002 = vmatpush1.xpose.msra.mxu0 %v1996
    %2003 = vmatprep.subr.mxu0 0.0
    %2004 = vmatpush1.xpose.msra.mxu0 %v1999
    %2005 = vmatprep.subr.mxu0 0.0
    %2006 = vmatpush1.xpose.msra.mxu0 0.0
    %2007 = vmatprep.subr.mxu0 0.0
    %2008 = vmatpush1.xpose.msra.mxu0 0.0
    %2009 = vmatprep.subr.mxu0 0.0
    %2010 = vmatpush1.xpose.msra.mxu0 0.0
    %2011 = vmatprep.subr.mxu0 0.0
    %2012 = vmatpush1.xpose.msra.mxu0 0.0
    %2013 = vmatprep.subr.mxu0 0.0
    %2014 = vmatpush1.xpose.msra.mxu0 0.0
    %2015 = vmatprep.subr.mxu0 0.0
    %2016 = vmatpush1.xpose.msra.mxu0 0.0
    %2017 = vmatprep.subr.mxu0 0.0
    %2018 = vmatpush1.xpose.msra.mxu0 0.0
    %2019 = vmatprep.subr.mxu0 0.0
    %2020 = vmatpush1.xpose.msra.mxu0 0.0
    %2021 = vmatprep.subr.mxu0 0.0
    %2022 = vmatpush1.xpose.msra.mxu0 0.0
    %2023 = vmatprep.subr.mxu0 0.0
    %2024 = vmatpush1.xpose.msra.mxu0 0.0
    %2025 = vmatprep.subr.mxu0 0.0
    %2026 = vmatpush1.xpose.msra.mxu0 0.0
    %2027 = vmatprep.subr.mxu0 0.0
    %2028 = vmatpush1.xpose.msra.mxu0 0.0
    %2029 = vmatprep.subr.mxu0 0.0
    %2030 = vmatpush1.xpose.msra.mxu0 0.0
    %2031 = vmatprep.subr.mxu0 0.0
    %2032 = vmatpush1.xpose.msra.mxu0 0.0
    %2033 = vmatprep.subr.mxu0 0.0
    %2034 = vmatpush1.xpose.msra.mxu0 0.0
    %2035 = vmatprep.subr.mxu0 0.0
    %2036 = vmatpush1.xpose.msra.mxu0 0.0
    %2037 = vmatprep.subr.mxu0 0.0
    %2038 = vmatpush1.xpose.msra.mxu0 0.0
    %2039 = vmatprep.subr.mxu0 0.0
    %2040 = vmatpush1.xpose.msra.mxu0 0.0
    %2041 = vmatprep.subr.mxu0 0.0
    %2042 = vmatpush1.xpose.msra.mxu0 0.0
    %2043 = vmatprep.subr.mxu0 0.0
    %2044 = vmatpush1.xpose.msra.mxu0 0.0
    %2045 = vmatprep.subr.mxu0 0.0
    %2046 = vmatpush1.xpose.msra.mxu0 0.0
    %2047 = vmatprep.subr.mxu0 0.0
    %2048 = vmatpush1.xpose.msra.mxu0 0.0
    %2049 = vmatprep.subr.mxu0 0.0
    %2050 = vmatpush1.xpose.msra.mxu0 0.0
    %2051 = vmatprep.subr.mxu0 0.0
    %2052 = vmatpush1.xpose.msra.mxu0 0.0
    %2053 = vmatprep.subr.mxu0 0.0
    %2054 = vmatpush1.xpose.msra.mxu0 0.0
    %2055 = vmatprep.subr.mxu0 0.0
    %2056 = vmatpush1.xpose.msra.mxu0 0.0
    %2057 = vmatprep.subr.mxu0 0.0
    %2058 = vmatpush1.xpose.msra.mxu0 0.0
    %2059 = vmatprep.subr.mxu0 0.0
    %2060 = vmatpush1.xpose.msra.mxu0 0.0
    %2061 = vmatprep.subr.mxu0 0.0
    %2062 = vmatpush1.xpose.msra.mxu0 0.0
    %2063 = vmatprep.subr.mxu0 0.0
    %2064 = vmatpush1.xpose.msra.mxu0 0.0
    %2065 = vmatprep.mubr.f32.mxu0 0.0
    %2066 = vmatmul.mubr.f32.gmra.mrb[0].mxu0 %v290
    %v2067 = vpop.f32.mrb[0].mxu0
    %v2068 = vadd.f32 0.0, %v2067
    %v2069 = vpop.f32.mrb[0].mxu0
    %2070 = vdwg.mxu0
    %v2072 = vrot.slane %v2068, 7
    %v2074 = vsel %vm371, %v1992, %v2072
    %v2075 = vmul.f32 %v2074, 0.2
    %v2076 = vtanh.pop %v2075
    %v2077 = vmul.f32 %v2076, 2.5
    %v2078 = vmul.f32 %v2077, 1.442695
    %v2079 = vpow.pop %v2078
    %v2080 = vsel %vm1390, %v2079, 0.0
    %v2081 = vsel %vm379, %v2080, 0.0
    %2082 = vadd.xlane.f32.xlu0 %v2081
    %v2083 = vpop.xlane.xlu0 %2082
    %v2084 = vlog2.pop %v2083
    %v2085 = vmul.f32 %v2084, 0.6931472
    %v2086 = vrcp.pop %v2083
    %v2087 = vsub.f32 %v2077, %v2085
    %v2088 = vsel %vm1390, %v2087, 0.0
    %v2090 = vsel %vm389, %v2080, 0
    %2092 = vmatprep.subr.mxu0 0.0
    %2093 = vmatpush1.msra.mxu0 %v41
    %2094 = vmatprep.subr.mxu0 0.0
    %2095 = vmatpush1.msra.mxu0 %v395
    %2096 = vmatprep.subr.mxu0 0.0
    %2097 = vmatpush1.msra.mxu0 0.0
    %2098 = vmatprep.subr.mxu0 0.0
    %2099 = vmatpush1.msra.mxu0 0.0
    %2100 = vmatprep.subr.mxu0 0.0
    %2101 = vmatpush1.msra.mxu0 0.0
    %2102 = vmatprep.subr.mxu0 0.0
    %2103 = vmatpush1.msra.mxu0 0.0
    %2104 = vmatprep.subr.mxu0 0.0
    %2105 = vmatpush1.msra.mxu0 0.0
    %2106 = vmatprep.subr.mxu0 0.0
    %2107 = vmatpush1.msra.mxu0 0.0
    %2108 = vmatprep.subr.mxu0 0.0
    %2109 = vmatpush1.msra.mxu0 0.0
    %2110 = vmatprep.subr.mxu0 0.0
    %2111 = vmatpush1.msra.mxu0 0.0
    %2112 = vmatprep.subr.mxu0 0.0
    %2113 = vmatpush1.msra.mxu0 0.0
    %2114 = vmatprep.subr.mxu0 0.0
    %2115 = vmatpush1.msra.mxu0 0.0
    %2116 = vmatprep.subr.mxu0 0.0
    %2117 = vmatpush1.msra.mxu0 0.0
    %2118 = vmatprep.subr.mxu0 0.0
    %2119 = vmatpush1.msra.mxu0 0.0
    %2120 = vmatprep.subr.mxu0 0.0
    %2121 = vmatpush1.msra.mxu0 0.0
    %2122 = vmatprep.subr.mxu0 0.0
    %2123 = vmatpush1.msra.mxu0 0.0
    %2124 = vmatprep.subr.mxu0 0.0
    %2125 = vmatpush1.msra.mxu0 0.0
    %2126 = vmatprep.subr.mxu0 0.0
    %2127 = vmatpush1.msra.mxu0 0.0
    %2128 = vmatprep.subr.mxu0 0.0
    %2129 = vmatpush1.msra.mxu0 0.0
    %2130 = vmatprep.subr.mxu0 0.0
    %2131 = vmatpush1.msra.mxu0 0.0
    %2132 = vmatprep.subr.mxu0 0.0
    %2133 = vmatpush1.msra.mxu0 0.0
    %2134 = vmatprep.subr.mxu0 0.0
    %2135 = vmatpush1.msra.mxu0 0.0
    %2136 = vmatprep.subr.mxu0 0.0
    %2137 = vmatpush1.msra.mxu0 0.0
    %2138 = vmatprep.subr.mxu0 0.0
    %2139 = vmatpush1.msra.mxu0 0.0
    %2140 = vmatprep.subr.mxu0 0.0
    %2141 = vmatpush1.msra.mxu0 0.0
    %2142 = vmatprep.subr.mxu0 0.0
    %2143 = vmatpush1.msra.mxu0 0.0
    %2144 = vmatprep.subr.mxu0 0.0
    %2145 = vmatpush1.msra.mxu0 0.0
    %2146 = vmatprep.subr.mxu0 0.0
    %2147 = vmatpush1.msra.mxu0 0.0
    %2148 = vmatprep.subr.mxu0 0.0
    %2149 = vmatpush1.msra.mxu0 0.0
    %2150 = vmatprep.subr.mxu0 0.0
    %2151 = vmatpush1.msra.mxu0 0.0
    %2152 = vmatprep.subr.mxu0 0.0
    %2153 = vmatpush1.msra.mxu0 0.0
    %2154 = vmatprep.subr.mxu0 0.0
    %2155 = vmatpush1.msra.mxu0 0.0
    %2156 = vmatprep.mubr.f32.mxu0 0.0
    %2157 = vmatmul.mubr.f32.gmra.mrb[0].mxu0 %v2090
    %v2158 = vpop.f32.mrb[0].mxu0
    %v2159 = vadd.f32 0.0, %v2158
    %v2160 = vpop.f32.mrb[0].mxu0
    %2161 = vdwg.mxu0
    %v2162 = vmul.f32 %v388, %v2083
    %2164 = vset.pattern.permute.xlu0 5
    %2165 = vperm.xlu0 %2164, %v2162
    %v2166 = vpop.permute.xlu0 %2165
    %vm2168 = vcmp.lt.f32.partialorder %v2159, %v2166
    %v2169 = vsel %vm2168, 1, 0
    %v2170 = vcvt.s32.f32 %v2169
    %v2171 = vsel %vm379, %v2170, 0.0
    %2172 = vadd.xlane.f32.xlu0 %v2171
    %v2173 = vpop.xlane.xlu0 %2172
    %v2174 = vcvt.f32.s32.to.zero.pseudo %v2173
    %vm2175 = vcmp.lt.s32.totalorder %v2174, 2
    %v2176 = vsel %vm2175, %v2174, 2
    %v2177 = vcvt.s32.f32 %v2176
    %vm2178 = vcmp.eq.s32.totalorder %v33, %v2176
    %v2179 = vsel %vm2178, 1, 0
    %v2180 = vcvt.s32.f32 %v2179
    %v2181 = vmul.f32 %v2180, %v2088
    %v2182 = vsel %vm379, %v2181, 0.0
    %2183 = vadd.xlane.f32.xlu0 %v2182
    %v2184 = vpop.xlane.xlu0 %2183
    %v2185 = vadd.f32 %v1782, %v2184
    %v2186 = vmul.f32 %v2080, %v2088
    %v2187 = vsel %vm379, %v2186, 0.0
    %2188 = vadd.xlane.f32.xlu0 %v2187
    %v2189 = vpop.xlane.xlu0 %2188
    %v2190 = vmul.f32 %v2189, %v2086
    %v2191 = vsub.f32 %v1788, %v2190
    %vm2192 = vcmp.eq.s32.totalorder %v33, 3
    %v2193 = vsel %vm2192, 1, 0
    %v2194 = vcvt.s32.f32 %v2193
    %v2195 = vmul.f32 %v2177, %v2194
    %v2196 = vadd.f32 %v1793, %v2195
    %2198 = vrot.lane.b32.xlu0 %v1902, 42
    %v2199 = vpop.permute.xlu0 %2198
    %v2201 = vsel %vm389, %v2180, %v2199
    %v2202 = vsel %vm44, %v2201, 1.0
    %v2203 = vsel %vm46, %v2202, 0.0
    %2205 = vrot.lane.b32.xlu0 %v2202, 64
    %v2206 = vpop.permute.xlu0 %2205
    %v2208 = vsel %vm52, 0.0, %v2206
    %v2209 = vsel %vm54, %v2208, 0.0
    %v2210 = vsel %vm56, %v2203, %v2209
    %2211 = vmatprep.subr.mxu0 %v59
    %2212 = vmatpush1.msra.mxu0 %v58
    %2213 = vmatprep.subr.mxu0 %v61
    %2214 = vmatpush1.msra.mxu0 %v60
    %2215 = vmatprep.subr.mxu0 %v63
    %2216 = vmatpush1.msra.mxu0 %v62
    %2217 = vmatprep.subr.mxu0 %v65
    %2218 = vmatpush1.msra.mxu0 %v64
    %2219 = vmatprep.subr.mxu0 %v67
    %2220 = vmatpush1.msra.mxu0 %v66
    %2221 = vmatprep.subr.mxu0 %v69
    %2222 = vmatpush1.msra.mxu0 %v68
    %2223 = vmatprep.subr.mxu0 %v71
    %2224 = vmatpush1.msra.mxu0 %v70
    %2225 = vmatprep.subr.mxu0 %v73
    %2226 = vmatpush1.msra.mxu0 %v72
    %2227 = vmatprep.subr.mxu0 %v75
    %2228 = vmatpush1.msra.mxu0 %v74
    %2229 = vmatprep.subr.mxu0 %v77
    %2230 = vmatpush1.msra.mxu0 %v76
    %2231 = vmatprep.subr.mxu0 %v79
    %2232 = vmatpush1.msra.mxu0 %v78
    %2233 = vmatprep.subr.mxu0 %v81
    %2234 = vmatpush1.msra.mxu0 %v80
    %2235 = vmatprep.subr.mxu0 %v83
    %2236 = vmatpush1.msra.mxu0 %v82
    %2237 = vmatprep.subr.mxu0 %v85
    %2238 = vmatpush1.msra.mxu0 %v84
    %2239 = vmatprep.subr.mxu0 %v87
    %2240 = vmatpush1.msra.mxu0 %v86
    %2241 = vmatprep.subr.mxu0 %v89
    %2242 = vmatpush1.msra.mxu0 %v88
    %2243 = vmatprep.subr.mxu0 0.0
    %2244 = vmatpush1.msra.mxu0 0.0
    %2245 = vmatprep.subr.mxu0 0.0
    %2246 = vmatpush1.msra.mxu0 0.0
    %2247 = vmatprep.subr.mxu0 0.0
    %2248 = vmatpush1.msra.mxu0 0.0
    %2249 = vmatprep.subr.mxu0 0.0
    %2250 = vmatpush1.msra.mxu0 0.0
    %2251 = vmatprep.subr.mxu0 0.0
    %2252 = vmatpush1.msra.mxu0 0.0
    %2253 = vmatprep.subr.mxu0 0.0
    %2254 = vmatpush1.msra.mxu0 0.0
    %2255 = vmatprep.subr.mxu0 0.0
    %2256 = vmatpush1.msra.mxu0 0.0
    %2257 = vmatprep.subr.mxu0 0.0
    %2258 = vmatpush1.msra.mxu0 0.0
    %2259 = vmatprep.subr.mxu0 0.0
    %2260 = vmatpush1.msra.mxu0 0.0
    %2261 = vmatprep.subr.mxu0 0.0
    %2262 = vmatpush1.msra.mxu0 0.0
    %2263 = vmatprep.subr.mxu0 0.0
    %2264 = vmatpush1.msra.mxu0 0.0
    %2265 = vmatprep.subr.mxu0 0.0
    %2266 = vmatpush1.msra.mxu0 0.0
    %2267 = vmatprep.subr.mxu0 0.0
    %2268 = vmatpush1.msra.mxu0 0.0
    %2269 = vmatprep.subr.mxu0 0.0
    %2270 = vmatpush1.msra.mxu0 0.0
    %2271 = vmatprep.subr.mxu0 0.0
    %2272 = vmatpush1.msra.mxu0 0.0
    %2273 = vmatprep.subr.mxu0 0.0
    %2274 = vmatpush1.msra.mxu0 0.0
    %2275 = vmatprep.mubr.f32.mxu0 0.0
    %2276 = vmatmul.mubr.f32.gmra.mrb[0].mxu0 %v2210
    %v2277 = vpop.f32.mrb[0].mxu0
    %v2278 = vadd.f32 0.0, %v2277
    %v2279 = vpop.f32.mrb[0].mxu0
    %v2280 = vadd.f32 0.0, %v2279
    %2281 = vdwg.mxu0
    %v2282 = vxor.u32 %v2278, 2147483648
    %v2283 = vmul.f32 %v2282, 1.442695
    %v2284 = vpow.pop %v2283
    %v2285 = vadd.f32 %v2284, 1.0
    %v2286 = vrcp.pop %v2285
    %v2287 = vmul.f32 1.0, %v2286
    %v2288 = vtanh.pop %v2278
    %v2289 = vmul.f32 %v2287, %v1896
    %2291 = vrot.lane.b32.xlu0 %v2288, 64
    %v2292 = vpop.permute.xlu0 %2291
    %v2294 = vmul.f32 %v2287, %v2292
    %2296 = vrot.lane.b32.xlu0 %v2294, 32
    %v2297 = vpop.permute.xlu0 %2296
    %v2299 = vadd.f32 %v2289, %v2297
    %v2300 = vtanh.pop %v2299
    %2302 = vrot.lane.b32.xlu0 %v2300, 64
    %v2303 = vpop.permute.xlu0 %2302
    %v2305 = vmul.f32 %v2287, %v2303
    %v2306 = vmul.f32 %v2280, 0.2
    %v2307 = vtanh.pop %v2306
    %v2308 = vmul.f32 %v2307, 1.442695
    %v2309 = vpow.pop %v2308
    %2311 = vrot.lane.b32.xlu0 %v2309, 96
    %v2312 = vpop.permute.xlu0 %2311
    %v2314 = vsel %vm905, %v2312, 0.0
    %v2315 = vsel %vm379, %v2314, 0.0
    %2316 = vadd.xlane.f32.xlu0 %v2315
    %v2317 = vpop.xlane.xlu0 %2316
    %v2318 = vlog2.pop %v2317
    %v2319 = vmul.f32 %v2318, 0.6931472
    %v2320 = vrcp.pop %v2317
    %v2321 = vsub.f32 %v2307, %v2319
    %2323 = vrot.lane.b32.xlu0 %v2321, 96
    %v2324 = vpop.permute.xlu0 %2323
    %v2326 = vsel %vm905, %v2324, 0.0
    %v2328 = vsel %vm389, %v2314, 0
    %2330 = vmatprep.subr.mxu0 0.0
    %2331 = vmatpush1.msra.mxu0 %v41
    %2332 = vmatprep.subr.mxu0 0.0
    %2333 = vmatpush1.msra.mxu0 %v395
    %2334 = vmatprep.subr.mxu0 0.0
    %2335 = vmatpush1.msra.mxu0 0.0
    %2336 = vmatprep.subr.mxu0 0.0
    %2337 = vmatpush1.msra.mxu0 0.0
    %2338 = vmatprep.subr.mxu0 0.0
    %2339 = vmatpush1.msra.mxu0 0.0
    %2340 = vmatprep.subr.mxu0 0.0
    %2341 = vmatpush1.msra.mxu0 0.0
    %2342 = vmatprep.subr.mxu0 0.0
    %2343 = vmatpush1.msra.mxu0 0.0
    %2344 = vmatprep.subr.mxu0 0.0
    %2345 = vmatpush1.msra.mxu0 0.0
    %2346 = vmatprep.subr.mxu0 0.0
    %2347 = vmatpush1.msra.mxu0 0.0
    %2348 = vmatprep.subr.mxu0 0.0
    %2349 = vmatpush1.msra.mxu0 0.0
    %2350 = vmatprep.subr.mxu0 0.0
    %2351 = vmatpush1.msra.mxu0 0.0
    %2352 = vmatprep.subr.mxu0 0.0
    %2353 = vmatpush1.msra.mxu0 0.0
    %2354 = vmatprep.subr.mxu0 0.0
    %2355 = vmatpush1.msra.mxu0 0.0
    %2356 = vmatprep.subr.mxu0 0.0
    %2357 = vmatpush1.msra.mxu0 0.0
    %2358 = vmatprep.subr.mxu0 0.0
    %2359 = vmatpush1.msra.mxu0 0.0
    %2360 = vmatprep.subr.mxu0 0.0
    %2361 = vmatpush1.msra.mxu0 0.0
    %2362 = vmatprep.subr.mxu0 0.0
    %2363 = vmatpush1.msra.mxu0 0.0
    %2364 = vmatprep.subr.mxu0 0.0
    %2365 = vmatpush1.msra.mxu0 0.0
    %2366 = vmatprep.subr.mxu0 0.0
    %2367 = vmatpush1.msra.mxu0 0.0
    %2368 = vmatprep.subr.mxu0 0.0
    %2369 = vmatpush1.msra.mxu0 0.0
    %2370 = vmatprep.subr.mxu0 0.0
    %2371 = vmatpush1.msra.mxu0 0.0
    %2372 = vmatprep.subr.mxu0 0.0
    %2373 = vmatpush1.msra.mxu0 0.0
    %2374 = vmatprep.subr.mxu0 0.0
    %2375 = vmatpush1.msra.mxu0 0.0
    %2376 = vmatprep.subr.mxu0 0.0
    %2377 = vmatpush1.msra.mxu0 0.0
    %2378 = vmatprep.subr.mxu0 0.0
    %2379 = vmatpush1.msra.mxu0 0.0
    %2380 = vmatprep.subr.mxu0 0.0
    %2381 = vmatpush1.msra.mxu0 0.0
    %2382 = vmatprep.subr.mxu0 0.0
    %2383 = vmatpush1.msra.mxu0 0.0
    %2384 = vmatprep.subr.mxu0 0.0
    %2385 = vmatpush1.msra.mxu0 0.0
    %2386 = vmatprep.subr.mxu0 0.0
    %2387 = vmatpush1.msra.mxu0 0.0
    %2388 = vmatprep.subr.mxu0 0.0
    %2389 = vmatpush1.msra.mxu0 0.0
    %2390 = vmatprep.subr.mxu0 0.0
    %2391 = vmatpush1.msra.mxu0 0.0
    %2392 = vmatprep.subr.mxu0 0.0
    %2393 = vmatpush1.msra.mxu0 0.0
    %2394 = vmatprep.mubr.f32.mxu0 0.0
    %2395 = vmatmul.mubr.f32.gmra.mrb[0].mxu0 %v2328
    %v2396 = vpop.f32.mrb[0].mxu0
    %v2397 = vadd.f32 0.0, %v2396
    %v2398 = vpop.f32.mrb[0].mxu0
    %2399 = vdwg.mxu0
    %v2400 = vmul.f32 %v388, %v2317
    %2402 = vset.pattern.permute.xlu0 6
    %2403 = vperm.xlu0 %2402, %v2400
    %v2404 = vpop.permute.xlu0 %2403
    %vm2406 = vcmp.lt.f32.partialorder %v2397, %v2404
    %v2407 = vsel %vm2406, 1, 0
    %v2408 = vcvt.s32.f32 %v2407
    %v2409 = vsel %vm379, %v2408, 0.0
    %2410 = vadd.xlane.f32.xlu0 %v2409
    %v2411 = vpop.xlane.xlu0 %2410
    %v2412 = vcvt.f32.s32.to.zero.pseudo %v2411
    %vm2413 = vcmp.lt.s32.totalorder %v2412, 4
    %v2414 = vsel %vm2413, %v2412, 4
    %v2415 = vcvt.s32.f32 %v2414
    %vm2416 = vcmp.eq.s32.totalorder %v33, %v2414
    %v2417 = vsel %vm2416, 1, 0
    %v2418 = vcvt.s32.f32 %v2417
    %v2419 = vmul.f32 %v2418, %v2326
    %v2420 = vsel %vm379, %v2419, 0.0
    %2421 = vadd.xlane.f32.xlu0 %v2420
    %v2422 = vpop.xlane.xlu0 %2421
    %v2423 = vadd.f32 %v2185, %v2422
    %v2424 = vmul.f32 %v2314, %v2326
    %v2425 = vsel %vm379, %v2424, 0.0
    %2426 = vadd.xlane.f32.xlu0 %v2425
    %v2427 = vpop.xlane.xlu0 %2426
    %v2428 = vmul.f32 %v2427, %v2320
    %v2429 = vsub.f32 %v2191, %v2428
    %vm2430 = vcmp.eq.s32.totalorder %v33, 10
    %v2431 = vsel %vm2430, 1, 0
    %v2432 = vcvt.s32.f32 %v2431
    %v2433 = vmul.f32 %v2415, %v2432
    %v2434 = vadd.f32 %v2196, %v2433
    %v2435 = vadd.s32 %v2414, 5
    %vm2436 = vcmp.eq.s32.totalorder %v33, %v2435
    %v2437 = vsel %vm2436, 1, 0
    %v2438 = vcvt.s32.f32 %v2437
    %2440 = vrot.lane.b32.xlu0 %v2305, 42
    %v2441 = vpop.permute.xlu0 %2440
    %v2443 = vsel %vm389, %v2438, %v2441
    %v2444 = vsel %vm44, %v2443, 1.0
    %v2445 = vsel %vm46, %v2444, 0.0
    %2447 = vrot.lane.b32.xlu0 %v2444, 64
    %v2448 = vpop.permute.xlu0 %2447
    %v2450 = vsel %vm52, 0.0, %v2448
    %v2451 = vsel %vm54, %v2450, 0.0
    %v2452 = vsel %vm56, %v2445, %v2451
    %2453 = vmatprep.subr.mxu0 %v59
    %2454 = vmatpush1.msra.mxu0 %v58
    %2455 = vmatprep.subr.mxu0 %v61
    %2456 = vmatpush1.msra.mxu0 %v60
    %2457 = vmatprep.subr.mxu0 %v63
    %2458 = vmatpush1.msra.mxu0 %v62
    %2459 = vmatprep.subr.mxu0 %v65
    %2460 = vmatpush1.msra.mxu0 %v64
    %2461 = vmatprep.subr.mxu0 %v67
    %2462 = vmatpush1.msra.mxu0 %v66
    %2463 = vmatprep.subr.mxu0 %v69
    %2464 = vmatpush1.msra.mxu0 %v68
    %2465 = vmatprep.subr.mxu0 %v71
    %2466 = vmatpush1.msra.mxu0 %v70
    %2467 = vmatprep.subr.mxu0 %v73
    %2468 = vmatpush1.msra.mxu0 %v72
    %2469 = vmatprep.subr.mxu0 %v75
    %2470 = vmatpush1.msra.mxu0 %v74
    %2471 = vmatprep.subr.mxu0 %v77
    %2472 = vmatpush1.msra.mxu0 %v76
    %2473 = vmatprep.subr.mxu0 %v79
    %2474 = vmatpush1.msra.mxu0 %v78
    %2475 = vmatprep.subr.mxu0 %v81
    %2476 = vmatpush1.msra.mxu0 %v80
    %2477 = vmatprep.subr.mxu0 %v83
    %2478 = vmatpush1.msra.mxu0 %v82
    %2479 = vmatprep.subr.mxu0 %v85
    %2480 = vmatpush1.msra.mxu0 %v84
    %2481 = vmatprep.subr.mxu0 %v87
    %2482 = vmatpush1.msra.mxu0 %v86
    %2483 = vmatprep.subr.mxu0 %v89
    %2484 = vmatpush1.msra.mxu0 %v88
    %2485 = vmatprep.subr.mxu0 0.0
    %2486 = vmatpush1.msra.mxu0 0.0
    %2487 = vmatprep.subr.mxu0 0.0
    %2488 = vmatpush1.msra.mxu0 0.0
    %2489 = vmatprep.subr.mxu0 0.0
    %2490 = vmatpush1.msra.mxu0 0.0
    %2491 = vmatprep.subr.mxu0 0.0
    %2492 = vmatpush1.msra.mxu0 0.0
    %2493 = vmatprep.subr.mxu0 0.0
    %2494 = vmatpush1.msra.mxu0 0.0
    %2495 = vmatprep.subr.mxu0 0.0
    %2496 = vmatpush1.msra.mxu0 0.0
    %2497 = vmatprep.subr.mxu0 0.0
    %2498 = vmatpush1.msra.mxu0 0.0
    %2499 = vmatprep.subr.mxu0 0.0
    %2500 = vmatpush1.msra.mxu0 0.0
    %2501 = vmatprep.subr.mxu0 0.0
    %2502 = vmatpush1.msra.mxu0 0.0
    %2503 = vmatprep.subr.mxu0 0.0
    %2504 = vmatpush1.msra.mxu0 0.0
    %2505 = vmatprep.subr.mxu0 0.0
    %2506 = vmatpush1.msra.mxu0 0.0
    %2507 = vmatprep.subr.mxu0 0.0
    %2508 = vmatpush1.msra.mxu0 0.0
    %2509 = vmatprep.subr.mxu0 0.0
    %2510 = vmatpush1.msra.mxu0 0.0
    %2511 = vmatprep.subr.mxu0 0.0
    %2512 = vmatpush1.msra.mxu0 0.0
    %2513 = vmatprep.subr.mxu0 0.0
    %2514 = vmatpush1.msra.mxu0 0.0
    %2515 = vmatprep.subr.mxu0 0.0
    %2516 = vmatpush1.msra.mxu0 0.0
    %2517 = vmatprep.mubr.f32.mxu0 0.0
    %2518 = vmatmul.mubr.f32.gmra.mrb[0].mxu0 %v2452
    %v2519 = vpop.f32.mrb[0].mxu0
    %v2520 = vadd.f32 0.0, %v2519
    %v2521 = vpop.f32.mrb[0].mxu0
    %v2522 = vadd.f32 0.0, %v2521
    %2523 = vdwg.mxu0
    %v2524 = vxor.u32 %v2520, 2147483648
    %v2525 = vmul.f32 %v2524, 1.442695
    %v2526 = vpow.pop %v2525
    %v2527 = vadd.f32 %v2526, 1.0
    %v2528 = vrcp.pop %v2527
    %v2529 = vmul.f32 1.0, %v2528
    %v2530 = vtanh.pop %v2520
    %v2531 = vmul.f32 %v2529, %v2299
    %2533 = vrot.lane.b32.xlu0 %v2530, 64
    %v2534 = vpop.permute.xlu0 %2533
    %v2536 = vmul.f32 %v2529, %v2534
    %2538 = vrot.lane.b32.xlu0 %v2536, 32
    %v2539 = vpop.permute.xlu0 %2538
    %v2541 = vadd.f32 %v2531, %v2539
    %v2542 = vtanh.pop %v2541
    %2544 = vrot.lane.b32.xlu0 %v2542, 64
    %v2545 = vpop.permute.xlu0 %2544
    %v2547 = vmul.f32 %v2529, %v2545
    %v2548 = vmul.f32 %v2522, 0.2
    %v2549 = vtanh.pop %v2548
    %v2550 = vmul.f32 %v2549, 1.442695
    %v2551 = vpow.pop %v2550
    %2553 = vrot.lane.b32.xlu0 %v2551, 96
    %v2554 = vpop.permute.xlu0 %2553
    %v2556 = vsel %vm905, %v2554, 0.0
    %v2557 = vsel %vm379, %v2556, 0.0
    %2558 = vadd.xlane.f32.xlu0 %v2557
    %v2559 = vpop.xlane.xlu0 %2558
    %v2560 = vlog2.pop %v2559
    %v2561 = vmul.f32 %v2560, 0.6931472
    %v2562 = vrcp.pop %v2559
    %v2563 = vsub.f32 %v2549, %v2561
    %2565 = vrot.lane.b32.xlu0 %v2563, 96
    %v2566 = vpop.permute.xlu0 %2565
    %v2568 = vsel %vm905, %v2566, 0.0
    %v2570 = vsel %vm389, %v2556, 0
    %2572 = vmatprep.subr.mxu0 0.0
    %2573 = vmatpush1.msra.mxu0 %v41
    %2574 = vmatprep.subr.mxu0 0.0
    %2575 = vmatpush1.msra.mxu0 %v395
    %2576 = vmatprep.subr.mxu0 0.0
    %2577 = vmatpush1.msra.mxu0 0.0
    %2578 = vmatprep.subr.mxu0 0.0
    %2579 = vmatpush1.msra.mxu0 0.0
    %2580 = vmatprep.subr.mxu0 0.0
    %2581 = vmatpush1.msra.mxu0 0.0
    %2582 = vmatprep.subr.mxu0 0.0
    %2583 = vmatpush1.msra.mxu0 0.0
    %2584 = vmatprep.subr.mxu0 0.0
    %2585 = vmatpush1.msra.mxu0 0.0
    %2586 = vmatprep.subr.mxu0 0.0
    %2587 = vmatpush1.msra.mxu0 0.0
    %2588 = vmatprep.subr.mxu0 0.0
    %2589 = vmatpush1.msra.mxu0 0.0
    %2590 = vmatprep.subr.mxu0 0.0
    %2591 = vmatpush1.msra.mxu0 0.0
    %2592 = vmatprep.subr.mxu0 0.0
    %2593 = vmatpush1.msra.mxu0 0.0
    %2594 = vmatprep.subr.mxu0 0.0
    %2595 = vmatpush1.msra.mxu0 0.0
    %2596 = vmatprep.subr.mxu0 0.0
    %2597 = vmatpush1.msra.mxu0 0.0
    %2598 = vmatprep.subr.mxu0 0.0
    %2599 = vmatpush1.msra.mxu0 0.0
    %2600 = vmatprep.subr.mxu0 0.0
    %2601 = vmatpush1.msra.mxu0 0.0
    %2602 = vmatprep.subr.mxu0 0.0
    %2603 = vmatpush1.msra.mxu0 0.0
    %2604 = vmatprep.subr.mxu0 0.0
    %2605 = vmatpush1.msra.mxu0 0.0
    %2606 = vmatprep.subr.mxu0 0.0
    %2607 = vmatpush1.msra.mxu0 0.0
    %2608 = vmatprep.subr.mxu0 0.0
    %2609 = vmatpush1.msra.mxu0 0.0
    %2610 = vmatprep.subr.mxu0 0.0
    %2611 = vmatpush1.msra.mxu0 0.0
    %2612 = vmatprep.subr.mxu0 0.0
    %2613 = vmatpush1.msra.mxu0 0.0
    %2614 = vmatprep.subr.mxu0 0.0
    %2615 = vmatpush1.msra.mxu0 0.0
    %2616 = vmatprep.subr.mxu0 0.0
    %2617 = vmatpush1.msra.mxu0 0.0
    %2618 = vmatprep.subr.mxu0 0.0
    %2619 = vmatpush1.msra.mxu0 0.0
    %2620 = vmatprep.subr.mxu0 0.0
    %2621 = vmatpush1.msra.mxu0 0.0
    %2622 = vmatprep.subr.mxu0 0.0
    %2623 = vmatpush1.msra.mxu0 0.0
    %2624 = vmatprep.subr.mxu0 0.0
    %2625 = vmatpush1.msra.mxu0 0.0
    %2626 = vmatprep.subr.mxu0 0.0
    %2627 = vmatpush1.msra.mxu0 0.0
    %2628 = vmatprep.subr.mxu0 0.0
    %2629 = vmatpush1.msra.mxu0 0.0
    %2630 = vmatprep.subr.mxu0 0.0
    %2631 = vmatpush1.msra.mxu0 0.0
    %2632 = vmatprep.subr.mxu0 0.0
    %2633 = vmatpush1.msra.mxu0 0.0
    %2634 = vmatprep.subr.mxu0 0.0
    %2635 = vmatpush1.msra.mxu0 0.0
    %2636 = vmatprep.mubr.f32.mxu0 0.0
    %2637 = vmatmul.mubr.f32.gmra.mrb[0].mxu0 %v2570
    %v2638 = vpop.f32.mrb[0].mxu0
    %v2639 = vadd.f32 0.0, %v2638
    %v2640 = vpop.f32.mrb[0].mxu0
    %2641 = vdwg.mxu0
    %v2642 = vmul.f32 %v388, %v2559
    %2644 = vset.pattern.permute.xlu0 7
    %2645 = vperm.xlu0 %2644, %v2642
    %v2646 = vpop.permute.xlu0 %2645
    %vm2648 = vcmp.lt.f32.partialorder %v2639, %v2646
    %v2649 = vsel %vm2648, 1, 0
    %v2650 = vcvt.s32.f32 %v2649
    %v2651 = vsel %vm379, %v2650, 0.0
    %2652 = vadd.xlane.f32.xlu0 %v2651
    %v2653 = vpop.xlane.xlu0 %2652
    %v2654 = vcvt.f32.s32.to.zero.pseudo %v2653
    %vm2655 = vcmp.lt.s32.totalorder %v2654, 4
    %v2656 = vsel %vm2655, %v2654, 4
    %v2657 = vcvt.s32.f32 %v2656
    %vm2658 = vcmp.eq.s32.totalorder %v33, %v2656
    %v2659 = vsel %vm2658, 1, 0
    %v2660 = vcvt.s32.f32 %v2659
    %v2661 = vmul.f32 %v2660, %v2568
    %v2662 = vsel %vm379, %v2661, 0.0
    %2663 = vadd.xlane.f32.xlu0 %v2662
    %v2664 = vpop.xlane.xlu0 %2663
    %v2665 = vadd.f32 %v2423, %v2664
    %v2666 = vmul.f32 %v2556, %v2568
    %v2667 = vsel %vm379, %v2666, 0.0
    %2668 = vadd.xlane.f32.xlu0 %v2667
    %v2669 = vpop.xlane.xlu0 %2668
    %v2670 = vmul.f32 %v2669, %v2562
    %v2671 = vsub.f32 %v2429, %v2670
    %vm2672 = vcmp.eq.s32.totalorder %v33, 11
    %v2673 = vsel %vm2672, 1, 0
    %v2674 = vcvt.s32.f32 %v2673
    %v2675 = vmul.f32 %v2657, %v2674
    %v2676 = vadd.f32 %v2434, %v2675
    %v2677 = vadd.s32 %v2656, 5
    %vm2678 = vcmp.eq.s32.totalorder %v33, %v2677
    %v2679 = vsel %vm2678, 1, 0
    %v2680 = vcvt.s32.f32 %v2679
    %vm2681 = vcmp.lt.s32.totalorder %v33, 4
    %2683 = vrot.lane.b32.xlu0 %v2547, 42
    %v2684 = vpop.permute.xlu0 %2683
    %v2686 = vsel %vm389, %v2680, %v2684
    %v2687 = vsel %vm44, %v2686, 1.0
    %v2688 = vsel %vm46, %v2687, 0.0
    %2690 = vrot.lane.b32.xlu0 %v2687, 64
    %v2691 = vpop.permute.xlu0 %2690
    %v2693 = vsel %vm52, 0.0, %v2691
    %v2694 = vsel %vm54, %v2693, 0.0
    %v2695 = vsel %vm56, %v2688, %v2694
    %2696 = vmatprep.subr.mxu0 %v59
    %2697 = vmatpush1.msra.mxu0 %v58
    %2698 = vmatprep.subr.mxu0 %v61
    %2699 = vmatpush1.msra.mxu0 %v60
    %2700 = vmatprep.subr.mxu0 %v63
    %2701 = vmatpush1.msra.mxu0 %v62
    %2702 = vmatprep.subr.mxu0 %v65
    %2703 = vmatpush1.msra.mxu0 %v64
    %2704 = vmatprep.subr.mxu0 %v67
    %2705 = vmatpush1.msra.mxu0 %v66
    %2706 = vmatprep.subr.mxu0 %v69
    %2707 = vmatpush1.msra.mxu0 %v68
    %2708 = vmatprep.subr.mxu0 %v71
    %2709 = vmatpush1.msra.mxu0 %v70
    %2710 = vmatprep.subr.mxu0 %v73
    %2711 = vmatpush1.msra.mxu0 %v72
    %2712 = vmatprep.subr.mxu0 %v75
    %2713 = vmatpush1.msra.mxu0 %v74
    %2714 = vmatprep.subr.mxu0 %v77
    %2715 = vmatpush1.msra.mxu0 %v76
    %2716 = vmatprep.subr.mxu0 %v79
    %2717 = vmatpush1.msra.mxu0 %v78
    %2718 = vmatprep.subr.mxu0 %v81
    %2719 = vmatpush1.msra.mxu0 %v80
    %2720 = vmatprep.subr.mxu0 %v83
    %2721 = vmatpush1.msra.mxu0 %v82
    %2722 = vmatprep.subr.mxu0 %v85
    %2723 = vmatpush1.msra.mxu0 %v84
    %2724 = vmatprep.subr.mxu0 %v87
    %2725 = vmatpush1.msra.mxu0 %v86
    %2726 = vmatprep.subr.mxu0 %v89
    %2727 = vmatpush1.msra.mxu0 %v88
    %2728 = vmatprep.subr.mxu0 0.0
    %2729 = vmatpush1.msra.mxu0 0.0
    %2730 = vmatprep.subr.mxu0 0.0
    %2731 = vmatpush1.msra.mxu0 0.0
    %2732 = vmatprep.subr.mxu0 0.0
    %2733 = vmatpush1.msra.mxu0 0.0
    %2734 = vmatprep.subr.mxu0 0.0
    %2735 = vmatpush1.msra.mxu0 0.0
    %2736 = vmatprep.subr.mxu0 0.0
    %2737 = vmatpush1.msra.mxu0 0.0
    %2738 = vmatprep.subr.mxu0 0.0
    %2739 = vmatpush1.msra.mxu0 0.0
    %2740 = vmatprep.subr.mxu0 0.0
    %2741 = vmatpush1.msra.mxu0 0.0
    %2742 = vmatprep.subr.mxu0 0.0
    %2743 = vmatpush1.msra.mxu0 0.0
    %2744 = vmatprep.subr.mxu0 0.0
    %2745 = vmatpush1.msra.mxu0 0.0
    %2746 = vmatprep.subr.mxu0 0.0
    %2747 = vmatpush1.msra.mxu0 0.0
    %2748 = vmatprep.subr.mxu0 0.0
    %2749 = vmatpush1.msra.mxu0 0.0
    %2750 = vmatprep.subr.mxu0 0.0
    %2751 = vmatpush1.msra.mxu0 0.0
    %2752 = vmatprep.subr.mxu0 0.0
    %2753 = vmatpush1.msra.mxu0 0.0
    %2754 = vmatprep.subr.mxu0 0.0
    %2755 = vmatpush1.msra.mxu0 0.0
    %2756 = vmatprep.subr.mxu0 0.0
    %2757 = vmatpush1.msra.mxu0 0.0
    %2758 = vmatprep.subr.mxu0 0.0
    %2759 = vmatpush1.msra.mxu0 0.0
    %2760 = vmatprep.mubr.f32.mxu0 0.0
    %2761 = vmatmul.mubr.f32.gmra.mrb[0].mxu0 %v2695
    %v2762 = vpop.f32.mrb[0].mxu0
    %v2763 = vadd.f32 0.0, %v2762
    %v2764 = vpop.f32.mrb[0].mxu0
    %v2765 = vadd.f32 0.0, %v2764
    %2766 = vdwg.mxu0
    %v2767 = vxor.u32 %v2763, 2147483648
    %v2768 = vmul.f32 %v2767, 1.442695
    %v2769 = vpow.pop %v2768
    %v2770 = vadd.f32 %v2769, 1.0
    %v2771 = vrcp.pop %v2770
    %v2772 = vmul.f32 1.0, %v2771
    %v2773 = vtanh.pop %v2763
    %v2774 = vmul.f32 %v2772, %v2541
    %2776 = vrot.lane.b32.xlu0 %v2773, 64
    %v2777 = vpop.permute.xlu0 %2776
    %v2779 = vmul.f32 %v2772, %v2777
    %2781 = vrot.lane.b32.xlu0 %v2779, 32
    %v2782 = vpop.permute.xlu0 %2781
    %v2784 = vadd.f32 %v2774, %v2782
    %v2785 = vtanh.pop %v2784
    %2787 = vrot.lane.b32.xlu0 %v2785, 64
    %v2788 = vpop.permute.xlu0 %2787
    %v2790 = vmul.f32 %v2772, %v2788
    %v2791 = vlaneseq
    %v2792 = vshrl.u32 %v2791, 7
    %v2793 = vsub.s32 0, %v2792
    %v2794 = vrot.slane %v2765, %v2793
    %v2795 = vadd.f32 %v185, %v2794
    %v2796 = vadd.f32 %v186, %v2794
    %v2797 = vtanh.pop %v2795
    %v2798 = vtanh.pop %v2796
    %v2799 = vlaneseq
    %v2800 = vshrl.u32 %v2799, 7
    %v2801 = vsub.s32 1, %v2800
    %v2802 = vrot.slane %v2765, %v2801
    %v2803 = vadd.f32 %v196, %v2802
    %v2804 = vadd.f32 %v197, %v2802
    %v2805 = vtanh.pop %v2803
    %v2806 = vtanh.pop %v2804
    %v2808 = vsel %vm207, %v2797, 0
    %v2811 = vsel %vm207, %v2798, 0
    %2813 = vmatprep.subr.mxu0 0.0
    %2814 = vmatpush1.xpose.msra.mxu0 %v2808
    %2815 = vmatprep.subr.mxu0 0.0
    %2816 = vmatpush1.xpose.msra.mxu0 %v2811
    %2817 = vmatprep.subr.mxu0 0.0
    %2818 = vmatpush1.xpose.msra.mxu0 0.0
    %2819 = vmatprep.subr.mxu0 0.0
    %2820 = vmatpush1.xpose.msra.mxu0 0.0
    %2821 = vmatprep.subr.mxu0 0.0
    %2822 = vmatpush1.xpose.msra.mxu0 0.0
    %2823 = vmatprep.subr.mxu0 0.0
    %2824 = vmatpush1.xpose.msra.mxu0 0.0
    %2825 = vmatprep.subr.mxu0 0.0
    %2826 = vmatpush1.xpose.msra.mxu0 0.0
    %2827 = vmatprep.subr.mxu0 0.0
    %2828 = vmatpush1.xpose.msra.mxu0 0.0
    %2829 = vmatprep.subr.mxu0 0.0
    %2830 = vmatpush1.xpose.msra.mxu0 0.0
    %2831 = vmatprep.subr.mxu0 0.0
    %2832 = vmatpush1.xpose.msra.mxu0 0.0
    %2833 = vmatprep.subr.mxu0 0.0
    %2834 = vmatpush1.xpose.msra.mxu0 0.0
    %2835 = vmatprep.subr.mxu0 0.0
    %2836 = vmatpush1.xpose.msra.mxu0 0.0
    %2837 = vmatprep.subr.mxu0 0.0
    %2838 = vmatpush1.xpose.msra.mxu0 0.0
    %2839 = vmatprep.subr.mxu0 0.0
    %2840 = vmatpush1.xpose.msra.mxu0 0.0
    %2841 = vmatprep.subr.mxu0 0.0
    %2842 = vmatpush1.xpose.msra.mxu0 0.0
    %2843 = vmatprep.subr.mxu0 0.0
    %2844 = vmatpush1.xpose.msra.mxu0 0.0
    %2845 = vmatprep.subr.mxu0 0.0
    %2846 = vmatpush1.xpose.msra.mxu0 0.0
    %2847 = vmatprep.subr.mxu0 0.0
    %2848 = vmatpush1.xpose.msra.mxu0 0.0
    %2849 = vmatprep.subr.mxu0 0.0
    %2850 = vmatpush1.xpose.msra.mxu0 0.0
    %2851 = vmatprep.subr.mxu0 0.0
    %2852 = vmatpush1.xpose.msra.mxu0 0.0
    %2853 = vmatprep.subr.mxu0 0.0
    %2854 = vmatpush1.xpose.msra.mxu0 0.0
    %2855 = vmatprep.subr.mxu0 0.0
    %2856 = vmatpush1.xpose.msra.mxu0 0.0
    %2857 = vmatprep.subr.mxu0 0.0
    %2858 = vmatpush1.xpose.msra.mxu0 0.0
    %2859 = vmatprep.subr.mxu0 0.0
    %2860 = vmatpush1.xpose.msra.mxu0 0.0
    %2861 = vmatprep.subr.mxu0 0.0
    %2862 = vmatpush1.xpose.msra.mxu0 0.0
    %2863 = vmatprep.subr.mxu0 0.0
    %2864 = vmatpush1.xpose.msra.mxu0 0.0
    %2865 = vmatprep.subr.mxu0 0.0
    %2866 = vmatpush1.xpose.msra.mxu0 0.0
    %2867 = vmatprep.subr.mxu0 0.0
    %2868 = vmatpush1.xpose.msra.mxu0 0.0
    %2869 = vmatprep.subr.mxu0 0.0
    %2870 = vmatpush1.xpose.msra.mxu0 0.0
    %2871 = vmatprep.subr.mxu0 0.0
    %2872 = vmatpush1.xpose.msra.mxu0 0.0
    %2873 = vmatprep.subr.mxu0 0.0
    %2874 = vmatpush1.xpose.msra.mxu0 0.0
    %2875 = vmatprep.subr.mxu0 0.0
    %2876 = vmatpush1.xpose.msra.mxu0 0.0
    %2877 = vmatprep.mubr.f32.mxu0 0.0
    %2878 = vmatmul.mubr.f32.gmra.mrb[0].mxu0 %v209
    %v2879 = vpop.f32.mrb[0].mxu0
    %v2880 = vadd.f32 0.0, %v2879
    %v2881 = vpop.f32.mrb[0].mxu0
    %2882 = vdwg.mxu0
    %v2884 = vsel %vm207, %v2805, 0
    %v2887 = vsel %vm207, %v2806, 0
    %2889 = vmatprep.subr.mxu0 0.0
    %2890 = vmatpush1.xpose.msra.mxu0 %v2884
    %2891 = vmatprep.subr.mxu0 0.0
    %2892 = vmatpush1.xpose.msra.mxu0 %v2887
    %2893 = vmatprep.subr.mxu0 0.0
    %2894 = vmatpush1.xpose.msra.mxu0 0.0
    %2895 = vmatprep.subr.mxu0 0.0
    %2896 = vmatpush1.xpose.msra.mxu0 0.0
    %2897 = vmatprep.subr.mxu0 0.0
    %2898 = vmatpush1.xpose.msra.mxu0 0.0
    %2899 = vmatprep.subr.mxu0 0.0
    %2900 = vmatpush1.xpose.msra.mxu0 0.0
    %2901 = vmatprep.subr.mxu0 0.0
    %2902 = vmatpush1.xpose.msra.mxu0 0.0
    %2903 = vmatprep.subr.mxu0 0.0
    %2904 = vmatpush1.xpose.msra.mxu0 0.0
    %2905 = vmatprep.subr.mxu0 0.0
    %2906 = vmatpush1.xpose.msra.mxu0 0.0
    %2907 = vmatprep.subr.mxu0 0.0
    %2908 = vmatpush1.xpose.msra.mxu0 0.0
    %2909 = vmatprep.subr.mxu0 0.0
    %2910 = vmatpush1.xpose.msra.mxu0 0.0
    %2911 = vmatprep.subr.mxu0 0.0
    %2912 = vmatpush1.xpose.msra.mxu0 0.0
    %2913 = vmatprep.subr.mxu0 0.0
    %2914 = vmatpush1.xpose.msra.mxu0 0.0
    %2915 = vmatprep.subr.mxu0 0.0
    %2916 = vmatpush1.xpose.msra.mxu0 0.0
    %2917 = vmatprep.subr.mxu0 0.0
    %2918 = vmatpush1.xpose.msra.mxu0 0.0
    %2919 = vmatprep.subr.mxu0 0.0
    %2920 = vmatpush1.xpose.msra.mxu0 0.0
    %2921 = vmatprep.subr.mxu0 0.0
    %2922 = vmatpush1.xpose.msra.mxu0 0.0
    %2923 = vmatprep.subr.mxu0 0.0
    %2924 = vmatpush1.xpose.msra.mxu0 0.0
    %2925 = vmatprep.subr.mxu0 0.0
    %2926 = vmatpush1.xpose.msra.mxu0 0.0
    %2927 = vmatprep.subr.mxu0 0.0
    %2928 = vmatpush1.xpose.msra.mxu0 0.0
    %2929 = vmatprep.subr.mxu0 0.0
    %2930 = vmatpush1.xpose.msra.mxu0 0.0
    %2931 = vmatprep.subr.mxu0 0.0
    %2932 = vmatpush1.xpose.msra.mxu0 0.0
    %2933 = vmatprep.subr.mxu0 0.0
    %2934 = vmatpush1.xpose.msra.mxu0 0.0
    %2935 = vmatprep.subr.mxu0 0.0
    %2936 = vmatpush1.xpose.msra.mxu0 0.0
    %2937 = vmatprep.subr.mxu0 0.0
    %2938 = vmatpush1.xpose.msra.mxu0 0.0
    %2939 = vmatprep.subr.mxu0 0.0
    %2940 = vmatpush1.xpose.msra.mxu0 0.0
    %2941 = vmatprep.subr.mxu0 0.0
    %2942 = vmatpush1.xpose.msra.mxu0 0.0
    %2943 = vmatprep.subr.mxu0 0.0
    %2944 = vmatpush1.xpose.msra.mxu0 0.0
    %2945 = vmatprep.subr.mxu0 0.0
    %2946 = vmatpush1.xpose.msra.mxu0 0.0
    %2947 = vmatprep.subr.mxu0 0.0
    %2948 = vmatpush1.xpose.msra.mxu0 0.0
    %2949 = vmatprep.subr.mxu0 0.0
    %2950 = vmatpush1.xpose.msra.mxu0 0.0
    %2951 = vmatprep.subr.mxu0 0.0
    %2952 = vmatpush1.xpose.msra.mxu0 0.0
    %2953 = vmatprep.mubr.f32.mxu0 0.0
    %2954 = vmatmul.mubr.f32.gmra.mrb[0].mxu0 %v290
    %v2955 = vpop.f32.mrb[0].mxu0
    %v2956 = vadd.f32 0.0, %v2955
    %v2957 = vpop.f32.mrb[0].mxu0
    %2958 = vdwg.mxu0
    %v2960 = vrot.slane %v2956, 7
    %v2962 = vsel %vm371, %v2880, %v2960
    %v2963 = vmul.f32 %v2962, 0.2
    %v2964 = vtanh.pop %v2963
    %v2965 = vmul.f32 %v2964, 2.5
    %v2966 = vmul.f32 %v2965, 1.442695
    %v2967 = vpow.pop %v2966
    %v2968 = vsel %vm2681, %v2967, 0.0
    %v2969 = vsel %vm379, %v2968, 0.0
    %2970 = vadd.xlane.f32.xlu0 %v2969
    %v2971 = vpop.xlane.xlu0 %2970
    %v2972 = vlog2.pop %v2971
    %v2973 = vmul.f32 %v2972, 0.6931472
    %v2974 = vrcp.pop %v2971
    %v2975 = vsub.f32 %v2965, %v2973
    %v2976 = vsel %vm2681, %v2975, 0.0
    %v2978 = vsel %vm389, %v2968, 0
    %2980 = vmatprep.subr.mxu0 0.0
    %2981 = vmatpush1.msra.mxu0 %v41
    %2982 = vmatprep.subr.mxu0 0.0
    %2983 = vmatpush1.msra.mxu0 %v395
    %2984 = vmatprep.subr.mxu0 0.0
    %2985 = vmatpush1.msra.mxu0 0.0
    %2986 = vmatprep.subr.mxu0 0.0
    %2987 = vmatpush1.msra.mxu0 0.0
    %2988 = vmatprep.subr.mxu0 0.0
    %2989 = vmatpush1.msra.mxu0 0.0
    %2990 = vmatprep.subr.mxu0 0.0
    %2991 = vmatpush1.msra.mxu0 0.0
    %2992 = vmatprep.subr.mxu0 0.0
    %2993 = vmatpush1.msra.mxu0 0.0
    %2994 = vmatprep.subr.mxu0 0.0
    %2995 = vmatpush1.msra.mxu0 0.0
    %2996 = vmatprep.subr.mxu0 0.0
    %2997 = vmatpush1.msra.mxu0 0.0
    %2998 = vmatprep.subr.mxu0 0.0
    %2999 = vmatpush1.msra.mxu0 0.0
    %3000 = vmatprep.subr.mxu0 0.0
    %3001 = vmatpush1.msra.mxu0 0.0
    %3002 = vmatprep.subr.mxu0 0.0
    %3003 = vmatpush1.msra.mxu0 0.0
    %3004 = vmatprep.subr.mxu0 0.0
    %3005 = vmatpush1.msra.mxu0 0.0
    %3006 = vmatprep.subr.mxu0 0.0
    %3007 = vmatpush1.msra.mxu0 0.0
    %3008 = vmatprep.subr.mxu0 0.0
    %3009 = vmatpush1.msra.mxu0 0.0
    %3010 = vmatprep.subr.mxu0 0.0
    %3011 = vmatpush1.msra.mxu0 0.0
    %3012 = vmatprep.subr.mxu0 0.0
    %3013 = vmatpush1.msra.mxu0 0.0
    %3014 = vmatprep.subr.mxu0 0.0
    %3015 = vmatpush1.msra.mxu0 0.0
    %3016 = vmatprep.subr.mxu0 0.0
    %3017 = vmatpush1.msra.mxu0 0.0
    %3018 = vmatprep.subr.mxu0 0.0
    %3019 = vmatpush1.msra.mxu0 0.0
    %3020 = vmatprep.subr.mxu0 0.0
    %3021 = vmatpush1.msra.mxu0 0.0
    %3022 = vmatprep.subr.mxu0 0.0
    %3023 = vmatpush1.msra.mxu0 0.0
    %3024 = vmatprep.subr.mxu0 0.0
    %3025 = vmatpush1.msra.mxu0 0.0
    %3026 = vmatprep.subr.mxu0 0.0
    %3027 = vmatpush1.msra.mxu0 0.0
    %3028 = vmatprep.subr.mxu0 0.0
    %3029 = vmatpush1.msra.mxu0 0.0
    %3030 = vmatprep.subr.mxu0 0.0
    %3031 = vmatpush1.msra.mxu0 0.0
    %3032 = vmatprep.subr.mxu0 0.0
    %3033 = vmatpush1.msra.mxu0 0.0
    %3034 = vmatprep.subr.mxu0 0.0
    %3035 = vmatpush1.msra.mxu0 0.0
    %3036 = vmatprep.subr.mxu0 0.0
    %3037 = vmatpush1.msra.mxu0 0.0
    %3038 = vmatprep.subr.mxu0 0.0
    %3039 = vmatpush1.msra.mxu0 0.0
    %3040 = vmatprep.subr.mxu0 0.0
    %3041 = vmatpush1.msra.mxu0 0.0
    %3042 = vmatprep.subr.mxu0 0.0
    %3043 = vmatpush1.msra.mxu0 0.0
    %3044 = vmatprep.mubr.f32.mxu0 0.0
    %3045 = vmatmul.mubr.f32.gmra.mrb[0].mxu0 %v2978
    %v3046 = vpop.f32.mrb[0].mxu0
    %v3047 = vadd.f32 0.0, %v3046
    %v3048 = vpop.f32.mrb[0].mxu0
    %3049 = vdwg.mxu0
    %v3050 = vmul.f32 %v388, %v2971
    %3052 = vset.pattern.permute.xlu0 8
    %3053 = vperm.xlu0 %3052, %v3050
    %v3054 = vpop.permute.xlu0 %3053
    %vm3056 = vcmp.lt.f32.partialorder %v3047, %v3054
    %v3057 = vsel %vm3056, 1, 0
    %v3058 = vcvt.s32.f32 %v3057
    %v3059 = vsel %vm379, %v3058, 0.0
    %3060 = vadd.xlane.f32.xlu0 %v3059
    %v3061 = vpop.xlane.xlu0 %3060
    %v3062 = vcvt.f32.s32.to.zero.pseudo %v3061
    %vm3063 = vcmp.lt.s32.totalorder %v3062, 3
    %v3064 = vsel %vm3063, %v3062, 3
    %v3065 = vcvt.s32.f32 %v3064
    %vm3066 = vcmp.eq.s32.totalorder %v33, %v3064
    %v3067 = vsel %vm3066, 1, 0
    %v3068 = vcvt.s32.f32 %v3067
    %v3069 = vmul.f32 %v3068, %v2976
    %v3070 = vsel %vm379, %v3069, 0.0
    %3071 = vadd.xlane.f32.xlu0 %v3070
    %v3072 = vpop.xlane.xlu0 %3071
    %v3073 = vadd.f32 %v2665, %v3072
    %v3074 = vmul.f32 %v2968, %v2976
    %v3075 = vsel %vm379, %v3074, 0.0
    %3076 = vadd.xlane.f32.xlu0 %v3075
    %v3077 = vpop.xlane.xlu0 %3076
    %v3078 = vmul.f32 %v3077, %v2974
    %v3079 = vsub.f32 %v2671, %v3078
    %vm3080 = vcmp.eq.s32.totalorder %v33, 4
    %v3081 = vsel %vm3080, 1, 0
    %v3082 = vcvt.s32.f32 %v3081
    %v3083 = vmul.f32 %v3065, %v3082
    %v3084 = vadd.f32 %v2676, %v3083
    %3086 = vrot.lane.b32.xlu0 %v2790, 42
    %v3087 = vpop.permute.xlu0 %3086
    %v3089 = vsel %vm389, %v3068, %v3087
    %v3090 = vsel %vm44, %v3089, 1.0
    %v3091 = vsel %vm46, %v3090, 0.0
    %3093 = vrot.lane.b32.xlu0 %v3090, 64
    %v3094 = vpop.permute.xlu0 %3093
    %v3096 = vsel %vm52, 0.0, %v3094
    %v3097 = vsel %vm54, %v3096, 0.0
    %v3098 = vsel %vm56, %v3091, %v3097
    %3099 = vmatprep.subr.mxu0 %v59
    %3100 = vmatpush1.msra.mxu0 %v58
    %3101 = vmatprep.subr.mxu0 %v61
    %3102 = vmatpush1.msra.mxu0 %v60
    %3103 = vmatprep.subr.mxu0 %v63
    %3104 = vmatpush1.msra.mxu0 %v62
    %3105 = vmatprep.subr.mxu0 %v65
    %3106 = vmatpush1.msra.mxu0 %v64
    %3107 = vmatprep.subr.mxu0 %v67
    %3108 = vmatpush1.msra.mxu0 %v66
    %3109 = vmatprep.subr.mxu0 %v69
    %3110 = vmatpush1.msra.mxu0 %v68
    %3111 = vmatprep.subr.mxu0 %v71
    %3112 = vmatpush1.msra.mxu0 %v70
    %3113 = vmatprep.subr.mxu0 %v73
    %3114 = vmatpush1.msra.mxu0 %v72
    %3115 = vmatprep.subr.mxu0 %v75
    %3116 = vmatpush1.msra.mxu0 %v74
    %3117 = vmatprep.subr.mxu0 %v77
    %3118 = vmatpush1.msra.mxu0 %v76
    %3119 = vmatprep.subr.mxu0 %v79
    %3120 = vmatpush1.msra.mxu0 %v78
    %3121 = vmatprep.subr.mxu0 %v81
    %3122 = vmatpush1.msra.mxu0 %v80
    %3123 = vmatprep.subr.mxu0 %v83
    %3124 = vmatpush1.msra.mxu0 %v82
    %3125 = vmatprep.subr.mxu0 %v85
    %3126 = vmatpush1.msra.mxu0 %v84
    %3127 = vmatprep.subr.mxu0 %v87
    %3128 = vmatpush1.msra.mxu0 %v86
    %3129 = vmatprep.subr.mxu0 %v89
    %3130 = vmatpush1.msra.mxu0 %v88
    %3131 = vmatprep.subr.mxu0 0.0
    %3132 = vmatpush1.msra.mxu0 0.0
    %3133 = vmatprep.subr.mxu0 0.0
    %3134 = vmatpush1.msra.mxu0 0.0
    %3135 = vmatprep.subr.mxu0 0.0
    %3136 = vmatpush1.msra.mxu0 0.0
    %3137 = vmatprep.subr.mxu0 0.0
    %3138 = vmatpush1.msra.mxu0 0.0
    %3139 = vmatprep.subr.mxu0 0.0
    %3140 = vmatpush1.msra.mxu0 0.0
    %3141 = vmatprep.subr.mxu0 0.0
    %3142 = vmatpush1.msra.mxu0 0.0
    %3143 = vmatprep.subr.mxu0 0.0
    %3144 = vmatpush1.msra.mxu0 0.0
    %3145 = vmatprep.subr.mxu0 0.0
    %3146 = vmatpush1.msra.mxu0 0.0
    %3147 = vmatprep.subr.mxu0 0.0
    %3148 = vmatpush1.msra.mxu0 0.0
    %3149 = vmatprep.subr.mxu0 0.0
    %3150 = vmatpush1.msra.mxu0 0.0
    %3151 = vmatprep.subr.mxu0 0.0
    %3152 = vmatpush1.msra.mxu0 0.0
    %3153 = vmatprep.subr.mxu0 0.0
    %3154 = vmatpush1.msra.mxu0 0.0
    %3155 = vmatprep.subr.mxu0 0.0
    %3156 = vmatpush1.msra.mxu0 0.0
    %3157 = vmatprep.subr.mxu0 0.0
    %3158 = vmatpush1.msra.mxu0 0.0
    %3159 = vmatprep.subr.mxu0 0.0
    %3160 = vmatpush1.msra.mxu0 0.0
    %3161 = vmatprep.subr.mxu0 0.0
    %3162 = vmatpush1.msra.mxu0 0.0
    %3163 = vmatprep.mubr.f32.mxu0 0.0
    %3164 = vmatmul.mubr.f32.gmra.mrb[0].mxu0 %v3098
    %v3165 = vpop.f32.mrb[0].mxu0
    %v3166 = vadd.f32 0.0, %v3165
    %v3167 = vpop.f32.mrb[0].mxu0
    %v3168 = vadd.f32 0.0, %v3167
    %3169 = vdwg.mxu0
    %v3170 = vxor.u32 %v3166, 2147483648
    %v3171 = vmul.f32 %v3170, 1.442695
    %v3172 = vpow.pop %v3171
    %v3173 = vadd.f32 %v3172, 1.0
    %v3174 = vrcp.pop %v3173
    %v3175 = vmul.f32 1.0, %v3174
    %v3176 = vtanh.pop %v3166
    %v3177 = vmul.f32 %v3175, %v2784
    %3179 = vrot.lane.b32.xlu0 %v3176, 64
    %v3180 = vpop.permute.xlu0 %3179
    %v3182 = vmul.f32 %v3175, %v3180
    %3184 = vrot.lane.b32.xlu0 %v3182, 32
    %v3185 = vpop.permute.xlu0 %3184
    %v3187 = vadd.f32 %v3177, %v3185
    %v3188 = vtanh.pop %v3187
    %3190 = vrot.lane.b32.xlu0 %v3188, 64
    %v3191 = vpop.permute.xlu0 %3190
    %v3193 = vmul.f32 %v3175, %v3191
    %v3194 = vlaneseq
    %v3195 = vshrl.u32 %v3194, 7
    %v3196 = vsub.s32 0, %v3195
    %v3197 = vrot.slane %v3168, %v3196
    %v3198 = vadd.f32 %v185, %v3197
    %v3199 = vadd.f32 %v186, %v3197
    %v3200 = vtanh.pop %v3198
    %v3201 = vtanh.pop %v3199
    %v3202 = vlaneseq
    %v3203 = vshrl.u32 %v3202, 7
    %v3204 = vsub.s32 1, %v3203
    %v3205 = vrot.slane %v3168, %v3204
    %v3206 = vadd.f32 %v196, %v3205
    %v3207 = vadd.f32 %v197, %v3205
    %v3208 = vtanh.pop %v3206
    %v3209 = vtanh.pop %v3207
    %v3211 = vsel %vm207, %v3200, 0
    %v3214 = vsel %vm207, %v3201, 0
    %3216 = vmatprep.subr.mxu0 0.0
    %3217 = vmatpush1.xpose.msra.mxu0 %v3211
    %3218 = vmatprep.subr.mxu0 0.0
    %3219 = vmatpush1.xpose.msra.mxu0 %v3214
    %3220 = vmatprep.subr.mxu0 0.0
    %3221 = vmatpush1.xpose.msra.mxu0 0.0
    %3222 = vmatprep.subr.mxu0 0.0
    %3223 = vmatpush1.xpose.msra.mxu0 0.0
    %3224 = vmatprep.subr.mxu0 0.0
    %3225 = vmatpush1.xpose.msra.mxu0 0.0
    %3226 = vmatprep.subr.mxu0 0.0
    %3227 = vmatpush1.xpose.msra.mxu0 0.0
    %3228 = vmatprep.subr.mxu0 0.0
    %3229 = vmatpush1.xpose.msra.mxu0 0.0
    %3230 = vmatprep.subr.mxu0 0.0
    %3231 = vmatpush1.xpose.msra.mxu0 0.0
    %3232 = vmatprep.subr.mxu0 0.0
    %3233 = vmatpush1.xpose.msra.mxu0 0.0
    %3234 = vmatprep.subr.mxu0 0.0
    %3235 = vmatpush1.xpose.msra.mxu0 0.0
    %3236 = vmatprep.subr.mxu0 0.0
    %3237 = vmatpush1.xpose.msra.mxu0 0.0
    %3238 = vmatprep.subr.mxu0 0.0
    %3239 = vmatpush1.xpose.msra.mxu0 0.0
    %3240 = vmatprep.subr.mxu0 0.0
    %3241 = vmatpush1.xpose.msra.mxu0 0.0
    %3242 = vmatprep.subr.mxu0 0.0
    %3243 = vmatpush1.xpose.msra.mxu0 0.0
    %3244 = vmatprep.subr.mxu0 0.0
    %3245 = vmatpush1.xpose.msra.mxu0 0.0
    %3246 = vmatprep.subr.mxu0 0.0
    %3247 = vmatpush1.xpose.msra.mxu0 0.0
    %3248 = vmatprep.subr.mxu0 0.0
    %3249 = vmatpush1.xpose.msra.mxu0 0.0
    %3250 = vmatprep.subr.mxu0 0.0
    %3251 = vmatpush1.xpose.msra.mxu0 0.0
    %3252 = vmatprep.subr.mxu0 0.0
    %3253 = vmatpush1.xpose.msra.mxu0 0.0
    %3254 = vmatprep.subr.mxu0 0.0
    %3255 = vmatpush1.xpose.msra.mxu0 0.0
    %3256 = vmatprep.subr.mxu0 0.0
    %3257 = vmatpush1.xpose.msra.mxu0 0.0
    %3258 = vmatprep.subr.mxu0 0.0
    %3259 = vmatpush1.xpose.msra.mxu0 0.0
    %3260 = vmatprep.subr.mxu0 0.0
    %3261 = vmatpush1.xpose.msra.mxu0 0.0
    %3262 = vmatprep.subr.mxu0 0.0
    %3263 = vmatpush1.xpose.msra.mxu0 0.0
    %3264 = vmatprep.subr.mxu0 0.0
    %3265 = vmatpush1.xpose.msra.mxu0 0.0
    %3266 = vmatprep.subr.mxu0 0.0
    %3267 = vmatpush1.xpose.msra.mxu0 0.0
    %3268 = vmatprep.subr.mxu0 0.0
    %3269 = vmatpush1.xpose.msra.mxu0 0.0
    %3270 = vmatprep.subr.mxu0 0.0
    %3271 = vmatpush1.xpose.msra.mxu0 0.0
    %3272 = vmatprep.subr.mxu0 0.0
    %3273 = vmatpush1.xpose.msra.mxu0 0.0
    %3274 = vmatprep.subr.mxu0 0.0
    %3275 = vmatpush1.xpose.msra.mxu0 0.0
    %3276 = vmatprep.subr.mxu0 0.0
    %3277 = vmatpush1.xpose.msra.mxu0 0.0
    %3278 = vmatprep.subr.mxu0 0.0
    %3279 = vmatpush1.xpose.msra.mxu0 0.0
    %3280 = vmatprep.mubr.f32.mxu0 0.0
    %3281 = vmatmul.mubr.f32.gmra.mrb[0].mxu0 %v209
    %v3282 = vpop.f32.mrb[0].mxu0
    %v3283 = vadd.f32 0.0, %v3282
    %v3284 = vpop.f32.mrb[0].mxu0
    %3285 = vdwg.mxu0
    %v3287 = vsel %vm207, %v3208, 0
    %v3290 = vsel %vm207, %v3209, 0
    %3292 = vmatprep.subr.mxu0 0.0
    %3293 = vmatpush1.xpose.msra.mxu0 %v3287
    %3294 = vmatprep.subr.mxu0 0.0
    %3295 = vmatpush1.xpose.msra.mxu0 %v3290
    %3296 = vmatprep.subr.mxu0 0.0
    %3297 = vmatpush1.xpose.msra.mxu0 0.0
    %3298 = vmatprep.subr.mxu0 0.0
    %3299 = vmatpush1.xpose.msra.mxu0 0.0
    %3300 = vmatprep.subr.mxu0 0.0
    %3301 = vmatpush1.xpose.msra.mxu0 0.0
    %3302 = vmatprep.subr.mxu0 0.0
    %3303 = vmatpush1.xpose.msra.mxu0 0.0
    %3304 = vmatprep.subr.mxu0 0.0
    %3305 = vmatpush1.xpose.msra.mxu0 0.0
    %3306 = vmatprep.subr.mxu0 0.0
    %3307 = vmatpush1.xpose.msra.mxu0 0.0
    %3308 = vmatprep.subr.mxu0 0.0
    %3309 = vmatpush1.xpose.msra.mxu0 0.0
    %3310 = vmatprep.subr.mxu0 0.0
    %3311 = vmatpush1.xpose.msra.mxu0 0.0
    %3312 = vmatprep.subr.mxu0 0.0
    %3313 = vmatpush1.xpose.msra.mxu0 0.0
    %3314 = vmatprep.subr.mxu0 0.0
    %3315 = vmatpush1.xpose.msra.mxu0 0.0
    %3316 = vmatprep.subr.mxu0 0.0
    %3317 = vmatpush1.xpose.msra.mxu0 0.0
    %3318 = vmatprep.subr.mxu0 0.0
    %3319 = vmatpush1.xpose.msra.mxu0 0.0
    %3320 = vmatprep.subr.mxu0 0.0
    %3321 = vmatpush1.xpose.msra.mxu0 0.0
    %3322 = vmatprep.subr.mxu0 0.0
    %3323 = vmatpush1.xpose.msra.mxu0 0.0
    %3324 = vmatprep.subr.mxu0 0.0
    %3325 = vmatpush1.xpose.msra.mxu0 0.0
    %3326 = vmatprep.subr.mxu0 0.0
    %3327 = vmatpush1.xpose.msra.mxu0 0.0
    %3328 = vmatprep.subr.mxu0 0.0
    %3329 = vmatpush1.xpose.msra.mxu0 0.0
    %3330 = vmatprep.subr.mxu0 0.0
    %3331 = vmatpush1.xpose.msra.mxu0 0.0
    %3332 = vmatprep.subr.mxu0 0.0
    %3333 = vmatpush1.xpose.msra.mxu0 0.0
    %3334 = vmatprep.subr.mxu0 0.0
    %3335 = vmatpush1.xpose.msra.mxu0 0.0
    %3336 = vmatprep.subr.mxu0 0.0
    %3337 = vmatpush1.xpose.msra.mxu0 0.0
    %3338 = vmatprep.subr.mxu0 0.0
    %3339 = vmatpush1.xpose.msra.mxu0 0.0
    %3340 = vmatprep.subr.mxu0 0.0
    %3341 = vmatpush1.xpose.msra.mxu0 0.0
    %3342 = vmatprep.subr.mxu0 0.0
    %3343 = vmatpush1.xpose.msra.mxu0 0.0
    %3344 = vmatprep.subr.mxu0 0.0
    %3345 = vmatpush1.xpose.msra.mxu0 0.0
    %3346 = vmatprep.subr.mxu0 0.0
    %3347 = vmatpush1.xpose.msra.mxu0 0.0
    %3348 = vmatprep.subr.mxu0 0.0
    %3349 = vmatpush1.xpose.msra.mxu0 0.0
    %3350 = vmatprep.subr.mxu0 0.0
    %3351 = vmatpush1.xpose.msra.mxu0 0.0
    %3352 = vmatprep.subr.mxu0 0.0
    %3353 = vmatpush1.xpose.msra.mxu0 0.0
    %3354 = vmatprep.subr.mxu0 0.0
    %3355 = vmatpush1.xpose.msra.mxu0 0.0
    %3356 = vmatprep.mubr.f32.mxu0 0.0
    %3357 = vmatmul.mubr.f32.gmra.mrb[0].mxu0 %v290
    %v3358 = vpop.f32.mrb[0].mxu0
    %v3359 = vadd.f32 0.0, %v3358
    %v3360 = vpop.f32.mrb[0].mxu0
    %3361 = vdwg.mxu0
    %v3363 = vrot.slane %v3359, 7
    %v3365 = vsel %vm371, %v3283, %v3363
    %v3366 = vmul.f32 %v3365, 0.2
    %v3367 = vtanh.pop %v3366
    %v3368 = vmul.f32 %v3367, 2.5
    %v3369 = vmul.f32 %v3368, 1.442695
    %v3370 = vpow.pop %v3369
    %v3371 = vsel %vm2681, %v3370, 0.0
    %v3372 = vsel %vm379, %v3371, 0.0
    %3373 = vadd.xlane.f32.xlu0 %v3372
    %v3374 = vpop.xlane.xlu0 %3373
    %v3375 = vlog2.pop %v3374
    %v3376 = vmul.f32 %v3375, 0.6931472
    %v3377 = vrcp.pop %v3374
    %v3378 = vsub.f32 %v3368, %v3376
    %v3379 = vsel %vm2681, %v3378, 0.0
    %v3381 = vsel %vm389, %v3371, 0
    %3383 = vmatprep.subr.mxu0 0.0
    %3384 = vmatpush1.msra.mxu0 %v41
    %3385 = vmatprep.subr.mxu0 0.0
    %3386 = vmatpush1.msra.mxu0 %v395
    %3387 = vmatprep.subr.mxu0 0.0
    %3388 = vmatpush1.msra.mxu0 0.0
    %3389 = vmatprep.subr.mxu0 0.0
    %3390 = vmatpush1.msra.mxu0 0.0
    %3391 = vmatprep.subr.mxu0 0.0
    %3392 = vmatpush1.msra.mxu0 0.0
    %3393 = vmatprep.subr.mxu0 0.0
    %3394 = vmatpush1.msra.mxu0 0.0
    %3395 = vmatprep.subr.mxu0 0.0
    %3396 = vmatpush1.msra.mxu0 0.0
    %3397 = vmatprep.subr.mxu0 0.0
    %3398 = vmatpush1.msra.mxu0 0.0
    %3399 = vmatprep.subr.mxu0 0.0
    %3400 = vmatpush1.msra.mxu0 0.0
    %3401 = vmatprep.subr.mxu0 0.0
    %3402 = vmatpush1.msra.mxu0 0.0
    %3403 = vmatprep.subr.mxu0 0.0
    %3404 = vmatpush1.msra.mxu0 0.0
    %3405 = vmatprep.subr.mxu0 0.0
    %3406 = vmatpush1.msra.mxu0 0.0
    %3407 = vmatprep.subr.mxu0 0.0
    %3408 = vmatpush1.msra.mxu0 0.0
    %3409 = vmatprep.subr.mxu0 0.0
    %3410 = vmatpush1.msra.mxu0 0.0
    %3411 = vmatprep.subr.mxu0 0.0
    %3412 = vmatpush1.msra.mxu0 0.0
    %3413 = vmatprep.subr.mxu0 0.0
    %3414 = vmatpush1.msra.mxu0 0.0
    %3415 = vmatprep.subr.mxu0 0.0
    %3416 = vmatpush1.msra.mxu0 0.0
    %3417 = vmatprep.subr.mxu0 0.0
    %3418 = vmatpush1.msra.mxu0 0.0
    %3419 = vmatprep.subr.mxu0 0.0
    %3420 = vmatpush1.msra.mxu0 0.0
    %3421 = vmatprep.subr.mxu0 0.0
    %3422 = vmatpush1.msra.mxu0 0.0
    %3423 = vmatprep.subr.mxu0 0.0
    %3424 = vmatpush1.msra.mxu0 0.0
    %3425 = vmatprep.subr.mxu0 0.0
    %3426 = vmatpush1.msra.mxu0 0.0
    %3427 = vmatprep.subr.mxu0 0.0
    %3428 = vmatpush1.msra.mxu0 0.0
    %3429 = vmatprep.subr.mxu0 0.0
    %3430 = vmatpush1.msra.mxu0 0.0
    %3431 = vmatprep.subr.mxu0 0.0
    %3432 = vmatpush1.msra.mxu0 0.0
    %3433 = vmatprep.subr.mxu0 0.0
    %3434 = vmatpush1.msra.mxu0 0.0
    %3435 = vmatprep.subr.mxu0 0.0
    %3436 = vmatpush1.msra.mxu0 0.0
    %3437 = vmatprep.subr.mxu0 0.0
    %3438 = vmatpush1.msra.mxu0 0.0
    %3439 = vmatprep.subr.mxu0 0.0
    %3440 = vmatpush1.msra.mxu0 0.0
    %3441 = vmatprep.subr.mxu0 0.0
    %3442 = vmatpush1.msra.mxu0 0.0
    %3443 = vmatprep.subr.mxu0 0.0
    %3444 = vmatpush1.msra.mxu0 0.0
    %3445 = vmatprep.subr.mxu0 0.0
    %3446 = vmatpush1.msra.mxu0 0.0
    %3447 = vmatprep.mubr.f32.mxu0 0.0
    %3448 = vmatmul.mubr.f32.gmra.mrb[0].mxu0 %v3381
    %v3449 = vpop.f32.mrb[0].mxu0
    %v3450 = vadd.f32 0.0, %v3449
    %v3451 = vpop.f32.mrb[0].mxu0
    %3452 = vdwg.mxu0
    %v3453 = vmul.f32 %v388, %v3374
    %3455 = vset.pattern.permute.xlu0 9
    %3456 = vperm.xlu0 %3455, %v3453
    %v3457 = vpop.permute.xlu0 %3456
    %vm3459 = vcmp.lt.f32.partialorder %v3450, %v3457
    %v3460 = vsel %vm3459, 1, 0
    %v3461 = vcvt.s32.f32 %v3460
    %v3462 = vsel %vm379, %v3461, 0.0
    %3463 = vadd.xlane.f32.xlu0 %v3462
    %v3464 = vpop.xlane.xlu0 %3463
    %v3465 = vcvt.f32.s32.to.zero.pseudo %v3464
    %vm3466 = vcmp.lt.s32.totalorder %v3465, 3
    %v3467 = vsel %vm3466, %v3465, 3
    %v3468 = vcvt.s32.f32 %v3467
    %vm3469 = vcmp.eq.s32.totalorder %v33, %v3467
    %v3470 = vsel %vm3469, 1, 0
    %v3471 = vcvt.s32.f32 %v3470
    %v3472 = vmul.f32 %v3471, %v3379
    %v3473 = vsel %vm379, %v3472, 0.0
    %3474 = vadd.xlane.f32.xlu0 %v3473
    %v3475 = vpop.xlane.xlu0 %3474
    %v3476 = vadd.f32 %v3073, %v3475
    %v3477 = vmul.f32 %v3371, %v3379
    %v3478 = vsel %vm379, %v3477, 0.0
    %3479 = vadd.xlane.f32.xlu0 %v3478
    %v3480 = vpop.xlane.xlu0 %3479
    %v3481 = vmul.f32 %v3480, %v3377
    %v3482 = vsub.f32 %v3079, %v3481
    %vm3483 = vcmp.eq.s32.totalorder %v33, 5
    %v3484 = vsel %vm3483, 1, 0
    %v3485 = vcvt.s32.f32 %v3484
    %v3486 = vmul.f32 %v3468, %v3485
    %v3487 = vadd.f32 %v3084, %v3486
    %3489 = vrot.lane.b32.xlu0 %v3193, 42
    %v3490 = vpop.permute.xlu0 %3489
    %v3492 = vsel %vm389, %v3471, %v3490
    %v3493 = vsel %vm44, %v3492, 1.0
    %v3494 = vsel %vm46, %v3493, 0.0
    %3496 = vrot.lane.b32.xlu0 %v3493, 64
    %v3497 = vpop.permute.xlu0 %3496
    %v3499 = vsel %vm52, 0.0, %v3497
    %v3500 = vsel %vm54, %v3499, 0.0
    %v3501 = vsel %vm56, %v3494, %v3500
    %3502 = vmatprep.subr.mxu0 %v59
    %3503 = vmatpush1.msra.mxu0 %v58
    %3504 = vmatprep.subr.mxu0 %v61
    %3505 = vmatpush1.msra.mxu0 %v60
    %3506 = vmatprep.subr.mxu0 %v63
    %3507 = vmatpush1.msra.mxu0 %v62
    %3508 = vmatprep.subr.mxu0 %v65
    %3509 = vmatpush1.msra.mxu0 %v64
    %3510 = vmatprep.subr.mxu0 %v67
    %3511 = vmatpush1.msra.mxu0 %v66
    %3512 = vmatprep.subr.mxu0 %v69
    %3513 = vmatpush1.msra.mxu0 %v68
    %3514 = vmatprep.subr.mxu0 %v71
    %3515 = vmatpush1.msra.mxu0 %v70
    %3516 = vmatprep.subr.mxu0 %v73
    %3517 = vmatpush1.msra.mxu0 %v72
    %3518 = vmatprep.subr.mxu0 %v75
    %3519 = vmatpush1.msra.mxu0 %v74
    %3520 = vmatprep.subr.mxu0 %v77
    %3521 = vmatpush1.msra.mxu0 %v76
    %3522 = vmatprep.subr.mxu0 %v79
    %3523 = vmatpush1.msra.mxu0 %v78
    %3524 = vmatprep.subr.mxu0 %v81
    %3525 = vmatpush1.msra.mxu0 %v80
    %3526 = vmatprep.subr.mxu0 %v83
    %3527 = vmatpush1.msra.mxu0 %v82
    %3528 = vmatprep.subr.mxu0 %v85
    %3529 = vmatpush1.msra.mxu0 %v84
    %3530 = vmatprep.subr.mxu0 %v87
    %3531 = vmatpush1.msra.mxu0 %v86
    %3532 = vmatprep.subr.mxu0 %v89
    %3533 = vmatpush1.msra.mxu0 %v88
    %3534 = vmatprep.subr.mxu0 0.0
    %3535 = vmatpush1.msra.mxu0 0.0
    %3536 = vmatprep.subr.mxu0 0.0
    %3537 = vmatpush1.msra.mxu0 0.0
    %3538 = vmatprep.subr.mxu0 0.0
    %3539 = vmatpush1.msra.mxu0 0.0
    %3540 = vmatprep.subr.mxu0 0.0
    %3541 = vmatpush1.msra.mxu0 0.0
    %3542 = vmatprep.subr.mxu0 0.0
    %3543 = vmatpush1.msra.mxu0 0.0
    %3544 = vmatprep.subr.mxu0 0.0
    %3545 = vmatpush1.msra.mxu0 0.0
    %3546 = vmatprep.subr.mxu0 0.0
    %3547 = vmatpush1.msra.mxu0 0.0
    %3548 = vmatprep.subr.mxu0 0.0
    %3549 = vmatpush1.msra.mxu0 0.0
    %3550 = vmatprep.subr.mxu0 0.0
    %3551 = vmatpush1.msra.mxu0 0.0
    %3552 = vmatprep.subr.mxu0 0.0
    %3553 = vmatpush1.msra.mxu0 0.0
    %3554 = vmatprep.subr.mxu0 0.0
    %3555 = vmatpush1.msra.mxu0 0.0
    %3556 = vmatprep.subr.mxu0 0.0
    %3557 = vmatpush1.msra.mxu0 0.0
    %3558 = vmatprep.subr.mxu0 0.0
    %3559 = vmatpush1.msra.mxu0 0.0
    %3560 = vmatprep.subr.mxu0 0.0
    %3561 = vmatpush1.msra.mxu0 0.0
    %3562 = vmatprep.subr.mxu0 0.0
    %3563 = vmatpush1.msra.mxu0 0.0
    %3564 = vmatprep.subr.mxu0 0.0
    %3565 = vmatpush1.msra.mxu0 0.0
    %3566 = vmatprep.mubr.f32.mxu0 0.0
    %3567 = vmatmul.mubr.f32.gmra.mrb[0].mxu0 %v3501
    %v3568 = vpop.f32.mrb[0].mxu0
    %v3569 = vadd.f32 0.0, %v3568
    %v3570 = vpop.f32.mrb[0].mxu0
    %v3571 = vadd.f32 0.0, %v3570
    %3572 = vdwg.mxu0
    %v3573 = vxor.u32 %v3569, 2147483648
    %v3574 = vmul.f32 %v3573, 1.442695
    %v3575 = vpow.pop %v3574
    %v3576 = vadd.f32 %v3575, 1.0
    %v3577 = vrcp.pop %v3576
    %v3578 = vmul.f32 1.0, %v3577
    %v3579 = vtanh.pop %v3569
    %v3580 = vmul.f32 %v3578, %v3187
    %3582 = vrot.lane.b32.xlu0 %v3579, 64
    %v3583 = vpop.permute.xlu0 %3582
    %v3585 = vmul.f32 %v3578, %v3583
    %3587 = vrot.lane.b32.xlu0 %v3585, 32
    %v3588 = vpop.permute.xlu0 %3587
    %v3590 = vadd.f32 %v3580, %v3588
    %v3591 = vtanh.pop %v3590
    %3593 = vrot.lane.b32.xlu0 %v3591, 64
    %v3594 = vpop.permute.xlu0 %3593
    %v3596 = vmul.f32 %v3578, %v3594
    %v3597 = vmul.f32 %v3571, 0.2
    %v3598 = vtanh.pop %v3597
    %v3599 = vmul.f32 %v3598, 1.442695
    %v3600 = vpow.pop %v3599
    %3602 = vrot.lane.b32.xlu0 %v3600, 96
    %v3603 = vpop.permute.xlu0 %3602
    %v3605 = vsel %vm905, %v3603, 0.0
    %v3606 = vsel %vm379, %v3605, 0.0
    %3607 = vadd.xlane.f32.xlu0 %v3606
    %v3608 = vpop.xlane.xlu0 %3607
    %v3609 = vlog2.pop %v3608
    %v3610 = vmul.f32 %v3609, 0.6931472
    %v3611 = vrcp.pop %v3608
    %v3612 = vsub.f32 %v3598, %v3610
    %3614 = vrot.lane.b32.xlu0 %v3612, 96
    %v3615 = vpop.permute.xlu0 %3614
    %v3617 = vsel %vm905, %v3615, 0.0
    %v3619 = vsel %vm389, %v3605, 0
    %3621 = vmatprep.subr.mxu0 0.0
    %3622 = vmatpush1.msra.mxu0 %v41
    %3623 = vmatprep.subr.mxu0 0.0
    %3624 = vmatpush1.msra.mxu0 %v395
    %3625 = vmatprep.subr.mxu0 0.0
    %3626 = vmatpush1.msra.mxu0 0.0
    %3627 = vmatprep.subr.mxu0 0.0
    %3628 = vmatpush1.msra.mxu0 0.0
    %3629 = vmatprep.subr.mxu0 0.0
    %3630 = vmatpush1.msra.mxu0 0.0
    %3631 = vmatprep.subr.mxu0 0.0
    %3632 = vmatpush1.msra.mxu0 0.0
    %3633 = vmatprep.subr.mxu0 0.0
    %3634 = vmatpush1.msra.mxu0 0.0
    %3635 = vmatprep.subr.mxu0 0.0
    %3636 = vmatpush1.msra.mxu0 0.0
    %3637 = vmatprep.subr.mxu0 0.0
    %3638 = vmatpush1.msra.mxu0 0.0
    %3639 = vmatprep.subr.mxu0 0.0
    %3640 = vmatpush1.msra.mxu0 0.0
    %3641 = vmatprep.subr.mxu0 0.0
    %3642 = vmatpush1.msra.mxu0 0.0
    %3643 = vmatprep.subr.mxu0 0.0
    %3644 = vmatpush1.msra.mxu0 0.0
    %3645 = vmatprep.subr.mxu0 0.0
    %3646 = vmatpush1.msra.mxu0 0.0
    %3647 = vmatprep.subr.mxu0 0.0
    %3648 = vmatpush1.msra.mxu0 0.0
    %3649 = vmatprep.subr.mxu0 0.0
    %3650 = vmatpush1.msra.mxu0 0.0
    %3651 = vmatprep.subr.mxu0 0.0
    %3652 = vmatpush1.msra.mxu0 0.0
    %3653 = vmatprep.subr.mxu0 0.0
    %3654 = vmatpush1.msra.mxu0 0.0
    %3655 = vmatprep.subr.mxu0 0.0
    %3656 = vmatpush1.msra.mxu0 0.0
    %3657 = vmatprep.subr.mxu0 0.0
    %3658 = vmatpush1.msra.mxu0 0.0
    %3659 = vmatprep.subr.mxu0 0.0
    %3660 = vmatpush1.msra.mxu0 0.0
    %3661 = vmatprep.subr.mxu0 0.0
    %3662 = vmatpush1.msra.mxu0 0.0
    %3663 = vmatprep.subr.mxu0 0.0
    %3664 = vmatpush1.msra.mxu0 0.0
    %3665 = vmatprep.subr.mxu0 0.0
    %3666 = vmatpush1.msra.mxu0 0.0
    %3667 = vmatprep.subr.mxu0 0.0
    %3668 = vmatpush1.msra.mxu0 0.0
    %3669 = vmatprep.subr.mxu0 0.0
    %3670 = vmatpush1.msra.mxu0 0.0
    %3671 = vmatprep.subr.mxu0 0.0
    %3672 = vmatpush1.msra.mxu0 0.0
    %3673 = vmatprep.subr.mxu0 0.0
    %3674 = vmatpush1.msra.mxu0 0.0
    %3675 = vmatprep.subr.mxu0 0.0
    %3676 = vmatpush1.msra.mxu0 0.0
    %3677 = vmatprep.subr.mxu0 0.0
    %3678 = vmatpush1.msra.mxu0 0.0
    %3679 = vmatprep.subr.mxu0 0.0
    %3680 = vmatpush1.msra.mxu0 0.0
    %3681 = vmatprep.subr.mxu0 0.0
    %3682 = vmatpush1.msra.mxu0 0.0
    %3683 = vmatprep.subr.mxu0 0.0
    %3684 = vmatpush1.msra.mxu0 0.0
    %3685 = vmatprep.mubr.f32.mxu0 0.0
    %3686 = vmatmul.mubr.f32.gmra.mrb[0].mxu0 %v3619
    %v3687 = vpop.f32.mrb[0].mxu0
    %v3688 = vadd.f32 0.0, %v3687
    %v3689 = vpop.f32.mrb[0].mxu0
    %3690 = vdwg.mxu0
    %v3691 = vmul.f32 %v388, %v3608
    %3693 = vset.pattern.permute.xlu0 10
    %3694 = vperm.xlu0 %3693, %v3691
    %v3695 = vpop.permute.xlu0 %3694
    %vm3697 = vcmp.lt.f32.partialorder %v3688, %v3695
    %v3698 = vsel %vm3697, 1, 0
    %v3699 = vcvt.s32.f32 %v3698
    %v3700 = vsel %vm379, %v3699, 0.0
    %3701 = vadd.xlane.f32.xlu0 %v3700
    %v3702 = vpop.xlane.xlu0 %3701
    %v3703 = vcvt.f32.s32.to.zero.pseudo %v3702
    %vm3704 = vcmp.lt.s32.totalorder %v3703, 4
    %v3705 = vsel %vm3704, %v3703, 4
    %v3706 = vcvt.s32.f32 %v3705
    %vm3707 = vcmp.eq.s32.totalorder %v33, %v3705
    %v3708 = vsel %vm3707, 1, 0
    %v3709 = vcvt.s32.f32 %v3708
    %v3710 = vmul.f32 %v3709, %v3617
    %v3711 = vsel %vm379, %v3710, 0.0
    %3712 = vadd.xlane.f32.xlu0 %v3711
    %v3713 = vpop.xlane.xlu0 %3712
    %v3714 = vadd.f32 %v3476, %v3713
    %v3715 = vmul.f32 %v3605, %v3617
    %v3716 = vsel %vm379, %v3715, 0.0
    %3717 = vadd.xlane.f32.xlu0 %v3716
    %v3718 = vpop.xlane.xlu0 %3717
    %v3719 = vmul.f32 %v3718, %v3611
    %v3720 = vsub.f32 %v3482, %v3719
    %vm3721 = vcmp.eq.s32.totalorder %v33, 12
    %v3722 = vsel %vm3721, 1, 0
    %v3723 = vcvt.s32.f32 %v3722
    %v3724 = vmul.f32 %v3706, %v3723
    %v3725 = vadd.f32 %v3487, %v3724
    %v3726 = vadd.s32 %v3705, 5
    %vm3727 = vcmp.eq.s32.totalorder %v33, %v3726
    %v3728 = vsel %vm3727, 1, 0
    %v3729 = vcvt.s32.f32 %v3728
    %3731 = vrot.lane.b32.xlu0 %v3596, 42
    %v3732 = vpop.permute.xlu0 %3731
    %v3734 = vsel %vm389, %v3729, %v3732
    %v3735 = vsel %vm44, %v3734, 1.0
    %v3736 = vsel %vm46, %v3735, 0.0
    %3738 = vrot.lane.b32.xlu0 %v3735, 64
    %v3739 = vpop.permute.xlu0 %3738
    %v3741 = vsel %vm52, 0.0, %v3739
    %v3742 = vsel %vm54, %v3741, 0.0
    %v3743 = vsel %vm56, %v3736, %v3742
    %3744 = vmatprep.subr.mxu0 %v59
    %3745 = vmatpush1.msra.mxu0 %v58
    %3746 = vmatprep.subr.mxu0 %v61
    %3747 = vmatpush1.msra.mxu0 %v60
    %3748 = vmatprep.subr.mxu0 %v63
    %3749 = vmatpush1.msra.mxu0 %v62
    %3750 = vmatprep.subr.mxu0 %v65
    %3751 = vmatpush1.msra.mxu0 %v64
    %3752 = vmatprep.subr.mxu0 %v67
    %3753 = vmatpush1.msra.mxu0 %v66
    %3754 = vmatprep.subr.mxu0 %v69
    %3755 = vmatpush1.msra.mxu0 %v68
    %3756 = vmatprep.subr.mxu0 %v71
    %3757 = vmatpush1.msra.mxu0 %v70
    %3758 = vmatprep.subr.mxu0 %v73
    %3759 = vmatpush1.msra.mxu0 %v72
    %3760 = vmatprep.subr.mxu0 %v75
    %3761 = vmatpush1.msra.mxu0 %v74
    %3762 = vmatprep.subr.mxu0 %v77
    %3763 = vmatpush1.msra.mxu0 %v76
    %3764 = vmatprep.subr.mxu0 %v79
    %3765 = vmatpush1.msra.mxu0 %v78
    %3766 = vmatprep.subr.mxu0 %v81
    %3767 = vmatpush1.msra.mxu0 %v80
    %3768 = vmatprep.subr.mxu0 %v83
    %3769 = vmatpush1.msra.mxu0 %v82
    %3770 = vmatprep.subr.mxu0 %v85
    %3771 = vmatpush1.msra.mxu0 %v84
    %3772 = vmatprep.subr.mxu0 %v87
    %3773 = vmatpush1.msra.mxu0 %v86
    %3774 = vmatprep.subr.mxu0 %v89
    %3775 = vmatpush1.msra.mxu0 %v88
    %3776 = vmatprep.subr.mxu0 0.0
    %3777 = vmatpush1.msra.mxu0 0.0
    %3778 = vmatprep.subr.mxu0 0.0
    %3779 = vmatpush1.msra.mxu0 0.0
    %3780 = vmatprep.subr.mxu0 0.0
    %3781 = vmatpush1.msra.mxu0 0.0
    %3782 = vmatprep.subr.mxu0 0.0
    %3783 = vmatpush1.msra.mxu0 0.0
    %3784 = vmatprep.subr.mxu0 0.0
    %3785 = vmatpush1.msra.mxu0 0.0
    %3786 = vmatprep.subr.mxu0 0.0
    %3787 = vmatpush1.msra.mxu0 0.0
    %3788 = vmatprep.subr.mxu0 0.0
    %3789 = vmatpush1.msra.mxu0 0.0
    %3790 = vmatprep.subr.mxu0 0.0
    %3791 = vmatpush1.msra.mxu0 0.0
    %3792 = vmatprep.subr.mxu0 0.0
    %3793 = vmatpush1.msra.mxu0 0.0
    %3794 = vmatprep.subr.mxu0 0.0
    %3795 = vmatpush1.msra.mxu0 0.0
    %3796 = vmatprep.subr.mxu0 0.0
    %3797 = vmatpush1.msra.mxu0 0.0
    %3798 = vmatprep.subr.mxu0 0.0
    %3799 = vmatpush1.msra.mxu0 0.0
    %3800 = vmatprep.subr.mxu0 0.0
    %3801 = vmatpush1.msra.mxu0 0.0
    %3802 = vmatprep.subr.mxu0 0.0
    %3803 = vmatpush1.msra.mxu0 0.0
    %3804 = vmatprep.subr.mxu0 0.0
    %3805 = vmatpush1.msra.mxu0 0.0
    %3806 = vmatprep.subr.mxu0 0.0
    %3807 = vmatpush1.msra.mxu0 0.0
    %3808 = vmatprep.mubr.f32.mxu0 0.0
    %3809 = vmatmul.mubr.f32.gmra.mrb[0].mxu0 %v3743
    %v3810 = vpop.f32.mrb[0].mxu0
    %v3811 = vadd.f32 0.0, %v3810
    %v3812 = vpop.f32.mrb[0].mxu0
    %v3813 = vadd.f32 0.0, %v3812
    %3814 = vdwg.mxu0
    %v3815 = vxor.u32 %v3811, 2147483648
    %v3816 = vmul.f32 %v3815, 1.442695
    %v3817 = vpow.pop %v3816
    %v3818 = vadd.f32 %v3817, 1.0
    %v3819 = vrcp.pop %v3818
    %v3820 = vmul.f32 1.0, %v3819
    %v3821 = vtanh.pop %v3811
    %v3822 = vmul.f32 %v3820, %v3590
    %3824 = vrot.lane.b32.xlu0 %v3821, 64
    %v3825 = vpop.permute.xlu0 %3824
    %v3827 = vmul.f32 %v3820, %v3825
    %3829 = vrot.lane.b32.xlu0 %v3827, 32
    %v3830 = vpop.permute.xlu0 %3829
    %v3832 = vadd.f32 %v3822, %v3830
    %v3833 = vtanh.pop %v3832
    %3835 = vrot.lane.b32.xlu0 %v3833, 64
    %v3836 = vpop.permute.xlu0 %3835
    %v3838 = vmul.f32 %v3820, %v3836
    %v3839 = vmul.f32 %v3813, 0.2
    %v3840 = vtanh.pop %v3839
    %v3841 = vmul.f32 %v3840, 1.442695
    %v3842 = vpow.pop %v3841
    %3844 = vrot.lane.b32.xlu0 %v3842, 96
    %v3845 = vpop.permute.xlu0 %3844
    %v3847 = vsel %vm905, %v3845, 0.0
    %v3848 = vsel %vm379, %v3847, 0.0
    %3849 = vadd.xlane.f32.xlu0 %v3848
    %v3850 = vpop.xlane.xlu0 %3849
    %v3851 = vlog2.pop %v3850
    %v3852 = vmul.f32 %v3851, 0.6931472
    %v3853 = vrcp.pop %v3850
    %v3854 = vsub.f32 %v3840, %v3852
    %3856 = vrot.lane.b32.xlu0 %v3854, 96
    %v3857 = vpop.permute.xlu0 %3856
    %v3859 = vsel %vm905, %v3857, 0.0
    %v3861 = vsel %vm389, %v3847, 0
    %3863 = vmatprep.subr.mxu0 0.0
    %3864 = vmatpush1.msra.mxu0 %v41
    %3865 = vmatprep.subr.mxu0 0.0
    %3866 = vmatpush1.msra.mxu0 %v395
    %3867 = vmatprep.subr.mxu0 0.0
    %3868 = vmatpush1.msra.mxu0 0.0
    %3869 = vmatprep.subr.mxu0 0.0
    %3870 = vmatpush1.msra.mxu0 0.0
    %3871 = vmatprep.subr.mxu0 0.0
    %3872 = vmatpush1.msra.mxu0 0.0
    %3873 = vmatprep.subr.mxu0 0.0
    %3874 = vmatpush1.msra.mxu0 0.0
    %3875 = vmatprep.subr.mxu0 0.0
    %3876 = vmatpush1.msra.mxu0 0.0
    %3877 = vmatprep.subr.mxu0 0.0
    %3878 = vmatpush1.msra.mxu0 0.0
    %3879 = vmatprep.subr.mxu0 0.0
    %3880 = vmatpush1.msra.mxu0 0.0
    %3881 = vmatprep.subr.mxu0 0.0
    %3882 = vmatpush1.msra.mxu0 0.0
    %3883 = vmatprep.subr.mxu0 0.0
    %3884 = vmatpush1.msra.mxu0 0.0
    %3885 = vmatprep.subr.mxu0 0.0
    %3886 = vmatpush1.msra.mxu0 0.0
    %3887 = vmatprep.subr.mxu0 0.0
    %3888 = vmatpush1.msra.mxu0 0.0
    %3889 = vmatprep.subr.mxu0 0.0
    %3890 = vmatpush1.msra.mxu0 0.0
    %3891 = vmatprep.subr.mxu0 0.0
    %3892 = vmatpush1.msra.mxu0 0.0
    %3893 = vmatprep.subr.mxu0 0.0
    %3894 = vmatpush1.msra.mxu0 0.0
    %3895 = vmatprep.subr.mxu0 0.0
    %3896 = vmatpush1.msra.mxu0 0.0
    %3897 = vmatprep.subr.mxu0 0.0
    %3898 = vmatpush1.msra.mxu0 0.0
    %3899 = vmatprep.subr.mxu0 0.0
    %3900 = vmatpush1.msra.mxu0 0.0
    %3901 = vmatprep.subr.mxu0 0.0
    %3902 = vmatpush1.msra.mxu0 0.0
    %3903 = vmatprep.subr.mxu0 0.0
    %3904 = vmatpush1.msra.mxu0 0.0
    %3905 = vmatprep.subr.mxu0 0.0
    %3906 = vmatpush1.msra.mxu0 0.0
    %3907 = vmatprep.subr.mxu0 0.0
    %3908 = vmatpush1.msra.mxu0 0.0
    %3909 = vmatprep.subr.mxu0 0.0
    %3910 = vmatpush1.msra.mxu0 0.0
    %3911 = vmatprep.subr.mxu0 0.0
    %3912 = vmatpush1.msra.mxu0 0.0
    %3913 = vmatprep.subr.mxu0 0.0
    %3914 = vmatpush1.msra.mxu0 0.0
    %3915 = vmatprep.subr.mxu0 0.0
    %3916 = vmatpush1.msra.mxu0 0.0
    %3917 = vmatprep.subr.mxu0 0.0
    %3918 = vmatpush1.msra.mxu0 0.0
    %3919 = vmatprep.subr.mxu0 0.0
    %3920 = vmatpush1.msra.mxu0 0.0
    %3921 = vmatprep.subr.mxu0 0.0
    %3922 = vmatpush1.msra.mxu0 0.0
    %3923 = vmatprep.subr.mxu0 0.0
    %3924 = vmatpush1.msra.mxu0 0.0
    %3925 = vmatprep.subr.mxu0 0.0
    %3926 = vmatpush1.msra.mxu0 0.0
    %3927 = vmatprep.mubr.f32.mxu0 0.0
    %3928 = vmatmul.mubr.f32.gmra.mrb[0].mxu0 %v3861
    %v3929 = vpop.f32.mrb[0].mxu0
    %v3930 = vadd.f32 0.0, %v3929
    %v3931 = vpop.f32.mrb[0].mxu0
    %3932 = vdwg.mxu0
    %v3933 = vmul.f32 %v388, %v3850
    %3935 = vset.pattern.permute.xlu0 11
    %3936 = vperm.xlu0 %3935, %v3933
    %v3937 = vpop.permute.xlu0 %3936
    %vm3939 = vcmp.lt.f32.partialorder %v3930, %v3937
    %v3940 = vsel %vm3939, 1, 0
    %v3941 = vcvt.s32.f32 %v3940
    %v3942 = vsel %vm379, %v3941, 0.0
    %3943 = vadd.xlane.f32.xlu0 %v3942
    %v3944 = vpop.xlane.xlu0 %3943
    %v3945 = vcvt.f32.s32.to.zero.pseudo %v3944
    %vm3946 = vcmp.lt.s32.totalorder %v3945, 4
    %v3947 = vsel %vm3946, %v3945, 4
    %v3948 = vcvt.s32.f32 %v3947
    %vm3949 = vcmp.eq.s32.totalorder %v33, %v3947
    %v3950 = vsel %vm3949, 1, 0
    %v3951 = vcvt.s32.f32 %v3950
    %v3952 = vmul.f32 %v3951, %v3859
    %v3953 = vsel %vm379, %v3952, 0.0
    %3954 = vadd.xlane.f32.xlu0 %v3953
    %v3955 = vpop.xlane.xlu0 %3954
    %v3956 = vadd.f32 %v3714, %v3955
    %v3957 = vmul.f32 %v3847, %v3859
    %v3958 = vsel %vm379, %v3957, 0.0
    %3959 = vadd.xlane.f32.xlu0 %v3958
    %v3960 = vpop.xlane.xlu0 %3959
    %v3961 = vmul.f32 %v3960, %v3853
    %v3962 = vsub.f32 %v3720, %v3961
    %vm3963 = vcmp.eq.s32.totalorder %v33, 13
    %v3964 = vsel %vm3963, 1, 0
    %v3965 = vcvt.s32.f32 %v3964
    %v3966 = vmul.f32 %v3948, %v3965
    %v3967 = vadd.f32 %v3725, %v3966
    %v3968 = vadd.s32 %v3947, 5
    %vm3969 = vcmp.eq.s32.totalorder %v33, %v3968
    %v3970 = vsel %vm3969, 1, 0
    %v3971 = vcvt.s32.f32 %v3970
    %3973 = vrot.lane.b32.xlu0 %v3838, 42
    %v3974 = vpop.permute.xlu0 %3973
    %v3976 = vsel %vm389, %v3971, %v3974
    %v3977 = vsel %vm44, %v3976, 1.0
    %v3978 = vsel %vm46, %v3977, 0.0
    %3980 = vrot.lane.b32.xlu0 %v3977, 64
    %v3981 = vpop.permute.xlu0 %3980
    %v3983 = vsel %vm52, 0.0, %v3981
    %v3984 = vsel %vm54, %v3983, 0.0
    %v3985 = vsel %vm56, %v3978, %v3984
    %3986 = vmatprep.subr.mxu0 %v59
    %3987 = vmatpush1.msra.mxu0 %v58
    %3988 = vmatprep.subr.mxu0 %v61
    %3989 = vmatpush1.msra.mxu0 %v60
    %3990 = vmatprep.subr.mxu0 %v63
    %3991 = vmatpush1.msra.mxu0 %v62
    %3992 = vmatprep.subr.mxu0 %v65
    %3993 = vmatpush1.msra.mxu0 %v64
    %3994 = vmatprep.subr.mxu0 %v67
    %3995 = vmatpush1.msra.mxu0 %v66
    %3996 = vmatprep.subr.mxu0 %v69
    %3997 = vmatpush1.msra.mxu0 %v68
    %3998 = vmatprep.subr.mxu0 %v71
    %3999 = vmatpush1.msra.mxu0 %v70
    %4000 = vmatprep.subr.mxu0 %v73
    %4001 = vmatpush1.msra.mxu0 %v72
    %4002 = vmatprep.subr.mxu0 %v75
    %4003 = vmatpush1.msra.mxu0 %v74
    %4004 = vmatprep.subr.mxu0 %v77
    %4005 = vmatpush1.msra.mxu0 %v76
    %4006 = vmatprep.subr.mxu0 %v79
    %4007 = vmatpush1.msra.mxu0 %v78
    %4008 = vmatprep.subr.mxu0 %v81
    %4009 = vmatpush1.msra.mxu0 %v80
    %4010 = vmatprep.subr.mxu0 %v83
    %4011 = vmatpush1.msra.mxu0 %v82
    %4012 = vmatprep.subr.mxu0 %v85
    %4013 = vmatpush1.msra.mxu0 %v84
    %4014 = vmatprep.subr.mxu0 %v87
    %4015 = vmatpush1.msra.mxu0 %v86
    %4016 = vmatprep.subr.mxu0 %v89
    %4017 = vmatpush1.msra.mxu0 %v88
    %4018 = vmatprep.subr.mxu0 0.0
    %4019 = vmatpush1.msra.mxu0 0.0
    %4020 = vmatprep.subr.mxu0 0.0
    %4021 = vmatpush1.msra.mxu0 0.0
    %4022 = vmatprep.subr.mxu0 0.0
    %4023 = vmatpush1.msra.mxu0 0.0
    %4024 = vmatprep.subr.mxu0 0.0
    %4025 = vmatpush1.msra.mxu0 0.0
    %4026 = vmatprep.subr.mxu0 0.0
    %4027 = vmatpush1.msra.mxu0 0.0
    %4028 = vmatprep.subr.mxu0 0.0
    %4029 = vmatpush1.msra.mxu0 0.0
    %4030 = vmatprep.subr.mxu0 0.0
    %4031 = vmatpush1.msra.mxu0 0.0
    %4032 = vmatprep.subr.mxu0 0.0
    %4033 = vmatpush1.msra.mxu0 0.0
    %4034 = vmatprep.subr.mxu0 0.0
    %4035 = vmatpush1.msra.mxu0 0.0
    %4036 = vmatprep.subr.mxu0 0.0
    %4037 = vmatpush1.msra.mxu0 0.0
    %4038 = vmatprep.subr.mxu0 0.0
    %4039 = vmatpush1.msra.mxu0 0.0
    %4040 = vmatprep.subr.mxu0 0.0
    %4041 = vmatpush1.msra.mxu0 0.0
    %4042 = vmatprep.subr.mxu0 0.0
    %4043 = vmatpush1.msra.mxu0 0.0
    %4044 = vmatprep.subr.mxu0 0.0
    %4045 = vmatpush1.msra.mxu0 0.0
    %4046 = vmatprep.subr.mxu0 0.0
    %4047 = vmatpush1.msra.mxu0 0.0
    %4048 = vmatprep.subr.mxu0 0.0
    %4049 = vmatpush1.msra.mxu0 0.0
    %4050 = vmatprep.mubr.f32.mxu0 0.0
    %4051 = vmatmul.mubr.f32.gmra.mrb[0].mxu0 %v3985
    %v4052 = vpop.f32.mrb[0].mxu0
    %v4053 = vadd.f32 0.0, %v4052
    %v4054 = vpop.f32.mrb[0].mxu0
    %v4055 = vadd.f32 0.0, %v4054
    %4056 = vdwg.mxu0
    %v4057 = vxor.u32 %v4053, 2147483648
    %v4058 = vmul.f32 %v4057, 1.442695
    %v4059 = vpow.pop %v4058
    %v4060 = vadd.f32 %v4059, 1.0
    %v4061 = vrcp.pop %v4060
    %v4062 = vmul.f32 1.0, %v4061
    %v4063 = vtanh.pop %v4053
    %v4064 = vmul.f32 %v4062, %v3832
    %4066 = vrot.lane.b32.xlu0 %v4063, 64
    %v4067 = vpop.permute.xlu0 %4066
    %v4069 = vmul.f32 %v4062, %v4067
    %4071 = vrot.lane.b32.xlu0 %v4069, 32
    %v4072 = vpop.permute.xlu0 %4071
    %v4074 = vadd.f32 %v4064, %v4072
    %v4075 = vtanh.pop %v4074
    %4077 = vrot.lane.b32.xlu0 %v4075, 64
    %v4078 = vpop.permute.xlu0 %4077
    %v4080 = vmul.f32 %v4062, %v4078
    %v4081 = vlaneseq
    %v4082 = vshrl.u32 %v4081, 7
    %v4083 = vsub.s32 0, %v4082
    %v4084 = vrot.slane %v4055, %v4083
    %v4085 = vadd.f32 %v185, %v4084
    %v4086 = vadd.f32 %v186, %v4084
    %v4087 = vtanh.pop %v4085
    %v4088 = vtanh.pop %v4086
    %v4089 = vlaneseq
    %v4090 = vshrl.u32 %v4089, 7
    %v4091 = vsub.s32 1, %v4090
    %v4092 = vrot.slane %v4055, %v4091
    %v4093 = vadd.f32 %v196, %v4092
    %v4094 = vadd.f32 %v197, %v4092
    %v4095 = vtanh.pop %v4093
    %v4096 = vtanh.pop %v4094
    %v4098 = vsel %vm207, %v4087, 0
    %v4101 = vsel %vm207, %v4088, 0
    %4103 = vmatprep.subr.mxu0 0.0
    %4104 = vmatpush1.xpose.msra.mxu0 %v4098
    %4105 = vmatprep.subr.mxu0 0.0
    %4106 = vmatpush1.xpose.msra.mxu0 %v4101
    %4107 = vmatprep.subr.mxu0 0.0
    %4108 = vmatpush1.xpose.msra.mxu0 0.0
    %4109 = vmatprep.subr.mxu0 0.0
    %4110 = vmatpush1.xpose.msra.mxu0 0.0
    %4111 = vmatprep.subr.mxu0 0.0
    %4112 = vmatpush1.xpose.msra.mxu0 0.0
    %4113 = vmatprep.subr.mxu0 0.0
    %4114 = vmatpush1.xpose.msra.mxu0 0.0
    %4115 = vmatprep.subr.mxu0 0.0
    %4116 = vmatpush1.xpose.msra.mxu0 0.0
    %4117 = vmatprep.subr.mxu0 0.0
    %4118 = vmatpush1.xpose.msra.mxu0 0.0
    %4119 = vmatprep.subr.mxu0 0.0
    %4120 = vmatpush1.xpose.msra.mxu0 0.0
    %4121 = vmatprep.subr.mxu0 0.0
    %4122 = vmatpush1.xpose.msra.mxu0 0.0
    %4123 = vmatprep.subr.mxu0 0.0
    %4124 = vmatpush1.xpose.msra.mxu0 0.0
    %4125 = vmatprep.subr.mxu0 0.0
    %4126 = vmatpush1.xpose.msra.mxu0 0.0
    %4127 = vmatprep.subr.mxu0 0.0
    %4128 = vmatpush1.xpose.msra.mxu0 0.0
    %4129 = vmatprep.subr.mxu0 0.0
    %4130 = vmatpush1.xpose.msra.mxu0 0.0
    %4131 = vmatprep.subr.mxu0 0.0
    %4132 = vmatpush1.xpose.msra.mxu0 0.0
    %4133 = vmatprep.subr.mxu0 0.0
    %4134 = vmatpush1.xpose.msra.mxu0 0.0
    %4135 = vmatprep.subr.mxu0 0.0
    %4136 = vmatpush1.xpose.msra.mxu0 0.0
    %4137 = vmatprep.subr.mxu0 0.0
    %4138 = vmatpush1.xpose.msra.mxu0 0.0
    %4139 = vmatprep.subr.mxu0 0.0
    %4140 = vmatpush1.xpose.msra.mxu0 0.0
    %4141 = vmatprep.subr.mxu0 0.0
    %4142 = vmatpush1.xpose.msra.mxu0 0.0
    %4143 = vmatprep.subr.mxu0 0.0
    %4144 = vmatpush1.xpose.msra.mxu0 0.0
    %4145 = vmatprep.subr.mxu0 0.0
    %4146 = vmatpush1.xpose.msra.mxu0 0.0
    %4147 = vmatprep.subr.mxu0 0.0
    %4148 = vmatpush1.xpose.msra.mxu0 0.0
    %4149 = vmatprep.subr.mxu0 0.0
    %4150 = vmatpush1.xpose.msra.mxu0 0.0
    %4151 = vmatprep.subr.mxu0 0.0
    %4152 = vmatpush1.xpose.msra.mxu0 0.0
    %4153 = vmatprep.subr.mxu0 0.0
    %4154 = vmatpush1.xpose.msra.mxu0 0.0
    %4155 = vmatprep.subr.mxu0 0.0
    %4156 = vmatpush1.xpose.msra.mxu0 0.0
    %4157 = vmatprep.subr.mxu0 0.0
    %4158 = vmatpush1.xpose.msra.mxu0 0.0
    %4159 = vmatprep.subr.mxu0 0.0
    %4160 = vmatpush1.xpose.msra.mxu0 0.0
    %4161 = vmatprep.subr.mxu0 0.0
    %4162 = vmatpush1.xpose.msra.mxu0 0.0
    %4163 = vmatprep.subr.mxu0 0.0
    %4164 = vmatpush1.xpose.msra.mxu0 0.0
    %4165 = vmatprep.subr.mxu0 0.0
    %4166 = vmatpush1.xpose.msra.mxu0 0.0
    %4167 = vmatprep.mubr.f32.mxu0 0.0
    %4168 = vmatmul.mubr.f32.gmra.mrb[0].mxu0 %v209
    %v4169 = vpop.f32.mrb[0].mxu0
    %v4170 = vadd.f32 0.0, %v4169
    %v4171 = vpop.f32.mrb[0].mxu0
    %4172 = vdwg.mxu0
    %v4174 = vsel %vm207, %v4095, 0
    %v4177 = vsel %vm207, %v4096, 0
    %4179 = vmatprep.subr.mxu0 0.0
    %4180 = vmatpush1.xpose.msra.mxu0 %v4174
    %4181 = vmatprep.subr.mxu0 0.0
    %4182 = vmatpush1.xpose.msra.mxu0 %v4177
    %4183 = vmatprep.subr.mxu0 0.0
    %4184 = vmatpush1.xpose.msra.mxu0 0.0
    %4185 = vmatprep.subr.mxu0 0.0
    %4186 = vmatpush1.xpose.msra.mxu0 0.0
    %4187 = vmatprep.subr.mxu0 0.0
    %4188 = vmatpush1.xpose.msra.mxu0 0.0
    %4189 = vmatprep.subr.mxu0 0.0
    %4190 = vmatpush1.xpose.msra.mxu0 0.0
    %4191 = vmatprep.subr.mxu0 0.0
    %4192 = vmatpush1.xpose.msra.mxu0 0.0
    %4193 = vmatprep.subr.mxu0 0.0
    %4194 = vmatpush1.xpose.msra.mxu0 0.0
    %4195 = vmatprep.subr.mxu0 0.0
    %4196 = vmatpush1.xpose.msra.mxu0 0.0
    %4197 = vmatprep.subr.mxu0 0.0
    %4198 = vmatpush1.xpose.msra.mxu0 0.0
    %4199 = vmatprep.subr.mxu0 0.0
    %4200 = vmatpush1.xpose.msra.mxu0 0.0
    %4201 = vmatprep.subr.mxu0 0.0
    %4202 = vmatpush1.xpose.msra.mxu0 0.0
    %4203 = vmatprep.subr.mxu0 0.0
    %4204 = vmatpush1.xpose.msra.mxu0 0.0
    %4205 = vmatprep.subr.mxu0 0.0
    %4206 = vmatpush1.xpose.msra.mxu0 0.0
    %4207 = vmatprep.subr.mxu0 0.0
    %4208 = vmatpush1.xpose.msra.mxu0 0.0
    %4209 = vmatprep.subr.mxu0 0.0
    %4210 = vmatpush1.xpose.msra.mxu0 0.0
    %4211 = vmatprep.subr.mxu0 0.0
    %4212 = vmatpush1.xpose.msra.mxu0 0.0
    %4213 = vmatprep.subr.mxu0 0.0
    %4214 = vmatpush1.xpose.msra.mxu0 0.0
    %4215 = vmatprep.subr.mxu0 0.0
    %4216 = vmatpush1.xpose.msra.mxu0 0.0
    %4217 = vmatprep.subr.mxu0 0.0
    %4218 = vmatpush1.xpose.msra.mxu0 0.0
    %4219 = vmatprep.subr.mxu0 0.0
    %4220 = vmatpush1.xpose.msra.mxu0 0.0
    %4221 = vmatprep.subr.mxu0 0.0
    %4222 = vmatpush1.xpose.msra.mxu0 0.0
    %4223 = vmatprep.subr.mxu0 0.0
    %4224 = vmatpush1.xpose.msra.mxu0 0.0
    %4225 = vmatprep.subr.mxu0 0.0
    %4226 = vmatpush1.xpose.msra.mxu0 0.0
    %4227 = vmatprep.subr.mxu0 0.0
    %4228 = vmatpush1.xpose.msra.mxu0 0.0
    %4229 = vmatprep.subr.mxu0 0.0
    %4230 = vmatpush1.xpose.msra.mxu0 0.0
    %4231 = vmatprep.subr.mxu0 0.0
    %4232 = vmatpush1.xpose.msra.mxu0 0.0
    %4233 = vmatprep.subr.mxu0 0.0
    %4234 = vmatpush1.xpose.msra.mxu0 0.0
    %4235 = vmatprep.subr.mxu0 0.0
    %4236 = vmatpush1.xpose.msra.mxu0 0.0
    %4237 = vmatprep.subr.mxu0 0.0
    %4238 = vmatpush1.xpose.msra.mxu0 0.0
    %4239 = vmatprep.subr.mxu0 0.0
    %4240 = vmatpush1.xpose.msra.mxu0 0.0
    %4241 = vmatprep.subr.mxu0 0.0
    %4242 = vmatpush1.xpose.msra.mxu0 0.0
    %4243 = vmatprep.mubr.f32.mxu0 0.0
    %4244 = vmatmul.mubr.f32.gmra.mrb[0].mxu0 %v290
    %v4245 = vpop.f32.mrb[0].mxu0
    %v4246 = vadd.f32 0.0, %v4245
    %v4247 = vpop.f32.mrb[0].mxu0
    %4248 = vdwg.mxu0
    %v4250 = vrot.slane %v4246, 7
    %v4252 = vsel %vm371, %v4170, %v4250
    %v4253 = vmul.f32 %v4252, 0.2
    %v4254 = vtanh.pop %v4253
    %v4255 = vmul.f32 %v4254, 2.5
    %v4256 = vmul.f32 %v4255, 1.442695
    %v4257 = vpow.pop %v4256
    %v4258 = vsel %vm905, %v4257, 0.0
    %v4259 = vsel %vm379, %v4258, 0.0
    %4260 = vadd.xlane.f32.xlu0 %v4259
    %v4261 = vpop.xlane.xlu0 %4260
    %v4262 = vlog2.pop %v4261
    %v4263 = vmul.f32 %v4262, 0.6931472
    %v4264 = vrcp.pop %v4261
    %v4265 = vsub.f32 %v4255, %v4263
    %v4266 = vsel %vm905, %v4265, 0.0
    %v4268 = vsel %vm389, %v4258, 0
    %4270 = vmatprep.subr.mxu0 0.0
    %4271 = vmatpush1.msra.mxu0 %v41
    %4272 = vmatprep.subr.mxu0 0.0
    %4273 = vmatpush1.msra.mxu0 %v395
    %4274 = vmatprep.subr.mxu0 0.0
    %4275 = vmatpush1.msra.mxu0 0.0
    %4276 = vmatprep.subr.mxu0 0.0
    %4277 = vmatpush1.msra.mxu0 0.0
    %4278 = vmatprep.subr.mxu0 0.0
    %4279 = vmatpush1.msra.mxu0 0.0
    %4280 = vmatprep.subr.mxu0 0.0
    %4281 = vmatpush1.msra.mxu0 0.0
    %4282 = vmatprep.subr.mxu0 0.0
    %4283 = vmatpush1.msra.mxu0 0.0
    %4284 = vmatprep.subr.mxu0 0.0
    %4285 = vmatpush1.msra.mxu0 0.0
    %4286 = vmatprep.subr.mxu0 0.0
    %4287 = vmatpush1.msra.mxu0 0.0
    %4288 = vmatprep.subr.mxu0 0.0
    %4289 = vmatpush1.msra.mxu0 0.0
    %4290 = vmatprep.subr.mxu0 0.0
    %4291 = vmatpush1.msra.mxu0 0.0
    %4292 = vmatprep.subr.mxu0 0.0
    %4293 = vmatpush1.msra.mxu0 0.0
    %4294 = vmatprep.subr.mxu0 0.0
    %4295 = vmatpush1.msra.mxu0 0.0
    %4296 = vmatprep.subr.mxu0 0.0
    %4297 = vmatpush1.msra.mxu0 0.0
    %4298 = vmatprep.subr.mxu0 0.0
    %4299 = vmatpush1.msra.mxu0 0.0
    %4300 = vmatprep.subr.mxu0 0.0
    %4301 = vmatpush1.msra.mxu0 0.0
    %4302 = vmatprep.subr.mxu0 0.0
    %4303 = vmatpush1.msra.mxu0 0.0
    %4304 = vmatprep.subr.mxu0 0.0
    %4305 = vmatpush1.msra.mxu0 0.0
    %4306 = vmatprep.subr.mxu0 0.0
    %4307 = vmatpush1.msra.mxu0 0.0
    %4308 = vmatprep.subr.mxu0 0.0
    %4309 = vmatpush1.msra.mxu0 0.0
    %4310 = vmatprep.subr.mxu0 0.0
    %4311 = vmatpush1.msra.mxu0 0.0
    %4312 = vmatprep.subr.mxu0 0.0
    %4313 = vmatpush1.msra.mxu0 0.0
    %4314 = vmatprep.subr.mxu0 0.0
    %4315 = vmatpush1.msra.mxu0 0.0
    %4316 = vmatprep.subr.mxu0 0.0
    %4317 = vmatpush1.msra.mxu0 0.0
    %4318 = vmatprep.subr.mxu0 0.0
    %4319 = vmatpush1.msra.mxu0 0.0
    %4320 = vmatprep.subr.mxu0 0.0
    %4321 = vmatpush1.msra.mxu0 0.0
    %4322 = vmatprep.subr.mxu0 0.0
    %4323 = vmatpush1.msra.mxu0 0.0
    %4324 = vmatprep.subr.mxu0 0.0
    %4325 = vmatpush1.msra.mxu0 0.0
    %4326 = vmatprep.subr.mxu0 0.0
    %4327 = vmatpush1.msra.mxu0 0.0
    %4328 = vmatprep.subr.mxu0 0.0
    %4329 = vmatpush1.msra.mxu0 0.0
    %4330 = vmatprep.subr.mxu0 0.0
    %4331 = vmatpush1.msra.mxu0 0.0
    %4332 = vmatprep.subr.mxu0 0.0
    %4333 = vmatpush1.msra.mxu0 0.0
    %4334 = vmatprep.mubr.f32.mxu0 0.0
    %4335 = vmatmul.mubr.f32.gmra.mrb[0].mxu0 %v4268
    %v4336 = vpop.f32.mrb[0].mxu0
    %v4337 = vadd.f32 0.0, %v4336
    %v4338 = vpop.f32.mrb[0].mxu0
    %4339 = vdwg.mxu0
    %v4340 = vmul.f32 %v388, %v4261
    %4342 = vset.pattern.permute.xlu0 12
    %4343 = vperm.xlu0 %4342, %v4340
    %v4344 = vpop.permute.xlu0 %4343
    %vm4346 = vcmp.lt.f32.partialorder %v4337, %v4344
    %v4347 = vsel %vm4346, 1, 0
    %v4348 = vcvt.s32.f32 %v4347
    %v4349 = vsel %vm379, %v4348, 0.0
    %4350 = vadd.xlane.f32.xlu0 %v4349
    %v4351 = vpop.xlane.xlu0 %4350
    %v4352 = vcvt.f32.s32.to.zero.pseudo %v4351
    %vm4353 = vcmp.lt.s32.totalorder %v4352, 4
    %v4354 = vsel %vm4353, %v4352, 4
    %v4355 = vcvt.s32.f32 %v4354
    %vm4356 = vcmp.eq.s32.totalorder %v33, %v4354
    %v4357 = vsel %vm4356, 1, 0
    %v4358 = vcvt.s32.f32 %v4357
    %v4359 = vmul.f32 %v4358, %v4266
    %v4360 = vsel %vm379, %v4359, 0.0
    %4361 = vadd.xlane.f32.xlu0 %v4360
    %v4362 = vpop.xlane.xlu0 %4361
    %v4363 = vadd.f32 %v3956, %v4362
    %v4364 = vmul.f32 %v4258, %v4266
    %v4365 = vsel %vm379, %v4364, 0.0
    %4366 = vadd.xlane.f32.xlu0 %v4365
    %v4367 = vpop.xlane.xlu0 %4366
    %v4368 = vmul.f32 %v4367, %v4264
    %v4369 = vsub.f32 %v3962, %v4368
    %vm4370 = vcmp.eq.s32.totalorder %v33, 6
    %v4371 = vsel %vm4370, 1, 0
    %v4372 = vcvt.s32.f32 %v4371
    %v4373 = vmul.f32 %v4355, %v4372
    %v4374 = vadd.f32 %v3967, %v4373
    %4376 = vrot.lane.b32.xlu0 %v4080, 42
    %v4377 = vpop.permute.xlu0 %4376
    %v4379 = vsel %vm389, %v4358, %v4377
    %v4380 = vsel %vm44, %v4379, 1.0
    %v4381 = vsel %vm46, %v4380, 0.0
    %4383 = vrot.lane.b32.xlu0 %v4380, 64
    %v4384 = vpop.permute.xlu0 %4383
    %v4386 = vsel %vm52, 0.0, %v4384
    %v4387 = vsel %vm54, %v4386, 0.0
    %v4388 = vsel %vm56, %v4381, %v4387
    %4389 = vmatprep.subr.mxu0 %v59
    %4390 = vmatpush1.msra.mxu0 %v58
    %4391 = vmatprep.subr.mxu0 %v61
    %4392 = vmatpush1.msra.mxu0 %v60
    %4393 = vmatprep.subr.mxu0 %v63
    %4394 = vmatpush1.msra.mxu0 %v62
    %4395 = vmatprep.subr.mxu0 %v65
    %4396 = vmatpush1.msra.mxu0 %v64
    %4397 = vmatprep.subr.mxu0 %v67
    %4398 = vmatpush1.msra.mxu0 %v66
    %4399 = vmatprep.subr.mxu0 %v69
    %4400 = vmatpush1.msra.mxu0 %v68
    %4401 = vmatprep.subr.mxu0 %v71
    %4402 = vmatpush1.msra.mxu0 %v70
    %4403 = vmatprep.subr.mxu0 %v73
    %4404 = vmatpush1.msra.mxu0 %v72
    %4405 = vmatprep.subr.mxu0 %v75
    %4406 = vmatpush1.msra.mxu0 %v74
    %4407 = vmatprep.subr.mxu0 %v77
    %4408 = vmatpush1.msra.mxu0 %v76
    %4409 = vmatprep.subr.mxu0 %v79
    %4410 = vmatpush1.msra.mxu0 %v78
    %4411 = vmatprep.subr.mxu0 %v81
    %4412 = vmatpush1.msra.mxu0 %v80
    %4413 = vmatprep.subr.mxu0 %v83
    %4414 = vmatpush1.msra.mxu0 %v82
    %4415 = vmatprep.subr.mxu0 %v85
    %4416 = vmatpush1.msra.mxu0 %v84
    %4417 = vmatprep.subr.mxu0 %v87
    %4418 = vmatpush1.msra.mxu0 %v86
    %4419 = vmatprep.subr.mxu0 %v89
    %4420 = vmatpush1.msra.mxu0 %v88
    %4421 = vmatprep.subr.mxu0 0.0
    %4422 = vmatpush1.msra.mxu0 0.0
    %4423 = vmatprep.subr.mxu0 0.0
    %4424 = vmatpush1.msra.mxu0 0.0
    %4425 = vmatprep.subr.mxu0 0.0
    %4426 = vmatpush1.msra.mxu0 0.0
    %4427 = vmatprep.subr.mxu0 0.0
    %4428 = vmatpush1.msra.mxu0 0.0
    %4429 = vmatprep.subr.mxu0 0.0
    %4430 = vmatpush1.msra.mxu0 0.0
    %4431 = vmatprep.subr.mxu0 0.0
    %4432 = vmatpush1.msra.mxu0 0.0
    %4433 = vmatprep.subr.mxu0 0.0
    %4434 = vmatpush1.msra.mxu0 0.0
    %4435 = vmatprep.subr.mxu0 0.0
    %4436 = vmatpush1.msra.mxu0 0.0
    %4437 = vmatprep.subr.mxu0 0.0
    %4438 = vmatpush1.msra.mxu0 0.0
    %4439 = vmatprep.subr.mxu0 0.0
    %4440 = vmatpush1.msra.mxu0 0.0
    %4441 = vmatprep.subr.mxu0 0.0
    %4442 = vmatpush1.msra.mxu0 0.0
    %4443 = vmatprep.subr.mxu0 0.0
    %4444 = vmatpush1.msra.mxu0 0.0
    %4445 = vmatprep.subr.mxu0 0.0
    %4446 = vmatpush1.msra.mxu0 0.0
    %4447 = vmatprep.subr.mxu0 0.0
    %4448 = vmatpush1.msra.mxu0 0.0
    %4449 = vmatprep.subr.mxu0 0.0
    %4450 = vmatpush1.msra.mxu0 0.0
    %4451 = vmatprep.subr.mxu0 0.0
    %4452 = vmatpush1.msra.mxu0 0.0
    %4453 = vmatprep.mubr.f32.mxu0 0.0
    %4454 = vmatmul.mubr.f32.gmra.mrb[0].mxu0 %v4388
    %v4455 = vpop.f32.mrb[0].mxu0
    %v4456 = vadd.f32 0.0, %v4455
    %v4457 = vpop.f32.mrb[0].mxu0
    %v4458 = vadd.f32 0.0, %v4457
    %4459 = vdwg.mxu0
    %v4460 = vxor.u32 %v4456, 2147483648
    %v4461 = vmul.f32 %v4460, 1.442695
    %v4462 = vpow.pop %v4461
    %v4463 = vadd.f32 %v4462, 1.0
    %v4464 = vrcp.pop %v4463
    %v4465 = vmul.f32 1.0, %v4464
    %v4466 = vtanh.pop %v4456
    %v4467 = vmul.f32 %v4465, %v4074
    %4469 = vrot.lane.b32.xlu0 %v4466, 64
    %v4470 = vpop.permute.xlu0 %4469
    %v4472 = vmul.f32 %v4465, %v4470
    %4474 = vrot.lane.b32.xlu0 %v4472, 32
    %v4475 = vpop.permute.xlu0 %4474
    %v4477 = vadd.f32 %v4467, %v4475
    %v4478 = vtanh.pop %v4477
    %4480 = vrot.lane.b32.xlu0 %v4478, 64
    %v4481 = vpop.permute.xlu0 %4480
    %v4483 = vmul.f32 %v4465, %v4481
    %v4484 = vlaneseq
    %v4485 = vshrl.u32 %v4484, 7
    %v4486 = vsub.s32 0, %v4485
    %v4487 = vrot.slane %v4458, %v4486
    %v4488 = vadd.f32 %v185, %v4487
    %v4489 = vadd.f32 %v186, %v4487
    %v4490 = vtanh.pop %v4488
    %v4491 = vtanh.pop %v4489
    %v4492 = vlaneseq
    %v4493 = vshrl.u32 %v4492, 7
    %v4494 = vsub.s32 1, %v4493
    %v4495 = vrot.slane %v4458, %v4494
    %v4496 = vadd.f32 %v196, %v4495
    %v4497 = vadd.f32 %v197, %v4495
    %v4498 = vtanh.pop %v4496
    %v4499 = vtanh.pop %v4497
    %v4501 = vsel %vm207, %v4490, 0
    %v4504 = vsel %vm207, %v4491, 0
    %4506 = vmatprep.subr.mxu0 0.0
    %4507 = vmatpush1.xpose.msra.mxu0 %v4501
    %4508 = vmatprep.subr.mxu0 0.0
    %4509 = vmatpush1.xpose.msra.mxu0 %v4504
    %4510 = vmatprep.subr.mxu0 0.0
    %4511 = vmatpush1.xpose.msra.mxu0 0.0
    %4512 = vmatprep.subr.mxu0 0.0
    %4513 = vmatpush1.xpose.msra.mxu0 0.0
    %4514 = vmatprep.subr.mxu0 0.0
    %4515 = vmatpush1.xpose.msra.mxu0 0.0
    %4516 = vmatprep.subr.mxu0 0.0
    %4517 = vmatpush1.xpose.msra.mxu0 0.0
    %4518 = vmatprep.subr.mxu0 0.0
    %4519 = vmatpush1.xpose.msra.mxu0 0.0
    %4520 = vmatprep.subr.mxu0 0.0
    %4521 = vmatpush1.xpose.msra.mxu0 0.0
    %4522 = vmatprep.subr.mxu0 0.0
    %4523 = vmatpush1.xpose.msra.mxu0 0.0
    %4524 = vmatprep.subr.mxu0 0.0
    %4525 = vmatpush1.xpose.msra.mxu0 0.0
    %4526 = vmatprep.subr.mxu0 0.0
    %4527 = vmatpush1.xpose.msra.mxu0 0.0
    %4528 = vmatprep.subr.mxu0 0.0
    %4529 = vmatpush1.xpose.msra.mxu0 0.0
    %4530 = vmatprep.subr.mxu0 0.0
    %4531 = vmatpush1.xpose.msra.mxu0 0.0
    %4532 = vmatprep.subr.mxu0 0.0
    %4533 = vmatpush1.xpose.msra.mxu0 0.0
    %4534 = vmatprep.subr.mxu0 0.0
    %4535 = vmatpush1.xpose.msra.mxu0 0.0
    %4536 = vmatprep.subr.mxu0 0.0
    %4537 = vmatpush1.xpose.msra.mxu0 0.0
    %4538 = vmatprep.subr.mxu0 0.0
    %4539 = vmatpush1.xpose.msra.mxu0 0.0
    %4540 = vmatprep.subr.mxu0 0.0
    %4541 = vmatpush1.xpose.msra.mxu0 0.0
    %4542 = vmatprep.subr.mxu0 0.0
    %4543 = vmatpush1.xpose.msra.mxu0 0.0
    %4544 = vmatprep.subr.mxu0 0.0
    %4545 = vmatpush1.xpose.msra.mxu0 0.0
    %4546 = vmatprep.subr.mxu0 0.0
    %4547 = vmatpush1.xpose.msra.mxu0 0.0
    %4548 = vmatprep.subr.mxu0 0.0
    %4549 = vmatpush1.xpose.msra.mxu0 0.0
    %4550 = vmatprep.subr.mxu0 0.0
    %4551 = vmatpush1.xpose.msra.mxu0 0.0
    %4552 = vmatprep.subr.mxu0 0.0
    %4553 = vmatpush1.xpose.msra.mxu0 0.0
    %4554 = vmatprep.subr.mxu0 0.0
    %4555 = vmatpush1.xpose.msra.mxu0 0.0
    %4556 = vmatprep.subr.mxu0 0.0
    %4557 = vmatpush1.xpose.msra.mxu0 0.0
    %4558 = vmatprep.subr.mxu0 0.0
    %4559 = vmatpush1.xpose.msra.mxu0 0.0
    %4560 = vmatprep.subr.mxu0 0.0
    %4561 = vmatpush1.xpose.msra.mxu0 0.0
    %4562 = vmatprep.subr.mxu0 0.0
    %4563 = vmatpush1.xpose.msra.mxu0 0.0
    %4564 = vmatprep.subr.mxu0 0.0
    %4565 = vmatpush1.xpose.msra.mxu0 0.0
    %4566 = vmatprep.subr.mxu0 0.0
    %4567 = vmatpush1.xpose.msra.mxu0 0.0
    %4568 = vmatprep.subr.mxu0 0.0
    %4569 = vmatpush1.xpose.msra.mxu0 0.0
    %4570 = vmatprep.mubr.f32.mxu0 0.0
    %4571 = vmatmul.mubr.f32.gmra.mrb[0].mxu0 %v209
    %v4572 = vpop.f32.mrb[0].mxu0
    %v4573 = vadd.f32 0.0, %v4572
    %v4574 = vpop.f32.mrb[0].mxu0
    %4575 = vdwg.mxu0
    %v4577 = vsel %vm207, %v4498, 0
    %v4580 = vsel %vm207, %v4499, 0
    %4582 = vmatprep.subr.mxu0 0.0
    %4583 = vmatpush1.xpose.msra.mxu0 %v4577
    %4584 = vmatprep.subr.mxu0 0.0
    %4585 = vmatpush1.xpose.msra.mxu0 %v4580
    %4586 = vmatprep.subr.mxu0 0.0
    %4587 = vmatpush1.xpose.msra.mxu0 0.0
    %4588 = vmatprep.subr.mxu0 0.0
    %4589 = vmatpush1.xpose.msra.mxu0 0.0
    %4590 = vmatprep.subr.mxu0 0.0
    %4591 = vmatpush1.xpose.msra.mxu0 0.0
    %4592 = vmatprep.subr.mxu0 0.0
    %4593 = vmatpush1.xpose.msra.mxu0 0.0
    %4594 = vmatprep.subr.mxu0 0.0
    %4595 = vmatpush1.xpose.msra.mxu0 0.0
    %4596 = vmatprep.subr.mxu0 0.0
    %4597 = vmatpush1.xpose.msra.mxu0 0.0
    %4598 = vmatprep.subr.mxu0 0.0
    %4599 = vmatpush1.xpose.msra.mxu0 0.0
    %4600 = vmatprep.subr.mxu0 0.0
    %4601 = vmatpush1.xpose.msra.mxu0 0.0
    %4602 = vmatprep.subr.mxu0 0.0
    %4603 = vmatpush1.xpose.msra.mxu0 0.0
    %4604 = vmatprep.subr.mxu0 0.0
    %4605 = vmatpush1.xpose.msra.mxu0 0.0
    %4606 = vmatprep.subr.mxu0 0.0
    %4607 = vmatpush1.xpose.msra.mxu0 0.0
    %4608 = vmatprep.subr.mxu0 0.0
    %4609 = vmatpush1.xpose.msra.mxu0 0.0
    %4610 = vmatprep.subr.mxu0 0.0
    %4611 = vmatpush1.xpose.msra.mxu0 0.0
    %4612 = vmatprep.subr.mxu0 0.0
    %4613 = vmatpush1.xpose.msra.mxu0 0.0
    %4614 = vmatprep.subr.mxu0 0.0
    %4615 = vmatpush1.xpose.msra.mxu0 0.0
    %4616 = vmatprep.subr.mxu0 0.0
    %4617 = vmatpush1.xpose.msra.mxu0 0.0
    %4618 = vmatprep.subr.mxu0 0.0
    %4619 = vmatpush1.xpose.msra.mxu0 0.0
    %4620 = vmatprep.subr.mxu0 0.0
    %4621 = vmatpush1.xpose.msra.mxu0 0.0
    %4622 = vmatprep.subr.mxu0 0.0
    %4623 = vmatpush1.xpose.msra.mxu0 0.0
    %4624 = vmatprep.subr.mxu0 0.0
    %4625 = vmatpush1.xpose.msra.mxu0 0.0
    %4626 = vmatprep.subr.mxu0 0.0
    %4627 = vmatpush1.xpose.msra.mxu0 0.0
    %4628 = vmatprep.subr.mxu0 0.0
    %4629 = vmatpush1.xpose.msra.mxu0 0.0
    %4630 = vmatprep.subr.mxu0 0.0
    %4631 = vmatpush1.xpose.msra.mxu0 0.0
    %4632 = vmatprep.subr.mxu0 0.0
    %4633 = vmatpush1.xpose.msra.mxu0 0.0
    %4634 = vmatprep.subr.mxu0 0.0
    %4635 = vmatpush1.xpose.msra.mxu0 0.0
    %4636 = vmatprep.subr.mxu0 0.0
    %4637 = vmatpush1.xpose.msra.mxu0 0.0
    %4638 = vmatprep.subr.mxu0 0.0
    %4639 = vmatpush1.xpose.msra.mxu0 0.0
    %4640 = vmatprep.subr.mxu0 0.0
    %4641 = vmatpush1.xpose.msra.mxu0 0.0
    %4642 = vmatprep.subr.mxu0 0.0
    %4643 = vmatpush1.xpose.msra.mxu0 0.0
    %4644 = vmatprep.subr.mxu0 0.0
    %4645 = vmatpush1.xpose.msra.mxu0 0.0
    %4646 = vmatprep.mubr.f32.mxu0 0.0
    %4647 = vmatmul.mubr.f32.gmra.mrb[0].mxu0 %v290
    %v4648 = vpop.f32.mrb[0].mxu0
    %v4649 = vadd.f32 0.0, %v4648
    %v4650 = vpop.f32.mrb[0].mxu0
    %4651 = vdwg.mxu0
    %v4653 = vrot.slane %v4649, 7
    %v4655 = vsel %vm371, %v4573, %v4653
    %v4656 = vmul.f32 %v4655, 0.2
    %v4657 = vtanh.pop %v4656
    %v4658 = vmul.f32 %v4657, 2.5
    %v4659 = vmul.f32 %v4658, 1.442695
    %v4660 = vpow.pop %v4659
    %v4661 = vsel %vm905, %v4660, 0.0
    %v4662 = vsel %vm379, %v4661, 0.0
    %4663 = vadd.xlane.f32.xlu0 %v4662
    %v4664 = vpop.xlane.xlu0 %4663
    %v4665 = vlog2.pop %v4664
    %v4666 = vmul.f32 %v4665, 0.6931472
    %v4667 = vrcp.pop %v4664
    %v4668 = vsub.f32 %v4658, %v4666
    %v4669 = vsel %vm905, %v4668, 0.0
    %v4671 = vsel %vm389, %v4661, 0
    %4673 = vmatprep.subr.mxu0 0.0
    %4674 = vmatpush1.msra.mxu0 %v41
    %4675 = vmatprep.subr.mxu0 0.0
    %4676 = vmatpush1.msra.mxu0 %v395
    %4677 = vmatprep.subr.mxu0 0.0
    %4678 = vmatpush1.msra.mxu0 0.0
    %4679 = vmatprep.subr.mxu0 0.0
    %4680 = vmatpush1.msra.mxu0 0.0
    %4681 = vmatprep.subr.mxu0 0.0
    %4682 = vmatpush1.msra.mxu0 0.0
    %4683 = vmatprep.subr.mxu0 0.0
    %4684 = vmatpush1.msra.mxu0 0.0
    %4685 = vmatprep.subr.mxu0 0.0
    %4686 = vmatpush1.msra.mxu0 0.0
    %4687 = vmatprep.subr.mxu0 0.0
    %4688 = vmatpush1.msra.mxu0 0.0
    %4689 = vmatprep.subr.mxu0 0.0
    %4690 = vmatpush1.msra.mxu0 0.0
    %4691 = vmatprep.subr.mxu0 0.0
    %4692 = vmatpush1.msra.mxu0 0.0
    %4693 = vmatprep.subr.mxu0 0.0
    %4694 = vmatpush1.msra.mxu0 0.0
    %4695 = vmatprep.subr.mxu0 0.0
    %4696 = vmatpush1.msra.mxu0 0.0
    %4697 = vmatprep.subr.mxu0 0.0
    %4698 = vmatpush1.msra.mxu0 0.0
    %4699 = vmatprep.subr.mxu0 0.0
    %4700 = vmatpush1.msra.mxu0 0.0
    %4701 = vmatprep.subr.mxu0 0.0
    %4702 = vmatpush1.msra.mxu0 0.0
    %4703 = vmatprep.subr.mxu0 0.0
    %4704 = vmatpush1.msra.mxu0 0.0
    %4705 = vmatprep.subr.mxu0 0.0
    %4706 = vmatpush1.msra.mxu0 0.0
    %4707 = vmatprep.subr.mxu0 0.0
    %4708 = vmatpush1.msra.mxu0 0.0
    %4709 = vmatprep.subr.mxu0 0.0
    %4710 = vmatpush1.msra.mxu0 0.0
    %4711 = vmatprep.subr.mxu0 0.0
    %4712 = vmatpush1.msra.mxu0 0.0
    %4713 = vmatprep.subr.mxu0 0.0
    %4714 = vmatpush1.msra.mxu0 0.0
    %4715 = vmatprep.subr.mxu0 0.0
    %4716 = vmatpush1.msra.mxu0 0.0
    %4717 = vmatprep.subr.mxu0 0.0
    %4718 = vmatpush1.msra.mxu0 0.0
    %4719 = vmatprep.subr.mxu0 0.0
    %4720 = vmatpush1.msra.mxu0 0.0
    %4721 = vmatprep.subr.mxu0 0.0
    %4722 = vmatpush1.msra.mxu0 0.0
    %4723 = vmatprep.subr.mxu0 0.0
    %4724 = vmatpush1.msra.mxu0 0.0
    %4725 = vmatprep.subr.mxu0 0.0
    %4726 = vmatpush1.msra.mxu0 0.0
    %4727 = vmatprep.subr.mxu0 0.0
    %4728 = vmatpush1.msra.mxu0 0.0
    %4729 = vmatprep.subr.mxu0 0.0
    %4730 = vmatpush1.msra.mxu0 0.0
    %4731 = vmatprep.subr.mxu0 0.0
    %4732 = vmatpush1.msra.mxu0 0.0
    %4733 = vmatprep.subr.mxu0 0.0
    %4734 = vmatpush1.msra.mxu0 0.0
    %4735 = vmatprep.subr.mxu0 0.0
    %4736 = vmatpush1.msra.mxu0 0.0
    %4737 = vmatprep.mubr.f32.mxu0 0.0
    %4738 = vmatmul.mubr.f32.gmra.mrb[0].mxu0 %v4671
    %v4739 = vpop.f32.mrb[0].mxu0
    %v4740 = vadd.f32 0.0, %v4739
    %v4741 = vpop.f32.mrb[0].mxu0
    %4742 = vdwg.mxu0
    %v4743 = vmul.f32 %v388, %v4664
    %4745 = vset.pattern.permute.xlu0 13
    %4746 = vperm.xlu0 %4745, %v4743
    %v4747 = vpop.permute.xlu0 %4746
    %vm4749 = vcmp.lt.f32.partialorder %v4740, %v4747
    %v4750 = vsel %vm4749, 1, 0
    %v4751 = vcvt.s32.f32 %v4750
    %v4752 = vsel %vm379, %v4751, 0.0
    %4753 = vadd.xlane.f32.xlu0 %v4752
    %v4754 = vpop.xlane.xlu0 %4753
    %v4755 = vcvt.f32.s32.to.zero.pseudo %v4754
    %vm4756 = vcmp.lt.s32.totalorder %v4755, 4
    %v4757 = vsel %vm4756, %v4755, 4
    %v4758 = vcvt.s32.f32 %v4757
    %vm4759 = vcmp.eq.s32.totalorder %v33, %v4757
    %v4760 = vsel %vm4759, 1, 0
    %v4761 = vcvt.s32.f32 %v4760
    %v4762 = vmul.f32 %v4761, %v4669
    %v4763 = vsel %vm379, %v4762, 0.0
    %4764 = vadd.xlane.f32.xlu0 %v4763
    %v4765 = vpop.xlane.xlu0 %4764
    %v4766 = vadd.f32 %v4363, %v4765
    %v4767 = vmul.f32 %v4661, %v4669
    %v4768 = vsel %vm379, %v4767, 0.0
    %4769 = vadd.xlane.f32.xlu0 %v4768
    %v4770 = vpop.xlane.xlu0 %4769
    %v4771 = vmul.f32 %v4770, %v4667
    %v4772 = vsub.f32 %v4369, %v4771
    %vm4773 = vcmp.eq.s32.totalorder %v33, 7
    %v4774 = vsel %vm4773, 1, 0
    %v4775 = vcvt.s32.f32 %v4774
    %v4776 = vmul.f32 %v4758, %v4775
    %v4777 = vadd.f32 %v4374, %v4776
    %4779 = vrot.lane.b32.xlu0 %v4483, 42
    %v4780 = vpop.permute.xlu0 %4779
    %v4782 = vsel %vm389, %v4761, %v4780
    %v4783 = vsel %vm44, %v4782, 1.0
    %v4784 = vsel %vm46, %v4783, 0.0
    %4786 = vrot.lane.b32.xlu0 %v4783, 64
    %v4787 = vpop.permute.xlu0 %4786
    %v4789 = vsel %vm52, 0.0, %v4787
    %v4790 = vsel %vm54, %v4789, 0.0
    %v4791 = vsel %vm56, %v4784, %v4790
    %4792 = vmatprep.subr.mxu0 %v59
    %4793 = vmatpush1.msra.mxu0 %v58
    %4794 = vmatprep.subr.mxu0 %v61
    %4795 = vmatpush1.msra.mxu0 %v60
    %4796 = vmatprep.subr.mxu0 %v63
    %4797 = vmatpush1.msra.mxu0 %v62
    %4798 = vmatprep.subr.mxu0 %v65
    %4799 = vmatpush1.msra.mxu0 %v64
    %4800 = vmatprep.subr.mxu0 %v67
    %4801 = vmatpush1.msra.mxu0 %v66
    %4802 = vmatprep.subr.mxu0 %v69
    %4803 = vmatpush1.msra.mxu0 %v68
    %4804 = vmatprep.subr.mxu0 %v71
    %4805 = vmatpush1.msra.mxu0 %v70
    %4806 = vmatprep.subr.mxu0 %v73
    %4807 = vmatpush1.msra.mxu0 %v72
    %4808 = vmatprep.subr.mxu0 %v75
    %4809 = vmatpush1.msra.mxu0 %v74
    %4810 = vmatprep.subr.mxu0 %v77
    %4811 = vmatpush1.msra.mxu0 %v76
    %4812 = vmatprep.subr.mxu0 %v79
    %4813 = vmatpush1.msra.mxu0 %v78
    %4814 = vmatprep.subr.mxu0 %v81
    %4815 = vmatpush1.msra.mxu0 %v80
    %4816 = vmatprep.subr.mxu0 %v83
    %4817 = vmatpush1.msra.mxu0 %v82
    %4818 = vmatprep.subr.mxu0 %v85
    %4819 = vmatpush1.msra.mxu0 %v84
    %4820 = vmatprep.subr.mxu0 %v87
    %4821 = vmatpush1.msra.mxu0 %v86
    %4822 = vmatprep.subr.mxu0 %v89
    %4823 = vmatpush1.msra.mxu0 %v88
    %4824 = vmatprep.subr.mxu0 0.0
    %4825 = vmatpush1.msra.mxu0 0.0
    %4826 = vmatprep.subr.mxu0 0.0
    %4827 = vmatpush1.msra.mxu0 0.0
    %4828 = vmatprep.subr.mxu0 0.0
    %4829 = vmatpush1.msra.mxu0 0.0
    %4830 = vmatprep.subr.mxu0 0.0
    %4831 = vmatpush1.msra.mxu0 0.0
    %4832 = vmatprep.subr.mxu0 0.0
    %4833 = vmatpush1.msra.mxu0 0.0
    %4834 = vmatprep.subr.mxu0 0.0
    %4835 = vmatpush1.msra.mxu0 0.0
    %4836 = vmatprep.subr.mxu0 0.0
    %4837 = vmatpush1.msra.mxu0 0.0
    %4838 = vmatprep.subr.mxu0 0.0
    %4839 = vmatpush1.msra.mxu0 0.0
    %4840 = vmatprep.subr.mxu0 0.0
    %4841 = vmatpush1.msra.mxu0 0.0
    %4842 = vmatprep.subr.mxu0 0.0
    %4843 = vmatpush1.msra.mxu0 0.0
    %4844 = vmatprep.subr.mxu0 0.0
    %4845 = vmatpush1.msra.mxu0 0.0
    %4846 = vmatprep.subr.mxu0 0.0
    %4847 = vmatpush1.msra.mxu0 0.0
    %4848 = vmatprep.subr.mxu0 0.0
    %4849 = vmatpush1.msra.mxu0 0.0
    %4850 = vmatprep.subr.mxu0 0.0
    %4851 = vmatpush1.msra.mxu0 0.0
    %4852 = vmatprep.subr.mxu0 0.0
    %4853 = vmatpush1.msra.mxu0 0.0
    %4854 = vmatprep.subr.mxu0 0.0
    %4855 = vmatpush1.msra.mxu0 0.0
    %4856 = vmatprep.mubr.f32.mxu0 0.0
    %4857 = vmatmul.mubr.f32.gmra.mrb[0].mxu0 %v4791
    %v4858 = vpop.f32.mrb[0].mxu0
    %v4859 = vadd.f32 0.0, %v4858
    %v4860 = vpop.f32.mrb[0].mxu0
    %v4861 = vadd.f32 0.0, %v4860
    %4862 = vdwg.mxu0
    %v4863 = vxor.u32 %v4859, 2147483648
    %v4864 = vmul.f32 %v4863, 1.442695
    %v4865 = vpow.pop %v4864
    %v4866 = vadd.f32 %v4865, 1.0
    %v4867 = vrcp.pop %v4866
    %v4868 = vmul.f32 1.0, %v4867
    %v4869 = vtanh.pop %v4859
    %v4870 = vmul.f32 %v4868, %v4477
    %4872 = vrot.lane.b32.xlu0 %v4869, 64
    %v4873 = vpop.permute.xlu0 %4872
    %v4875 = vmul.f32 %v4868, %v4873
    %4877 = vrot.lane.b32.xlu0 %v4875, 32
    %v4878 = vpop.permute.xlu0 %4877
    %v4880 = vadd.f32 %v4870, %v4878
    %v4881 = vtanh.pop %v4880
    %4883 = vrot.lane.b32.xlu0 %v4881, 64
    %v4884 = vpop.permute.xlu0 %4883
    %v4886 = vmul.f32 %v4868, %v4884
    %v4887 = vmul.f32 %v4861, 0.2
    %v4888 = vtanh.pop %v4887
    %v4889 = vmul.f32 %v4888, 1.442695
    %v4890 = vpow.pop %v4889
    %4892 = vrot.lane.b32.xlu0 %v4890, 96
    %v4893 = vpop.permute.xlu0 %4892
    %v4895 = vsel %vm905, %v4893, 0.0
    %v4896 = vsel %vm379, %v4895, 0.0
    %4897 = vadd.xlane.f32.xlu0 %v4896
    %v4898 = vpop.xlane.xlu0 %4897
    %v4899 = vlog2.pop %v4898
    %v4900 = vmul.f32 %v4899, 0.6931472
    %v4901 = vrcp.pop %v4898
    %v4902 = vsub.f32 %v4888, %v4900
    %4904 = vrot.lane.b32.xlu0 %v4902, 96
    %v4905 = vpop.permute.xlu0 %4904
    %v4907 = vsel %vm905, %v4905, 0.0
    %v4909 = vsel %vm389, %v4895, 0
    %4911 = vmatprep.subr.mxu0 0.0
    %4912 = vmatpush1.msra.mxu0 %v41
    %4913 = vmatprep.subr.mxu0 0.0
    %4914 = vmatpush1.msra.mxu0 %v395
    %4915 = vmatprep.subr.mxu0 0.0
    %4916 = vmatpush1.msra.mxu0 0.0
    %4917 = vmatprep.subr.mxu0 0.0
    %4918 = vmatpush1.msra.mxu0 0.0
    %4919 = vmatprep.subr.mxu0 0.0
    %4920 = vmatpush1.msra.mxu0 0.0
    %4921 = vmatprep.subr.mxu0 0.0
    %4922 = vmatpush1.msra.mxu0 0.0
    %4923 = vmatprep.subr.mxu0 0.0
    %4924 = vmatpush1.msra.mxu0 0.0
    %4925 = vmatprep.subr.mxu0 0.0
    %4926 = vmatpush1.msra.mxu0 0.0
    %4927 = vmatprep.subr.mxu0 0.0
    %4928 = vmatpush1.msra.mxu0 0.0
    %4929 = vmatprep.subr.mxu0 0.0
    %4930 = vmatpush1.msra.mxu0 0.0
    %4931 = vmatprep.subr.mxu0 0.0
    %4932 = vmatpush1.msra.mxu0 0.0
    %4933 = vmatprep.subr.mxu0 0.0
    %4934 = vmatpush1.msra.mxu0 0.0
    %4935 = vmatprep.subr.mxu0 0.0
    %4936 = vmatpush1.msra.mxu0 0.0
    %4937 = vmatprep.subr.mxu0 0.0
    %4938 = vmatpush1.msra.mxu0 0.0
    %4939 = vmatprep.subr.mxu0 0.0
    %4940 = vmatpush1.msra.mxu0 0.0
    %4941 = vmatprep.subr.mxu0 0.0
    %4942 = vmatpush1.msra.mxu0 0.0
    %4943 = vmatprep.subr.mxu0 0.0
    %4944 = vmatpush1.msra.mxu0 0.0
    %4945 = vmatprep.subr.mxu0 0.0
    %4946 = vmatpush1.msra.mxu0 0.0
    %4947 = vmatprep.subr.mxu0 0.0
    %4948 = vmatpush1.msra.mxu0 0.0
    %4949 = vmatprep.subr.mxu0 0.0
    %4950 = vmatpush1.msra.mxu0 0.0
    %4951 = vmatprep.subr.mxu0 0.0
    %4952 = vmatpush1.msra.mxu0 0.0
    %4953 = vmatprep.subr.mxu0 0.0
    %4954 = vmatpush1.msra.mxu0 0.0
    %4955 = vmatprep.subr.mxu0 0.0
    %4956 = vmatpush1.msra.mxu0 0.0
    %4957 = vmatprep.subr.mxu0 0.0
    %4958 = vmatpush1.msra.mxu0 0.0
    %4959 = vmatprep.subr.mxu0 0.0
    %4960 = vmatpush1.msra.mxu0 0.0
    %4961 = vmatprep.subr.mxu0 0.0
    %4962 = vmatpush1.msra.mxu0 0.0
    %4963 = vmatprep.subr.mxu0 0.0
    %4964 = vmatpush1.msra.mxu0 0.0
    %4965 = vmatprep.subr.mxu0 0.0
    %4966 = vmatpush1.msra.mxu0 0.0
    %4967 = vmatprep.subr.mxu0 0.0
    %4968 = vmatpush1.msra.mxu0 0.0
    %4969 = vmatprep.subr.mxu0 0.0
    %4970 = vmatpush1.msra.mxu0 0.0
    %4971 = vmatprep.subr.mxu0 0.0
    %4972 = vmatpush1.msra.mxu0 0.0
    %4973 = vmatprep.subr.mxu0 0.0
    %4974 = vmatpush1.msra.mxu0 0.0
    %4975 = vmatprep.mubr.f32.mxu0 0.0
    %4976 = vmatmul.mubr.f32.gmra.mrb[0].mxu0 %v4909
    %v4977 = vpop.f32.mrb[0].mxu0
    %v4978 = vadd.f32 0.0, %v4977
    %v4979 = vpop.f32.mrb[0].mxu0
    %4980 = vdwg.mxu0
    %v4981 = vmul.f32 %v388, %v4898
    %4983 = vset.pattern.permute.xlu0 14
    %4984 = vperm.xlu0 %4983, %v4981
    %v4985 = vpop.permute.xlu0 %4984
    %vm4987 = vcmp.lt.f32.partialorder %v4978, %v4985
    %v4988 = vsel %vm4987, 1, 0
    %v4989 = vcvt.s32.f32 %v4988
    %v4990 = vsel %vm379, %v4989, 0.0
    %4991 = vadd.xlane.f32.xlu0 %v4990
    %v4992 = vpop.xlane.xlu0 %4991
    %v4993 = vcvt.f32.s32.to.zero.pseudo %v4992
    %vm4994 = vcmp.lt.s32.totalorder %v4993, 4
    %v4995 = vsel %vm4994, %v4993, 4
    %v4996 = vcvt.s32.f32 %v4995
    %vm4997 = vcmp.eq.s32.totalorder %v33, %v4995
    %v4998 = vsel %vm4997, 1, 0
    %v4999 = vcvt.s32.f32 %v4998
    %v5000 = vmul.f32 %v4999, %v4907
    %v5001 = vsel %vm379, %v5000, 0.0
    %5002 = vadd.xlane.f32.xlu0 %v5001
    %v5003 = vpop.xlane.xlu0 %5002
    %v5004 = vadd.f32 %v4766, %v5003
    %v5005 = vmul.f32 %v4895, %v4907
    %v5006 = vsel %vm379, %v5005, 0.0
    %5007 = vadd.xlane.f32.xlu0 %v5006
    %v5008 = vpop.xlane.xlu0 %5007
    %v5009 = vmul.f32 %v5008, %v4901
    %v5010 = vsub.f32 %v4772, %v5009
    %vm5011 = vcmp.eq.s32.totalorder %v33, 14
    %v5012 = vsel %vm5011, 1, 0
    %v5013 = vcvt.s32.f32 %v5012
    %v5014 = vmul.f32 %v4996, %v5013
    %v5015 = vadd.f32 %v4777, %v5014
    %v5016 = vadd.s32 %v4995, 5
    %vm5017 = vcmp.eq.s32.totalorder %v33, %v5016
    %v5018 = vsel %vm5017, 1, 0
    %v5019 = vcvt.s32.f32 %v5018
    %5021 = vrot.lane.b32.xlu0 %v4886, 42
    %v5022 = vpop.permute.xlu0 %5021
    %v5024 = vsel %vm389, %v5019, %v5022
    %v5025 = vsel %vm44, %v5024, 1.0
    %v5026 = vsel %vm46, %v5025, 0.0
    %5028 = vrot.lane.b32.xlu0 %v5025, 64
    %v5029 = vpop.permute.xlu0 %5028
    %v5031 = vsel %vm52, 0.0, %v5029
    %v5032 = vsel %vm54, %v5031, 0.0
    %v5033 = vsel %vm56, %v5026, %v5032
    %5034 = vmatprep.subr.mxu0 %v59
    %5035 = vmatpush1.msra.mxu0 %v58
    %5036 = vmatprep.subr.mxu0 %v61
    %5037 = vmatpush1.msra.mxu0 %v60
    %5038 = vmatprep.subr.mxu0 %v63
    %5039 = vmatpush1.msra.mxu0 %v62
    %5040 = vmatprep.subr.mxu0 %v65
    %5041 = vmatpush1.msra.mxu0 %v64
    %5042 = vmatprep.subr.mxu0 %v67
    %5043 = vmatpush1.msra.mxu0 %v66
    %5044 = vmatprep.subr.mxu0 %v69
    %5045 = vmatpush1.msra.mxu0 %v68
    %5046 = vmatprep.subr.mxu0 %v71
    %5047 = vmatpush1.msra.mxu0 %v70
    %5048 = vmatprep.subr.mxu0 %v73
    %5049 = vmatpush1.msra.mxu0 %v72
    %5050 = vmatprep.subr.mxu0 %v75
    %5051 = vmatpush1.msra.mxu0 %v74
    %5052 = vmatprep.subr.mxu0 %v77
    %5053 = vmatpush1.msra.mxu0 %v76
    %5054 = vmatprep.subr.mxu0 %v79
    %5055 = vmatpush1.msra.mxu0 %v78
    %5056 = vmatprep.subr.mxu0 %v81
    %5057 = vmatpush1.msra.mxu0 %v80
    %5058 = vmatprep.subr.mxu0 %v83
    %5059 = vmatpush1.msra.mxu0 %v82
    %5060 = vmatprep.subr.mxu0 %v85
    %5061 = vmatpush1.msra.mxu0 %v84
    %5062 = vmatprep.subr.mxu0 %v87
    %5063 = vmatpush1.msra.mxu0 %v86
    %5064 = vmatprep.subr.mxu0 %v89
    %5065 = vmatpush1.msra.mxu0 %v88
    %5066 = vmatprep.subr.mxu0 0.0
    %5067 = vmatpush1.msra.mxu0 0.0
    %5068 = vmatprep.subr.mxu0 0.0
    %5069 = vmatpush1.msra.mxu0 0.0
    %5070 = vmatprep.subr.mxu0 0.0
    %5071 = vmatpush1.msra.mxu0 0.0
    %5072 = vmatprep.subr.mxu0 0.0
    %5073 = vmatpush1.msra.mxu0 0.0
    %5074 = vmatprep.subr.mxu0 0.0
    %5075 = vmatpush1.msra.mxu0 0.0
    %5076 = vmatprep.subr.mxu0 0.0
    %5077 = vmatpush1.msra.mxu0 0.0
    %5078 = vmatprep.subr.mxu0 0.0
    %5079 = vmatpush1.msra.mxu0 0.0
    %5080 = vmatprep.subr.mxu0 0.0
    %5081 = vmatpush1.msra.mxu0 0.0
    %5082 = vmatprep.subr.mxu0 0.0
    %5083 = vmatpush1.msra.mxu0 0.0
    %5084 = vmatprep.subr.mxu0 0.0
    %5085 = vmatpush1.msra.mxu0 0.0
    %5086 = vmatprep.subr.mxu0 0.0
    %5087 = vmatpush1.msra.mxu0 0.0
    %5088 = vmatprep.subr.mxu0 0.0
    %5089 = vmatpush1.msra.mxu0 0.0
    %5090 = vmatprep.subr.mxu0 0.0
    %5091 = vmatpush1.msra.mxu0 0.0
    %5092 = vmatprep.subr.mxu0 0.0
    %5093 = vmatpush1.msra.mxu0 0.0
    %5094 = vmatprep.subr.mxu0 0.0
    %5095 = vmatpush1.msra.mxu0 0.0
    %5096 = vmatprep.subr.mxu0 0.0
    %5097 = vmatpush1.msra.mxu0 0.0
    %5098 = vmatprep.mubr.f32.mxu0 0.0
    %5099 = vmatmul.mubr.f32.gmra.mrb[0].mxu0 %v5033
    %v5100 = vpop.f32.mrb[0].mxu0
    %v5101 = vpop.f32.mrb[0].mxu0
    %v5102 = vadd.f32 0.0, %v5101
    %5103 = vdwg.mxu0
    %v5104 = vmul.f32 %v5102, 0.2
    %v5105 = vtanh.pop %v5104
    %v5106 = vmul.f32 %v5105, 1.442695
    %v5107 = vpow.pop %v5106
    %5109 = vrot.lane.b32.xlu0 %v5107, 96
    %v5110 = vpop.permute.xlu0 %5109
    %v5112 = vsel %vm905, %v5110, 0.0
    %v5113 = vsel %vm379, %v5112, 0.0
    %5114 = vadd.xlane.f32.xlu0 %v5113
    %v5115 = vpop.xlane.xlu0 %5114
    %v5116 = vlog2.pop %v5115
    %v5117 = vmul.f32 %v5116, 0.6931472
    %v5118 = vrcp.pop %v5115
    %v5119 = vsub.f32 %v5105, %v5117
    %5121 = vrot.lane.b32.xlu0 %v5119, 96
    %v5122 = vpop.permute.xlu0 %5121
    %v5124 = vsel %vm905, %v5122, 0.0
    %v5126 = vsel %vm389, %v5112, 0
    %5128 = vmatprep.subr.mxu0 0.0
    %5129 = vmatpush1.msra.mxu0 %v41
    %5130 = vmatprep.subr.mxu0 0.0
    %5131 = vmatpush1.msra.mxu0 %v395
    %5132 = vmatprep.subr.mxu0 0.0
    %5133 = vmatpush1.msra.mxu0 0.0
    %5134 = vmatprep.subr.mxu0 0.0
    %5135 = vmatpush1.msra.mxu0 0.0
    %5136 = vmatprep.subr.mxu0 0.0
    %5137 = vmatpush1.msra.mxu0 0.0
    %5138 = vmatprep.subr.mxu0 0.0
    %5139 = vmatpush1.msra.mxu0 0.0
    %5140 = vmatprep.subr.mxu0 0.0
    %5141 = vmatpush1.msra.mxu0 0.0
    %5142 = vmatprep.subr.mxu0 0.0
    %5143 = vmatpush1.msra.mxu0 0.0
    %5144 = vmatprep.subr.mxu0 0.0
    %5145 = vmatpush1.msra.mxu0 0.0
    %5146 = vmatprep.subr.mxu0 0.0
    %5147 = vmatpush1.msra.mxu0 0.0
    %5148 = vmatprep.subr.mxu0 0.0
    %5149 = vmatpush1.msra.mxu0 0.0
    %5150 = vmatprep.subr.mxu0 0.0
    %5151 = vmatpush1.msra.mxu0 0.0
    %5152 = vmatprep.subr.mxu0 0.0
    %5153 = vmatpush1.msra.mxu0 0.0
    %5154 = vmatprep.subr.mxu0 0.0
    %5155 = vmatpush1.msra.mxu0 0.0
    %5156 = vmatprep.subr.mxu0 0.0
    %5157 = vmatpush1.msra.mxu0 0.0
    %5158 = vmatprep.subr.mxu0 0.0
    %5159 = vmatpush1.msra.mxu0 0.0
    %5160 = vmatprep.subr.mxu0 0.0
    %5161 = vmatpush1.msra.mxu0 0.0
    %5162 = vmatprep.subr.mxu0 0.0
    %5163 = vmatpush1.msra.mxu0 0.0
    %5164 = vmatprep.subr.mxu0 0.0
    %5165 = vmatpush1.msra.mxu0 0.0
    %5166 = vmatprep.subr.mxu0 0.0
    %5167 = vmatpush1.msra.mxu0 0.0
    %5168 = vmatprep.subr.mxu0 0.0
    %5169 = vmatpush1.msra.mxu0 0.0
    %5170 = vmatprep.subr.mxu0 0.0
    %5171 = vmatpush1.msra.mxu0 0.0
    %5172 = vmatprep.subr.mxu0 0.0
    %5173 = vmatpush1.msra.mxu0 0.0
    %5174 = vmatprep.subr.mxu0 0.0
    %5175 = vmatpush1.msra.mxu0 0.0
    %5176 = vmatprep.subr.mxu0 0.0
    %5177 = vmatpush1.msra.mxu0 0.0
    %5178 = vmatprep.subr.mxu0 0.0
    %5179 = vmatpush1.msra.mxu0 0.0
    %5180 = vmatprep.subr.mxu0 0.0
    %5181 = vmatpush1.msra.mxu0 0.0
    %5182 = vmatprep.subr.mxu0 0.0
    %5183 = vmatpush1.msra.mxu0 0.0
    %5184 = vmatprep.subr.mxu0 0.0
    %5185 = vmatpush1.msra.mxu0 0.0
    %5186 = vmatprep.subr.mxu0 0.0
    %5187 = vmatpush1.msra.mxu0 0.0
    %5188 = vmatprep.subr.mxu0 0.0
    %5189 = vmatpush1.msra.mxu0 0.0
    %5190 = vmatprep.subr.mxu0 0.0
    %5191 = vmatpush1.msra.mxu0 0.0
    %5192 = vmatprep.mubr.f32.mxu0 0.0
    %5193 = vmatmul.mubr.f32.gmra.mrb[0].mxu0 %v5126
    %v5194 = vpop.f32.mrb[0].mxu0
    %v5195 = vadd.f32 0.0, %v5194
    %v5196 = vpop.f32.mrb[0].mxu0
    %5197 = vdwg.mxu0
    %v5198 = vmul.f32 %v388, %v5115
    %5200 = vset.pattern.permute.xlu0 15
    %5201 = vperm.xlu0 %5200, %v5198
    %v5202 = vpop.permute.xlu0 %5201
    %vm5204 = vcmp.lt.f32.partialorder %v5195, %v5202
    %v5205 = vsel %vm5204, 1, 0
    %v5206 = vcvt.s32.f32 %v5205
    %v5207 = vsel %vm379, %v5206, 0.0
    %5208 = vadd.xlane.f32.xlu0 %v5207
    %v5209 = vpop.xlane.xlu0 %5208
    %v5210 = vcvt.f32.s32.to.zero.pseudo %v5209
    %vm5211 = vcmp.lt.s32.totalorder %v5210, 4
    %v5212 = vsel %vm5211, %v5210, 4
    %v5213 = vcvt.s32.f32 %v5212
    %vm5214 = vcmp.eq.s32.totalorder %v33, %v5212
    %v5215 = vsel %vm5214, 1, 0
    %v5216 = vcvt.s32.f32 %v5215
    %v5217 = vmul.f32 %v5216, %v5124
    %v5218 = vsel %vm379, %v5217, 0.0
    %5219 = vadd.xlane.f32.xlu0 %v5218
    %v5220 = vpop.xlane.xlu0 %5219
    %v5221 = vadd.f32 %v5004, %v5220
    %v5222 = vmul.f32 %v5112, %v5124
    %v5223 = vsel %vm379, %v5222, 0.0
    %5224 = vadd.xlane.f32.xlu0 %v5223
    %v5225 = vpop.xlane.xlu0 %5224
    %v5226 = vmul.f32 %v5225, %v5118
    %v5227 = vsub.f32 %v5010, %v5226
    %vm5228 = vcmp.eq.s32.totalorder %v33, 15
    %v5229 = vsel %vm5228, 1, 0
    %v5230 = vcvt.s32.f32 %v5229
    %v5231 = vmul.f32 %v5213, %v5230
    %v5232 = vadd.f32 %v5015, %v5231
    %vm5233 = vcmp.eq.s32.totalorder %v33, 16
    %v5234 = vsel %vm5233, 1, 0
    %v5235 = vcvt.s32.f32 %v5234
    %v5236 = vmul.f32 %v5221, %v5235
    %v5237 = vadd.f32 %v5232, %v5236
    %vm5238 = vcmp.eq.s32.totalorder %v33, 17
    %v5239 = vsel %vm5238, 1, 0
    %v5240 = vcvt.s32.f32 %v5239
    %v5241 = vmul.f32 %v5227, %v5240
    %v5242 = vadd.f32 %v5237, %v5241
    %5243 = vst [vmem:[#allocation5] sm:$0x3] %v5242
    // Predicated region
    $region22: #{tpu_custom_call.1} parent=1 // pred_check
      _
    $region23: #{tpu_custom_call.1} parent=1 // pred_check_branch
      %5245 = sbr.rel (0) target = $region25
    $region24: #{tpu_custom_call.1} parent=1 // pred_region
      %s5247 = ssub.s32 32, 32
      %5248 = vsyncadd [#allocation4], %s5247
      %s5250 = sshll.u32 [#allocation5], 4
      %s5251 = int_to_ptr.vmem [resolvable:$true] %s5250
      %5253 = dma.vmem_to_hbm [thread:$0]  %s5251, 32, %s4, [#allocation4]
    $region25: #{tpu_custom_call.1} parent=1 // pred_fallthru
      _
    // Predicated region
    $region26: #{tpu_custom_call.1} parent=1 // pred_check
      _
    $region27: #{tpu_custom_call.1} parent=1 // pred_check_branch
      %5255 = sbr.rel (0) target = $region29
    $region28: #{tpu_custom_call.1} parent=1 // pred_region
      %5256 = dma.done [#allocation4], 32
    $region29: #{tpu_custom_call.1} parent=1 // pred_fallthru
      _
    %5257 = vsyncpa [#allocation3], 1
    %5258 = vsyncpa [#allocation4], 1

</llo_original>
